<compile_context>
chip_gen: v7x
topology: tpu7x:2x2x1
jax: 0.10.0
libtpu: 0.0.40
codegen_flags: <defaults>
</compile_context>

<pallas_src>
import functools
import math

import jax
import jax.numpy as jnp
import numpy as np
from jax.experimental import pallas as pl
from jax.experimental.pallas import tpu as pltpu


# ----------------------------------------------------------------------------
# Pallas kernels
# ----------------------------------------------------------------------------
def _conv_stage(x_ref, w_ref, b_ref, sel_ref, out_ref, *, hw):
    """One conv3x3(+foldedBN)+ReLU+2x2maxpool stage, fully inside VMEM.

    x_ref   : ((H+4)*(W+2), Cin)  flat, zero-padded input image
    w_ref   : (9, Cin, Cout)      BN-scale-folded weights (bf16 for the MXU path)
    b_ref   : (1, Cout)           folded BN bias
    sel_ref : (4, Lout, H*(W+2))  0/1 selection matrices implementing the 2x2 max-pool
                                  (and, for inner stages, the scatter into the next stage's
                                  zero-padded flat layout)
    out_ref : (Lout, Cout)
    """
    H, W = hw
    Wp = W + 2                    # row pitch of the flat padded layout
    M = H * Wp                    # extended conv-output rows we compute
    base = 2 * Wp                 # flat index of padded-buffer position (row 2, col 0)
    cin = x_ref.shape[-1]

    acc = None
    for k in range(9):            # 3x3 taps, statically unrolled
        kh, kw = divmod(k, 3)
        off = base + (kh - 1) * Wp + (kw - 1)
        xk = x_ref[off:off + M, :]                     # (M, Cin) static ref slice -> no im2col
        wk = w_ref[k]                                  # (Cin, Cout)
        if cin == 1:
            t = xk * wk                                # VPU path: K=1 matmul would waste the MXU
        else:
            t = jnp.dot(xk.astype(jnp.bfloat16), wk,   # bf16 MXU, f32 accumulation
                        preferred_element_type=jnp.float32)
        acc = t if acc is None else acc + t

    y = jnp.maximum(acc + b_ref[...], 0.0)             # folded BatchNorm bias + ReLU

    # 2x2 max-pool (floor mode) via four exact 0/1 selection matmuls; also zero-fills the
    # padding ring of the next stage's layout for free.
    r = jnp.dot(sel_ref[0], y, preferred_element_type=jnp.float32)
    for i in range(1, 4):
        r = jnp.maximum(r, jnp.dot(sel_ref[i], y, preferred_element_type=jnp.float32))
    out_ref[...] = r


def _conv_trunk_kernel(x_ref, w1_ref, b1_ref, s1_ref, w2_ref, b2_ref, s2_ref,
                       w3_ref, b3_ref, s3_ref, o_ref, a2_ref, a3_ref, *, stage_hw):
    # Three fused stages; a2/a3 are VMEM scratch so the trunk never touches HBM in between.
    _conv_stage(x_ref, w1_ref, b1_ref, s1_ref, a2_ref, hw=stage_hw[0])
    _conv_stage(a2_ref, w2_ref, b2_ref, s2_ref, a3_ref, hw=stage_hw[1])
    _conv_stage(a3_ref, w3_ref, b3_ref, s3_ref, o_ref, hw=stage_hw[2])


def _fc_head_kernel(x_ref, w1_ref, b1_ref, w2_ref, b2_ref, w3_ref, b3_ref, o_ref):
    # fc1 -> ReLU -> (dropout: identity in eval) -> fc2 -> ReLU -> fc3, all in one kernel.
    h = jnp.dot(x_ref[...].astype(jnp.bfloat16), w1_ref[...],
                preferred_element_type=jnp.float32)
    h = jnp.maximum(h + b1_ref[...], 0.0)
    h = jnp.dot(h.astype(jnp.bfloat16), w2_ref[...], preferred_element_type=jnp.float32)
    h = jnp.maximum(h + b2_ref[...], 0.0)
    h = jnp.dot(h.astype(jnp.bfloat16), w3_ref[...], preferred_element_type=jnp.float32)
    o_ref[...] = h + b3_ref[...]


# ----------------------------------------------------------------------------
# Static helpers (run once at parameter-preparation time)
# ----------------------------------------------------------------------------
def make_pool_matrices(H, W, scatter):
    """0/1 matrices selecting, from the extended conv output (H*(W+2) rows), the max-pool
    operands; if `scatter`, the result is laid out directly as the next stage's zero-padded
    flat input ((H2+4)*(W2+2) rows), otherwise densely (H2*W2 rows)."""
    Wp, H2, W2 = W + 2, H // 2, W // 2
    M = H * Wp
    Ln = (H2 + 4) * (W2 + 2) if scatter else H2 * W2
    sel = np.zeros((4, Ln, M), np.float32)
    for i, (dh, dw) in enumerate(((0, 0), (0, 1), (1, 0), (1, 1))):
        for h2 in range(H2):
            for w2 in range(W2):
                q = (h2 + 2) * (W2 + 2) + (w2 + 1) if scatter else h2 * W2 + w2
                m = (2 * h2 + dh) * Wp + (2 * w2 + dw) + 1
                sel[i, q, m] = 1.0
    return jnp.asarray(sel)


def _fold_conv_bn(w, b, gamma, beta, mean, var, *, cin_pad, cout_pad, eps, w_dtype):
    """Fold eval-mode BatchNorm into the conv weights/bias and lane-pad the channels."""
    cout, cin = w.shape[0], w.shape[1]
    scale = gamma / jnp.sqrt(var + eps)                              # (cout,)
    w9 = jnp.transpose(w, (2, 3, 1, 0)).reshape(9, cin, cout) * scale
    bias = (b - mean) * scale + beta
    w9p = jnp.zeros((9, cin_pad, cout_pad), jnp.float32).at[:, :cin, :cout].set(w9)
    bp = jnp.zeros((1, cout_pad), jnp.float32).at[0, :cout].set(bias)
    return w9p.astype(w_dtype), bp


def prepare_params(params, image_hw=(14, 14), num_classes=10, eps=1e-5):
    hw1 = image_hw
    hw2 = (hw1[0] // 2, hw1[1] // 2)
    hw3 = (hw2[0] // 2, hw2[1] // 2)
    hw4 = (hw3[0] // 2, hw3[1] // 2)          # conv3 pooled spatial (pre adaptive pool)
    assert hw4[0] >= 1 and hw4[1] >= 1, "input too small for three 2x2 pools"
    C = 128                                    # lane-dense channel width of the conv trunk

    cw1, cb1 = _fold_conv_bn(*params["conv1"], cin_pad=1, cout_pad=C, eps=eps,
                             w_dtype=jnp.float32)          # VPU path keeps f32 weights
    cw2, cb2 = _fold_conv_bn(*params["conv2"], cin_pad=C, cout_pad=C, eps=eps,
                             w_dtype=jnp.bfloat16)
    cw3, cb3 = _fold_conv_bn(*params["conv3"], cin_pad=C, cout_pad=C, eps=eps,
                             w_dtype=jnp.bfloat16)

    s1 = make_pool_matrices(*hw1, scatter=True)
    s2 = make_pool_matrices(*hw2, scatter=True)
    s3 = make_pool_matrices(*hw3, scatter=False)

    # ---- fold AdaptiveAvgPool2d((4,4)) + flatten (a linear map) into fc1's weight ----
    fw1, fb1 = params["fc1"]                   # (256, 128*16), (256,)
    P3 = hw4[0] * hw4[1]
    pool_map = np.zeros((16, P3), np.float32)  # (adaptive-pool cell, conv3-pooled position)
    for i in range(4):
        h0, h1 = (i * hw4[0]) // 4, -(-((i + 1) * hw4[0]) // 4)
        for j in range(4):
            c0, c1 = (j * hw4[1]) // 4, -(-((j + 1) * hw4[1]) // 4)
            inv_area = 1.0 / ((h1 - h0) * (c1 - c0))
            for hh in range(h0, h1):
                for ww in range(c0, c1):
                    pool_map[i * 4 + j, hh * hw4[1] + ww] += inv_area
    w1_eff = jnp.einsum("ocs,sp->opc", fw1.reshape(256, 128, 16),
                        jnp.asarray(pool_map)).reshape(256, P3 * 128)

    fw2, fb2 = params["fc2"]
    fw3, fb3 = params["fc3"]
    ncp = ((num_classes + 127) // 128) * 128   # lane-dense logits; sliced back in the wrapper
    fc3_w = jnp.zeros((fw3.shape[1], ncp), jnp.float32).at[:, :num_classes].set(fw3.T)
    fc3_b = jnp.zeros((1, ncp), jnp.float32).at[0, :num_classes].set(fb3)

    return dict(
        num_classes=num_classes, ncp=ncp, p3=P3,
        stage_hw=(hw1, hw2, hw3),
        conv=((cw1, cb1, s1), (cw2, cb2, s2), (cw3, cb3, s3)),
        fc=(w1_eff.T.astype(jnp.bfloat16), fb1.reshape(1, -1),
            fw2.T.astype(jnp.bfloat16), fb2.reshape(1, -1),
            fc3_w.astype(jnp.bfloat16), fc3_b),
    )


# ----------------------------------------------------------------------------
# Pallas wrappers
# ----------------------------------------------------------------------------
def _conv_trunk(prep, xflat):
    B, Lf1, cin1 = xflat.shape
    (cw1, cb1, s1), (cw2, cb2, s2), (cw3, cb3, s3) = prep["conv"]
    Lf2, Lf3, P3 = s1.shape[1], s2.shape[1], s3.shape[1]
    C = cw1.shape[-1]

    kernel = functools.partial(_conv_trunk_kernel, stage_hw=prep["stage_hw"])
    out = pl.pallas_call(
        kernel,
        out_shape=jax.ShapeDtypeStruct((B, P3, C), jnp.float32),
        grid=(B,),
        in_specs=[
            pl.BlockSpec((None, Lf1, cin1), lambda b: (b, 0, 0)),
            pl.BlockSpec(cw1.shape, lambda b: (0, 0, 0)),
            pl.BlockSpec(cb1.shape, lambda b: (0, 0)),
            pl.BlockSpec(s1.shape, lambda b: (0, 0, 0)),
            pl.BlockSpec(cw2.shape, lambda b: (0, 0, 0)),
            pl.BlockSpec(cb2.shape, lambda b: (0, 0)),
            pl.BlockSpec(s2.shape, lambda b: (0, 0, 0)),
            pl.BlockSpec(cw3.shape, lambda b: (0, 0, 0)),
            pl.BlockSpec(cb3.shape, lambda b: (0, 0)),
            pl.BlockSpec(s3.shape, lambda b: (0, 0, 0)),
        ],
        out_specs=pl.BlockSpec((None, P3, C), lambda b: (b, 0, 0)),
        scratch_shapes=[pltpu.VMEM((Lf2, C), jnp.float32),
                        pltpu.VMEM((Lf3, C), jnp.float32)],
        compiler_params=pltpu.CompilerParams(dimension_semantics=("parallel",)),
    )(xflat, cw1, cb1, s1, cw2, cb2, s2, cw3, cb3, s3)
    return out.reshape(B, P3 * C)


def _fc_head(prep, x):
    B, K = x.shape
    ncp = prep["ncp"]
    fc1_w, fc1_b, fc2_w, fc2_b, fc3_w, fc3_b = prep["fc"]
    tb = 128 if (B >= 256 and B % 128 == 0) else B       # batch-tile large batches; full block otherwise
    return pl.pallas_call(
        _fc_head_kernel,
        out_shape=jax.ShapeDtypeStruct((B, ncp), jnp.float32),
        grid=(B // tb,),
        in_specs=[
            pl.BlockSpec((tb, K), lambda i: (i, 0)),
            pl.BlockSpec(fc1_w.shape, lambda i: (0, 0)),
            pl.BlockSpec(fc1_b.shape, lambda i: (0, 0)),
            pl.BlockSpec(fc2_w.shape, lambda i: (0, 0)),
            pl.BlockSpec(fc2_b.shape, lambda i: (0, 0)),
            pl.BlockSpec(fc3_w.shape, lambda i: (0, 0)),
            pl.BlockSpec(fc3_b.shape, lambda i: (0, 0)),
        ],
        out_specs=pl.BlockSpec((tb, ncp), lambda i: (i, 0)),
        compiler_params=pltpu.CompilerParams(dimension_semantics=("parallel",)),
    )(x, fc1_w, fc1_b, fc2_w, fc2_b, fc3_w, fc3_b)


# ----------------------------------------------------------------------------
# Parameter init (deterministic, mirrors _initialize_weights)
# ----------------------------------------------------------------------------
def xavier_uniform(key, shape, fan_in, fan_out):
    bound = math.sqrt(6.0 / (fan_in + fan_out))
    return jax.random.uniform(key, shape, jnp.float32, -bound, bound)


def init_params(key, num_classes=10):
    ks = jax.random.split(key, 6)

    def conv_params(k, cout, cin):
        w = xavier_uniform(k, (cout, cin, 3, 3), cin * 9, cout * 9)
        b = jnp.zeros((cout,), jnp.float32)
        gamma = jnp.ones((cout,), jnp.float32)
        beta = jnp.zeros((cout,), jnp.float32)
        mean = jnp.zeros((cout,), jnp.float32)
        var = jnp.ones((cout,), jnp.float32)
        return (w, b, gamma, beta, mean, var)

    def linear_params(k, out_f, in_f):
        w = xavier_uniform(k, (out_f, in_f), in_f, out_f)
        b = jnp.zeros((out_f,), jnp.float32)
        return (w, b)

    return {
        "conv1": conv_params(ks[0], 32, 1),
        "conv2": conv_params(ks[1], 64, 32),
        "conv3": conv_params(ks[2], 128, 64),
        "fc1": linear_params(ks[3], 256, 128 * 4 * 4),
        "fc2": linear_params(ks[4], 128, 256),
        "fc3": linear_params(ks[5], num_classes, 128),
    }


# ----------------------------------------------------------------------------
# Forward pass (CNNClassifier.forward in eval mode) -- two pallas_calls total
# ----------------------------------------------------------------------------
def forward(prep, x_nchw):
    B = x_nchw.shape[0]
    H, W = prep["stage_hw"][0]
    assert x_nchw.shape[2:] == (H, W)
    x = jnp.transpose(x_nchw, (0, 2, 3, 1))                   # NCHW -> NHWC
    x = jnp.pad(x, ((0, 0), (2, 2), (1, 1), (0, 0)))          # halo for the flat-conv layout
    xflat = x.reshape(B, (H + 4) * (W + 2), x.shape[-1])

    feat = _conv_trunk(prep, xflat)                           # (B, P3*128)
    # adaptive_pool + flatten are folded into fc1; dropout1/2 are identity in eval mode
    logits = _fc_head(prep, feat)                             # (B, ncp)
    return logits[:, :prep["num_classes"]]


if __name__ == "__main__":
    key = jax.random.PRNGKey(0)
    k_params, k_data = jax.random.split(key)

    params = init_params(k_params, num_classes=10)
    prep = prepare_params(params, image_hw=(14, 14), num_classes=10)

    # 14x14 single-channel input (per the module's "+14_14" naming), batch=2, NCHW.
    x = jax.random.normal(k_data, (2, 1, 14, 14), dtype=jnp.float32)

    logits = forward(prep, x)
    jax.block_until_ready(logits)
    assert logits.shape == (2, 10), logits.shape
    print("KERNEL_OK")
</pallas_src>

<mosaic_0001>
module attributes {stable_mosaic.version = 11 : i64} {
  func.func @_conv_trunk_kernel(%arg0: i32, %arg1: memref<1x288x1xf32, #tpu.memory_space<vmem>>, %arg2: memref<9x1x128xf32, #tpu.memory_space<vmem>>, %arg3: memref<1x128xf32, #tpu.memory_space<vmem>>, %arg4: memref<4x99x224xf32, #tpu.memory_space<vmem>>, %arg5: memref<9x128x128xbf16, #tpu.memory_space<vmem>>, %arg6: memref<1x128xf32, #tpu.memory_space<vmem>>, %arg7: memref<4x35x63xf32, #tpu.memory_space<vmem>>, %arg8: memref<9x128x128xbf16, #tpu.memory_space<vmem>>, %arg9: memref<1x128xf32, #tpu.memory_space<vmem>>, %arg10: memref<4x1x15xf32, #tpu.memory_space<vmem>>, %arg11: memref<1x1x128xf32, #tpu.memory_space<vmem>>, %arg12: memref<99x128xf32, #tpu.memory_space<vmem>>, %arg13: memref<35x128xf32, #tpu.memory_space<vmem>>) attributes {dimension_semantics = [#tpu.dimension_semantics<parallel>], iteration_bounds = array<i64: 2>, scalar_prefetch = 0 : i64, scratch_operands = 2 : i64, tpu.core_type = #tpu.core_type<tc>, window_params = [{transform_indices = @transform_0, window_bounds = array<i64: 1, 288, 1>}, {pipeline_mode = #tpu.pipeline_mode<synchronous>, transform_indices = @transform_1, window_bounds = array<i64: 9, 1, 128>}, {pipeline_mode = #tpu.pipeline_mode<synchronous>, transform_indices = @transform_2, window_bounds = array<i64: 1, 128>}, {pipeline_mode = #tpu.pipeline_mode<synchronous>, transform_indices = @transform_3, window_bounds = array<i64: 4, 99, 224>}, {pipeline_mode = #tpu.pipeline_mode<synchronous>, transform_indices = @transform_4, window_bounds = array<i64: 9, 128, 128>}, {pipeline_mode = #tpu.pipeline_mode<synchronous>, transform_indices = @transform_5, window_bounds = array<i64: 1, 128>}, {pipeline_mode = #tpu.pipeline_mode<synchronous>, transform_indices = @transform_6, window_bounds = array<i64: 4, 35, 63>}, {pipeline_mode = #tpu.pipeline_mode<synchronous>, transform_indices = @transform_7, window_bounds = array<i64: 9, 128, 128>}, {pipeline_mode = #tpu.pipeline_mode<synchronous>, transform_indices = @transform_8, window_bounds = array<i64: 1, 128>}, {pipeline_mode = #tpu.pipeline_mode<synchronous>, transform_indices = @transform_9, window_bounds = array<i64: 4, 1, 15>}, {transform_indices = @transform_10, window_bounds = array<i64: 1, 1, 128>}]} {
    %c0 = arith.constant 0 : index
    %c15 = arith.constant 15 : index
    %c0_0 = arith.constant 0 : index
    %0 = vector.load %arg1[%c0, %c15, %c0_0] : memref<1x288x1xf32, #tpu.memory_space<vmem>>, vector<1x224x1xf32>
    %1 = vector.shape_cast %0 : vector<1x224x1xf32> to vector<224x1xf32>
    %c0_1 = arith.constant 0 : index
    %c0_2 = arith.constant 0 : index
    %c0_3 = arith.constant 0 : index
    %2 = vector.load %arg2[%c0_1, %c0_2, %c0_3] : memref<9x1x128xf32, #tpu.memory_space<vmem>>, vector<1x1x128xf32>
    %3 = vector.shape_cast %2 : vector<1x1x128xf32> to vector<1x128xf32>
    %4 = vector.broadcast %1 : vector<224x1xf32> to vector<224x128xf32>
    %5 = vector.broadcast %3 : vector<1x128xf32> to vector<224x128xf32>
    %6 = arith.mulf %4, %5 : vector<224x128xf32>
    %c0_4 = arith.constant 0 : index
    %c16 = arith.constant 16 : index
    %c0_5 = arith.constant 0 : index
    %7 = vector.load %arg1[%c0_4, %c16, %c0_5] : memref<1x288x1xf32, #tpu.memory_space<vmem>>, vector<1x224x1xf32>
    %8 = vector.shape_cast %7 : vector<1x224x1xf32> to vector<224x1xf32>
    %c1 = arith.constant 1 : index
    %c0_6 = arith.constant 0 : index
    %c0_7 = arith.constant 0 : index
    %9 = vector.load %arg2[%c1, %c0_6, %c0_7] : memref<9x1x128xf32, #tpu.memory_space<vmem>>, vector<1x1x128xf32>
    %10 = vector.shape_cast %9 : vector<1x1x128xf32> to vector<1x128xf32>
    %11 = vector.broadcast %8 : vector<224x1xf32> to vector<224x128xf32>
    %12 = vector.broadcast %10 : vector<1x128xf32> to vector<224x128xf32>
    %13 = arith.mulf %11, %12 : vector<224x128xf32>
    %14 = arith.addf %6, %13 : vector<224x128xf32>
    %c0_8 = arith.constant 0 : index
    %c17 = arith.constant 17 : index
    %c0_9 = arith.constant 0 : index
    %15 = vector.load %arg1[%c0_8, %c17, %c0_9] : memref<1x288x1xf32, #tpu.memory_space<vmem>>, vector<1x224x1xf32>
    %16 = vector.shape_cast %15 : vector<1x224x1xf32> to vector<224x1xf32>
    %c2 = arith.constant 2 : index
    %c0_10 = arith.constant 0 : index
    %c0_11 = arith.constant 0 : index
    %17 = vector.load %arg2[%c2, %c0_10, %c0_11] : memref<9x1x128xf32, #tpu.memory_space<vmem>>, vector<1x1x128xf32>
    %18 = vector.shape_cast %17 : vector<1x1x128xf32> to vector<1x128xf32>
    %19 = vector.broadcast %16 : vector<224x1xf32> to vector<224x128xf32>
    %20 = vector.broadcast %18 : vector<1x128xf32> to vector<224x128xf32>
    %21 = arith.mulf %19, %20 : vector<224x128xf32>
    %22 = arith.addf %14, %21 : vector<224x128xf32>
    %c0_12 = arith.constant 0 : index
    %c31 = arith.constant 31 : index
    %c0_13 = arith.constant 0 : index
    %23 = vector.load %arg1[%c0_12, %c31, %c0_13] : memref<1x288x1xf32, #tpu.memory_space<vmem>>, vector<1x224x1xf32>
    %24 = vector.shape_cast %23 : vector<1x224x1xf32> to vector<224x1xf32>
    %c3 = arith.constant 3 : index
    %c0_14 = arith.constant 0 : index
    %c0_15 = arith.constant 0 : index
    %25 = vector.load %arg2[%c3, %c0_14, %c0_15] : memref<9x1x128xf32, #tpu.memory_space<vmem>>, vector<1x1x128xf32>
    %26 = vector.shape_cast %25 : vector<1x1x128xf32> to vector<1x128xf32>
    %27 = vector.broadcast %24 : vector<224x1xf32> to vector<224x128xf32>
    %28 = vector.broadcast %26 : vector<1x128xf32> to vector<224x128xf32>
    %29 = arith.mulf %27, %28 : vector<224x128xf32>
    %30 = arith.addf %22, %29 : vector<224x128xf32>
    %c0_16 = arith.constant 0 : index
    %c32 = arith.constant 32 : index
    %c0_17 = arith.constant 0 : index
    %31 = vector.load %arg1[%c0_16, %c32, %c0_17] : memref<1x288x1xf32, #tpu.memory_space<vmem>>, vector<1x224x1xf32>
    %32 = vector.shape_cast %31 : vector<1x224x1xf32> to vector<224x1xf32>
    %c4 = arith.constant 4 : index
    %c0_18 = arith.constant 0 : index
    %c0_19 = arith.constant 0 : index
    %33 = vector.load %arg2[%c4, %c0_18, %c0_19] : memref<9x1x128xf32, #tpu.memory_space<vmem>>, vector<1x1x128xf32>
    %34 = vector.shape_cast %33 : vector<1x1x128xf32> to vector<1x128xf32>
    %35 = vector.broadcast %32 : vector<224x1xf32> to vector<224x128xf32>
    %36 = vector.broadcast %34 : vector<1x128xf32> to vector<224x128xf32>
    %37 = arith.mulf %35, %36 : vector<224x128xf32>
    %38 = arith.addf %30, %37 : vector<224x128xf32>
    %c0_20 = arith.constant 0 : index
    %c33 = arith.constant 33 : index
    %c0_21 = arith.constant 0 : index
    %39 = vector.load %arg1[%c0_20, %c33, %c0_21] : memref<1x288x1xf32, #tpu.memory_space<vmem>>, vector<1x224x1xf32>
    %40 = vector.shape_cast %39 : vector<1x224x1xf32> to vector<224x1xf32>
    %c5 = arith.constant 5 : index
    %c0_22 = arith.constant 0 : index
    %c0_23 = arith.constant 0 : index
    %41 = vector.load %arg2[%c5, %c0_22, %c0_23] : memref<9x1x128xf32, #tpu.memory_space<vmem>>, vector<1x1x128xf32>
    %42 = vector.shape_cast %41 : vector<1x1x128xf32> to vector<1x128xf32>
    %43 = vector.broadcast %40 : vector<224x1xf32> to vector<224x128xf32>
    %44 = vector.broadcast %42 : vector<1x128xf32> to vector<224x128xf32>
    %45 = arith.mulf %43, %44 : vector<224x128xf32>
    %46 = arith.addf %38, %45 : vector<224x128xf32>
    %c0_24 = arith.constant 0 : index
    %c47 = arith.constant 47 : index
    %c0_25 = arith.constant 0 : index
    %47 = vector.load %arg1[%c0_24, %c47, %c0_25] : memref<1x288x1xf32, #tpu.memory_space<vmem>>, vector<1x224x1xf32>
    %48 = vector.shape_cast %47 : vector<1x224x1xf32> to vector<224x1xf32>
    %c6 = arith.constant 6 : index
    %c0_26 = arith.constant 0 : index
    %c0_27 = arith.constant 0 : index
    %49 = vector.load %arg2[%c6, %c0_26, %c0_27] : memref<9x1x128xf32, #tpu.memory_space<vmem>>, vector<1x1x128xf32>
    %50 = vector.shape_cast %49 : vector<1x1x128xf32> to vector<1x128xf32>
    %51 = vector.broadcast %48 : vector<224x1xf32> to vector<224x128xf32>
    %52 = vector.broadcast %50 : vector<1x128xf32> to vector<224x128xf32>
    %53 = arith.mulf %51, %52 : vector<224x128xf32>
    %54 = arith.addf %46, %53 : vector<224x128xf32>
    %c0_28 = arith.constant 0 : index
    %c48 = arith.constant 48 : index
    %c0_29 = arith.constant 0 : index
    %55 = vector.load %arg1[%c0_28, %c48, %c0_29] : memref<1x288x1xf32, #tpu.memory_space<vmem>>, vector<1x224x1xf32>
    %56 = vector.shape_cast %55 : vector<1x224x1xf32> to vector<224x1xf32>
    %c7 = arith.constant 7 : index
    %c0_30 = arith.constant 0 : index
    %c0_31 = arith.constant 0 : index
    %57 = vector.load %arg2[%c7, %c0_30, %c0_31] : memref<9x1x128xf32, #tpu.memory_space<vmem>>, vector<1x1x128xf32>
    %58 = vector.shape_cast %57 : vector<1x1x128xf32> to vector<1x128xf32>
    %59 = vector.broadcast %56 : vector<224x1xf32> to vector<224x128xf32>
    %60 = vector.broadcast %58 : vector<1x128xf32> to vector<224x128xf32>
    %61 = arith.mulf %59, %60 : vector<224x128xf32>
    %62 = arith.addf %54, %61 : vector<224x128xf32>
    %c0_32 = arith.constant 0 : index
    %c49 = arith.constant 49 : index
    %c0_33 = arith.constant 0 : index
    %63 = vector.load %arg1[%c0_32, %c49, %c0_33] : memref<1x288x1xf32, #tpu.memory_space<vmem>>, vector<1x224x1xf32>
    %64 = vector.shape_cast %63 : vector<1x224x1xf32> to vector<224x1xf32>
    %c8 = arith.constant 8 : index
    %c0_34 = arith.constant 0 : index
    %c0_35 = arith.constant 0 : index
    %65 = vector.load %arg2[%c8, %c0_34, %c0_35] : memref<9x1x128xf32, #tpu.memory_space<vmem>>, vector<1x1x128xf32>
    %66 = vector.shape_cast %65 : vector<1x1x128xf32> to vector<1x128xf32>
    %67 = vector.broadcast %64 : vector<224x1xf32> to vector<224x128xf32>
    %68 = vector.broadcast %66 : vector<1x128xf32> to vector<224x128xf32>
    %69 = arith.mulf %67, %68 : vector<224x128xf32>
    %70 = arith.addf %62, %69 : vector<224x128xf32>
    %c0_36 = arith.constant 0 : index
    %c0_37 = arith.constant 0 : index
    %71 = vector.load %arg3[%c0_36, %c0_37] : memref<1x128xf32, #tpu.memory_space<vmem>>, vector<1x128xf32>
    %72 = vector.broadcast %71 : vector<1x128xf32> to vector<224x128xf32>
    %73 = arith.addf %70, %72 : vector<224x128xf32>
    %cst = arith.constant 0.000000e+00 : f32
    %74 = vector.broadcast %cst : f32 to vector<224x128xf32>
    %75 = arith.maximumf %73, %74 : vector<224x128xf32>
    %c0_38 = arith.constant 0 : index
    %c0_39 = arith.constant 0 : index
    %c0_40 = arith.constant 0 : index
    %76 = vector.load %arg4[%c0_38, %c0_39, %c0_40] : memref<4x99x224xf32, #tpu.memory_space<vmem>>, vector<1x99x224xf32>
    %77 = vector.shape_cast %76 : vector<1x99x224xf32> to vector<99x224xf32>
    %cst_41 = arith.constant dense<0.000000e+00> : vector<99x128xf32>
    %78 = tpu.matmul %77, %75, %cst_41 {dimension_numbers = #tpu.dot_dimension_numbers<[1], [0], [0], [1], [0, 0, 1, 1], [], []>} : vector<99x224xf32>, vector<224x128xf32>, vector<99x128xf32> -> vector<99x128xf32>
    %c1_42 = arith.constant 1 : index
    %c0_43 = arith.constant 0 : index
    %c0_44 = arith.constant 0 : index
    %79 = vector.load %arg4[%c1_42, %c0_43, %c0_44] : memref<4x99x224xf32, #tpu.memory_space<vmem>>, vector<1x99x224xf32>
    %80 = vector.shape_cast %79 : vector<1x99x224xf32> to vector<99x224xf32>
    %cst_45 = arith.constant dense<0.000000e+00> : vector<99x128xf32>
    %81 = tpu.matmul %80, %75, %cst_45 {dimension_numbers = #tpu.dot_dimension_numbers<[1], [0], [0], [1], [0, 0, 1, 1], [], []>} : vector<99x224xf32>, vector<224x128xf32>, vector<99x128xf32> -> vector<99x128xf32>
    %82 = arith.maximumf %78, %81 : vector<99x128xf32>
    %c2_46 = arith.constant 2 : index
    %c0_47 = arith.constant 0 : index
    %c0_48 = arith.constant 0 : index
    %83 = vector.load %arg4[%c2_46, %c0_47, %c0_48] : memref<4x99x224xf32, #tpu.memory_space<vmem>>, vector<1x99x224xf32>
    %84 = vector.shape_cast %83 : vector<1x99x224xf32> to vector<99x224xf32>
    %cst_49 = arith.constant dense<0.000000e+00> : vector<99x128xf32>
    %85 = tpu.matmul %84, %75, %cst_49 {dimension_numbers = #tpu.dot_dimension_numbers<[1], [0], [0], [1], [0, 0, 1, 1], [], []>} : vector<99x224xf32>, vector<224x128xf32>, vector<99x128xf32> -> vector<99x128xf32>
    %86 = arith.maximumf %82, %85 : vector<99x128xf32>
    %c3_50 = arith.constant 3 : index
    %c0_51 = arith.constant 0 : index
    %c0_52 = arith.constant 0 : index
    %87 = vector.load %arg4[%c3_50, %c0_51, %c0_52] : memref<4x99x224xf32, #tpu.memory_space<vmem>>, vector<1x99x224xf32>
    %88 = vector.shape_cast %87 : vector<1x99x224xf32> to vector<99x224xf32>
    %cst_53 = arith.constant dense<0.000000e+00> : vector<99x128xf32>
    %89 = tpu.matmul %88, %75, %cst_53 {dimension_numbers = #tpu.dot_dimension_numbers<[1], [0], [0], [1], [0, 0, 1, 1], [], []>} : vector<99x224xf32>, vector<224x128xf32>, vector<99x128xf32> -> vector<99x128xf32>
    %90 = arith.maximumf %86, %89 : vector<99x128xf32>
    %c0_54 = arith.constant 0 : index
    %c0_55 = arith.constant 0 : index
    %91 = vector.load %arg12[%c0_54, %c0_55] : memref<99x128xf32, #tpu.memory_space<vmem>>, vector<99x128xf32>
    tpu.vector_store %arg12[%c0_54, %c0_55], %90 {strides = array<i32>} : memref<99x128xf32, #tpu.memory_space<vmem>>, vector<99x128xf32>,
    %c8_56 = arith.constant 8 : index
    %c0_57 = arith.constant 0 : index
    %92 = vector.load %arg12[%c8_56, %c0_57] : memref<99x128xf32, #tpu.memory_space<vmem>>, vector<63x128xf32>
    %c0_58 = arith.constant 0 : index
    %c0_59 = arith.constant 0 : index
    %c0_60 = arith.constant 0 : index
    %93 = vector.load %arg5[%c0_58, %c0_59, %c0_60] : memref<9x128x128xbf16, #tpu.memory_space<vmem>>, vector<1x128x128xbf16>
    %94 = vector.shape_cast %93 : vector<1x128x128xbf16> to vector<128x128xbf16>
    %95 = arith.truncf %92 : vector<63x128xf32> to vector<63x128xbf16>
    %cst_61 = arith.constant dense<0.000000e+00> : vector<63x128xf32>
    %96 = tpu.matmul %95, %94, %cst_61 {dimension_numbers = #tpu.dot_dimension_numbers<[1], [0], [0], [1], [0, 0, 1, 1], [], []>} : vector<63x128xbf16>, vector<128x128xbf16>, vector<63x128xf32> -> vector<63x128xf32>
    %c9 = arith.constant 9 : index
    %c0_62 = arith.constant 0 : index
    %97 = vector.load %arg12[%c9, %c0_62] : memref<99x128xf32, #tpu.memory_space<vmem>>, vector<63x128xf32>
    %c1_63 = arith.constant 1 : index
    %c0_64 = arith.constant 0 : index
    %c0_65 = arith.constant 0 : index
    %98 = vector.load %arg5[%c1_63, %c0_64, %c0_65] : memref<9x128x128xbf16, #tpu.memory_space<vmem>>, vector<1x128x128xbf16>
    %99 = vector.shape_cast %98 : vector<1x128x128xbf16> to vector<128x128xbf16>
    %100 = arith.truncf %97 : vector<63x128xf32> to vector<63x128xbf16>
    %cst_66 = arith.constant dense<0.000000e+00> : vector<63x128xf32>
    %101 = tpu.matmul %100, %99, %cst_66 {dimension_numbers = #tpu.dot_dimension_numbers<[1], [0], [0], [1], [0, 0, 1, 1], [], []>} : vector<63x128xbf16>, vector<128x128xbf16>, vector<63x128xf32> -> vector<63x128xf32>
    %102 = arith.addf %96, %101 : vector<63x128xf32>
    %c10 = arith.constant 10 : index
    %c0_67 = arith.constant 0 : index
    %103 = vector.load %arg12[%c10, %c0_67] : memref<99x128xf32, #tpu.memory_space<vmem>>, vector<63x128xf32>
    %c2_68 = arith.constant 2 : index
    %c0_69 = arith.constant 0 : index
    %c0_70 = arith.constant 0 : index
    %104 = vector.load %arg5[%c2_68, %c0_69, %c0_70] : memref<9x128x128xbf16, #tpu.memory_space<vmem>>, vector<1x128x128xbf16>
    %105 = vector.shape_cast %104 : vector<1x128x128xbf16> to vector<128x128xbf16>
    %106 = arith.truncf %103 : vector<63x128xf32> to vector<63x128xbf16>
    %cst_71 = arith.constant dense<0.000000e+00> : vector<63x128xf32>
    %107 = tpu.matmul %106, %105, %cst_71 {dimension_numbers = #tpu.dot_dimension_numbers<[1], [0], [0], [1], [0, 0, 1, 1], [], []>} : vector<63x128xbf16>, vector<128x128xbf16>, vector<63x128xf32> -> vector<63x128xf32>
    %108 = arith.addf %102, %107 : vector<63x128xf32>
    %c17_72 = arith.constant 17 : index
    %c0_73 = arith.constant 0 : index
    %109 = vector.load %arg12[%c17_72, %c0_73] : memref<99x128xf32, #tpu.memory_space<vmem>>, vector<63x128xf32>
    %c3_74 = arith.constant 3 : index
    %c0_75 = arith.constant 0 : index
    %c0_76 = arith.constant 0 : index
    %110 = vector.load %arg5[%c3_74, %c0_75, %c0_76] : memref<9x128x128xbf16, #tpu.memory_space<vmem>>, vector<1x128x128xbf16>
    %111 = vector.shape_cast %110 : vector<1x128x128xbf16> to vector<128x128xbf16>
    %112 = arith.truncf %109 : vector<63x128xf32> to vector<63x128xbf16>
    %cst_77 = arith.constant dense<0.000000e+00> : vector<63x128xf32>
    %113 = tpu.matmul %112, %111, %cst_77 {dimension_numbers = #tpu.dot_dimension_numbers<[1], [0], [0], [1], [0, 0, 1, 1], [], []>} : vector<63x128xbf16>, vector<128x128xbf16>, vector<63x128xf32> -> vector<63x128xf32>
    %114 = arith.addf %108, %113 : vector<63x128xf32>
    %c18 = arith.constant 18 : index
    %c0_78 = arith.constant 0 : index
    %115 = vector.load %arg12[%c18, %c0_78] : memref<99x128xf32, #tpu.memory_space<vmem>>, vector<63x128xf32>
    %c4_79 = arith.constant 4 : index
    %c0_80 = arith.constant 0 : index
    %c0_81 = arith.constant 0 : index
    %116 = vector.load %arg5[%c4_79, %c0_80, %c0_81] : memref<9x128x128xbf16, #tpu.memory_space<vmem>>, vector<1x128x128xbf16>
    %117 = vector.shape_cast %116 : vector<1x128x128xbf16> to vector<128x128xbf16>
    %118 = arith.truncf %115 : vector<63x128xf32> to vector<63x128xbf16>
    %cst_82 = arith.constant dense<0.000000e+00> : vector<63x128xf32>
    %119 = tpu.matmul %118, %117, %cst_82 {dimension_numbers = #tpu.dot_dimension_numbers<[1], [0], [0], [1], [0, 0, 1, 1], [], []>} : vector<63x128xbf16>, vector<128x128xbf16>, vector<63x128xf32> -> vector<63x128xf32>
    %120 = arith.addf %114, %119 : vector<63x128xf32>
    %c19 = arith.constant 19 : index
    %c0_83 = arith.constant 0 : index
    %121 = vector.load %arg12[%c19, %c0_83] : memref<99x128xf32, #tpu.memory_space<vmem>>, vector<63x128xf32>
    %c5_84 = arith.constant 5 : index
    %c0_85 = arith.constant 0 : index
    %c0_86 = arith.constant 0 : index
    %122 = vector.load %arg5[%c5_84, %c0_85, %c0_86] : memref<9x128x128xbf16, #tpu.memory_space<vmem>>, vector<1x128x128xbf16>
    %123 = vector.shape_cast %122 : vector<1x128x128xbf16> to vector<128x128xbf16>
    %124 = arith.truncf %121 : vector<63x128xf32> to vector<63x128xbf16>
    %cst_87 = arith.constant dense<0.000000e+00> : vector<63x128xf32>
    %125 = tpu.matmul %124, %123, %cst_87 {dimension_numbers = #tpu.dot_dimension_numbers<[1], [0], [0], [1], [0, 0, 1, 1], [], []>} : vector<63x128xbf16>, vector<128x128xbf16>, vector<63x128xf32> -> vector<63x128xf32>
    %126 = arith.addf %120, %125 : vector<63x128xf32>
    %c26 = arith.constant 26 : index
    %c0_88 = arith.constant 0 : index
    %127 = vector.load %arg12[%c26, %c0_88] : memref<99x128xf32, #tpu.memory_space<vmem>>, vector<63x128xf32>
    %c6_89 = arith.constant 6 : index
    %c0_90 = arith.constant 0 : index
    %c0_91 = arith.constant 0 : index
    %128 = vector.load %arg5[%c6_89, %c0_90, %c0_91] : memref<9x128x128xbf16, #tpu.memory_space<vmem>>, vector<1x128x128xbf16>
    %129 = vector.shape_cast %128 : vector<1x128x128xbf16> to vector<128x128xbf16>
    %130 = arith.truncf %127 : vector<63x128xf32> to vector<63x128xbf16>
    %cst_92 = arith.constant dense<0.000000e+00> : vector<63x128xf32>
    %131 = tpu.matmul %130, %129, %cst_92 {dimension_numbers = #tpu.dot_dimension_numbers<[1], [0], [0], [1], [0, 0, 1, 1], [], []>} : vector<63x128xbf16>, vector<128x128xbf16>, vector<63x128xf32> -> vector<63x128xf32>
    %132 = arith.addf %126, %131 : vector<63x128xf32>
    %c27 = arith.constant 27 : index
    %c0_93 = arith.constant 0 : index
    %133 = vector.load %arg12[%c27, %c0_93] : memref<99x128xf32, #tpu.memory_space<vmem>>, vector<63x128xf32>
    %c7_94 = arith.constant 7 : index
    %c0_95 = arith.constant 0 : index
    %c0_96 = arith.constant 0 : index
    %134 = vector.load %arg5[%c7_94, %c0_95, %c0_96] : memref<9x128x128xbf16, #tpu.memory_space<vmem>>, vector<1x128x128xbf16>
    %135 = vector.shape_cast %134 : vector<1x128x128xbf16> to vector<128x128xbf16>
    %136 = arith.truncf %133 : vector<63x128xf32> to vector<63x128xbf16>
    %cst_97 = arith.constant dense<0.000000e+00> : vector<63x128xf32>
    %137 = tpu.matmul %136, %135, %cst_97 {dimension_numbers = #tpu.dot_dimension_numbers<[1], [0], [0], [1], [0, 0, 1, 1], [], []>} : vector<63x128xbf16>, vector<128x128xbf16>, vector<63x128xf32> -> vector<63x128xf32>
    %138 = arith.addf %132, %137 : vector<63x128xf32>
    %c28 = arith.constant 28 : index
    %c0_98 = arith.constant 0 : index
    %139 = vector.load %arg12[%c28, %c0_98] : memref<99x128xf32, #tpu.memory_space<vmem>>, vector<63x128xf32>
    %c8_99 = arith.constant 8 : index
    %c0_100 = arith.constant 0 : index
    %c0_101 = arith.constant 0 : index
    %140 = vector.load %arg5[%c8_99, %c0_100, %c0_101] : memref<9x128x128xbf16, #tpu.memory_space<vmem>>, vector<1x128x128xbf16>
    %141 = vector.shape_cast %140 : vector<1x128x128xbf16> to vector<128x128xbf16>
    %142 = arith.truncf %139 : vector<63x128xf32> to vector<63x128xbf16>
    %cst_102 = arith.constant dense<0.000000e+00> : vector<63x128xf32>
    %143 = tpu.matmul %142, %141, %cst_102 {dimension_numbers = #tpu.dot_dimension_numbers<[1], [0], [0], [1], [0, 0, 1, 1], [], []>} : vector<63x128xbf16>, vector<128x128xbf16>, vector<63x128xf32> -> vector<63x128xf32>
    %144 = arith.addf %138, %143 : vector<63x128xf32>
    %c0_103 = arith.constant 0 : index
    %c0_104 = arith.constant 0 : index
    %145 = vector.load %arg6[%c0_103, %c0_104] : memref<1x128xf32, #tpu.memory_space<vmem>>, vector<1x128xf32>
    %146 = vector.broadcast %145 : vector<1x128xf32> to vector<63x128xf32>
    %147 = arith.addf %144, %146 : vector<63x128xf32>
    %cst_105 = arith.constant 0.000000e+00 : f32
    %148 = vector.broadcast %cst_105 : f32 to vector<63x128xf32>
    %149 = arith.maximumf %147, %148 : vector<63x128xf32>
    %c0_106 = arith.constant 0 : index
    %c0_107 = arith.constant 0 : index
    %c0_108 = arith.constant 0 : index
    %150 = vector.load %arg7[%c0_106, %c0_107, %c0_108] : memref<4x35x63xf32, #tpu.memory_space<vmem>>, vector<1x35x63xf32>
    %151 = vector.shape_cast %150 : vector<1x35x63xf32> to vector<35x63xf32>
    %cst_109 = arith.constant dense<0.000000e+00> : vector<35x128xf32>
    %152 = tpu.matmul %151, %149, %cst_109 {dimension_numbers = #tpu.dot_dimension_numbers<[1], [0], [0], [1], [0, 0, 1, 1], [], []>} : vector<35x63xf32>, vector<63x128xf32>, vector<35x128xf32> -> vector<35x128xf32>
    %c1_110 = arith.constant 1 : index
    %c0_111 = arith.constant 0 : index
    %c0_112 = arith.constant 0 : index
    %153 = vector.load %arg7[%c1_110, %c0_111, %c0_112] : memref<4x35x63xf32, #tpu.memory_space<vmem>>, vector<1x35x63xf32>
    %154 = vector.shape_cast %153 : vector<1x35x63xf32> to vector<35x63xf32>
    %cst_113 = arith.constant dense<0.000000e+00> : vector<35x128xf32>
    %155 = tpu.matmul %154, %149, %cst_113 {dimension_numbers = #tpu.dot_dimension_numbers<[1], [0], [0], [1], [0, 0, 1, 1], [], []>} : vector<35x63xf32>, vector<63x128xf32>, vector<35x128xf32> -> vector<35x128xf32>
    %156 = arith.maximumf %152, %155 : vector<35x128xf32>
    %c2_114 = arith.constant 2 : index
    %c0_115 = arith.constant 0 : index
    %c0_116 = arith.constant 0 : index
    %157 = vector.load %arg7[%c2_114, %c0_115, %c0_116] : memref<4x35x63xf32, #tpu.memory_space<vmem>>, vector<1x35x63xf32>
    %158 = vector.shape_cast %157 : vector<1x35x63xf32> to vector<35x63xf32>
    %cst_117 = arith.constant dense<0.000000e+00> : vector<35x128xf32>
    %159 = tpu.matmul %158, %149, %cst_117 {dimension_numbers = #tpu.dot_dimension_numbers<[1], [0], [0], [1], [0, 0, 1, 1], [], []>} : vector<35x63xf32>, vector<63x128xf32>, vector<35x128xf32> -> vector<35x128xf32>
    %160 = arith.maximumf %156, %159 : vector<35x128xf32>
    %c3_118 = arith.constant 3 : index
    %c0_119 = arith.constant 0 : index
    %c0_120 = arith.constant 0 : index
    %161 = vector.load %arg7[%c3_118, %c0_119, %c0_120] : memref<4x35x63xf32, #tpu.memory_space<vmem>>, vector<1x35x63xf32>
    %162 = vector.shape_cast %161 : vector<1x35x63xf32> to vector<35x63xf32>
    %cst_121 = arith.constant dense<0.000000e+00> : vector<35x128xf32>
    %163 = tpu.matmul %162, %149, %cst_121 {dimension_numbers = #tpu.dot_dimension_numbers<[1], [0], [0], [1], [0, 0, 1, 1], [], []>} : vector<35x63xf32>, vector<63x128xf32>, vector<35x128xf32> -> vector<35x128xf32>
    %164 = arith.maximumf %160, %163 : vector<35x128xf32>
    %c0_122 = arith.constant 0 : index
    %c0_123 = arith.constant 0 : index
    %165 = vector.load %arg13[%c0_122, %c0_123] : memref<35x128xf32, #tpu.memory_space<vmem>>, vector<35x128xf32>
    tpu.vector_store %arg13[%c0_122, %c0_123], %164 {strides = array<i32>} : memref<35x128xf32, #tpu.memory_space<vmem>>, vector<35x128xf32>,
    %c4_124 = arith.constant 4 : index
    %c0_125 = arith.constant 0 : index
    %166 = vector.load %arg13[%c4_124, %c0_125] : memref<35x128xf32, #tpu.memory_space<vmem>>, vector<15x128xf32>
    %c0_126 = arith.constant 0 : index
    %c0_127 = arith.constant 0 : index
    %c0_128 = arith.constant 0 : index
    %167 = vector.load %arg8[%c0_126, %c0_127, %c0_128] : memref<9x128x128xbf16, #tpu.memory_space<vmem>>, vector<1x128x128xbf16>
    %168 = vector.shape_cast %167 : vector<1x128x128xbf16> to vector<128x128xbf16>
    %169 = arith.truncf %166 : vector<15x128xf32> to vector<15x128xbf16>
    %cst_129 = arith.constant dense<0.000000e+00> : vector<15x128xf32>
    %170 = tpu.matmul %169, %168, %cst_129 {dimension_numbers = #tpu.dot_dimension_numbers<[1], [0], [0], [1], [0, 0, 1, 1], [], []>} : vector<15x128xbf16>, vector<128x128xbf16>, vector<15x128xf32> -> vector<15x128xf32>
    %c5_130 = arith.constant 5 : index
    %c0_131 = arith.constant 0 : index
    %171 = vector.load %arg13[%c5_130, %c0_131] : memref<35x128xf32, #tpu.memory_space<vmem>>, vector<15x128xf32>
    %c1_132 = arith.constant 1 : index
    %c0_133 = arith.constant 0 : index
    %c0_134 = arith.constant 0 : index
    %172 = vector.load %arg8[%c1_132, %c0_133, %c0_134] : memref<9x128x128xbf16, #tpu.memory_space<vmem>>, vector<1x128x128xbf16>
    %173 = vector.shape_cast %172 : vector<1x128x128xbf16> to vector<128x128xbf16>
    %174 = arith.truncf %171 : vector<15x128xf32> to vector<15x128xbf16>
    %cst_135 = arith.constant dense<0.000000e+00> : vector<15x128xf32>
    %175 = tpu.matmul %174, %173, %cst_135 {dimension_numbers = #tpu.dot_dimension_numbers<[1], [0], [0], [1], [0, 0, 1, 1], [], []>} : vector<15x128xbf16>, vector<128x128xbf16>, vector<15x128xf32> -> vector<15x128xf32>
    %176 = arith.addf %170, %175 : vector<15x128xf32>
    %c6_136 = arith.constant 6 : index
    %c0_137 = arith.constant 0 : index
    %177 = vector.load %arg13[%c6_136, %c0_137] : memref<35x128xf32, #tpu.memory_space<vmem>>, vector<15x128xf32>
    %c2_138 = arith.constant 2 : index
    %c0_139 = arith.constant 0 : index
    %c0_140 = arith.constant 0 : index
    %178 = vector.load %arg8[%c2_138, %c0_139, %c0_140] : memref<9x128x128xbf16, #tpu.memory_space<vmem>>, vector<1x128x128xbf16>
    %179 = vector.shape_cast %178 : vector<1x128x128xbf16> to vector<128x128xbf16>
    %180 = arith.truncf %177 : vector<15x128xf32> to vector<15x128xbf16>
    %cst_141 = arith.constant dense<0.000000e+00> : vector<15x128xf32>
    %181 = tpu.matmul %180, %179, %cst_141 {dimension_numbers = #tpu.dot_dimension_numbers<[1], [0], [0], [1], [0, 0, 1, 1], [], []>} : vector<15x128xbf16>, vector<128x128xbf16>, vector<15x128xf32> -> vector<15x128xf32>
    %182 = arith.addf %176, %181 : vector<15x128xf32>
    %c9_142 = arith.constant 9 : index
    %c0_143 = arith.constant 0 : index
    %183 = vector.load %arg13[%c9_142, %c0_143] : memref<35x128xf32, #tpu.memory_space<vmem>>, vector<15x128xf32>
    %c3_144 = arith.constant 3 : index
    %c0_145 = arith.constant 0 : index
    %c0_146 = arith.constant 0 : index
    %184 = vector.load %arg8[%c3_144, %c0_145, %c0_146] : memref<9x128x128xbf16, #tpu.memory_space<vmem>>, vector<1x128x128xbf16>
    %185 = vector.shape_cast %184 : vector<1x128x128xbf16> to vector<128x128xbf16>
    %186 = arith.truncf %183 : vector<15x128xf32> to vector<15x128xbf16>
    %cst_147 = arith.constant dense<0.000000e+00> : vector<15x128xf32>
    %187 = tpu.matmul %186, %185, %cst_147 {dimension_numbers = #tpu.dot_dimension_numbers<[1], [0], [0], [1], [0, 0, 1, 1], [], []>} : vector<15x128xbf16>, vector<128x128xbf16>, vector<15x128xf32> -> vector<15x128xf32>
    %188 = arith.addf %182, %187 : vector<15x128xf32>
    %c10_148 = arith.constant 10 : index
    %c0_149 = arith.constant 0 : index
    %189 = vector.load %arg13[%c10_148, %c0_149] : memref<35x128xf32, #tpu.memory_space<vmem>>, vector<15x128xf32>
    %c4_150 = arith.constant 4 : index
    %c0_151 = arith.constant 0 : index
    %c0_152 = arith.constant 0 : index
    %190 = vector.load %arg8[%c4_150, %c0_151, %c0_152] : memref<9x128x128xbf16, #tpu.memory_space<vmem>>, vector<1x128x128xbf16>
    %191 = vector.shape_cast %190 : vector<1x128x128xbf16> to vector<128x128xbf16>
    %192 = arith.truncf %189 : vector<15x128xf32> to vector<15x128xbf16>
    %cst_153 = arith.constant dense<0.000000e+00> : vector<15x128xf32>
    %193 = tpu.matmul %192, %191, %cst_153 {dimension_numbers = #tpu.dot_dimension_numbers<[1], [0], [0], [1], [0, 0, 1, 1], [], []>} : vector<15x128xbf16>, vector<128x128xbf16>, vector<15x128xf32> -> vector<15x128xf32>
    %194 = arith.addf %188, %193 : vector<15x128xf32>
    %c11 = arith.constant 11 : index
    %c0_154 = arith.constant 0 : index
    %195 = vector.load %arg13[%c11, %c0_154] : memref<35x128xf32, #tpu.memory_space<vmem>>, vector<15x128xf32>
    %c5_155 = arith.constant 5 : index
    %c0_156 = arith.constant 0 : index
    %c0_157 = arith.constant 0 : index
    %196 = vector.load %arg8[%c5_155, %c0_156, %c0_157] : memref<9x128x128xbf16, #tpu.memory_space<vmem>>, vector<1x128x128xbf16>
    %197 = vector.shape_cast %196 : vector<1x128x128xbf16> to vector<128x128xbf16>
    %198 = arith.truncf %195 : vector<15x128xf32> to vector<15x128xbf16>
    %cst_158 = arith.constant dense<0.000000e+00> : vector<15x128xf32>
    %199 = tpu.matmul %198, %197, %cst_158 {dimension_numbers = #tpu.dot_dimension_numbers<[1], [0], [0], [1], [0, 0, 1, 1], [], []>} : vector<15x128xbf16>, vector<128x128xbf16>, vector<15x128xf32> -> vector<15x128xf32>
    %200 = arith.addf %194, %199 : vector<15x128xf32>
    %c14 = arith.constant 14 : index
    %c0_159 = arith.constant 0 : index
    %201 = vector.load %arg13[%c14, %c0_159] : memref<35x128xf32, #tpu.memory_space<vmem>>, vector<15x128xf32>
    %c6_160 = arith.constant 6 : index
    %c0_161 = arith.constant 0 : index
    %c0_162 = arith.constant 0 : index
    %202 = vector.load %arg8[%c6_160, %c0_161, %c0_162] : memref<9x128x128xbf16, #tpu.memory_space<vmem>>, vector<1x128x128xbf16>
    %203 = vector.shape_cast %202 : vector<1x128x128xbf16> to vector<128x128xbf16>
    %204 = arith.truncf %201 : vector<15x128xf32> to vector<15x128xbf16>
    %cst_163 = arith.constant dense<0.000000e+00> : vector<15x128xf32>
    %205 = tpu.matmul %204, %203, %cst_163 {dimension_numbers = #tpu.dot_dimension_numbers<[1], [0], [0], [1], [0, 0, 1, 1], [], []>} : vector<15x128xbf16>, vector<128x128xbf16>, vector<15x128xf32> -> vector<15x128xf32>
    %206 = arith.addf %200, %205 : vector<15x128xf32>
    %c15_164 = arith.constant 15 : index
    %c0_165 = arith.constant 0 : index
    %207 = vector.load %arg13[%c15_164, %c0_165] : memref<35x128xf32, #tpu.memory_space<vmem>>, vector<15x128xf32>
    %c7_166 = arith.constant 7 : index
    %c0_167 = arith.constant 0 : index
    %c0_168 = arith.constant 0 : index
    %208 = vector.load %arg8[%c7_166, %c0_167, %c0_168] : memref<9x128x128xbf16, #tpu.memory_space<vmem>>, vector<1x128x128xbf16>
    %209 = vector.shape_cast %208 : vector<1x128x128xbf16> to vector<128x128xbf16>
    %210 = arith.truncf %207 : vector<15x128xf32> to vector<15x128xbf16>
    %cst_169 = arith.constant dense<0.000000e+00> : vector<15x128xf32>
    %211 = tpu.matmul %210, %209, %cst_169 {dimension_numbers = #tpu.dot_dimension_numbers<[1], [0], [0], [1], [0, 0, 1, 1], [], []>} : vector<15x128xbf16>, vector<128x128xbf16>, vector<15x128xf32> -> vector<15x128xf32>
    %212 = arith.addf %206, %211 : vector<15x128xf32>
    %c16_170 = arith.constant 16 : index
    %c0_171 = arith.constant 0 : index
    %213 = vector.load %arg13[%c16_170, %c0_171] : memref<35x128xf32, #tpu.memory_space<vmem>>, vector<15x128xf32>
    %c8_172 = arith.constant 8 : index
    %c0_173 = arith.constant 0 : index
    %c0_174 = arith.constant 0 : index
    %214 = vector.load %arg8[%c8_172, %c0_173, %c0_174] : memref<9x128x128xbf16, #tpu.memory_space<vmem>>, vector<1x128x128xbf16>
    %215 = vector.shape_cast %214 : vector<1x128x128xbf16> to vector<128x128xbf16>
    %216 = arith.truncf %213 : vector<15x128xf32> to vector<15x128xbf16>
    %cst_175 = arith.constant dense<0.000000e+00> : vector<15x128xf32>
    %217 = tpu.matmul %216, %215, %cst_175 {dimension_numbers = #tpu.dot_dimension_numbers<[1], [0], [0], [1], [0, 0, 1, 1], [], []>} : vector<15x128xbf16>, vector<128x128xbf16>, vector<15x128xf32> -> vector<15x128xf32>
    %218 = arith.addf %212, %217 : vector<15x128xf32>
    %c0_176 = arith.constant 0 : index
    %c0_177 = arith.constant 0 : index
    %219 = vector.load %arg9[%c0_176, %c0_177] : memref<1x128xf32, #tpu.memory_space<vmem>>, vector<1x128xf32>
    %220 = vector.broadcast %219 : vector<1x128xf32> to vector<15x128xf32>
    %221 = arith.addf %218, %220 : vector<15x128xf32>
    %cst_178 = arith.constant 0.000000e+00 : f32
    %222 = vector.broadcast %cst_178 : f32 to vector<15x128xf32>
    %223 = arith.maximumf %221, %222 : vector<15x128xf32>
    %c0_179 = arith.constant 0 : index
    %c0_180 = arith.constant 0 : index
    %c0_181 = arith.constant 0 : index
    %224 = vector.load %arg10[%c0_179, %c0_180, %c0_181] : memref<4x1x15xf32, #tpu.memory_space<vmem>>, vector<1x1x15xf32>
    %225 = vector.shape_cast %224 : vector<1x1x15xf32> to vector<1x15xf32>
    %cst_182 = arith.constant dense<0.000000e+00> : vector<1x128xf32>
    %226 = tpu.matmul %225, %223, %cst_182 {dimension_numbers = #tpu.dot_dimension_numbers<[1], [0], [0], [1], [0, 0, 1, 1], [], []>} : vector<1x15xf32>, vector<15x128xf32>, vector<1x128xf32> -> vector<1x128xf32>
    %c1_183 = arith.constant 1 : index
    %c0_184 = arith.constant 0 : index
    %c0_185 = arith.constant 0 : index
    %227 = vector.load %arg10[%c1_183, %c0_184, %c0_185] : memref<4x1x15xf32, #tpu.memory_space<vmem>>, vector<1x1x15xf32>
    %228 = vector.shape_cast %227 : vector<1x1x15xf32> to vector<1x15xf32>
    %cst_186 = arith.constant dense<0.000000e+00> : vector<1x128xf32>
    %229 = tpu.matmul %228, %223, %cst_186 {dimension_numbers = #tpu.dot_dimension_numbers<[1], [0], [0], [1], [0, 0, 1, 1], [], []>} : vector<1x15xf32>, vector<15x128xf32>, vector<1x128xf32> -> vector<1x128xf32>
    %230 = arith.maximumf %226, %229 : vector<1x128xf32>
    %c2_187 = arith.constant 2 : index
    %c0_188 = arith.constant 0 : index
    %c0_189 = arith.constant 0 : index
    %231 = vector.load %arg10[%c2_187, %c0_188, %c0_189] : memref<4x1x15xf32, #tpu.memory_space<vmem>>, vector<1x1x15xf32>
    %232 = vector.shape_cast %231 : vector<1x1x15xf32> to vector<1x15xf32>
    %cst_190 = arith.constant dense<0.000000e+00> : vector<1x128xf32>
    %233 = tpu.matmul %232, %223, %cst_190 {dimension_numbers = #tpu.dot_dimension_numbers<[1], [0], [0], [1], [0, 0, 1, 1], [], []>} : vector<1x15xf32>, vector<15x128xf32>, vector<1x128xf32> -> vector<1x128xf32>
    %234 = arith.maximumf %230, %233 : vector<1x128xf32>
    %c3_191 = arith.constant 3 : index
    %c0_192 = arith.constant 0 : index
    %c0_193 = arith.constant 0 : index
    %235 = vector.load %arg10[%c3_191, %c0_192, %c0_193] : memref<4x1x15xf32, #tpu.memory_space<vmem>>, vector<1x1x15xf32>
    %236 = vector.shape_cast %235 : vector<1x1x15xf32> to vector<1x15xf32>
    %cst_194 = arith.constant dense<0.000000e+00> : vector<1x128xf32>
    %237 = tpu.matmul %236, %223, %cst_194 {dimension_numbers = #tpu.dot_dimension_numbers<[1], [0], [0], [1], [0, 0, 1, 1], [], []>} : vector<1x15xf32>, vector<15x128xf32>, vector<1x128xf32> -> vector<1x128xf32>
    %238 = arith.maximumf %234, %237 : vector<1x128xf32>
    %c0_195 = arith.constant 0 : index
    %c0_196 = arith.constant 0 : index
    %c0_197 = arith.constant 0 : index
    %239 = vector.load %arg11[%c0_195, %c0_196, %c0_197] : memref<1x1x128xf32, #tpu.memory_space<vmem>>, vector<1x1x128xf32>
    %240 = vector.shape_cast %239 : vector<1x1x128xf32> to vector<1x128xf32>
    %241 = vector.shape_cast %238 : vector<1x128xf32> to vector<1x1x128xf32>
    tpu.vector_store %arg11[%c0_195, %c0_196, %c0_197], %241 {strides = array<i32>} : memref<1x1x128xf32, #tpu.memory_space<vmem>>, vector<1x1x128xf32>,
    return
  }
  func.func @transform_0(%arg0: i32) -> (i32, i32, i32) {
    %c0_i32 = arith.constant 0 : i32
    %c0_i32_0 = arith.constant 0 : i32
    %c0_i32_1 = arith.constant 0 : i32
    return %arg0, %c0_i32, %c0_i32_0 : i32, i32, i32
  }
  func.func @transform_1(%arg0: i32) -> (i32, i32, i32) {
    %c0_i32 = arith.constant 0 : i32
    %c0_i32_0 = arith.constant 0 : i32
    %c0_i32_1 = arith.constant 0 : i32
    %c0_i32_2 = arith.constant 0 : i32
    return %c0_i32, %c0_i32_0, %c0_i32_1 : i32, i32, i32
  }
  func.func @transform_2(%arg0: i32) -> (i32, i32) {
    %c0_i32 = arith.constant 0 : i32
    %c0_i32_0 = arith.constant 0 : i32
    %c0_i32_1 = arith.constant 0 : i32
    return %c0_i32, %c0_i32_0 : i32, i32
  }
  func.func @transform_3(%arg0: i32) -> (i32, i32, i32) {
    %c0_i32 = arith.constant 0 : i32
    %c0_i32_0 = arith.constant 0 : i32
    %c0_i32_1 = arith.constant 0 : i32
    %c0_i32_2 = arith.constant 0 : i32
    return %c0_i32, %c0_i32_0, %c0_i32_1 : i32, i32, i32
  }
  func.func @transform_4(%arg0: i32) -> (i32, i32, i32) {
    %c0_i32 = arith.constant 0 : i32
    %c0_i32_0 = arith.constant 0 : i32
    %c0_i32_1 = arith.constant 0 : i32
    %c0_i32_2 = arith.constant 0 : i32
    return %c0_i32, %c0_i32_0, %c0_i32_1 : i32, i32, i32
  }
  func.func @transform_5(%arg0: i32) -> (i32, i32) {
    %c0_i32 = arith.constant 0 : i32
    %c0_i32_0 = arith.constant 0 : i32
    %c0_i32_1 = arith.constant 0 : i32
    return %c0_i32, %c0_i32_0 : i32, i32
  }
  func.func @transform_6(%arg0: i32) -> (i32, i32, i32) {
    %c0_i32 = arith.constant 0 : i32
    %c0_i32_0 = arith.constant 0 : i32
    %c0_i32_1 = arith.constant 0 : i32
    %c0_i32_2 = arith.constant 0 : i32
    return %c0_i32, %c0_i32_0, %c0_i32_1 : i32, i32, i32
  }
  func.func @transform_7(%arg0: i32) -> (i32, i32, i32) {
    %c0_i32 = arith.constant 0 : i32
    %c0_i32_0 = arith.constant 0 : i32
    %c0_i32_1 = arith.constant 0 : i32
    %c0_i32_2 = arith.constant 0 : i32
    return %c0_i32, %c0_i32_0, %c0_i32_1 : i32, i32, i32
  }
  func.func @transform_8(%arg0: i32) -> (i32, i32) {
    %c0_i32 = arith.constant 0 : i32
    %c0_i32_0 = arith.constant 0 : i32
    %c0_i32_1 = arith.constant 0 : i32
    return %c0_i32, %c0_i32_0 : i32, i32
  }
  func.func @transform_9(%arg0: i32) -> (i32, i32, i32) {
    %c0_i32 = arith.constant 0 : i32
    %c0_i32_0 = arith.constant 0 : i32
    %c0_i32_1 = arith.constant 0 : i32
    %c0_i32_2 = arith.constant 0 : i32
    return %c0_i32, %c0_i32_0, %c0_i32_1 : i32, i32, i32
  }
  func.func @transform_10(%arg0: i32) -> (i32, i32, i32) {
    %c0_i32 = arith.constant 0 : i32
    %c0_i32_0 = arith.constant 0 : i32
    %c0_i32_1 = arith.constant 0 : i32
    return %arg0, %c0_i32, %c0_i32_0 : i32, i32, i32
  }
}

</mosaic_0001>

<llo_original>
// kernel: tpu_custom_call.1
$region0: #{tpu_custom_call.1}
  #allocation0 [shape = 'u32[]', space=smem, size = 0x4, offset = 0x4, fixed_abs, tag = 'smem constant byte address 0x4 - core index']
  #allocation1 [shape = 'u32[144,128]{1,0:T(1,128)}', space=vmem, size = 0x12000, scoped, tag = 'internal scratch']
  #allocation2 [shape = 'f32[99,128]{1,0:T(8,128)}', space=vmem, size = 0xd000, scoped, tag = 'scratch operand']
  #allocation3 [shape = 'f32[35,128]{1,0:T(8,128)}', space=vmem, size = 0x5000, scoped, tag = 'scratch operand']
  %s0 = inlined_call_operand.vmem [shape: f32[2,288,1], index: 0, kind: input, shape index: {}]
  %s1 = inlined_call_operand.vmem [shape: f32[9,1,128], index: 1, kind: input, shape index: {}]
  %s2 = inlined_call_operand.vmem [shape: f32[1,128], index: 2, kind: input, shape index: {}]
  %s3 = inlined_call_operand.vmem [shape: f32[4,99,224], index: 3, kind: input, shape index: {}]
  %s4 = inlined_call_operand.vmem [shape: bf16[9,128,128], index: 4, kind: input, shape index: {}]
  %s5 = inlined_call_operand.vmem [shape: f32[1,128], index: 5, kind: input, shape index: {}]
  %s6 = inlined_call_operand.vmem [shape: f32[4,35,63], index: 6, kind: input, shape index: {}]
  %s7 = inlined_call_operand.vmem [shape: bf16[9,128,128], index: 7, kind: input, shape index: {}]
  %s8 = inlined_call_operand.vmem [shape: f32[1,128], index: 8, kind: input, shape index: {}]
  %s9 = inlined_call_operand.vmem [shape: f32[4,1,15], index: 9, kind: input, shape index: {}]
  %s10 = inlined_call_operand.hbm [shape: f32[2,1,128], index: 10, kind: output, shape index: {}]
  %s11 = sld [smem:[#allocation0]]
  $region73: #{tpu_custom_call.1} parent=0
    _
  %s13 = ssub.s32 1, %s11
  %s14 = scalar_select 0, %s13, %s11
  $region1: #{tpu_custom_call.1} parent=0
    #allocation4 [shape = 'u8[1024]{0}', space=vmem, size = 0x400, scoped, tag = 'output window, operand 0']
    #allocation5 [shape = 's32[2]{0}', space=sflag, size = 0x8, scoped, tag = 'scoped memory for tpu_custom_call.1']
    %15 = vsyncpa [#allocation5], 0
    %s16 = scalar_lea.sflag [#allocation5], 1
    %17 = vsyncpa %s16, 0
    loop: start=0, step=1, limit=4
    $region2: #{tpu_custom_call.1} parent=1 // loop_pre_header
      _
    $region3: #{tpu_custom_call.1} parent=1 // loop_header
      %s19 = sphi 0, %s23
      %p20 = scmp.ge.s32.totalorder %s19, 4
      %s29 = sphi 0, %s31
      %s32 = sphi 0, %s29
      %s33 = sphi 0, %s32
      %s49 = sphi 0, %s33
      %s53 = sphi 0, %s53
      %s55 = sphi 0, %s53
      %s56 = sphi 0, %s55
      %s70 = sphi 0, %s56
      %s74 = sphi 0, %s74
      %s76 = sphi 0, %s74
      %s77 = sphi 0, %s76
      %s91 = sphi 0, %s77
      %s95 = sphi 0, %s95
      %s97 = sphi 0, %s95
      %s98 = sphi 0, %s97
      %s112 = sphi 0, %s98
      %s116 = sphi 0, %s116
      %s118 = sphi 0, %s116
      %s119 = sphi 0, %s118
      %s133 = sphi 0, %s119
      %s137 = sphi 0, %s137
      %s139 = sphi 0, %s137
      %s140 = sphi 0, %s139
      %s154 = sphi 0, %s140
      %s158 = sphi 0, %s158
      %s160 = sphi 0, %s158
      %s161 = sphi 0, %s160
      %s175 = sphi 0, %s161
      %s179 = sphi 0, %s179
      %s181 = sphi 0, %s179
      %s182 = sphi 0, %s181
      %s196 = sphi 0, %s182
      %s200 = sphi 0, %s200
      %s202 = sphi 0, %s200
      %s203 = sphi 0, %s202
      %s217 = sphi 0, %s203
      %s221 = sphi 0, %s221
      %s223 = sphi 0, %s221
      %s224 = sphi 0, %s223
      %s238 = sphi 0, %s224
      %s244 = sphi 0, %s246
      %s247 = sphi 0, %s244
      %s248 = sphi 0, %s247
      %s264 = sphi 0, %s248
    $region4: #{tpu_custom_call.1} parent=1 // loop_header_branch
      %22 = sbr.rel (%p20) target = $region8
    $region5: #{tpu_custom_call.1} parent=1 // loop_body
      %s24 = ssub.s32 %s19, 1
      %s25 = ssub.s32 %s19, 2
      %s26 = sadd.s32 %s19, 1
      %s27 = ssub.s32 %s19, %s26
      %p28 = scmp.eq.s32.totalorder %s27, 0
      %s30 = sadd.s32 %s29, 1
      %s31 = scalar_select %p28, %s29, %s30
      %p34 = pneg %p28
      %p35 = scmp.eq.s32.totalorder %s19, 1
      %p36 = por %p34, %p35
      %p37 = scmp.ne.s32.totalorder %s29, %s32
      %p38 = scmp.eq.s32.totalorder %s19, 0
      %p39 = por %p37, %p38
      %p40 = scmp.ne.s32.totalorder %s29, %s32
      %p41 = scmp.eq.s32.totalorder %s24, 1
      %p42 = por %p40, %p41
      %p43 = scmp.ne.s32.totalorder %s32, %s33
      %p44 = scmp.eq.s32.totalorder %s24, 0
      %p45 = por %p43, %p44
      %p46 = scmp.ne.s32.totalorder %s32, %s33
      %p47 = scmp.eq.s32.totalorder %s25, 1
      %p48 = por %p46, %p47
      %p50 = scmp.ne.s32.totalorder %s33, %s49
      %p51 = scmp.eq.s32.totalorder %s25, 0
      %p52 = por %p50, %p51
      %s54 = sadd.s32 %s53, 1
      %p57 = scmp.eq.s32.totalorder %s19, 1
      %p58 = scmp.ne.s32.totalorder %s53, %s55
      %p59 = scmp.eq.s32.totalorder %s19, 0
      %p60 = por %p58, %p59
      %p61 = scmp.ne.s32.totalorder %s53, %s55
      %p62 = scmp.eq.s32.totalorder %s24, 1
      %p63 = por %p61, %p62
      %p64 = scmp.ne.s32.totalorder %s55, %s56
      %p65 = scmp.eq.s32.totalorder %s24, 0
      %p66 = por %p64, %p65
      %p67 = scmp.ne.s32.totalorder %s55, %s56
      %p68 = scmp.eq.s32.totalorder %s25, 1
      %p69 = por %p67, %p68
      %p71 = scmp.ne.s32.totalorder %s56, %s70
      %p72 = scmp.eq.s32.totalorder %s25, 0
      %p73 = por %p71, %p72
      %s75 = sadd.s32 %s74, 1
      %p78 = scmp.eq.s32.totalorder %s19, 1
      %p79 = scmp.ne.s32.totalorder %s74, %s76
      %p80 = scmp.eq.s32.totalorder %s19, 0
      %p81 = por %p79, %p80
      %p82 = scmp.ne.s32.totalorder %s74, %s76
      %p83 = scmp.eq.s32.totalorder %s24, 1
      %p84 = por %p82, %p83
      %p85 = scmp.ne.s32.totalorder %s76, %s77
      %p86 = scmp.eq.s32.totalorder %s24, 0
      %p87 = por %p85, %p86
      %p88 = scmp.ne.s32.totalorder %s76, %s77
      %p89 = scmp.eq.s32.totalorder %s25, 1
      %p90 = por %p88, %p89
      %p92 = scmp.ne.s32.totalorder %s77, %s91
      %p93 = scmp.eq.s32.totalorder %s25, 0
      %p94 = por %p92, %p93
      %s96 = sadd.s32 %s95, 1
      %p99 = scmp.eq.s32.totalorder %s19, 1
      %p100 = scmp.ne.s32.totalorder %s95, %s97
      %p101 = scmp.eq.s32.totalorder %s19, 0
      %p102 = por %p100, %p101
      %p103 = scmp.ne.s32.totalorder %s95, %s97
      %p104 = scmp.eq.s32.totalorder %s24, 1
      %p105 = por %p103, %p104
      %p106 = scmp.ne.s32.totalorder %s97, %s98
      %p107 = scmp.eq.s32.totalorder %s24, 0
      %p108 = por %p106, %p107
      %p109 = scmp.ne.s32.totalorder %s97, %s98
      %p110 = scmp.eq.s32.totalorder %s25, 1
      %p111 = por %p109, %p110
      %p113 = scmp.ne.s32.totalorder %s98, %s112
      %p114 = scmp.eq.s32.totalorder %s25, 0
      %p115 = por %p113, %p114
      %s117 = sadd.s32 %s116, 1
      %p120 = scmp.eq.s32.totalorder %s19, 1
      %p121 = scmp.ne.s32.totalorder %s116, %s118
      %p122 = scmp.eq.s32.totalorder %s19, 0
      %p123 = por %p121, %p122
      %p124 = scmp.ne.s32.totalorder %s116, %s118
      %p125 = scmp.eq.s32.totalorder %s24, 1
      %p126 = por %p124, %p125
      %p127 = scmp.ne.s32.totalorder %s118, %s119
      %p128 = scmp.eq.s32.totalorder %s24, 0
      %p129 = por %p127, %p128
      %p130 = scmp.ne.s32.totalorder %s118, %s119
      %p131 = scmp.eq.s32.totalorder %s25, 1
      %p132 = por %p130, %p131
      %p134 = scmp.ne.s32.totalorder %s119, %s133
      %p135 = scmp.eq.s32.totalorder %s25, 0
      %p136 = por %p134, %p135
      %s138 = sadd.s32 %s137, 1
      %p141 = scmp.eq.s32.totalorder %s19, 1
      %p142 = scmp.ne.s32.totalorder %s137, %s139
      %p143 = scmp.eq.s32.totalorder %s19, 0
      %p144 = por %p142, %p143
      %p145 = scmp.ne.s32.totalorder %s137, %s139
      %p146 = scmp.eq.s32.totalorder %s24, 1
      %p147 = por %p145, %p146
      %p148 = scmp.ne.s32.totalorder %s139, %s140
      %p149 = scmp.eq.s32.totalorder %s24, 0
      %p150 = por %p148, %p149
      %p151 = scmp.ne.s32.totalorder %s139, %s140
      %p152 = scmp.eq.s32.totalorder %s25, 1
      %p153 = por %p151, %p152
      %p155 = scmp.ne.s32.totalorder %s140, %s154
      %p156 = scmp.eq.s32.totalorder %s25, 0
      %p157 = por %p155, %p156
      %s159 = sadd.s32 %s158, 1
      %p162 = scmp.eq.s32.totalorder %s19, 1
      %p163 = scmp.ne.s32.totalorder %s158, %s160
      %p164 = scmp.eq.s32.totalorder %s19, 0
      %p165 = por %p163, %p164
      %p166 = scmp.ne.s32.totalorder %s158, %s160
      %p167 = scmp.eq.s32.totalorder %s24, 1
      %p168 = por %p166, %p167
      %p169 = scmp.ne.s32.totalorder %s160, %s161
      %p170 = scmp.eq.s32.totalorder %s24, 0
      %p171 = por %p169, %p170
      %p172 = scmp.ne.s32.totalorder %s160, %s161
      %p173 = scmp.eq.s32.totalorder %s25, 1
      %p174 = por %p172, %p173
      %p176 = scmp.ne.s32.totalorder %s161, %s175
      %p177 = scmp.eq.s32.totalorder %s25, 0
      %p178 = por %p176, %p177
      %s180 = sadd.s32 %s179, 1
      %p183 = scmp.eq.s32.totalorder %s19, 1
      %p184 = scmp.ne.s32.totalorder %s179, %s181
      %p185 = scmp.eq.s32.totalorder %s19, 0
      %p186 = por %p184, %p185
      %p187 = scmp.ne.s32.totalorder %s179, %s181
      %p188 = scmp.eq.s32.totalorder %s24, 1
      %p189 = por %p187, %p188
      %p190 = scmp.ne.s32.totalorder %s181, %s182
      %p191 = scmp.eq.s32.totalorder %s24, 0
      %p192 = por %p190, %p191
      %p193 = scmp.ne.s32.totalorder %s181, %s182
      %p194 = scmp.eq.s32.totalorder %s25, 1
      %p195 = por %p193, %p194
      %p197 = scmp.ne.s32.totalorder %s182, %s196
      %p198 = scmp.eq.s32.totalorder %s25, 0
      %p199 = por %p197, %p198
      %s201 = sadd.s32 %s200, 1
      %p204 = scmp.eq.s32.totalorder %s19, 1
      %p205 = scmp.ne.s32.totalorder %s200, %s202
      %p206 = scmp.eq.s32.totalorder %s19, 0
      %p207 = por %p205, %p206
      %p208 = scmp.ne.s32.totalorder %s200, %s202
      %p209 = scmp.eq.s32.totalorder %s24, 1
      %p210 = por %p208, %p209
      %p211 = scmp.ne.s32.totalorder %s202, %s203
      %p212 = scmp.eq.s32.totalorder %s24, 0
      %p213 = por %p211, %p212
      %p214 = scmp.ne.s32.totalorder %s202, %s203
      %p215 = scmp.eq.s32.totalorder %s25, 1
      %p216 = por %p214, %p215
      %p218 = scmp.ne.s32.totalorder %s203, %s217
      %p219 = scmp.eq.s32.totalorder %s25, 0
      %p220 = por %p218, %p219
      %s222 = sadd.s32 %s221, 1
      %p225 = scmp.eq.s32.totalorder %s19, 1
      %p226 = scmp.ne.s32.totalorder %s221, %s223
      %p227 = scmp.eq.s32.totalorder %s19, 0
      %p228 = por %p226, %p227
      %p229 = scmp.ne.s32.totalorder %s221, %s223
      %p230 = scmp.eq.s32.totalorder %s24, 1
      %p231 = por %p229, %p230
      %p232 = scmp.ne.s32.totalorder %s223, %s224
      %p233 = scmp.eq.s32.totalorder %s24, 0
      %p234 = por %p232, %p233
      %p235 = scmp.ne.s32.totalorder %s223, %s224
      %p236 = scmp.eq.s32.totalorder %s25, 1
      %p237 = por %p235, %p236
      %p239 = scmp.ne.s32.totalorder %s224, %s238
      %p240 = scmp.eq.s32.totalorder %s25, 0
      %p241 = por %p239, %p240
      %s242 = ssub.s32 %s19, %s26
      %p243 = scmp.eq.s32.totalorder %s242, 0
      %s245 = sadd.s32 %s244, 1
      %s246 = scalar_select %p243, %s244, %s245
      %p249 = pneg %p243
      %p250 = scmp.eq.s32.totalorder %s19, 1
      %p251 = por %p249, %p250
      %p252 = scmp.ne.s32.totalorder %s244, %s247
      %p253 = scmp.eq.s32.totalorder %s19, 0
      %p254 = por %p252, %p253
      %p255 = scmp.ne.s32.totalorder %s244, %s247
      %p256 = scmp.eq.s32.totalorder %s24, 1
      %p257 = por %p255, %p256
      %p258 = scmp.ne.s32.totalorder %s247, %s248
      %p259 = scmp.eq.s32.totalorder %s24, 0
      %p260 = por %p258, %p259
      %p261 = scmp.ne.s32.totalorder %s247, %s248
      %p262 = scmp.eq.s32.totalorder %s25, 1
      %p263 = por %p261, %p262
      %p265 = scmp.ne.s32.totalorder %s248, %s264
      %p266 = scmp.eq.s32.totalorder %s25, 0
      %p267 = por %p265, %p266
      %p268 = scmp.le.s32.totalorder 1, %s19
      %p269 = scmp.lt.s32.totalorder %s19, 3
      %p270 = pnand %p268, %p269
      %p271 = pneg %p270
      // Predicated region
      $region9: #{tpu_custom_call.1} parent=5 // pred_check
        _
      $region10: #{tpu_custom_call.1} parent=5 // pred_check_branch
        %273 = sbr.rel (%p270) target = $region12
      $region11: #{tpu_custom_call.1} parent=5 // pred_region
        %s274 = ssub.s32 %s19, 1
        // Predicated region
        $region13: #{tpu_custom_call.1} parent=11 // pred_check
          %p275 = pneg %p66
        $region14: #{tpu_custom_call.1} parent=11 // pred_check_branch
          %277 = sbr.rel (%p275) target = $region16
        $region15: #{tpu_custom_call.1} parent=11 // pred_region
          _
        $region16: #{tpu_custom_call.1} parent=11 // pred_fallthru
          _
        // Predicated region
        $region17: #{tpu_custom_call.1} parent=11 // pred_check
          %p278 = pneg %p87
        $region18: #{tpu_custom_call.1} parent=11 // pred_check_branch
          %280 = sbr.rel (%p278) target = $region20
        $region19: #{tpu_custom_call.1} parent=11 // pred_region
          _
        $region20: #{tpu_custom_call.1} parent=11 // pred_fallthru
          _
        // Predicated region
        $region21: #{tpu_custom_call.1} parent=11 // pred_check
          %p281 = pneg %p108
        $region22: #{tpu_custom_call.1} parent=11 // pred_check_branch
          %283 = sbr.rel (%p281) target = $region24
        $region23: #{tpu_custom_call.1} parent=11 // pred_region
          _
        $region24: #{tpu_custom_call.1} parent=11 // pred_fallthru
          _
        // Predicated region
        $region25: #{tpu_custom_call.1} parent=11 // pred_check
          %p284 = pneg %p129
        $region26: #{tpu_custom_call.1} parent=11 // pred_check_branch
          %286 = sbr.rel (%p284) target = $region28
        $region27: #{tpu_custom_call.1} parent=11 // pred_region
          _
        $region28: #{tpu_custom_call.1} parent=11 // pred_fallthru
          _
        // Predicated region
        $region29: #{tpu_custom_call.1} parent=11 // pred_check
          %p287 = pneg %p150
        $region30: #{tpu_custom_call.1} parent=11 // pred_check_branch
          %289 = sbr.rel (%p287) target = $region32
        $region31: #{tpu_custom_call.1} parent=11 // pred_region
          _
        $region32: #{tpu_custom_call.1} parent=11 // pred_fallthru
          _
        // Predicated region
        $region33: #{tpu_custom_call.1} parent=11 // pred_check
          %p290 = pneg %p171
        $region34: #{tpu_custom_call.1} parent=11 // pred_check_branch
          %292 = sbr.rel (%p290) target = $region36
        $region35: #{tpu_custom_call.1} parent=11 // pred_region
          _
        $region36: #{tpu_custom_call.1} parent=11 // pred_fallthru
          _
        // Predicated region
        $region37: #{tpu_custom_call.1} parent=11 // pred_check
          %p293 = pneg %p192
        $region38: #{tpu_custom_call.1} parent=11 // pred_check_branch
          %295 = sbr.rel (%p293) target = $region40
        $region39: #{tpu_custom_call.1} parent=11 // pred_region
          _
        $region40: #{tpu_custom_call.1} parent=11 // pred_fallthru
          _
        // Predicated region
        $region41: #{tpu_custom_call.1} parent=11 // pred_check
          %p296 = pneg %p213
        $region42: #{tpu_custom_call.1} parent=11 // pred_check_branch
          %298 = sbr.rel (%p296) target = $region44
        $region43: #{tpu_custom_call.1} parent=11 // pred_region
          _
        $region44: #{tpu_custom_call.1} parent=11 // pred_fallthru
          _
        // Predicated region
        $region45: #{tpu_custom_call.1} parent=11 // pred_check
          %p299 = pneg %p234
        $region46: #{tpu_custom_call.1} parent=11 // pred_check_branch
          %301 = sbr.rel (%p299) target = $region48
        $region47: #{tpu_custom_call.1} parent=11 // pred_region
          _
        $region48: #{tpu_custom_call.1} parent=11 // pred_fallthru
          _
      $region12: #{tpu_custom_call.1} parent=5 // pred_fallthru
        _
      %p302 = scmp.lt.s32.totalorder %s19, 2
      // Predicated region
      $region49: #{tpu_custom_call.1} parent=5 // pred_check
        %p303 = pneg %p302
      $region50: #{tpu_custom_call.1} parent=5 // pred_check_branch
        %305 = sbr.rel (%p303) target = $region52
      $region51: #{tpu_custom_call.1} parent=5 // pred_region
        // Predicated region
        $region53: #{tpu_custom_call.1} parent=51 // pred_check
          %p306 = pneg %p39
        $region54: #{tpu_custom_call.1} parent=51 // pred_check_branch
          %308 = sbr.rel (%p306) target = $region56
        $region55: #{tpu_custom_call.1} parent=51 // pred_region
          %p309 = scmp.lt.s32.totalorder %s19, 1
          %s310 = scalar_select %p309, %s19, 1
          %s311 = smul.addr %s310, 36
          %s312 = smul.addr %s311, 8
          %s313 = scalar_lea.vmem %s0, %s312
        $region56: #{tpu_custom_call.1} parent=51 // pred_fallthru
          _
      $region52: #{tpu_custom_call.1} parent=5 // pred_fallthru
        _
      %p314 = scmp.le.s32.totalorder 1, %s19
      %p315 = scmp.lt.s32.totalorder %s19, 3
      %p316 = pnand %p314, %p315
      %p317 = pneg %p316
      // Predicated region
      $region57: #{tpu_custom_call.1} parent=5 // pred_check
        _
      $region58: #{tpu_custom_call.1} parent=5 // pred_check_branch
        %319 = sbr.rel (%p316) target = $region60
      $region59: #{tpu_custom_call.1} parent=5 // pred_region
        %s320 = ssub.s32 %s19, 1
        %p321 = scmp.lt.s32.totalorder %s24, 1
        %s322 = scalar_select %p321, %s24, 1
        %s323 = smul.addr %s322, 36
        %s324 = smul.addr %s323, 8
        %s325 = scalar_lea.vmem %s0, %s324
        %p326 = pneg %p45
        %p327 = pneg %p42
        %p328 = pneg %p66
        %p329 = pneg %p63
        %p330 = pneg %p87
        %p331 = pneg %p84
        %p332 = pneg %p108
        %p333 = pneg %p105
        %p334 = pneg %p129
        %p335 = pneg %p126
        %p336 = pneg %p150
        %p337 = pneg %p147
        %p338 = pneg %p171
        %p339 = pneg %p168
        %p340 = pneg %p192
        %p341 = pneg %p189
        %p342 = pneg %p213
        %p343 = pneg %p210
        %p344 = pneg %p234
        %p345 = pneg %p231
        %p346 = pneg %p260
        %p347 = pneg %p257
        %s348 = sand.u32 %s247, 1
        %s349 = scalar_lea.sflag [#allocation5], %s348
        %s350 = sand.u32 %s247, 1
        %s351 = scalar_lea.vmem [#allocation4], %s350
        %p352 = scmp.lt.s32.totalorder %s24, 1
        %s353 = scalar_select %p352, %s24, 1
        %s354 = smul.addr %s353, 36
        %s355 = smul.addr %s354, 8
        %s356 = scalar_lea.vmem %s0, %s355
        %v358 = vld [vmem:[%s356 + $0xf] sm:$0xff]
        %v359 = vld [vmem:[%s356 + $0x17] sm:$0xff]
        %v360 = vld [vmem:[%s356 + $0x1f] sm:$0xff]
        %v361 = vld [vmem:[%s356 + $0x27] sm:$0xff]
        %v362 = vld [vmem:[%s356 + $0x2f] sm:$0xff]
        %v363 = vld [vmem:[%s356 + $0x37] sm:$0xff]
        %v364 = vld [vmem:[%s356 + $0x3f] sm:$0xff]
        %v365 = vld [vmem:[%s356 + $0x47] sm:$0xff]
        %v366 = vld [vmem:[%s356 + $0x4f] sm:$0xff]
        %v367 = vld [vmem:[%s356 + $0x57] sm:$0xff]
        %v368 = vld [vmem:[%s356 + $0x5f] sm:$0xff]
        %v369 = vld [vmem:[%s356 + $0x67] sm:$0xff]
        %v370 = vld [vmem:[%s356 + $0x6f] sm:$0xff]
        %v371 = vld [vmem:[%s356 + $0x77] sm:$0xff]
        %v372 = vld [vmem:[%s356 + $0x7f] sm:$0xff]
        %v373 = vld [vmem:[%s356 + $0x87] sm:$0xff]
        %v374 = vld [vmem:[%s356 + $0x8f] sm:$0xff]
        %v375 = vld [vmem:[%s356 + $0x97] sm:$0xff]
        %v376 = vld [vmem:[%s356 + $0x9f] sm:$0xff]
        %v377 = vld [vmem:[%s356 + $0xa7] sm:$0xff]
        %v378 = vld [vmem:[%s356 + $0xaf] sm:$0xff]
        %v379 = vld [vmem:[%s356 + $0xb7] sm:$0xff]
        %v380 = vld [vmem:[%s356 + $0xbf] sm:$0xff]
        %v381 = vld [vmem:[%s356 + $0xc7] sm:$0xff]
        %v382 = vld [vmem:[%s356 + $0xcf] sm:$0xff]
        %v383 = vld [vmem:[%s356 + $0xd7] sm:$0xff]
        %v384 = vld [vmem:[%s356 + $0xdf] sm:$0xff]
        %v385 = vld [vmem:[%s356 + $0xe7] sm:$0xff]
        %v386 = vld [vmem:[%s1] sm:$0x1]
        %388 = vset.pattern.permute.xlu0 0
        %389 = vperm.xlu0 %388, %v358
        %v390 = vpop.permute.xlu0 %389
        %393 = vset.pattern.permute.xlu0 0
        %394 = vperm.xlu0 %393, %v359
        %v395 = vpop.permute.xlu0 %394
        %398 = vset.pattern.permute.xlu0 0
        %399 = vperm.xlu0 %398, %v360
        %v400 = vpop.permute.xlu0 %399
        %403 = vset.pattern.permute.xlu0 0
        %404 = vperm.xlu0 %403, %v361
        %v405 = vpop.permute.xlu0 %404
        %408 = vset.pattern.permute.xlu0 0
        %409 = vperm.xlu0 %408, %v362
        %v410 = vpop.permute.xlu0 %409
        %413 = vset.pattern.permute.xlu0 0
        %414 = vperm.xlu0 %413, %v363
        %v415 = vpop.permute.xlu0 %414
        %418 = vset.pattern.permute.xlu0 0
        %419 = vperm.xlu0 %418, %v364
        %v420 = vpop.permute.xlu0 %419
        %423 = vset.pattern.permute.xlu0 0
        %424 = vperm.xlu0 %423, %v365
        %v425 = vpop.permute.xlu0 %424
        %428 = vset.pattern.permute.xlu0 0
        %429 = vperm.xlu0 %428, %v366
        %v430 = vpop.permute.xlu0 %429
        %433 = vset.pattern.permute.xlu0 0
        %434 = vperm.xlu0 %433, %v367
        %v435 = vpop.permute.xlu0 %434
        %438 = vset.pattern.permute.xlu0 0
        %439 = vperm.xlu0 %438, %v368
        %v440 = vpop.permute.xlu0 %439
        %443 = vset.pattern.permute.xlu0 0
        %444 = vperm.xlu0 %443, %v369
        %v445 = vpop.permute.xlu0 %444
        %448 = vset.pattern.permute.xlu0 0
        %449 = vperm.xlu0 %448, %v370
        %v450 = vpop.permute.xlu0 %449
        %453 = vset.pattern.permute.xlu0 0
        %454 = vperm.xlu0 %453, %v371
        %v455 = vpop.permute.xlu0 %454
        %458 = vset.pattern.permute.xlu0 0
        %459 = vperm.xlu0 %458, %v372
        %v460 = vpop.permute.xlu0 %459
        %463 = vset.pattern.permute.xlu0 0
        %464 = vperm.xlu0 %463, %v373
        %v465 = vpop.permute.xlu0 %464
        %468 = vset.pattern.permute.xlu0 0
        %469 = vperm.xlu0 %468, %v374
        %v470 = vpop.permute.xlu0 %469
        %473 = vset.pattern.permute.xlu0 0
        %474 = vperm.xlu0 %473, %v375
        %v475 = vpop.permute.xlu0 %474
        %478 = vset.pattern.permute.xlu0 0
        %479 = vperm.xlu0 %478, %v376
        %v480 = vpop.permute.xlu0 %479
        %483 = vset.pattern.permute.xlu0 0
        %484 = vperm.xlu0 %483, %v377
        %v485 = vpop.permute.xlu0 %484
        %488 = vset.pattern.permute.xlu0 0
        %489 = vperm.xlu0 %488, %v378
        %v490 = vpop.permute.xlu0 %489
        %493 = vset.pattern.permute.xlu0 0
        %494 = vperm.xlu0 %493, %v379
        %v495 = vpop.permute.xlu0 %494
        %498 = vset.pattern.permute.xlu0 0
        %499 = vperm.xlu0 %498, %v380
        %v500 = vpop.permute.xlu0 %499
        %503 = vset.pattern.permute.xlu0 0
        %504 = vperm.xlu0 %503, %v381
        %v505 = vpop.permute.xlu0 %504
        %508 = vset.pattern.permute.xlu0 0
        %509 = vperm.xlu0 %508, %v382
        %v510 = vpop.permute.xlu0 %509
        %513 = vset.pattern.permute.xlu0 0
        %514 = vperm.xlu0 %513, %v383
        %v515 = vpop.permute.xlu0 %514
        %518 = vset.pattern.permute.xlu0 0
        %519 = vperm.xlu0 %518, %v384
        %v520 = vpop.permute.xlu0 %519
        %523 = vset.pattern.permute.xlu0 0
        %524 = vperm.xlu0 %523, %v385
        %v525 = vpop.permute.xlu0 %524
        %v528 = vlaneseq
        %v529 = vshrl.u32 %v528, 7
        %v530 = vsub.s32 0, %v529
        %v531 = vrot.slane %v386, %v530
        %v533 = vmul.f32 %v390, %v531
        %v534 = vmul.f32 %v395, %v531
        %v535 = vmul.f32 %v400, %v531
        %v536 = vmul.f32 %v405, %v531
        %v537 = vmul.f32 %v410, %v531
        %v538 = vmul.f32 %v415, %v531
        %v539 = vmul.f32 %v420, %v531
        %v540 = vmul.f32 %v425, %v531
        %v541 = vmul.f32 %v430, %v531
        %v542 = vmul.f32 %v435, %v531
        %v543 = vmul.f32 %v440, %v531
        %v544 = vmul.f32 %v445, %v531
        %v545 = vmul.f32 %v450, %v531
        %v546 = vmul.f32 %v455, %v531
        %v547 = vmul.f32 %v460, %v531
        %v548 = vmul.f32 %v465, %v531
        %v549 = vmul.f32 %v470, %v531
        %v550 = vmul.f32 %v475, %v531
        %v551 = vmul.f32 %v480, %v531
        %v552 = vmul.f32 %v485, %v531
        %v553 = vmul.f32 %v490, %v531
        %v554 = vmul.f32 %v495, %v531
        %v555 = vmul.f32 %v500, %v531
        %v556 = vmul.f32 %v505, %v531
        %v557 = vmul.f32 %v510, %v531
        %v558 = vmul.f32 %v515, %v531
        %v559 = vmul.f32 %v520, %v531
        %v560 = vmul.f32 %v525, %v531
        %v561 = vld [vmem:[%s356 + $0x10] sm:$0xff]
        %v562 = vld [vmem:[%s356 + $0x18] sm:$0xff]
        %v563 = vld [vmem:[%s356 + $0x20] sm:$0xff]
        %v564 = vld [vmem:[%s356 + $0x28] sm:$0xff]
        %v565 = vld [vmem:[%s356 + $0x30] sm:$0xff]
        %v566 = vld [vmem:[%s356 + $0x38] sm:$0xff]
        %v567 = vld [vmem:[%s356 + $0x40] sm:$0xff]
        %v568 = vld [vmem:[%s356 + $0x48] sm:$0xff]
        %v569 = vld [vmem:[%s356 + $0x50] sm:$0xff]
        %v570 = vld [vmem:[%s356 + $0x58] sm:$0xff]
        %v571 = vld [vmem:[%s356 + $0x60] sm:$0xff]
        %v572 = vld [vmem:[%s356 + $0x68] sm:$0xff]
        %v573 = vld [vmem:[%s356 + $0x70] sm:$0xff]
        %v574 = vld [vmem:[%s356 + $0x78] sm:$0xff]
        %v575 = vld [vmem:[%s356 + $0x80] sm:$0xff]
        %v576 = vld [vmem:[%s356 + $0x88] sm:$0xff]
        %v577 = vld [vmem:[%s356 + $0x90] sm:$0xff]
        %v578 = vld [vmem:[%s356 + $0x98] sm:$0xff]
        %v579 = vld [vmem:[%s356 + $0xa0] sm:$0xff]
        %v580 = vld [vmem:[%s356 + $0xa8] sm:$0xff]
        %v581 = vld [vmem:[%s356 + $0xb0] sm:$0xff]
        %v582 = vld [vmem:[%s356 + $0xb8] sm:$0xff]
        %v583 = vld [vmem:[%s356 + $0xc0] sm:$0xff]
        %v584 = vld [vmem:[%s356 + $0xc8] sm:$0xff]
        %v585 = vld [vmem:[%s356 + $0xd0] sm:$0xff]
        %v586 = vld [vmem:[%s356 + $0xd8] sm:$0xff]
        %v587 = vld [vmem:[%s356 + $0xe0] sm:$0xff]
        %v588 = vld [vmem:[%s356 + $0xe8] sm:$0xff]
        %s589 = scalar_lea.vmem %s1, 1
        %v590 = vld [vmem:[%s589] sm:$0x1]
        %592 = vset.pattern.permute.xlu0 0
        %593 = vperm.xlu0 %592, %v561
        %v594 = vpop.permute.xlu0 %593
        %597 = vset.pattern.permute.xlu0 0
        %598 = vperm.xlu0 %597, %v562
        %v599 = vpop.permute.xlu0 %598
        %602 = vset.pattern.permute.xlu0 0
        %603 = vperm.xlu0 %602, %v563
        %v604 = vpop.permute.xlu0 %603
        %607 = vset.pattern.permute.xlu0 0
        %608 = vperm.xlu0 %607, %v564
        %v609 = vpop.permute.xlu0 %608
        %612 = vset.pattern.permute.xlu0 0
        %613 = vperm.xlu0 %612, %v565
        %v614 = vpop.permute.xlu0 %613
        %617 = vset.pattern.permute.xlu0 0
        %618 = vperm.xlu0 %617, %v566
        %v619 = vpop.permute.xlu0 %618
        %622 = vset.pattern.permute.xlu0 0
        %623 = vperm.xlu0 %622, %v567
        %v624 = vpop.permute.xlu0 %623
        %627 = vset.pattern.permute.xlu0 0
        %628 = vperm.xlu0 %627, %v568
        %v629 = vpop.permute.xlu0 %628
        %632 = vset.pattern.permute.xlu0 0
        %633 = vperm.xlu0 %632, %v569
        %v634 = vpop.permute.xlu0 %633
        %637 = vset.pattern.permute.xlu0 0
        %638 = vperm.xlu0 %637, %v570
        %v639 = vpop.permute.xlu0 %638
        %642 = vset.pattern.permute.xlu0 0
        %643 = vperm.xlu0 %642, %v571
        %v644 = vpop.permute.xlu0 %643
        %647 = vset.pattern.permute.xlu0 0
        %648 = vperm.xlu0 %647, %v572
        %v649 = vpop.permute.xlu0 %648
        %652 = vset.pattern.permute.xlu0 0
        %653 = vperm.xlu0 %652, %v573
        %v654 = vpop.permute.xlu0 %653
        %657 = vset.pattern.permute.xlu0 0
        %658 = vperm.xlu0 %657, %v574
        %v659 = vpop.permute.xlu0 %658
        %662 = vset.pattern.permute.xlu0 0
        %663 = vperm.xlu0 %662, %v575
        %v664 = vpop.permute.xlu0 %663
        %667 = vset.pattern.permute.xlu0 0
        %668 = vperm.xlu0 %667, %v576
        %v669 = vpop.permute.xlu0 %668
        %672 = vset.pattern.permute.xlu0 0
        %673 = vperm.xlu0 %672, %v577
        %v674 = vpop.permute.xlu0 %673
        %677 = vset.pattern.permute.xlu0 0
        %678 = vperm.xlu0 %677, %v578
        %v679 = vpop.permute.xlu0 %678
        %682 = vset.pattern.permute.xlu0 0
        %683 = vperm.xlu0 %682, %v579
        %v684 = vpop.permute.xlu0 %683
        %687 = vset.pattern.permute.xlu0 0
        %688 = vperm.xlu0 %687, %v580
        %v689 = vpop.permute.xlu0 %688
        %692 = vset.pattern.permute.xlu0 0
        %693 = vperm.xlu0 %692, %v581
        %v694 = vpop.permute.xlu0 %693
        %697 = vset.pattern.permute.xlu0 0
        %698 = vperm.xlu0 %697, %v582
        %v699 = vpop.permute.xlu0 %698
        %702 = vset.pattern.permute.xlu0 0
        %703 = vperm.xlu0 %702, %v583
        %v704 = vpop.permute.xlu0 %703
        %707 = vset.pattern.permute.xlu0 0
        %708 = vperm.xlu0 %707, %v584
        %v709 = vpop.permute.xlu0 %708
        %712 = vset.pattern.permute.xlu0 0
        %713 = vperm.xlu0 %712, %v585
        %v714 = vpop.permute.xlu0 %713
        %717 = vset.pattern.permute.xlu0 0
        %718 = vperm.xlu0 %717, %v586
        %v719 = vpop.permute.xlu0 %718
        %722 = vset.pattern.permute.xlu0 0
        %723 = vperm.xlu0 %722, %v587
        %v724 = vpop.permute.xlu0 %723
        %727 = vset.pattern.permute.xlu0 0
        %728 = vperm.xlu0 %727, %v588
        %v729 = vpop.permute.xlu0 %728
        %v732 = vlaneseq
        %v733 = vshrl.u32 %v732, 7
        %v734 = vsub.s32 0, %v733
        %v735 = vrot.slane %v590, %v734
        %v737 = vmul.f32 %v594, %v735
        %v738 = vmul.f32 %v599, %v735
        %v739 = vmul.f32 %v604, %v735
        %v740 = vmul.f32 %v609, %v735
        %v741 = vmul.f32 %v614, %v735
        %v742 = vmul.f32 %v619, %v735
        %v743 = vmul.f32 %v624, %v735
        %v744 = vmul.f32 %v629, %v735
        %v745 = vmul.f32 %v634, %v735
        %v746 = vmul.f32 %v639, %v735
        %v747 = vmul.f32 %v644, %v735
        %v748 = vmul.f32 %v649, %v735
        %v749 = vmul.f32 %v654, %v735
        %v750 = vmul.f32 %v659, %v735
        %v751 = vmul.f32 %v664, %v735
        %v752 = vmul.f32 %v669, %v735
        %v753 = vmul.f32 %v674, %v735
        %v754 = vmul.f32 %v679, %v735
        %v755 = vmul.f32 %v684, %v735
        %v756 = vmul.f32 %v689, %v735
        %v757 = vmul.f32 %v694, %v735
        %v758 = vmul.f32 %v699, %v735
        %v759 = vmul.f32 %v704, %v735
        %v760 = vmul.f32 %v709, %v735
        %v761 = vmul.f32 %v714, %v735
        %v762 = vmul.f32 %v719, %v735
        %v763 = vmul.f32 %v724, %v735
        %v764 = vmul.f32 %v729, %v735
        %v765 = vadd.f32 %v533, %v737
        %v766 = vadd.f32 %v534, %v738
        %v767 = vadd.f32 %v535, %v739
        %v768 = vadd.f32 %v536, %v740
        %v769 = vadd.f32 %v537, %v741
        %v770 = vadd.f32 %v538, %v742
        %v771 = vadd.f32 %v539, %v743
        %v772 = vadd.f32 %v540, %v744
        %v773 = vadd.f32 %v541, %v745
        %v774 = vadd.f32 %v542, %v746
        %v775 = vadd.f32 %v543, %v747
        %v776 = vadd.f32 %v544, %v748
        %v777 = vadd.f32 %v545, %v749
        %v778 = vadd.f32 %v546, %v750
        %v779 = vadd.f32 %v547, %v751
        %v780 = vadd.f32 %v548, %v752
        %v781 = vadd.f32 %v549, %v753
        %v782 = vadd.f32 %v550, %v754
        %v783 = vadd.f32 %v551, %v755
        %v784 = vadd.f32 %v552, %v756
        %v785 = vadd.f32 %v553, %v757
        %v786 = vadd.f32 %v554, %v758
        %v787 = vadd.f32 %v555, %v759
        %v788 = vadd.f32 %v556, %v760
        %v789 = vadd.f32 %v557, %v761
        %v790 = vadd.f32 %v558, %v762
        %v791 = vadd.f32 %v559, %v763
        %v792 = vadd.f32 %v560, %v764
        %v793 = vld [vmem:[%s356 + $0x11] sm:$0xff]
        %v794 = vld [vmem:[%s356 + $0x19] sm:$0xff]
        %v795 = vld [vmem:[%s356 + $0x21] sm:$0xff]
        %v796 = vld [vmem:[%s356 + $0x29] sm:$0xff]
        %v797 = vld [vmem:[%s356 + $0x31] sm:$0xff]
        %v798 = vld [vmem:[%s356 + $0x39] sm:$0xff]
        %v799 = vld [vmem:[%s356 + $0x41] sm:$0xff]
        %v800 = vld [vmem:[%s356 + $0x49] sm:$0xff]
        %v801 = vld [vmem:[%s356 + $0x51] sm:$0xff]
        %v802 = vld [vmem:[%s356 + $0x59] sm:$0xff]
        %v803 = vld [vmem:[%s356 + $0x61] sm:$0xff]
        %v804 = vld [vmem:[%s356 + $0x69] sm:$0xff]
        %v805 = vld [vmem:[%s356 + $0x71] sm:$0xff]
        %v806 = vld [vmem:[%s356 + $0x79] sm:$0xff]
        %v807 = vld [vmem:[%s356 + $0x81] sm:$0xff]
        %v808 = vld [vmem:[%s356 + $0x89] sm:$0xff]
        %v809 = vld [vmem:[%s356 + $0x91] sm:$0xff]
        %v810 = vld [vmem:[%s356 + $0x99] sm:$0xff]
        %v811 = vld [vmem:[%s356 + $0xa1] sm:$0xff]
        %v812 = vld [vmem:[%s356 + $0xa9] sm:$0xff]
        %v813 = vld [vmem:[%s356 + $0xb1] sm:$0xff]
        %v814 = vld [vmem:[%s356 + $0xb9] sm:$0xff]
        %v815 = vld [vmem:[%s356 + $0xc1] sm:$0xff]
        %v816 = vld [vmem:[%s356 + $0xc9] sm:$0xff]
        %v817 = vld [vmem:[%s356 + $0xd1] sm:$0xff]
        %v818 = vld [vmem:[%s356 + $0xd9] sm:$0xff]
        %v819 = vld [vmem:[%s356 + $0xe1] sm:$0xff]
        %v820 = vld [vmem:[%s356 + $0xe9] sm:$0xff]
        %s821 = scalar_lea.vmem %s1, 2
        %v822 = vld [vmem:[%s821] sm:$0x1]
        %824 = vset.pattern.permute.xlu0 0
        %825 = vperm.xlu0 %824, %v793
        %v826 = vpop.permute.xlu0 %825
        %829 = vset.pattern.permute.xlu0 0
        %830 = vperm.xlu0 %829, %v794
        %v831 = vpop.permute.xlu0 %830
        %834 = vset.pattern.permute.xlu0 0
        %835 = vperm.xlu0 %834, %v795
        %v836 = vpop.permute.xlu0 %835
        %839 = vset.pattern.permute.xlu0 0
        %840 = vperm.xlu0 %839, %v796
        %v841 = vpop.permute.xlu0 %840
        %844 = vset.pattern.permute.xlu0 0
        %845 = vperm.xlu0 %844, %v797
        %v846 = vpop.permute.xlu0 %845
        %849 = vset.pattern.permute.xlu0 0
        %850 = vperm.xlu0 %849, %v798
        %v851 = vpop.permute.xlu0 %850
        %854 = vset.pattern.permute.xlu0 0
        %855 = vperm.xlu0 %854, %v799
        %v856 = vpop.permute.xlu0 %855
        %859 = vset.pattern.permute.xlu0 0
        %860 = vperm.xlu0 %859, %v800
        %v861 = vpop.permute.xlu0 %860
        %864 = vset.pattern.permute.xlu0 0
        %865 = vperm.xlu0 %864, %v801
        %v866 = vpop.permute.xlu0 %865
        %869 = vset.pattern.permute.xlu0 0
        %870 = vperm.xlu0 %869, %v802
        %v871 = vpop.permute.xlu0 %870
        %874 = vset.pattern.permute.xlu0 0
        %875 = vperm.xlu0 %874, %v803
        %v876 = vpop.permute.xlu0 %875
        %879 = vset.pattern.permute.xlu0 0
        %880 = vperm.xlu0 %879, %v804
        %v881 = vpop.permute.xlu0 %880
        %884 = vset.pattern.permute.xlu0 0
        %885 = vperm.xlu0 %884, %v805
        %v886 = vpop.permute.xlu0 %885
        %889 = vset.pattern.permute.xlu0 0
        %890 = vperm.xlu0 %889, %v806
        %v891 = vpop.permute.xlu0 %890
        %894 = vset.pattern.permute.xlu0 0
        %895 = vperm.xlu0 %894, %v807
        %v896 = vpop.permute.xlu0 %895
        %899 = vset.pattern.permute.xlu0 0
        %900 = vperm.xlu0 %899, %v808
        %v901 = vpop.permute.xlu0 %900
        %904 = vset.pattern.permute.xlu0 0
        %905 = vperm.xlu0 %904, %v809
        %v906 = vpop.permute.xlu0 %905
        %909 = vset.pattern.permute.xlu0 0
        %910 = vperm.xlu0 %909, %v810
        %v911 = vpop.permute.xlu0 %910
        %914 = vset.pattern.permute.xlu0 0
        %915 = vperm.xlu0 %914, %v811
        %v916 = vpop.permute.xlu0 %915
        %919 = vset.pattern.permute.xlu0 0
        %920 = vperm.xlu0 %919, %v812
        %v921 = vpop.permute.xlu0 %920
        %924 = vset.pattern.permute.xlu0 0
        %925 = vperm.xlu0 %924, %v813
        %v926 = vpop.permute.xlu0 %925
        %929 = vset.pattern.permute.xlu0 0
        %930 = vperm.xlu0 %929, %v814
        %v931 = vpop.permute.xlu0 %930
        %934 = vset.pattern.permute.xlu0 0
        %935 = vperm.xlu0 %934, %v815
        %v936 = vpop.permute.xlu0 %935
        %939 = vset.pattern.permute.xlu0 0
        %940 = vperm.xlu0 %939, %v816
        %v941 = vpop.permute.xlu0 %940
        %944 = vset.pattern.permute.xlu0 0
        %945 = vperm.xlu0 %944, %v817
        %v946 = vpop.permute.xlu0 %945
        %949 = vset.pattern.permute.xlu0 0
        %950 = vperm.xlu0 %949, %v818
        %v951 = vpop.permute.xlu0 %950
        %954 = vset.pattern.permute.xlu0 0
        %955 = vperm.xlu0 %954, %v819
        %v956 = vpop.permute.xlu0 %955
        %959 = vset.pattern.permute.xlu0 0
        %960 = vperm.xlu0 %959, %v820
        %v961 = vpop.permute.xlu0 %960
        %v964 = vlaneseq
        %v965 = vshrl.u32 %v964, 7
        %v966 = vsub.s32 0, %v965
        %v967 = vrot.slane %v822, %v966
        %v969 = vmul.f32 %v826, %v967
        %v970 = vmul.f32 %v831, %v967
        %v971 = vmul.f32 %v836, %v967
        %v972 = vmul.f32 %v841, %v967
        %v973 = vmul.f32 %v846, %v967
        %v974 = vmul.f32 %v851, %v967
        %v975 = vmul.f32 %v856, %v967
        %v976 = vmul.f32 %v861, %v967
        %v977 = vmul.f32 %v866, %v967
        %v978 = vmul.f32 %v871, %v967
        %v979 = vmul.f32 %v876, %v967
        %v980 = vmul.f32 %v881, %v967
        %v981 = vmul.f32 %v886, %v967
        %v982 = vmul.f32 %v891, %v967
        %v983 = vmul.f32 %v896, %v967
        %v984 = vmul.f32 %v901, %v967
        %v985 = vmul.f32 %v906, %v967
        %v986 = vmul.f32 %v911, %v967
        %v987 = vmul.f32 %v916, %v967
        %v988 = vmul.f32 %v921, %v967
        %v989 = vmul.f32 %v926, %v967
        %v990 = vmul.f32 %v931, %v967
        %v991 = vmul.f32 %v936, %v967
        %v992 = vmul.f32 %v941, %v967
        %v993 = vmul.f32 %v946, %v967
        %v994 = vmul.f32 %v951, %v967
        %v995 = vmul.f32 %v956, %v967
        %v996 = vmul.f32 %v961, %v967
        %v997 = vadd.f32 %v765, %v969
        %v998 = vadd.f32 %v766, %v970
        %v999 = vadd.f32 %v767, %v971
        %v1000 = vadd.f32 %v768, %v972
        %v1001 = vadd.f32 %v769, %v973
        %v1002 = vadd.f32 %v770, %v974
        %v1003 = vadd.f32 %v771, %v975
        %v1004 = vadd.f32 %v772, %v976
        %v1005 = vadd.f32 %v773, %v977
        %v1006 = vadd.f32 %v774, %v978
        %v1007 = vadd.f32 %v775, %v979
        %v1008 = vadd.f32 %v776, %v980
        %v1009 = vadd.f32 %v777, %v981
        %v1010 = vadd.f32 %v778, %v982
        %v1011 = vadd.f32 %v779, %v983
        %v1012 = vadd.f32 %v780, %v984
        %v1013 = vadd.f32 %v781, %v985
        %v1014 = vadd.f32 %v782, %v986
        %v1015 = vadd.f32 %v783, %v987
        %v1016 = vadd.f32 %v784, %v988
        %v1017 = vadd.f32 %v785, %v989
        %v1018 = vadd.f32 %v786, %v990
        %v1019 = vadd.f32 %v787, %v991
        %v1020 = vadd.f32 %v788, %v992
        %v1021 = vadd.f32 %v789, %v993
        %v1022 = vadd.f32 %v790, %v994
        %v1023 = vadd.f32 %v791, %v995
        %v1024 = vadd.f32 %v792, %v996
        %v1025 = vld [vmem:[%s356 + $0x1f] sm:$0xff]
        %v1026 = vld [vmem:[%s356 + $0x27] sm:$0xff]
        %v1027 = vld [vmem:[%s356 + $0x2f] sm:$0xff]
        %v1028 = vld [vmem:[%s356 + $0x37] sm:$0xff]
        %v1029 = vld [vmem:[%s356 + $0x3f] sm:$0xff]
        %v1030 = vld [vmem:[%s356 + $0x47] sm:$0xff]
        %v1031 = vld [vmem:[%s356 + $0x4f] sm:$0xff]
        %v1032 = vld [vmem:[%s356 + $0x57] sm:$0xff]
        %v1033 = vld [vmem:[%s356 + $0x5f] sm:$0xff]
        %v1034 = vld [vmem:[%s356 + $0x67] sm:$0xff]
        %v1035 = vld [vmem:[%s356 + $0x6f] sm:$0xff]
        %v1036 = vld [vmem:[%s356 + $0x77] sm:$0xff]
        %v1037 = vld [vmem:[%s356 + $0x7f] sm:$0xff]
        %v1038 = vld [vmem:[%s356 + $0x87] sm:$0xff]
        %v1039 = vld [vmem:[%s356 + $0x8f] sm:$0xff]
        %v1040 = vld [vmem:[%s356 + $0x97] sm:$0xff]
        %v1041 = vld [vmem:[%s356 + $0x9f] sm:$0xff]
        %v1042 = vld [vmem:[%s356 + $0xa7] sm:$0xff]
        %v1043 = vld [vmem:[%s356 + $0xaf] sm:$0xff]
        %v1044 = vld [vmem:[%s356 + $0xb7] sm:$0xff]
        %v1045 = vld [vmem:[%s356 + $0xbf] sm:$0xff]
        %v1046 = vld [vmem:[%s356 + $0xc7] sm:$0xff]
        %v1047 = vld [vmem:[%s356 + $0xcf] sm:$0xff]
        %v1048 = vld [vmem:[%s356 + $0xd7] sm:$0xff]
        %v1049 = vld [vmem:[%s356 + $0xdf] sm:$0xff]
        %v1050 = vld [vmem:[%s356 + $0xe7] sm:$0xff]
        %v1051 = vld [vmem:[%s356 + $0xef] sm:$0xff]
        %v1052 = vld [vmem:[%s356 + $0xf7] sm:$0xff]
        %s1053 = scalar_lea.vmem %s1, 3
        %v1054 = vld [vmem:[%s1053] sm:$0x1]
        %1056 = vset.pattern.permute.xlu0 0
        %1057 = vperm.xlu0 %1056, %v1025
        %v1058 = vpop.permute.xlu0 %1057
        %1061 = vset.pattern.permute.xlu0 0
        %1062 = vperm.xlu0 %1061, %v1026
        %v1063 = vpop.permute.xlu0 %1062
        %1066 = vset.pattern.permute.xlu0 0
        %1067 = vperm.xlu0 %1066, %v1027
        %v1068 = vpop.permute.xlu0 %1067
        %1071 = vset.pattern.permute.xlu0 0
        %1072 = vperm.xlu0 %1071, %v1028
        %v1073 = vpop.permute.xlu0 %1072
        %1076 = vset.pattern.permute.xlu0 0
        %1077 = vperm.xlu0 %1076, %v1029
        %v1078 = vpop.permute.xlu0 %1077
        %1081 = vset.pattern.permute.xlu0 0
        %1082 = vperm.xlu0 %1081, %v1030
        %v1083 = vpop.permute.xlu0 %1082
        %1086 = vset.pattern.permute.xlu0 0
        %1087 = vperm.xlu0 %1086, %v1031
        %v1088 = vpop.permute.xlu0 %1087
        %1091 = vset.pattern.permute.xlu0 0
        %1092 = vperm.xlu0 %1091, %v1032
        %v1093 = vpop.permute.xlu0 %1092
        %1096 = vset.pattern.permute.xlu0 0
        %1097 = vperm.xlu0 %1096, %v1033
        %v1098 = vpop.permute.xlu0 %1097
        %1101 = vset.pattern.permute.xlu0 0
        %1102 = vperm.xlu0 %1101, %v1034
        %v1103 = vpop.permute.xlu0 %1102
        %1106 = vset.pattern.permute.xlu0 0
        %1107 = vperm.xlu0 %1106, %v1035
        %v1108 = vpop.permute.xlu0 %1107
        %1111 = vset.pattern.permute.xlu0 0
        %1112 = vperm.xlu0 %1111, %v1036
        %v1113 = vpop.permute.xlu0 %1112
        %1116 = vset.pattern.permute.xlu0 0
        %1117 = vperm.xlu0 %1116, %v1037
        %v1118 = vpop.permute.xlu0 %1117
        %1121 = vset.pattern.permute.xlu0 0
        %1122 = vperm.xlu0 %1121, %v1038
        %v1123 = vpop.permute.xlu0 %1122
        %1126 = vset.pattern.permute.xlu0 0
        %1127 = vperm.xlu0 %1126, %v1039
        %v1128 = vpop.permute.xlu0 %1127
        %1131 = vset.pattern.permute.xlu0 0
        %1132 = vperm.xlu0 %1131, %v1040
        %v1133 = vpop.permute.xlu0 %1132
        %1136 = vset.pattern.permute.xlu0 0
        %1137 = vperm.xlu0 %1136, %v1041
        %v1138 = vpop.permute.xlu0 %1137
        %1141 = vset.pattern.permute.xlu0 0
        %1142 = vperm.xlu0 %1141, %v1042
        %v1143 = vpop.permute.xlu0 %1142
        %1146 = vset.pattern.permute.xlu0 0
        %1147 = vperm.xlu0 %1146, %v1043
        %v1148 = vpop.permute.xlu0 %1147
        %1151 = vset.pattern.permute.xlu0 0
        %1152 = vperm.xlu0 %1151, %v1044
        %v1153 = vpop.permute.xlu0 %1152
        %1156 = vset.pattern.permute.xlu0 0
        %1157 = vperm.xlu0 %1156, %v1045
        %v1158 = vpop.permute.xlu0 %1157
        %1161 = vset.pattern.permute.xlu0 0
        %1162 = vperm.xlu0 %1161, %v1046
        %v1163 = vpop.permute.xlu0 %1162
        %1166 = vset.pattern.permute.xlu0 0
        %1167 = vperm.xlu0 %1166, %v1047
        %v1168 = vpop.permute.xlu0 %1167
        %1171 = vset.pattern.permute.xlu0 0
        %1172 = vperm.xlu0 %1171, %v1048
        %v1173 = vpop.permute.xlu0 %1172
        %1176 = vset.pattern.permute.xlu0 0
        %1177 = vperm.xlu0 %1176, %v1049
        %v1178 = vpop.permute.xlu0 %1177
        %1181 = vset.pattern.permute.xlu0 0
        %1182 = vperm.xlu0 %1181, %v1050
        %v1183 = vpop.permute.xlu0 %1182
        %1186 = vset.pattern.permute.xlu0 0
        %1187 = vperm.xlu0 %1186, %v1051
        %v1188 = vpop.permute.xlu0 %1187
        %1191 = vset.pattern.permute.xlu0 0
        %1192 = vperm.xlu0 %1191, %v1052
        %v1193 = vpop.permute.xlu0 %1192
        %v1196 = vlaneseq
        %v1197 = vshrl.u32 %v1196, 7
        %v1198 = vsub.s32 0, %v1197
        %v1199 = vrot.slane %v1054, %v1198
        %v1201 = vmul.f32 %v1058, %v1199
        %v1202 = vmul.f32 %v1063, %v1199
        %v1203 = vmul.f32 %v1068, %v1199
        %v1204 = vmul.f32 %v1073, %v1199
        %v1205 = vmul.f32 %v1078, %v1199
        %v1206 = vmul.f32 %v1083, %v1199
        %v1207 = vmul.f32 %v1088, %v1199
        %v1208 = vmul.f32 %v1093, %v1199
        %v1209 = vmul.f32 %v1098, %v1199
        %v1210 = vmul.f32 %v1103, %v1199
        %v1211 = vmul.f32 %v1108, %v1199
        %v1212 = vmul.f32 %v1113, %v1199
        %v1213 = vmul.f32 %v1118, %v1199
        %v1214 = vmul.f32 %v1123, %v1199
        %v1215 = vmul.f32 %v1128, %v1199
        %v1216 = vmul.f32 %v1133, %v1199
        %v1217 = vmul.f32 %v1138, %v1199
        %v1218 = vmul.f32 %v1143, %v1199
        %v1219 = vmul.f32 %v1148, %v1199
        %v1220 = vmul.f32 %v1153, %v1199
        %v1221 = vmul.f32 %v1158, %v1199
        %v1222 = vmul.f32 %v1163, %v1199
        %v1223 = vmul.f32 %v1168, %v1199
        %v1224 = vmul.f32 %v1173, %v1199
        %v1225 = vmul.f32 %v1178, %v1199
        %v1226 = vmul.f32 %v1183, %v1199
        %v1227 = vmul.f32 %v1188, %v1199
        %v1228 = vmul.f32 %v1193, %v1199
        %v1229 = vadd.f32 %v997, %v1201
        %v1230 = vadd.f32 %v998, %v1202
        %v1231 = vadd.f32 %v999, %v1203
        %v1232 = vadd.f32 %v1000, %v1204
        %v1233 = vadd.f32 %v1001, %v1205
        %v1234 = vadd.f32 %v1002, %v1206
        %v1235 = vadd.f32 %v1003, %v1207
        %v1236 = vadd.f32 %v1004, %v1208
        %v1237 = vadd.f32 %v1005, %v1209
        %v1238 = vadd.f32 %v1006, %v1210
        %v1239 = vadd.f32 %v1007, %v1211
        %v1240 = vadd.f32 %v1008, %v1212
        %v1241 = vadd.f32 %v1009, %v1213
        %v1242 = vadd.f32 %v1010, %v1214
        %v1243 = vadd.f32 %v1011, %v1215
        %v1244 = vadd.f32 %v1012, %v1216
        %v1245 = vadd.f32 %v1013, %v1217
        %v1246 = vadd.f32 %v1014, %v1218
        %v1247 = vadd.f32 %v1015, %v1219
        %v1248 = vadd.f32 %v1016, %v1220
        %v1249 = vadd.f32 %v1017, %v1221
        %v1250 = vadd.f32 %v1018, %v1222
        %v1251 = vadd.f32 %v1019, %v1223
        %v1252 = vadd.f32 %v1020, %v1224
        %v1253 = vadd.f32 %v1021, %v1225
        %v1254 = vadd.f32 %v1022, %v1226
        %v1255 = vadd.f32 %v1023, %v1227
        %v1256 = vadd.f32 %v1024, %v1228
        %v1257 = vld [vmem:[%s356 + $0x20] sm:$0xff]
        %v1258 = vld [vmem:[%s356 + $0x28] sm:$0xff]
        %v1259 = vld [vmem:[%s356 + $0x30] sm:$0xff]
        %v1260 = vld [vmem:[%s356 + $0x38] sm:$0xff]
        %v1261 = vld [vmem:[%s356 + $0x40] sm:$0xff]
        %v1262 = vld [vmem:[%s356 + $0x48] sm:$0xff]
        %v1263 = vld [vmem:[%s356 + $0x50] sm:$0xff]
        %v1264 = vld [vmem:[%s356 + $0x58] sm:$0xff]
        %v1265 = vld [vmem:[%s356 + $0x60] sm:$0xff]
        %v1266 = vld [vmem:[%s356 + $0x68] sm:$0xff]
        %v1267 = vld [vmem:[%s356 + $0x70] sm:$0xff]
        %v1268 = vld [vmem:[%s356 + $0x78] sm:$0xff]
        %v1269 = vld [vmem:[%s356 + $0x80] sm:$0xff]
        %v1270 = vld [vmem:[%s356 + $0x88] sm:$0xff]
        %v1271 = vld [vmem:[%s356 + $0x90] sm:$0xff]
        %v1272 = vld [vmem:[%s356 + $0x98] sm:$0xff]
        %v1273 = vld [vmem:[%s356 + $0xa0] sm:$0xff]
        %v1274 = vld [vmem:[%s356 + $0xa8] sm:$0xff]
        %v1275 = vld [vmem:[%s356 + $0xb0] sm:$0xff]
        %v1276 = vld [vmem:[%s356 + $0xb8] sm:$0xff]
        %v1277 = vld [vmem:[%s356 + $0xc0] sm:$0xff]
        %v1278 = vld [vmem:[%s356 + $0xc8] sm:$0xff]
        %v1279 = vld [vmem:[%s356 + $0xd0] sm:$0xff]
        %v1280 = vld [vmem:[%s356 + $0xd8] sm:$0xff]
        %v1281 = vld [vmem:[%s356 + $0xe0] sm:$0xff]
        %v1282 = vld [vmem:[%s356 + $0xe8] sm:$0xff]
        %v1283 = vld [vmem:[%s356 + $0xf0] sm:$0xff]
        %v1284 = vld [vmem:[%s356 + $0xf8] sm:$0xff]
        %s1285 = scalar_lea.vmem %s1, 4
        %v1286 = vld [vmem:[%s1285] sm:$0x1]
        %1288 = vset.pattern.permute.xlu0 0
        %1289 = vperm.xlu0 %1288, %v1257
        %v1290 = vpop.permute.xlu0 %1289
        %1293 = vset.pattern.permute.xlu0 0
        %1294 = vperm.xlu0 %1293, %v1258
        %v1295 = vpop.permute.xlu0 %1294
        %1298 = vset.pattern.permute.xlu0 0
        %1299 = vperm.xlu0 %1298, %v1259
        %v1300 = vpop.permute.xlu0 %1299
        %1303 = vset.pattern.permute.xlu0 0
        %1304 = vperm.xlu0 %1303, %v1260
        %v1305 = vpop.permute.xlu0 %1304
        %1308 = vset.pattern.permute.xlu0 0
        %1309 = vperm.xlu0 %1308, %v1261
        %v1310 = vpop.permute.xlu0 %1309
        %1313 = vset.pattern.permute.xlu0 0
        %1314 = vperm.xlu0 %1313, %v1262
        %v1315 = vpop.permute.xlu0 %1314
        %1318 = vset.pattern.permute.xlu0 0
        %1319 = vperm.xlu0 %1318, %v1263
        %v1320 = vpop.permute.xlu0 %1319
        %1323 = vset.pattern.permute.xlu0 0
        %1324 = vperm.xlu0 %1323, %v1264
        %v1325 = vpop.permute.xlu0 %1324
        %1328 = vset.pattern.permute.xlu0 0
        %1329 = vperm.xlu0 %1328, %v1265
        %v1330 = vpop.permute.xlu0 %1329
        %1333 = vset.pattern.permute.xlu0 0
        %1334 = vperm.xlu0 %1333, %v1266
        %v1335 = vpop.permute.xlu0 %1334
        %1338 = vset.pattern.permute.xlu0 0
        %1339 = vperm.xlu0 %1338, %v1267
        %v1340 = vpop.permute.xlu0 %1339
        %1343 = vset.pattern.permute.xlu0 0
        %1344 = vperm.xlu0 %1343, %v1268
        %v1345 = vpop.permute.xlu0 %1344
        %1348 = vset.pattern.permute.xlu0 0
        %1349 = vperm.xlu0 %1348, %v1269
        %v1350 = vpop.permute.xlu0 %1349
        %1353 = vset.pattern.permute.xlu0 0
        %1354 = vperm.xlu0 %1353, %v1270
        %v1355 = vpop.permute.xlu0 %1354
        %1358 = vset.pattern.permute.xlu0 0
        %1359 = vperm.xlu0 %1358, %v1271
        %v1360 = vpop.permute.xlu0 %1359
        %1363 = vset.pattern.permute.xlu0 0
        %1364 = vperm.xlu0 %1363, %v1272
        %v1365 = vpop.permute.xlu0 %1364
        %1368 = vset.pattern.permute.xlu0 0
        %1369 = vperm.xlu0 %1368, %v1273
        %v1370 = vpop.permute.xlu0 %1369
        %1373 = vset.pattern.permute.xlu0 0
        %1374 = vperm.xlu0 %1373, %v1274
        %v1375 = vpop.permute.xlu0 %1374
        %1378 = vset.pattern.permute.xlu0 0
        %1379 = vperm.xlu0 %1378, %v1275
        %v1380 = vpop.permute.xlu0 %1379
        %1383 = vset.pattern.permute.xlu0 0
        %1384 = vperm.xlu0 %1383, %v1276
        %v1385 = vpop.permute.xlu0 %1384
        %1388 = vset.pattern.permute.xlu0 0
        %1389 = vperm.xlu0 %1388, %v1277
        %v1390 = vpop.permute.xlu0 %1389
        %1393 = vset.pattern.permute.xlu0 0
        %1394 = vperm.xlu0 %1393, %v1278
        %v1395 = vpop.permute.xlu0 %1394
        %1398 = vset.pattern.permute.xlu0 0
        %1399 = vperm.xlu0 %1398, %v1279
        %v1400 = vpop.permute.xlu0 %1399
        %1403 = vset.pattern.permute.xlu0 0
        %1404 = vperm.xlu0 %1403, %v1280
        %v1405 = vpop.permute.xlu0 %1404
        %1408 = vset.pattern.permute.xlu0 0
        %1409 = vperm.xlu0 %1408, %v1281
        %v1410 = vpop.permute.xlu0 %1409
        %1413 = vset.pattern.permute.xlu0 0
        %1414 = vperm.xlu0 %1413, %v1282
        %v1415 = vpop.permute.xlu0 %1414
        %1418 = vset.pattern.permute.xlu0 0
        %1419 = vperm.xlu0 %1418, %v1283
        %v1420 = vpop.permute.xlu0 %1419
        %1423 = vset.pattern.permute.xlu0 0
        %1424 = vperm.xlu0 %1423, %v1284
        %v1425 = vpop.permute.xlu0 %1424
        %v1428 = vlaneseq
        %v1429 = vshrl.u32 %v1428, 7
        %v1430 = vsub.s32 0, %v1429
        %v1431 = vrot.slane %v1286, %v1430
        %v1433 = vmul.f32 %v1290, %v1431
        %v1434 = vmul.f32 %v1295, %v1431
        %v1435 = vmul.f32 %v1300, %v1431
        %v1436 = vmul.f32 %v1305, %v1431
        %v1437 = vmul.f32 %v1310, %v1431
        %v1438 = vmul.f32 %v1315, %v1431
        %v1439 = vmul.f32 %v1320, %v1431
        %v1440 = vmul.f32 %v1325, %v1431
        %v1441 = vmul.f32 %v1330, %v1431
        %v1442 = vmul.f32 %v1335, %v1431
        %v1443 = vmul.f32 %v1340, %v1431
        %v1444 = vmul.f32 %v1345, %v1431
        %v1445 = vmul.f32 %v1350, %v1431
        %v1446 = vmul.f32 %v1355, %v1431
        %v1447 = vmul.f32 %v1360, %v1431
        %v1448 = vmul.f32 %v1365, %v1431
        %v1449 = vmul.f32 %v1370, %v1431
        %v1450 = vmul.f32 %v1375, %v1431
        %v1451 = vmul.f32 %v1380, %v1431
        %v1452 = vmul.f32 %v1385, %v1431
        %v1453 = vmul.f32 %v1390, %v1431
        %v1454 = vmul.f32 %v1395, %v1431
        %v1455 = vmul.f32 %v1400, %v1431
        %v1456 = vmul.f32 %v1405, %v1431
        %v1457 = vmul.f32 %v1410, %v1431
        %v1458 = vmul.f32 %v1415, %v1431
        %v1459 = vmul.f32 %v1420, %v1431
        %v1460 = vmul.f32 %v1425, %v1431
        %v1461 = vadd.f32 %v1229, %v1433
        %v1462 = vadd.f32 %v1230, %v1434
        %v1463 = vadd.f32 %v1231, %v1435
        %v1464 = vadd.f32 %v1232, %v1436
        %v1465 = vadd.f32 %v1233, %v1437
        %v1466 = vadd.f32 %v1234, %v1438
        %v1467 = vadd.f32 %v1235, %v1439
        %v1468 = vadd.f32 %v1236, %v1440
        %v1469 = vadd.f32 %v1237, %v1441
        %v1470 = vadd.f32 %v1238, %v1442
        %v1471 = vadd.f32 %v1239, %v1443
        %v1472 = vadd.f32 %v1240, %v1444
        %v1473 = vadd.f32 %v1241, %v1445
        %v1474 = vadd.f32 %v1242, %v1446
        %v1475 = vadd.f32 %v1243, %v1447
        %v1476 = vadd.f32 %v1244, %v1448
        %v1477 = vadd.f32 %v1245, %v1449
        %v1478 = vadd.f32 %v1246, %v1450
        %v1479 = vadd.f32 %v1247, %v1451
        %v1480 = vadd.f32 %v1248, %v1452
        %v1481 = vadd.f32 %v1249, %v1453
        %v1482 = vadd.f32 %v1250, %v1454
        %v1483 = vadd.f32 %v1251, %v1455
        %v1484 = vadd.f32 %v1252, %v1456
        %v1485 = vadd.f32 %v1253, %v1457
        %v1486 = vadd.f32 %v1254, %v1458
        %v1487 = vadd.f32 %v1255, %v1459
        %v1488 = vadd.f32 %v1256, %v1460
        %v1489 = vld [vmem:[%s356 + $0x21] sm:$0xff]
        %v1490 = vld [vmem:[%s356 + $0x29] sm:$0xff]
        %v1491 = vld [vmem:[%s356 + $0x31] sm:$0xff]
        %v1492 = vld [vmem:[%s356 + $0x39] sm:$0xff]
        %v1493 = vld [vmem:[%s356 + $0x41] sm:$0xff]
        %v1494 = vld [vmem:[%s356 + $0x49] sm:$0xff]
        %v1495 = vld [vmem:[%s356 + $0x51] sm:$0xff]
        %v1496 = vld [vmem:[%s356 + $0x59] sm:$0xff]
        %v1497 = vld [vmem:[%s356 + $0x61] sm:$0xff]
        %v1498 = vld [vmem:[%s356 + $0x69] sm:$0xff]
        %v1499 = vld [vmem:[%s356 + $0x71] sm:$0xff]
        %v1500 = vld [vmem:[%s356 + $0x79] sm:$0xff]
        %v1501 = vld [vmem:[%s356 + $0x81] sm:$0xff]
        %v1502 = vld [vmem:[%s356 + $0x89] sm:$0xff]
        %v1503 = vld [vmem:[%s356 + $0x91] sm:$0xff]
        %v1504 = vld [vmem:[%s356 + $0x99] sm:$0xff]
        %v1505 = vld [vmem:[%s356 + $0xa1] sm:$0xff]
        %v1506 = vld [vmem:[%s356 + $0xa9] sm:$0xff]
        %v1507 = vld [vmem:[%s356 + $0xb1] sm:$0xff]
        %v1508 = vld [vmem:[%s356 + $0xb9] sm:$0xff]
        %v1509 = vld [vmem:[%s356 + $0xc1] sm:$0xff]
        %v1510 = vld [vmem:[%s356 + $0xc9] sm:$0xff]
        %v1511 = vld [vmem:[%s356 + $0xd1] sm:$0xff]
        %v1512 = vld [vmem:[%s356 + $0xd9] sm:$0xff]
        %v1513 = vld [vmem:[%s356 + $0xe1] sm:$0xff]
        %v1514 = vld [vmem:[%s356 + $0xe9] sm:$0xff]
        %v1515 = vld [vmem:[%s356 + $0xf1] sm:$0xff]
        %v1516 = vld [vmem:[%s356 + $0xf9] sm:$0xff]
        %s1517 = scalar_lea.vmem %s1, 5
        %v1518 = vld [vmem:[%s1517] sm:$0x1]
        %1520 = vset.pattern.permute.xlu0 0
        %1521 = vperm.xlu0 %1520, %v1489
        %v1522 = vpop.permute.xlu0 %1521
        %1525 = vset.pattern.permute.xlu0 0
        %1526 = vperm.xlu0 %1525, %v1490
        %v1527 = vpop.permute.xlu0 %1526
        %1530 = vset.pattern.permute.xlu0 0
        %1531 = vperm.xlu0 %1530, %v1491
        %v1532 = vpop.permute.xlu0 %1531
        %1535 = vset.pattern.permute.xlu0 0
        %1536 = vperm.xlu0 %1535, %v1492
        %v1537 = vpop.permute.xlu0 %1536
        %1540 = vset.pattern.permute.xlu0 0
        %1541 = vperm.xlu0 %1540, %v1493
        %v1542 = vpop.permute.xlu0 %1541
        %1545 = vset.pattern.permute.xlu0 0
        %1546 = vperm.xlu0 %1545, %v1494
        %v1547 = vpop.permute.xlu0 %1546
        %1550 = vset.pattern.permute.xlu0 0
        %1551 = vperm.xlu0 %1550, %v1495
        %v1552 = vpop.permute.xlu0 %1551
        %1555 = vset.pattern.permute.xlu0 0
        %1556 = vperm.xlu0 %1555, %v1496
        %v1557 = vpop.permute.xlu0 %1556
        %1560 = vset.pattern.permute.xlu0 0
        %1561 = vperm.xlu0 %1560, %v1497
        %v1562 = vpop.permute.xlu0 %1561
        %1565 = vset.pattern.permute.xlu0 0
        %1566 = vperm.xlu0 %1565, %v1498
        %v1567 = vpop.permute.xlu0 %1566
        %1570 = vset.pattern.permute.xlu0 0
        %1571 = vperm.xlu0 %1570, %v1499
        %v1572 = vpop.permute.xlu0 %1571
        %1575 = vset.pattern.permute.xlu0 0
        %1576 = vperm.xlu0 %1575, %v1500
        %v1577 = vpop.permute.xlu0 %1576
        %1580 = vset.pattern.permute.xlu0 0
        %1581 = vperm.xlu0 %1580, %v1501
        %v1582 = vpop.permute.xlu0 %1581
        %1585 = vset.pattern.permute.xlu0 0
        %1586 = vperm.xlu0 %1585, %v1502
        %v1587 = vpop.permute.xlu0 %1586
        %1590 = vset.pattern.permute.xlu0 0
        %1591 = vperm.xlu0 %1590, %v1503
        %v1592 = vpop.permute.xlu0 %1591
        %1595 = vset.pattern.permute.xlu0 0
        %1596 = vperm.xlu0 %1595, %v1504
        %v1597 = vpop.permute.xlu0 %1596
        %1600 = vset.pattern.permute.xlu0 0
        %1601 = vperm.xlu0 %1600, %v1505
        %v1602 = vpop.permute.xlu0 %1601
        %1605 = vset.pattern.permute.xlu0 0
        %1606 = vperm.xlu0 %1605, %v1506
        %v1607 = vpop.permute.xlu0 %1606
        %1610 = vset.pattern.permute.xlu0 0
        %1611 = vperm.xlu0 %1610, %v1507
        %v1612 = vpop.permute.xlu0 %1611
        %1615 = vset.pattern.permute.xlu0 0
        %1616 = vperm.xlu0 %1615, %v1508
        %v1617 = vpop.permute.xlu0 %1616
        %1620 = vset.pattern.permute.xlu0 0
        %1621 = vperm.xlu0 %1620, %v1509
        %v1622 = vpop.permute.xlu0 %1621
        %1625 = vset.pattern.permute.xlu0 0
        %1626 = vperm.xlu0 %1625, %v1510
        %v1627 = vpop.permute.xlu0 %1626
        %1630 = vset.pattern.permute.xlu0 0
        %1631 = vperm.xlu0 %1630, %v1511
        %v1632 = vpop.permute.xlu0 %1631
        %1635 = vset.pattern.permute.xlu0 0
        %1636 = vperm.xlu0 %1635, %v1512
        %v1637 = vpop.permute.xlu0 %1636
        %1640 = vset.pattern.permute.xlu0 0
        %1641 = vperm.xlu0 %1640, %v1513
        %v1642 = vpop.permute.xlu0 %1641
        %1645 = vset.pattern.permute.xlu0 0
        %1646 = vperm.xlu0 %1645, %v1514
        %v1647 = vpop.permute.xlu0 %1646
        %1650 = vset.pattern.permute.xlu0 0
        %1651 = vperm.xlu0 %1650, %v1515
        %v1652 = vpop.permute.xlu0 %1651
        %1655 = vset.pattern.permute.xlu0 0
        %1656 = vperm.xlu0 %1655, %v1516
        %v1657 = vpop.permute.xlu0 %1656
        %v1660 = vlaneseq
        %v1661 = vshrl.u32 %v1660, 7
        %v1662 = vsub.s32 0, %v1661
        %v1663 = vrot.slane %v1518, %v1662
        %v1665 = vmul.f32 %v1522, %v1663
        %v1666 = vmul.f32 %v1527, %v1663
        %v1667 = vmul.f32 %v1532, %v1663
        %v1668 = vmul.f32 %v1537, %v1663
        %v1669 = vmul.f32 %v1542, %v1663
        %v1670 = vmul.f32 %v1547, %v1663
        %v1671 = vmul.f32 %v1552, %v1663
        %v1672 = vmul.f32 %v1557, %v1663
        %v1673 = vmul.f32 %v1562, %v1663
        %v1674 = vmul.f32 %v1567, %v1663
        %v1675 = vmul.f32 %v1572, %v1663
        %v1676 = vmul.f32 %v1577, %v1663
        %v1677 = vmul.f32 %v1582, %v1663
        %v1678 = vmul.f32 %v1587, %v1663
        %v1679 = vmul.f32 %v1592, %v1663
        %v1680 = vmul.f32 %v1597, %v1663
        %v1681 = vmul.f32 %v1602, %v1663
        %v1682 = vmul.f32 %v1607, %v1663
        %v1683 = vmul.f32 %v1612, %v1663
        %v1684 = vmul.f32 %v1617, %v1663
        %v1685 = vmul.f32 %v1622, %v1663
        %v1686 = vmul.f32 %v1627, %v1663
        %v1687 = vmul.f32 %v1632, %v1663
        %v1688 = vmul.f32 %v1637, %v1663
        %v1689 = vmul.f32 %v1642, %v1663
        %v1690 = vmul.f32 %v1647, %v1663
        %v1691 = vmul.f32 %v1652, %v1663
        %v1692 = vmul.f32 %v1657, %v1663
        %v1693 = vadd.f32 %v1461, %v1665
        %v1694 = vadd.f32 %v1462, %v1666
        %v1695 = vadd.f32 %v1463, %v1667
        %v1696 = vadd.f32 %v1464, %v1668
        %v1697 = vadd.f32 %v1465, %v1669
        %v1698 = vadd.f32 %v1466, %v1670
        %v1699 = vadd.f32 %v1467, %v1671
        %v1700 = vadd.f32 %v1468, %v1672
        %v1701 = vadd.f32 %v1469, %v1673
        %v1702 = vadd.f32 %v1470, %v1674
        %v1703 = vadd.f32 %v1471, %v1675
        %v1704 = vadd.f32 %v1472, %v1676
        %v1705 = vadd.f32 %v1473, %v1677
        %v1706 = vadd.f32 %v1474, %v1678
        %v1707 = vadd.f32 %v1475, %v1679
        %v1708 = vadd.f32 %v1476, %v1680
        %v1709 = vadd.f32 %v1477, %v1681
        %v1710 = vadd.f32 %v1478, %v1682
        %v1711 = vadd.f32 %v1479, %v1683
        %v1712 = vadd.f32 %v1480, %v1684
        %v1713 = vadd.f32 %v1481, %v1685
        %v1714 = vadd.f32 %v1482, %v1686
        %v1715 = vadd.f32 %v1483, %v1687
        %v1716 = vadd.f32 %v1484, %v1688
        %v1717 = vadd.f32 %v1485, %v1689
        %v1718 = vadd.f32 %v1486, %v1690
        %v1719 = vadd.f32 %v1487, %v1691
        %v1720 = vadd.f32 %v1488, %v1692
        %v1721 = vld [vmem:[%s356 + $0x2f] sm:$0xff]
        %v1722 = vld [vmem:[%s356 + $0x37] sm:$0xff]
        %v1723 = vld [vmem:[%s356 + $0x3f] sm:$0xff]
        %v1724 = vld [vmem:[%s356 + $0x47] sm:$0xff]
        %v1725 = vld [vmem:[%s356 + $0x4f] sm:$0xff]
        %v1726 = vld [vmem:[%s356 + $0x57] sm:$0xff]
        %v1727 = vld [vmem:[%s356 + $0x5f] sm:$0xff]
        %v1728 = vld [vmem:[%s356 + $0x67] sm:$0xff]
        %v1729 = vld [vmem:[%s356 + $0x6f] sm:$0xff]
        %v1730 = vld [vmem:[%s356 + $0x77] sm:$0xff]
        %v1731 = vld [vmem:[%s356 + $0x7f] sm:$0xff]
        %v1732 = vld [vmem:[%s356 + $0x87] sm:$0xff]
        %v1733 = vld [vmem:[%s356 + $0x8f] sm:$0xff]
        %v1734 = vld [vmem:[%s356 + $0x97] sm:$0xff]
        %v1735 = vld [vmem:[%s356 + $0x9f] sm:$0xff]
        %v1736 = vld [vmem:[%s356 + $0xa7] sm:$0xff]
        %v1737 = vld [vmem:[%s356 + $0xaf] sm:$0xff]
        %v1738 = vld [vmem:[%s356 + $0xb7] sm:$0xff]
        %v1739 = vld [vmem:[%s356 + $0xbf] sm:$0xff]
        %v1740 = vld [vmem:[%s356 + $0xc7] sm:$0xff]
        %v1741 = vld [vmem:[%s356 + $0xcf] sm:$0xff]
        %v1742 = vld [vmem:[%s356 + $0xd7] sm:$0xff]
        %v1743 = vld [vmem:[%s356 + $0xdf] sm:$0xff]
        %v1744 = vld [vmem:[%s356 + $0xe7] sm:$0xff]
        %v1745 = vld [vmem:[%s356 + $0xef] sm:$0xff]
        %v1746 = vld [vmem:[%s356 + $0xf7] sm:$0xff]
        %v1747 = vld [vmem:[%s356 + $0xff] sm:$0xff]
        %v1748 = vld [vmem:[%s356 + $0x107] sm:$0xff]
        %s1749 = scalar_lea.vmem %s1, 6
        %v1750 = vld [vmem:[%s1749] sm:$0x1]
        %1752 = vset.pattern.permute.xlu0 0
        %1753 = vperm.xlu0 %1752, %v1721
        %v1754 = vpop.permute.xlu0 %1753
        %1757 = vset.pattern.permute.xlu0 0
        %1758 = vperm.xlu0 %1757, %v1722
        %v1759 = vpop.permute.xlu0 %1758
        %1762 = vset.pattern.permute.xlu0 0
        %1763 = vperm.xlu0 %1762, %v1723
        %v1764 = vpop.permute.xlu0 %1763
        %1767 = vset.pattern.permute.xlu0 0
        %1768 = vperm.xlu0 %1767, %v1724
        %v1769 = vpop.permute.xlu0 %1768
        %1772 = vset.pattern.permute.xlu0 0
        %1773 = vperm.xlu0 %1772, %v1725
        %v1774 = vpop.permute.xlu0 %1773
        %1777 = vset.pattern.permute.xlu0 0
        %1778 = vperm.xlu0 %1777, %v1726
        %v1779 = vpop.permute.xlu0 %1778
        %1782 = vset.pattern.permute.xlu0 0
        %1783 = vperm.xlu0 %1782, %v1727
        %v1784 = vpop.permute.xlu0 %1783
        %1787 = vset.pattern.permute.xlu0 0
        %1788 = vperm.xlu0 %1787, %v1728
        %v1789 = vpop.permute.xlu0 %1788
        %1792 = vset.pattern.permute.xlu0 0
        %1793 = vperm.xlu0 %1792, %v1729
        %v1794 = vpop.permute.xlu0 %1793
        %1797 = vset.pattern.permute.xlu0 0
        %1798 = vperm.xlu0 %1797, %v1730
        %v1799 = vpop.permute.xlu0 %1798
        %1802 = vset.pattern.permute.xlu0 0
        %1803 = vperm.xlu0 %1802, %v1731
        %v1804 = vpop.permute.xlu0 %1803
        %1807 = vset.pattern.permute.xlu0 0
        %1808 = vperm.xlu0 %1807, %v1732
        %v1809 = vpop.permute.xlu0 %1808
        %1812 = vset.pattern.permute.xlu0 0
        %1813 = vperm.xlu0 %1812, %v1733
        %v1814 = vpop.permute.xlu0 %1813
        %1817 = vset.pattern.permute.xlu0 0
        %1818 = vperm.xlu0 %1817, %v1734
        %v1819 = vpop.permute.xlu0 %1818
        %1822 = vset.pattern.permute.xlu0 0
        %1823 = vperm.xlu0 %1822, %v1735
        %v1824 = vpop.permute.xlu0 %1823
        %1827 = vset.pattern.permute.xlu0 0
        %1828 = vperm.xlu0 %1827, %v1736
        %v1829 = vpop.permute.xlu0 %1828
        %1832 = vset.pattern.permute.xlu0 0
        %1833 = vperm.xlu0 %1832, %v1737
        %v1834 = vpop.permute.xlu0 %1833
        %1837 = vset.pattern.permute.xlu0 0
        %1838 = vperm.xlu0 %1837, %v1738
        %v1839 = vpop.permute.xlu0 %1838
        %1842 = vset.pattern.permute.xlu0 0
        %1843 = vperm.xlu0 %1842, %v1739
        %v1844 = vpop.permute.xlu0 %1843
        %1847 = vset.pattern.permute.xlu0 0
        %1848 = vperm.xlu0 %1847, %v1740
        %v1849 = vpop.permute.xlu0 %1848
        %1852 = vset.pattern.permute.xlu0 0
        %1853 = vperm.xlu0 %1852, %v1741
        %v1854 = vpop.permute.xlu0 %1853
        %1857 = vset.pattern.permute.xlu0 0
        %1858 = vperm.xlu0 %1857, %v1742
        %v1859 = vpop.permute.xlu0 %1858
        %1862 = vset.pattern.permute.xlu0 0
        %1863 = vperm.xlu0 %1862, %v1743
        %v1864 = vpop.permute.xlu0 %1863
        %1867 = vset.pattern.permute.xlu0 0
        %1868 = vperm.xlu0 %1867, %v1744
        %v1869 = vpop.permute.xlu0 %1868
        %1872 = vset.pattern.permute.xlu0 0
        %1873 = vperm.xlu0 %1872, %v1745
        %v1874 = vpop.permute.xlu0 %1873
        %1877 = vset.pattern.permute.xlu0 0
        %1878 = vperm.xlu0 %1877, %v1746
        %v1879 = vpop.permute.xlu0 %1878
        %1882 = vset.pattern.permute.xlu0 0
        %1883 = vperm.xlu0 %1882, %v1747
        %v1884 = vpop.permute.xlu0 %1883
        %1887 = vset.pattern.permute.xlu0 0
        %1888 = vperm.xlu0 %1887, %v1748
        %v1889 = vpop.permute.xlu0 %1888
        %v1892 = vlaneseq
        %v1893 = vshrl.u32 %v1892, 7
        %v1894 = vsub.s32 0, %v1893
        %v1895 = vrot.slane %v1750, %v1894
        %v1897 = vmul.f32 %v1754, %v1895
        %v1898 = vmul.f32 %v1759, %v1895
        %v1899 = vmul.f32 %v1764, %v1895
        %v1900 = vmul.f32 %v1769, %v1895
        %v1901 = vmul.f32 %v1774, %v1895
        %v1902 = vmul.f32 %v1779, %v1895
        %v1903 = vmul.f32 %v1784, %v1895
        %v1904 = vmul.f32 %v1789, %v1895
        %v1905 = vmul.f32 %v1794, %v1895
        %v1906 = vmul.f32 %v1799, %v1895
        %v1907 = vmul.f32 %v1804, %v1895
        %v1908 = vmul.f32 %v1809, %v1895
        %v1909 = vmul.f32 %v1814, %v1895
        %v1910 = vmul.f32 %v1819, %v1895
        %v1911 = vmul.f32 %v1824, %v1895
        %v1912 = vmul.f32 %v1829, %v1895
        %v1913 = vmul.f32 %v1834, %v1895
        %v1914 = vmul.f32 %v1839, %v1895
        %v1915 = vmul.f32 %v1844, %v1895
        %v1916 = vmul.f32 %v1849, %v1895
        %v1917 = vmul.f32 %v1854, %v1895
        %v1918 = vmul.f32 %v1859, %v1895
        %v1919 = vmul.f32 %v1864, %v1895
        %v1920 = vmul.f32 %v1869, %v1895
        %v1921 = vmul.f32 %v1874, %v1895
        %v1922 = vmul.f32 %v1879, %v1895
        %v1923 = vmul.f32 %v1884, %v1895
        %v1924 = vmul.f32 %v1889, %v1895
        %v1925 = vadd.f32 %v1693, %v1897
        %v1926 = vadd.f32 %v1694, %v1898
        %v1927 = vadd.f32 %v1695, %v1899
        %v1928 = vadd.f32 %v1696, %v1900
        %v1929 = vadd.f32 %v1697, %v1901
        %v1930 = vadd.f32 %v1698, %v1902
        %v1931 = vadd.f32 %v1699, %v1903
        %v1932 = vadd.f32 %v1700, %v1904
        %v1933 = vadd.f32 %v1701, %v1905
        %v1934 = vadd.f32 %v1702, %v1906
        %v1935 = vadd.f32 %v1703, %v1907
        %v1936 = vadd.f32 %v1704, %v1908
        %v1937 = vadd.f32 %v1705, %v1909
        %v1938 = vadd.f32 %v1706, %v1910
        %v1939 = vadd.f32 %v1707, %v1911
        %v1940 = vadd.f32 %v1708, %v1912
        %v1941 = vadd.f32 %v1709, %v1913
        %v1942 = vadd.f32 %v1710, %v1914
        %v1943 = vadd.f32 %v1711, %v1915
        %v1944 = vadd.f32 %v1712, %v1916
        %v1945 = vadd.f32 %v1713, %v1917
        %v1946 = vadd.f32 %v1714, %v1918
        %v1947 = vadd.f32 %v1715, %v1919
        %v1948 = vadd.f32 %v1716, %v1920
        %v1949 = vadd.f32 %v1717, %v1921
        %v1950 = vadd.f32 %v1718, %v1922
        %v1951 = vadd.f32 %v1719, %v1923
        %v1952 = vadd.f32 %v1720, %v1924
        %v1953 = vld [vmem:[%s356 + $0x30] sm:$0xff]
        %v1954 = vld [vmem:[%s356 + $0x38] sm:$0xff]
        %v1955 = vld [vmem:[%s356 + $0x40] sm:$0xff]
        %v1956 = vld [vmem:[%s356 + $0x48] sm:$0xff]
        %v1957 = vld [vmem:[%s356 + $0x50] sm:$0xff]
        %v1958 = vld [vmem:[%s356 + $0x58] sm:$0xff]
        %v1959 = vld [vmem:[%s356 + $0x60] sm:$0xff]
        %v1960 = vld [vmem:[%s356 + $0x68] sm:$0xff]
        %v1961 = vld [vmem:[%s356 + $0x70] sm:$0xff]
        %v1962 = vld [vmem:[%s356 + $0x78] sm:$0xff]
        %v1963 = vld [vmem:[%s356 + $0x80] sm:$0xff]
        %v1964 = vld [vmem:[%s356 + $0x88] sm:$0xff]
        %v1965 = vld [vmem:[%s356 + $0x90] sm:$0xff]
        %v1966 = vld [vmem:[%s356 + $0x98] sm:$0xff]
        %v1967 = vld [vmem:[%s356 + $0xa0] sm:$0xff]
        %v1968 = vld [vmem:[%s356 + $0xa8] sm:$0xff]
        %v1969 = vld [vmem:[%s356 + $0xb0] sm:$0xff]
        %v1970 = vld [vmem:[%s356 + $0xb8] sm:$0xff]
        %v1971 = vld [vmem:[%s356 + $0xc0] sm:$0xff]
        %v1972 = vld [vmem:[%s356 + $0xc8] sm:$0xff]
        %v1973 = vld [vmem:[%s356 + $0xd0] sm:$0xff]
        %v1974 = vld [vmem:[%s356 + $0xd8] sm:$0xff]
        %v1975 = vld [vmem:[%s356 + $0xe0] sm:$0xff]
        %v1976 = vld [vmem:[%s356 + $0xe8] sm:$0xff]
        %v1977 = vld [vmem:[%s356 + $0xf0] sm:$0xff]
        %v1978 = vld [vmem:[%s356 + $0xf8] sm:$0xff]
        %v1979 = vld [vmem:[%s356 + $0x100] sm:$0xff]
        %v1980 = vld [vmem:[%s356 + $0x108] sm:$0xff]
        %s1981 = scalar_lea.vmem %s1, 7
        %v1982 = vld [vmem:[%s1981] sm:$0x1]
        %1984 = vset.pattern.permute.xlu0 0
        %1985 = vperm.xlu0 %1984, %v1953
        %v1986 = vpop.permute.xlu0 %1985
        %1989 = vset.pattern.permute.xlu0 0
        %1990 = vperm.xlu0 %1989, %v1954
        %v1991 = vpop.permute.xlu0 %1990
        %1994 = vset.pattern.permute.xlu0 0
        %1995 = vperm.xlu0 %1994, %v1955
        %v1996 = vpop.permute.xlu0 %1995
        %1999 = vset.pattern.permute.xlu0 0
        %2000 = vperm.xlu0 %1999, %v1956
        %v2001 = vpop.permute.xlu0 %2000
        %2004 = vset.pattern.permute.xlu0 0
        %2005 = vperm.xlu0 %2004, %v1957
        %v2006 = vpop.permute.xlu0 %2005
        %2009 = vset.pattern.permute.xlu0 0
        %2010 = vperm.xlu0 %2009, %v1958
        %v2011 = vpop.permute.xlu0 %2010
        %2014 = vset.pattern.permute.xlu0 0
        %2015 = vperm.xlu0 %2014, %v1959
        %v2016 = vpop.permute.xlu0 %2015
        %2019 = vset.pattern.permute.xlu0 0
        %2020 = vperm.xlu0 %2019, %v1960
        %v2021 = vpop.permute.xlu0 %2020
        %2024 = vset.pattern.permute.xlu0 0
        %2025 = vperm.xlu0 %2024, %v1961
        %v2026 = vpop.permute.xlu0 %2025
        %2029 = vset.pattern.permute.xlu0 0
        %2030 = vperm.xlu0 %2029, %v1962
        %v2031 = vpop.permute.xlu0 %2030
        %2034 = vset.pattern.permute.xlu0 0
        %2035 = vperm.xlu0 %2034, %v1963
        %v2036 = vpop.permute.xlu0 %2035
        %2039 = vset.pattern.permute.xlu0 0
        %2040 = vperm.xlu0 %2039, %v1964
        %v2041 = vpop.permute.xlu0 %2040
        %2044 = vset.pattern.permute.xlu0 0
        %2045 = vperm.xlu0 %2044, %v1965
        %v2046 = vpop.permute.xlu0 %2045
        %2049 = vset.pattern.permute.xlu0 0
        %2050 = vperm.xlu0 %2049, %v1966
        %v2051 = vpop.permute.xlu0 %2050
        %2054 = vset.pattern.permute.xlu0 0
        %2055 = vperm.xlu0 %2054, %v1967
        %v2056 = vpop.permute.xlu0 %2055
        %2059 = vset.pattern.permute.xlu0 0
        %2060 = vperm.xlu0 %2059, %v1968
        %v2061 = vpop.permute.xlu0 %2060
        %2064 = vset.pattern.permute.xlu0 0
        %2065 = vperm.xlu0 %2064, %v1969
        %v2066 = vpop.permute.xlu0 %2065
        %2069 = vset.pattern.permute.xlu0 0
        %2070 = vperm.xlu0 %2069, %v1970
        %v2071 = vpop.permute.xlu0 %2070
        %2074 = vset.pattern.permute.xlu0 0
        %2075 = vperm.xlu0 %2074, %v1971
        %v2076 = vpop.permute.xlu0 %2075
        %2079 = vset.pattern.permute.xlu0 0
        %2080 = vperm.xlu0 %2079, %v1972
        %v2081 = vpop.permute.xlu0 %2080
        %2084 = vset.pattern.permute.xlu0 0
        %2085 = vperm.xlu0 %2084, %v1973
        %v2086 = vpop.permute.xlu0 %2085
        %2089 = vset.pattern.permute.xlu0 0
        %2090 = vperm.xlu0 %2089, %v1974
        %v2091 = vpop.permute.xlu0 %2090
        %2094 = vset.pattern.permute.xlu0 0
        %2095 = vperm.xlu0 %2094, %v1975
        %v2096 = vpop.permute.xlu0 %2095
        %2099 = vset.pattern.permute.xlu0 0
        %2100 = vperm.xlu0 %2099, %v1976
        %v2101 = vpop.permute.xlu0 %2100
        %2104 = vset.pattern.permute.xlu0 0
        %2105 = vperm.xlu0 %2104, %v1977
        %v2106 = vpop.permute.xlu0 %2105
        %2109 = vset.pattern.permute.xlu0 0
        %2110 = vperm.xlu0 %2109, %v1978
        %v2111 = vpop.permute.xlu0 %2110
        %2114 = vset.pattern.permute.xlu0 0
        %2115 = vperm.xlu0 %2114, %v1979
        %v2116 = vpop.permute.xlu0 %2115
        %2119 = vset.pattern.permute.xlu0 0
        %2120 = vperm.xlu0 %2119, %v1980
        %v2121 = vpop.permute.xlu0 %2120
        %v2124 = vlaneseq
        %v2125 = vshrl.u32 %v2124, 7
        %v2126 = vsub.s32 0, %v2125
        %v2127 = vrot.slane %v1982, %v2126
        %v2129 = vmul.f32 %v1986, %v2127
        %v2130 = vmul.f32 %v1991, %v2127
        %v2131 = vmul.f32 %v1996, %v2127
        %v2132 = vmul.f32 %v2001, %v2127
        %v2133 = vmul.f32 %v2006, %v2127
        %v2134 = vmul.f32 %v2011, %v2127
        %v2135 = vmul.f32 %v2016, %v2127
        %v2136 = vmul.f32 %v2021, %v2127
        %v2137 = vmul.f32 %v2026, %v2127
        %v2138 = vmul.f32 %v2031, %v2127
        %v2139 = vmul.f32 %v2036, %v2127
        %v2140 = vmul.f32 %v2041, %v2127
        %v2141 = vmul.f32 %v2046, %v2127
        %v2142 = vmul.f32 %v2051, %v2127
        %v2143 = vmul.f32 %v2056, %v2127
        %v2144 = vmul.f32 %v2061, %v2127
        %v2145 = vmul.f32 %v2066, %v2127
        %v2146 = vmul.f32 %v2071, %v2127
        %v2147 = vmul.f32 %v2076, %v2127
        %v2148 = vmul.f32 %v2081, %v2127
        %v2149 = vmul.f32 %v2086, %v2127
        %v2150 = vmul.f32 %v2091, %v2127
        %v2151 = vmul.f32 %v2096, %v2127
        %v2152 = vmul.f32 %v2101, %v2127
        %v2153 = vmul.f32 %v2106, %v2127
        %v2154 = vmul.f32 %v2111, %v2127
        %v2155 = vmul.f32 %v2116, %v2127
        %v2156 = vmul.f32 %v2121, %v2127
        %v2157 = vadd.f32 %v1925, %v2129
        %v2158 = vadd.f32 %v1926, %v2130
        %v2159 = vadd.f32 %v1927, %v2131
        %v2160 = vadd.f32 %v1928, %v2132
        %v2161 = vadd.f32 %v1929, %v2133
        %v2162 = vadd.f32 %v1930, %v2134
        %v2163 = vadd.f32 %v1931, %v2135
        %v2164 = vadd.f32 %v1932, %v2136
        %v2165 = vadd.f32 %v1933, %v2137
        %v2166 = vadd.f32 %v1934, %v2138
        %v2167 = vadd.f32 %v1935, %v2139
        %v2168 = vadd.f32 %v1936, %v2140
        %v2169 = vadd.f32 %v1937, %v2141
        %v2170 = vadd.f32 %v1938, %v2142
        %v2171 = vadd.f32 %v1939, %v2143
        %v2172 = vadd.f32 %v1940, %v2144
        %v2173 = vadd.f32 %v1941, %v2145
        %v2174 = vadd.f32 %v1942, %v2146
        %v2175 = vadd.f32 %v1943, %v2147
        %v2176 = vadd.f32 %v1944, %v2148
        %v2177 = vadd.f32 %v1945, %v2149
        %v2178 = vadd.f32 %v1946, %v2150
        %v2179 = vadd.f32 %v1947, %v2151
        %v2180 = vadd.f32 %v1948, %v2152
        %v2181 = vadd.f32 %v1949, %v2153
        %v2182 = vadd.f32 %v1950, %v2154
        %v2183 = vadd.f32 %v1951, %v2155
        %v2184 = vadd.f32 %v1952, %v2156
        %v2185 = vld [vmem:[%s356 + $0x31] sm:$0xff]
        %v2186 = vld [vmem:[%s356 + $0x39] sm:$0xff]
        %v2187 = vld [vmem:[%s356 + $0x41] sm:$0xff]
        %v2188 = vld [vmem:[%s356 + $0x49] sm:$0xff]
        %v2189 = vld [vmem:[%s356 + $0x51] sm:$0xff]
        %v2190 = vld [vmem:[%s356 + $0x59] sm:$0xff]
        %v2191 = vld [vmem:[%s356 + $0x61] sm:$0xff]
        %v2192 = vld [vmem:[%s356 + $0x69] sm:$0xff]
        %v2193 = vld [vmem:[%s356 + $0x71] sm:$0xff]
        %v2194 = vld [vmem:[%s356 + $0x79] sm:$0xff]
        %v2195 = vld [vmem:[%s356 + $0x81] sm:$0xff]
        %v2196 = vld [vmem:[%s356 + $0x89] sm:$0xff]
        %v2197 = vld [vmem:[%s356 + $0x91] sm:$0xff]
        %v2198 = vld [vmem:[%s356 + $0x99] sm:$0xff]
        %v2199 = vld [vmem:[%s356 + $0xa1] sm:$0xff]
        %v2200 = vld [vmem:[%s356 + $0xa9] sm:$0xff]
        %v2201 = vld [vmem:[%s356 + $0xb1] sm:$0xff]
        %v2202 = vld [vmem:[%s356 + $0xb9] sm:$0xff]
        %v2203 = vld [vmem:[%s356 + $0xc1] sm:$0xff]
        %v2204 = vld [vmem:[%s356 + $0xc9] sm:$0xff]
        %v2205 = vld [vmem:[%s356 + $0xd1] sm:$0xff]
        %v2206 = vld [vmem:[%s356 + $0xd9] sm:$0xff]
        %v2207 = vld [vmem:[%s356 + $0xe1] sm:$0xff]
        %v2208 = vld [vmem:[%s356 + $0xe9] sm:$0xff]
        %v2209 = vld [vmem:[%s356 + $0xf1] sm:$0xff]
        %v2210 = vld [vmem:[%s356 + $0xf9] sm:$0xff]
        %v2211 = vld [vmem:[%s356 + $0x101] sm:$0xff]
        %v2212 = vld [vmem:[%s356 + $0x109] sm:$0xff]
        %s2213 = scalar_lea.vmem %s1, 8
        %v2214 = vld [vmem:[%s2213] sm:$0x1]
        %2216 = vset.pattern.permute.xlu0 0
        %2217 = vperm.xlu0 %2216, %v2185
        %v2218 = vpop.permute.xlu0 %2217
        %2221 = vset.pattern.permute.xlu0 0
        %2222 = vperm.xlu0 %2221, %v2186
        %v2223 = vpop.permute.xlu0 %2222
        %2226 = vset.pattern.permute.xlu0 0
        %2227 = vperm.xlu0 %2226, %v2187
        %v2228 = vpop.permute.xlu0 %2227
        %2231 = vset.pattern.permute.xlu0 0
        %2232 = vperm.xlu0 %2231, %v2188
        %v2233 = vpop.permute.xlu0 %2232
        %2236 = vset.pattern.permute.xlu0 0
        %2237 = vperm.xlu0 %2236, %v2189
        %v2238 = vpop.permute.xlu0 %2237
        %2241 = vset.pattern.permute.xlu0 0
        %2242 = vperm.xlu0 %2241, %v2190
        %v2243 = vpop.permute.xlu0 %2242
        %2246 = vset.pattern.permute.xlu0 0
        %2247 = vperm.xlu0 %2246, %v2191
        %v2248 = vpop.permute.xlu0 %2247
        %2251 = vset.pattern.permute.xlu0 0
        %2252 = vperm.xlu0 %2251, %v2192
        %v2253 = vpop.permute.xlu0 %2252
        %2256 = vset.pattern.permute.xlu0 0
        %2257 = vperm.xlu0 %2256, %v2193
        %v2258 = vpop.permute.xlu0 %2257
        %2261 = vset.pattern.permute.xlu0 0
        %2262 = vperm.xlu0 %2261, %v2194
        %v2263 = vpop.permute.xlu0 %2262
        %2266 = vset.pattern.permute.xlu0 0
        %2267 = vperm.xlu0 %2266, %v2195
        %v2268 = vpop.permute.xlu0 %2267
        %2271 = vset.pattern.permute.xlu0 0
        %2272 = vperm.xlu0 %2271, %v2196
        %v2273 = vpop.permute.xlu0 %2272
        %2276 = vset.pattern.permute.xlu0 0
        %2277 = vperm.xlu0 %2276, %v2197
        %v2278 = vpop.permute.xlu0 %2277
        %2281 = vset.pattern.permute.xlu0 0
        %2282 = vperm.xlu0 %2281, %v2198
        %v2283 = vpop.permute.xlu0 %2282
        %2286 = vset.pattern.permute.xlu0 0
        %2287 = vperm.xlu0 %2286, %v2199
        %v2288 = vpop.permute.xlu0 %2287
        %2291 = vset.pattern.permute.xlu0 0
        %2292 = vperm.xlu0 %2291, %v2200
        %v2293 = vpop.permute.xlu0 %2292
        %2296 = vset.pattern.permute.xlu0 0
        %2297 = vperm.xlu0 %2296, %v2201
        %v2298 = vpop.permute.xlu0 %2297
        %2301 = vset.pattern.permute.xlu0 0
        %2302 = vperm.xlu0 %2301, %v2202
        %v2303 = vpop.permute.xlu0 %2302
        %2306 = vset.pattern.permute.xlu0 0
        %2307 = vperm.xlu0 %2306, %v2203
        %v2308 = vpop.permute.xlu0 %2307
        %2311 = vset.pattern.permute.xlu0 0
        %2312 = vperm.xlu0 %2311, %v2204
        %v2313 = vpop.permute.xlu0 %2312
        %2316 = vset.pattern.permute.xlu0 0
        %2317 = vperm.xlu0 %2316, %v2205
        %v2318 = vpop.permute.xlu0 %2317
        %2321 = vset.pattern.permute.xlu0 0
        %2322 = vperm.xlu0 %2321, %v2206
        %v2323 = vpop.permute.xlu0 %2322
        %2326 = vset.pattern.permute.xlu0 0
        %2327 = vperm.xlu0 %2326, %v2207
        %v2328 = vpop.permute.xlu0 %2327
        %2331 = vset.pattern.permute.xlu0 0
        %2332 = vperm.xlu0 %2331, %v2208
        %v2333 = vpop.permute.xlu0 %2332
        %2336 = vset.pattern.permute.xlu0 0
        %2337 = vperm.xlu0 %2336, %v2209
        %v2338 = vpop.permute.xlu0 %2337
        %2341 = vset.pattern.permute.xlu0 0
        %2342 = vperm.xlu0 %2341, %v2210
        %v2343 = vpop.permute.xlu0 %2342
        %2346 = vset.pattern.permute.xlu0 0
        %2347 = vperm.xlu0 %2346, %v2211
        %v2348 = vpop.permute.xlu0 %2347
        %2351 = vset.pattern.permute.xlu0 0
        %2352 = vperm.xlu0 %2351, %v2212
        %v2353 = vpop.permute.xlu0 %2352
        %v2356 = vlaneseq
        %v2357 = vshrl.u32 %v2356, 7
        %v2358 = vsub.s32 0, %v2357
        %v2359 = vrot.slane %v2214, %v2358
        %v2361 = vmul.f32 %v2218, %v2359
        %v2362 = vmul.f32 %v2223, %v2359
        %v2363 = vmul.f32 %v2228, %v2359
        %v2364 = vmul.f32 %v2233, %v2359
        %v2365 = vmul.f32 %v2238, %v2359
        %v2366 = vmul.f32 %v2243, %v2359
        %v2367 = vmul.f32 %v2248, %v2359
        %v2368 = vmul.f32 %v2253, %v2359
        %v2369 = vmul.f32 %v2258, %v2359
        %v2370 = vmul.f32 %v2263, %v2359
        %v2371 = vmul.f32 %v2268, %v2359
        %v2372 = vmul.f32 %v2273, %v2359
        %v2373 = vmul.f32 %v2278, %v2359
        %v2374 = vmul.f32 %v2283, %v2359
        %v2375 = vmul.f32 %v2288, %v2359
        %v2376 = vmul.f32 %v2293, %v2359
        %v2377 = vmul.f32 %v2298, %v2359
        %v2378 = vmul.f32 %v2303, %v2359
        %v2379 = vmul.f32 %v2308, %v2359
        %v2380 = vmul.f32 %v2313, %v2359
        %v2381 = vmul.f32 %v2318, %v2359
        %v2382 = vmul.f32 %v2323, %v2359
        %v2383 = vmul.f32 %v2328, %v2359
        %v2384 = vmul.f32 %v2333, %v2359
        %v2385 = vmul.f32 %v2338, %v2359
        %v2386 = vmul.f32 %v2343, %v2359
        %v2387 = vmul.f32 %v2348, %v2359
        %v2388 = vmul.f32 %v2353, %v2359
        %v2389 = vadd.f32 %v2157, %v2361
        %v2390 = vadd.f32 %v2158, %v2362
        %v2391 = vadd.f32 %v2159, %v2363
        %v2392 = vadd.f32 %v2160, %v2364
        %v2393 = vadd.f32 %v2161, %v2365
        %v2394 = vadd.f32 %v2162, %v2366
        %v2395 = vadd.f32 %v2163, %v2367
        %v2396 = vadd.f32 %v2164, %v2368
        %v2397 = vadd.f32 %v2165, %v2369
        %v2398 = vadd.f32 %v2166, %v2370
        %v2399 = vadd.f32 %v2167, %v2371
        %v2400 = vadd.f32 %v2168, %v2372
        %v2401 = vadd.f32 %v2169, %v2373
        %v2402 = vadd.f32 %v2170, %v2374
        %v2403 = vadd.f32 %v2171, %v2375
        %v2404 = vadd.f32 %v2172, %v2376
        %v2405 = vadd.f32 %v2173, %v2377
        %v2406 = vadd.f32 %v2174, %v2378
        %v2407 = vadd.f32 %v2175, %v2379
        %v2408 = vadd.f32 %v2176, %v2380
        %v2409 = vadd.f32 %v2177, %v2381
        %v2410 = vadd.f32 %v2178, %v2382
        %v2411 = vadd.f32 %v2179, %v2383
        %v2412 = vadd.f32 %v2180, %v2384
        %v2413 = vadd.f32 %v2181, %v2385
        %v2414 = vadd.f32 %v2182, %v2386
        %v2415 = vadd.f32 %v2183, %v2387
        %v2416 = vadd.f32 %v2184, %v2388
        %v2417 = vld [vmem:[%s2] sm:$0x1]
        %v2419 = vlaneseq
        %v2420 = vshrl.u32 %v2419, 7
        %v2421 = vsub.s32 0, %v2420
        %v2422 = vrot.slane %v2417, %v2421
        %v2424 = vadd.f32 %v2389, %v2422
        %v2425 = vadd.f32 %v2390, %v2422
        %v2426 = vadd.f32 %v2391, %v2422
        %v2427 = vadd.f32 %v2392, %v2422
        %v2428 = vadd.f32 %v2393, %v2422
        %v2429 = vadd.f32 %v2394, %v2422
        %v2430 = vadd.f32 %v2395, %v2422
        %v2431 = vadd.f32 %v2396, %v2422
        %v2432 = vadd.f32 %v2397, %v2422
        %v2433 = vadd.f32 %v2398, %v2422
        %v2434 = vadd.f32 %v2399, %v2422
        %v2435 = vadd.f32 %v2400, %v2422
        %v2436 = vadd.f32 %v2401, %v2422
        %v2437 = vadd.f32 %v2402, %v2422
        %v2438 = vadd.f32 %v2403, %v2422
        %v2439 = vadd.f32 %v2404, %v2422
        %v2440 = vadd.f32 %v2405, %v2422
        %v2441 = vadd.f32 %v2406, %v2422
        %v2442 = vadd.f32 %v2407, %v2422
        %v2443 = vadd.f32 %v2408, %v2422
        %v2444 = vadd.f32 %v2409, %v2422
        %v2445 = vadd.f32 %v2410, %v2422
        %v2446 = vadd.f32 %v2411, %v2422
        %v2447 = vadd.f32 %v2412, %v2422
        %v2448 = vadd.f32 %v2413, %v2422
        %v2449 = vadd.f32 %v2414, %v2422
        %v2450 = vadd.f32 %v2415, %v2422
        %v2451 = vadd.f32 %v2416, %v2422
        %v2452 = vmax.f32 %v2424, 0.0
        %v2453 = vmax.f32 %v2425, 0.0
        %v2454 = vmax.f32 %v2426, 0.0
        %v2455 = vmax.f32 %v2427, 0.0
        %v2456 = vmax.f32 %v2428, 0.0
        %v2457 = vmax.f32 %v2429, 0.0
        %v2458 = vmax.f32 %v2430, 0.0
        %v2459 = vmax.f32 %v2431, 0.0
        %v2460 = vmax.f32 %v2432, 0.0
        %v2461 = vmax.f32 %v2433, 0.0
        %v2462 = vmax.f32 %v2434, 0.0
        %v2463 = vmax.f32 %v2435, 0.0
        %v2464 = vmax.f32 %v2436, 0.0
        %v2465 = vmax.f32 %v2437, 0.0
        %v2466 = vmax.f32 %v2438, 0.0
        %v2467 = vmax.f32 %v2439, 0.0
        %v2468 = vmax.f32 %v2440, 0.0
        %v2469 = vmax.f32 %v2441, 0.0
        %v2470 = vmax.f32 %v2442, 0.0
        %v2471 = vmax.f32 %v2443, 0.0
        %v2472 = vmax.f32 %v2444, 0.0
        %v2473 = vmax.f32 %v2445, 0.0
        %v2474 = vmax.f32 %v2446, 0.0
        %v2475 = vmax.f32 %v2447, 0.0
        %v2476 = vmax.f32 %v2448, 0.0
        %v2477 = vmax.f32 %v2449, 0.0
        %v2478 = vmax.f32 %v2450, 0.0
        %v2479 = vmax.f32 %v2451, 0.0
        %v2480 = vld [vmem:[%s3] sm:$0xff]
        %v2481 = vld [vmem:[%s3 + $0x8] sm:$0xff]
        %v2482 = vld [vmem:[%s3 + $0x10] sm:$0xff]
        %v2483 = vld [vmem:[%s3 + $0x18] sm:$0xff]
        %v2484 = vld [vmem:[%s3 + $0x20] sm:$0xff]
        %v2485 = vld [vmem:[%s3 + $0x28] sm:$0xff]
        %v2486 = vld [vmem:[%s3 + $0x30] sm:$0xff]
        %v2487 = vld [vmem:[%s3 + $0x38] sm:$0xff]
        %v2488 = vld [vmem:[%s3 + $0x40] sm:$0xff]
        %v2489 = vld [vmem:[%s3 + $0x48] sm:$0xff]
        %v2490 = vld [vmem:[%s3 + $0x50] sm:$0xff]
        %v2491 = vld [vmem:[%s3 + $0x58] sm:$0xff]
        %v2492 = vld [vmem:[%s3 + $0x60] sm:$0xff]
        %v2493 = vld [vmem:[%s3 + $0x68] sm:$0xff]
        %v2494 = vld [vmem:[%s3 + $0x70] sm:$0xff]
        %v2495 = vld [vmem:[%s3 + $0x78] sm:$0xff]
        %v2496 = vld [vmem:[%s3 + $0x80] sm:$0xff]
        %v2497 = vld [vmem:[%s3 + $0x88] sm:$0xff]
        %v2498 = vld [vmem:[%s3 + $0x90] sm:$0xff]
        %v2499 = vld [vmem:[%s3 + $0x98] sm:$0xff]
        %v2500 = vld [vmem:[%s3 + $0xa0] sm:$0xff]
        %v2501 = vld [vmem:[%s3 + $0xa8] sm:$0xff]
        %v2502 = vld [vmem:[%s3 + $0xb0] sm:$0xff]
        %v2503 = vld [vmem:[%s3 + $0xb8] sm:$0xff]
        %v2504 = vld [vmem:[%s3 + $0xc0] sm:$0x7]
        %v2505 = vld [vmem:[%s3 + $0xc8] sm:$0x7]
        %vm2506 = vcmask 785408
        %v2508 = vsel %vm2506, %v2481, 0
        %v2511 = vsel %vm2506, %v2483, 0
        %v2514 = vsel %vm2506, %v2485, 0
        %v2517 = vsel %vm2506, %v2487, 0
        %v2520 = vsel %vm2506, %v2489, 0
        %v2523 = vsel %vm2506, %v2491, 0
        %v2526 = vsel %vm2506, %v2493, 0
        %v2529 = vsel %vm2506, %v2495, 0
        %v2532 = vsel %vm2506, %v2497, 0
        %v2535 = vsel %vm2506, %v2499, 0
        %v2538 = vsel %vm2506, %v2501, 0
        %v2541 = vsel %vm2506, %v2503, 0
        %v2544 = vsel %vm2506, %v2505, 0
        %2546 = vmatprep.subr.mxu0 0.0
        %2547 = vmatpush1.msra.mxu0 %v2452
        %2548 = vmatprep.subr.mxu0 0.0
        %2549 = vmatpush1.msra.mxu0 %v2453
        %2550 = vmatprep.subr.mxu0 0.0
        %2551 = vmatpush1.msra.mxu0 %v2454
        %2552 = vmatprep.subr.mxu0 0.0
        %2553 = vmatpush1.msra.mxu0 %v2455
        %2554 = vmatprep.subr.mxu0 0.0
        %2555 = vmatpush1.msra.mxu0 %v2456
        %2556 = vmatprep.subr.mxu0 0.0
        %2557 = vmatpush1.msra.mxu0 %v2457
        %2558 = vmatprep.subr.mxu0 0.0
        %2559 = vmatpush1.msra.mxu0 %v2458
        %2560 = vmatprep.subr.mxu0 0.0
        %2561 = vmatpush1.msra.mxu0 %v2459
        %2562 = vmatprep.subr.mxu0 0.0
        %2563 = vmatpush1.msra.mxu0 %v2460
        %2564 = vmatprep.subr.mxu0 0.0
        %2565 = vmatpush1.msra.mxu0 %v2461
        %2566 = vmatprep.subr.mxu0 0.0
        %2567 = vmatpush1.msra.mxu0 %v2462
        %2568 = vmatprep.subr.mxu0 0.0
        %2569 = vmatpush1.msra.mxu0 %v2463
        %2570 = vmatprep.subr.mxu0 0.0
        %2571 = vmatpush1.msra.mxu0 %v2464
        %2572 = vmatprep.subr.mxu0 0.0
        %2573 = vmatpush1.msra.mxu0 %v2465
        %2574 = vmatprep.subr.mxu0 0.0
        %2575 = vmatpush1.msra.mxu0 %v2466
        %2576 = vmatprep.subr.mxu0 0.0
        %2577 = vmatpush1.msra.mxu0 %v2467
        %2578 = vmatprep.subr.mxu0 0.0
        %2579 = vmatpush1.msra.mxu0 %v2468
        %2580 = vmatprep.subr.mxu0 0.0
        %2581 = vmatpush1.msra.mxu0 %v2469
        %2582 = vmatprep.subr.mxu0 0.0
        %2583 = vmatpush1.msra.mxu0 %v2470
        %2584 = vmatprep.subr.mxu0 0.0
        %2585 = vmatpush1.msra.mxu0 %v2471
        %2586 = vmatprep.subr.mxu0 0.0
        %2587 = vmatpush1.msra.mxu0 %v2472
        %2588 = vmatprep.subr.mxu0 0.0
        %2589 = vmatpush1.msra.mxu0 %v2473
        %2590 = vmatprep.subr.mxu0 0.0
        %2591 = vmatpush1.msra.mxu0 %v2474
        %2592 = vmatprep.subr.mxu0 0.0
        %2593 = vmatpush1.msra.mxu0 %v2475
        %2594 = vmatprep.subr.mxu0 0.0
        %2595 = vmatpush1.msra.mxu0 %v2476
        %2596 = vmatprep.subr.mxu0 0.0
        %2597 = vmatpush1.msra.mxu0 %v2477
        %2598 = vmatprep.subr.mxu0 0.0
        %2599 = vmatpush1.msra.mxu0 %v2478
        %2600 = vmatprep.subr.mxu0 0.0
        %2601 = vmatpush1.msra.mxu0 %v2479
        %2602 = vmatprep.subr.mxu0 0.0
        %2603 = vmatpush1.msra.mxu0 0.0
        %2604 = vmatprep.subr.mxu0 0.0
        %2605 = vmatpush1.msra.mxu0 0.0
        %2606 = vmatprep.subr.mxu0 0.0
        %2607 = vmatpush1.msra.mxu0 0.0
        %2608 = vmatprep.subr.mxu0 0.0
        %2609 = vmatpush1.msra.mxu0 0.0
        %2610 = vmatprep.mubr.f32.mxu0 %v2508
        %2611 = vmatmul.mubr.f32.gmra.mrb[0].mxu0 %v2480
        %v2612 = vpop.f32.mrb[0].mxu0
        %v2613 = vadd.f32 0.0, %v2612
        %v2614 = vpop.f32.mrb[0].mxu0
        %2615 = vmatprep.mubr.f32.mxu0 %v2511
        %2616 = vmatmul.mubr.f32.gmra.mrb[0].mxu0 %v2482
        %v2617 = vpop.f32.mrb[0].mxu0
        %v2618 = vadd.f32 0.0, %v2617
        %v2619 = vpop.f32.mrb[0].mxu0
        %2620 = vmatprep.mubr.f32.mxu0 %v2514
        %2621 = vmatmul.mubr.f32.gmra.mrb[0].mxu0 %v2484
        %v2622 = vpop.f32.mrb[0].mxu0
        %v2623 = vadd.f32 0.0, %v2622
        %v2624 = vpop.f32.mrb[0].mxu0
        %2625 = vmatprep.mubr.f32.mxu0 %v2517
        %2626 = vmatmul.mubr.f32.gmra.mrb[0].mxu0 %v2486
        %v2627 = vpop.f32.mrb[0].mxu0
        %v2628 = vadd.f32 0.0, %v2627
        %v2629 = vpop.f32.mrb[0].mxu0
        %2630 = vmatprep.mubr.f32.mxu0 %v2520
        %2631 = vmatmul.mubr.f32.gmra.mrb[0].mxu0 %v2488
        %v2632 = vpop.f32.mrb[0].mxu0
        %v2633 = vadd.f32 0.0, %v2632
        %v2634 = vpop.f32.mrb[0].mxu0
        %2635 = vmatprep.mubr.f32.mxu0 %v2523
        %2636 = vmatmul.mubr.f32.gmra.mrb[0].mxu0 %v2490
        %v2637 = vpop.f32.mrb[0].mxu0
        %v2638 = vadd.f32 0.0, %v2637
        %v2639 = vpop.f32.mrb[0].mxu0
        %2640 = vmatprep.mubr.f32.mxu0 %v2526
        %2641 = vmatmul.mubr.f32.gmra.mrb[0].mxu0 %v2492
        %v2642 = vpop.f32.mrb[0].mxu0
        %v2643 = vadd.f32 0.0, %v2642
        %v2644 = vpop.f32.mrb[0].mxu0
        %2645 = vmatprep.mubr.f32.mxu0 %v2529
        %2646 = vmatmul.mubr.f32.gmra.mrb[0].mxu0 %v2494
        %v2647 = vpop.f32.mrb[0].mxu0
        %v2648 = vadd.f32 0.0, %v2647
        %v2649 = vpop.f32.mrb[0].mxu0
        %2650 = vmatprep.mubr.f32.mxu0 %v2532
        %2651 = vmatmul.mubr.f32.gmra.mrb[0].mxu0 %v2496
        %v2652 = vpop.f32.mrb[0].mxu0
        %v2653 = vadd.f32 0.0, %v2652
        %v2654 = vpop.f32.mrb[0].mxu0
        %2655 = vmatprep.mubr.f32.mxu0 %v2535
        %2656 = vmatmul.mubr.f32.gmra.mrb[0].mxu0 %v2498
        %v2657 = vpop.f32.mrb[0].mxu0
        %v2658 = vadd.f32 0.0, %v2657
        %v2659 = vpop.f32.mrb[0].mxu0
        %2660 = vmatprep.mubr.f32.mxu0 %v2538
        %2661 = vmatmul.mubr.f32.gmra.mrb[0].mxu0 %v2500
        %v2662 = vpop.f32.mrb[0].mxu0
        %v2663 = vadd.f32 0.0, %v2662
        %v2664 = vpop.f32.mrb[0].mxu0
        %2665 = vmatprep.mubr.f32.mxu0 %v2541
        %2666 = vmatmul.mubr.f32.gmra.mrb[0].mxu0 %v2502
        %v2667 = vpop.f32.mrb[0].mxu0
        %v2668 = vadd.f32 0.0, %v2667
        %v2669 = vpop.f32.mrb[0].mxu0
        %2670 = vmatprep.mubr.f32.mxu0 %v2544
        %2671 = vmatmul.mubr.f32.gmra.mrb[0].mxu0 %v2504
        %v2672 = vpop.f32.mrb[0].mxu0
        %v2673 = vadd.f32 0.0, %v2672
        %v2674 = vpop.f32.mrb[0].mxu0
        %2675 = vdwg.mxu0
        %s2676 = scalar_lea.vmem %s3, 208
        %v2677 = vld [vmem:[%s2676] sm:$0xff]
        %v2678 = vld [vmem:[%s2676 + $0x8] sm:$0xff]
        %v2679 = vld [vmem:[%s2676 + $0x10] sm:$0xff]
        %v2680 = vld [vmem:[%s2676 + $0x18] sm:$0xff]
        %v2681 = vld [vmem:[%s2676 + $0x20] sm:$0xff]
        %v2682 = vld [vmem:[%s2676 + $0x28] sm:$0xff]
        %v2683 = vld [vmem:[%s2676 + $0x30] sm:$0xff]
        %v2684 = vld [vmem:[%s2676 + $0x38] sm:$0xff]
        %v2685 = vld [vmem:[%s2676 + $0x40] sm:$0xff]
        %v2686 = vld [vmem:[%s2676 + $0x48] sm:$0xff]
        %v2687 = vld [vmem:[%s2676 + $0x50] sm:$0xff]
        %v2688 = vld [vmem:[%s2676 + $0x58] sm:$0xff]
        %v2689 = vld [vmem:[%s2676 + $0x60] sm:$0xff]
        %v2690 = vld [vmem:[%s2676 + $0x68] sm:$0xff]
        %v2691 = vld [vmem:[%s2676 + $0x70] sm:$0xff]
        %v2692 = vld [vmem:[%s2676 + $0x78] sm:$0xff]
        %v2693 = vld [vmem:[%s2676 + $0x80] sm:$0xff]
        %v2694 = vld [vmem:[%s2676 + $0x88] sm:$0xff]
        %v2695 = vld [vmem:[%s2676 + $0x90] sm:$0xff]
        %v2696 = vld [vmem:[%s2676 + $0x98] sm:$0xff]
        %v2697 = vld [vmem:[%s2676 + $0xa0] sm:$0xff]
        %v2698 = vld [vmem:[%s2676 + $0xa8] sm:$0xff]
        %v2699 = vld [vmem:[%s2676 + $0xb0] sm:$0xff]
        %v2700 = vld [vmem:[%s2676 + $0xb8] sm:$0xff]
        %v2701 = vld [vmem:[%s2676 + $0xc0] sm:$0x7]
        %v2702 = vld [vmem:[%s2676 + $0xc8] sm:$0x7]
        %v2704 = vsel %vm2506, %v2678, 0
        %v2707 = vsel %vm2506, %v2680, 0
        %v2710 = vsel %vm2506, %v2682, 0
        %v2713 = vsel %vm2506, %v2684, 0
        %v2716 = vsel %vm2506, %v2686, 0
        %v2719 = vsel %vm2506, %v2688, 0
        %v2722 = vsel %vm2506, %v2690, 0
        %v2725 = vsel %vm2506, %v2692, 0
        %v2728 = vsel %vm2506, %v2694, 0
        %v2731 = vsel %vm2506, %v2696, 0
        %v2734 = vsel %vm2506, %v2698, 0
        %v2737 = vsel %vm2506, %v2700, 0
        %v2740 = vsel %vm2506, %v2702, 0
        %2742 = vmatprep.subr.mxu0 0.0
        %2743 = vmatpush1.msra.mxu0 %v2452
        %2744 = vmatprep.subr.mxu0 0.0
        %2745 = vmatpush1.msra.mxu0 %v2453
        %2746 = vmatprep.subr.mxu0 0.0
        %2747 = vmatpush1.msra.mxu0 %v2454
        %2748 = vmatprep.subr.mxu0 0.0
        %2749 = vmatpush1.msra.mxu0 %v2455
        %2750 = vmatprep.subr.mxu0 0.0
        %2751 = vmatpush1.msra.mxu0 %v2456
        %2752 = vmatprep.subr.mxu0 0.0
        %2753 = vmatpush1.msra.mxu0 %v2457
        %2754 = vmatprep.subr.mxu0 0.0
        %2755 = vmatpush1.msra.mxu0 %v2458
        %2756 = vmatprep.subr.mxu0 0.0
        %2757 = vmatpush1.msra.mxu0 %v2459
        %2758 = vmatprep.subr.mxu0 0.0
        %2759 = vmatpush1.msra.mxu0 %v2460
        %2760 = vmatprep.subr.mxu0 0.0
        %2761 = vmatpush1.msra.mxu0 %v2461
        %2762 = vmatprep.subr.mxu0 0.0
        %2763 = vmatpush1.msra.mxu0 %v2462
        %2764 = vmatprep.subr.mxu0 0.0
        %2765 = vmatpush1.msra.mxu0 %v2463
        %2766 = vmatprep.subr.mxu0 0.0
        %2767 = vmatpush1.msra.mxu0 %v2464
        %2768 = vmatprep.subr.mxu0 0.0
        %2769 = vmatpush1.msra.mxu0 %v2465
        %2770 = vmatprep.subr.mxu0 0.0
        %2771 = vmatpush1.msra.mxu0 %v2466
        %2772 = vmatprep.subr.mxu0 0.0
        %2773 = vmatpush1.msra.mxu0 %v2467
        %2774 = vmatprep.subr.mxu0 0.0
        %2775 = vmatpush1.msra.mxu0 %v2468
        %2776 = vmatprep.subr.mxu0 0.0
        %2777 = vmatpush1.msra.mxu0 %v2469
        %2778 = vmatprep.subr.mxu0 0.0
        %2779 = vmatpush1.msra.mxu0 %v2470
        %2780 = vmatprep.subr.mxu0 0.0
        %2781 = vmatpush1.msra.mxu0 %v2471
        %2782 = vmatprep.subr.mxu0 0.0
        %2783 = vmatpush1.msra.mxu0 %v2472
        %2784 = vmatprep.subr.mxu0 0.0
        %2785 = vmatpush1.msra.mxu0 %v2473
        %2786 = vmatprep.subr.mxu0 0.0
        %2787 = vmatpush1.msra.mxu0 %v2474
        %2788 = vmatprep.subr.mxu0 0.0
        %2789 = vmatpush1.msra.mxu0 %v2475
        %2790 = vmatprep.subr.mxu0 0.0
        %2791 = vmatpush1.msra.mxu0 %v2476
        %2792 = vmatprep.subr.mxu0 0.0
        %2793 = vmatpush1.msra.mxu0 %v2477
        %2794 = vmatprep.subr.mxu0 0.0
        %2795 = vmatpush1.msra.mxu0 %v2478
        %2796 = vmatprep.subr.mxu0 0.0
        %2797 = vmatpush1.msra.mxu0 %v2479
        %2798 = vmatprep.subr.mxu0 0.0
        %2799 = vmatpush1.msra.mxu0 0.0
        %2800 = vmatprep.subr.mxu0 0.0
        %2801 = vmatpush1.msra.mxu0 0.0
        %2802 = vmatprep.subr.mxu0 0.0
        %2803 = vmatpush1.msra.mxu0 0.0
        %2804 = vmatprep.subr.mxu0 0.0
        %2805 = vmatpush1.msra.mxu0 0.0
        %2806 = vmatprep.mubr.f32.mxu0 %v2704
        %2807 = vmatmul.mubr.f32.gmra.mrb[0].mxu0 %v2677
        %v2808 = vpop.f32.mrb[0].mxu0
        %v2809 = vadd.f32 0.0, %v2808
        %v2810 = vpop.f32.mrb[0].mxu0
        %2811 = vmatprep.mubr.f32.mxu0 %v2707
        %2812 = vmatmul.mubr.f32.gmra.mrb[0].mxu0 %v2679
        %v2813 = vpop.f32.mrb[0].mxu0
        %v2814 = vadd.f32 0.0, %v2813
        %v2815 = vpop.f32.mrb[0].mxu0
        %2816 = vmatprep.mubr.f32.mxu0 %v2710
        %2817 = vmatmul.mubr.f32.gmra.mrb[0].mxu0 %v2681
        %v2818 = vpop.f32.mrb[0].mxu0
        %v2819 = vadd.f32 0.0, %v2818
        %v2820 = vpop.f32.mrb[0].mxu0
        %2821 = vmatprep.mubr.f32.mxu0 %v2713
        %2822 = vmatmul.mubr.f32.gmra.mrb[0].mxu0 %v2683
        %v2823 = vpop.f32.mrb[0].mxu0
        %v2824 = vadd.f32 0.0, %v2823
        %v2825 = vpop.f32.mrb[0].mxu0
        %2826 = vmatprep.mubr.f32.mxu0 %v2716
        %2827 = vmatmul.mubr.f32.gmra.mrb[0].mxu0 %v2685
        %v2828 = vpop.f32.mrb[0].mxu0
        %v2829 = vadd.f32 0.0, %v2828
        %v2830 = vpop.f32.mrb[0].mxu0
        %2831 = vmatprep.mubr.f32.mxu0 %v2719
        %2832 = vmatmul.mubr.f32.gmra.mrb[0].mxu0 %v2687
        %v2833 = vpop.f32.mrb[0].mxu0
        %v2834 = vadd.f32 0.0, %v2833
        %v2835 = vpop.f32.mrb[0].mxu0
        %2836 = vmatprep.mubr.f32.mxu0 %v2722
        %2837 = vmatmul.mubr.f32.gmra.mrb[0].mxu0 %v2689
        %v2838 = vpop.f32.mrb[0].mxu0
        %v2839 = vadd.f32 0.0, %v2838
        %v2840 = vpop.f32.mrb[0].mxu0
        %2841 = vmatprep.mubr.f32.mxu0 %v2725
        %2842 = vmatmul.mubr.f32.gmra.mrb[0].mxu0 %v2691
        %v2843 = vpop.f32.mrb[0].mxu0
        %v2844 = vadd.f32 0.0, %v2843
        %v2845 = vpop.f32.mrb[0].mxu0
        %2846 = vmatprep.mubr.f32.mxu0 %v2728
        %2847 = vmatmul.mubr.f32.gmra.mrb[0].mxu0 %v2693
        %v2848 = vpop.f32.mrb[0].mxu0
        %v2849 = vadd.f32 0.0, %v2848
        %v2850 = vpop.f32.mrb[0].mxu0
        %2851 = vmatprep.mubr.f32.mxu0 %v2731
        %2852 = vmatmul.mubr.f32.gmra.mrb[0].mxu0 %v2695
        %v2853 = vpop.f32.mrb[0].mxu0
        %v2854 = vadd.f32 0.0, %v2853
        %v2855 = vpop.f32.mrb[0].mxu0
        %2856 = vmatprep.mubr.f32.mxu0 %v2734
        %2857 = vmatmul.mubr.f32.gmra.mrb[0].mxu0 %v2697
        %v2858 = vpop.f32.mrb[0].mxu0
        %v2859 = vadd.f32 0.0, %v2858
        %v2860 = vpop.f32.mrb[0].mxu0
        %2861 = vmatprep.mubr.f32.mxu0 %v2737
        %2862 = vmatmul.mubr.f32.gmra.mrb[0].mxu0 %v2699
        %v2863 = vpop.f32.mrb[0].mxu0
        %v2864 = vadd.f32 0.0, %v2863
        %v2865 = vpop.f32.mrb[0].mxu0
        %2866 = vmatprep.mubr.f32.mxu0 %v2740
        %2867 = vmatmul.mubr.f32.gmra.mrb[0].mxu0 %v2701
        %v2868 = vpop.f32.mrb[0].mxu0
        %v2869 = vadd.f32 0.0, %v2868
        %v2870 = vpop.f32.mrb[0].mxu0
        %2871 = vdwg.mxu0
        %v2872 = vmax.f32 %v2613, %v2809
        %v2873 = vmax.f32 %v2618, %v2814
        %v2874 = vmax.f32 %v2623, %v2819
        %v2875 = vmax.f32 %v2628, %v2824
        %v2876 = vmax.f32 %v2633, %v2829
        %v2877 = vmax.f32 %v2638, %v2834
        %v2878 = vmax.f32 %v2643, %v2839
        %v2879 = vmax.f32 %v2648, %v2844
        %v2880 = vmax.f32 %v2653, %v2849
        %v2881 = vmax.f32 %v2658, %v2854
        %v2882 = vmax.f32 %v2663, %v2859
        %v2883 = vmax.f32 %v2668, %v2864
        %v2884 = vmax.f32 %v2673, %v2869
        %s2885 = scalar_lea.vmem %s3, 416
        %v2886 = vld [vmem:[%s2885] sm:$0xff]
        %v2887 = vld [vmem:[%s2885 + $0x8] sm:$0xff]
        %v2888 = vld [vmem:[%s2885 + $0x10] sm:$0xff]
        %v2889 = vld [vmem:[%s2885 + $0x18] sm:$0xff]
        %v2890 = vld [vmem:[%s2885 + $0x20] sm:$0xff]
        %v2891 = vld [vmem:[%s2885 + $0x28] sm:$0xff]
        %v2892 = vld [vmem:[%s2885 + $0x30] sm:$0xff]
        %v2893 = vld [vmem:[%s2885 + $0x38] sm:$0xff]
        %v2894 = vld [vmem:[%s2885 + $0x40] sm:$0xff]
        %v2895 = vld [vmem:[%s2885 + $0x48] sm:$0xff]
        %v2896 = vld [vmem:[%s2885 + $0x50] sm:$0xff]
        %v2897 = vld [vmem:[%s2885 + $0x58] sm:$0xff]
        %v2898 = vld [vmem:[%s2885 + $0x60] sm:$0xff]
        %v2899 = vld [vmem:[%s2885 + $0x68] sm:$0xff]
        %v2900 = vld [vmem:[%s2885 + $0x70] sm:$0xff]
        %v2901 = vld [vmem:[%s2885 + $0x78] sm:$0xff]
        %v2902 = vld [vmem:[%s2885 + $0x80] sm:$0xff]
        %v2903 = vld [vmem:[%s2885 + $0x88] sm:$0xff]
        %v2904 = vld [vmem:[%s2885 + $0x90] sm:$0xff]
        %v2905 = vld [vmem:[%s2885 + $0x98] sm:$0xff]
        %v2906 = vld [vmem:[%s2885 + $0xa0] sm:$0xff]
        %v2907 = vld [vmem:[%s2885 + $0xa8] sm:$0xff]
        %v2908 = vld [vmem:[%s2885 + $0xb0] sm:$0xff]
        %v2909 = vld [vmem:[%s2885 + $0xb8] sm:$0xff]
        %v2910 = vld [vmem:[%s2885 + $0xc0] sm:$0x7]
        %v2911 = vld [vmem:[%s2885 + $0xc8] sm:$0x7]
        %v2913 = vsel %vm2506, %v2887, 0
        %v2916 = vsel %vm2506, %v2889, 0
        %v2919 = vsel %vm2506, %v2891, 0
        %v2922 = vsel %vm2506, %v2893, 0
        %v2925 = vsel %vm2506, %v2895, 0
        %v2928 = vsel %vm2506, %v2897, 0
        %v2931 = vsel %vm2506, %v2899, 0
        %v2934 = vsel %vm2506, %v2901, 0
        %v2937 = vsel %vm2506, %v2903, 0
        %v2940 = vsel %vm2506, %v2905, 0
        %v2943 = vsel %vm2506, %v2907, 0
        %v2946 = vsel %vm2506, %v2909, 0
        %v2949 = vsel %vm2506, %v2911, 0
        %2951 = vmatprep.subr.mxu0 0.0
        %2952 = vmatpush1.msra.mxu0 %v2452
        %2953 = vmatprep.subr.mxu0 0.0
        %2954 = vmatpush1.msra.mxu0 %v2453
        %2955 = vmatprep.subr.mxu0 0.0
        %2956 = vmatpush1.msra.mxu0 %v2454
        %2957 = vmatprep.subr.mxu0 0.0
        %2958 = vmatpush1.msra.mxu0 %v2455
        %2959 = vmatprep.subr.mxu0 0.0
        %2960 = vmatpush1.msra.mxu0 %v2456
        %2961 = vmatprep.subr.mxu0 0.0
        %2962 = vmatpush1.msra.mxu0 %v2457
        %2963 = vmatprep.subr.mxu0 0.0
        %2964 = vmatpush1.msra.mxu0 %v2458
        %2965 = vmatprep.subr.mxu0 0.0
        %2966 = vmatpush1.msra.mxu0 %v2459
        %2967 = vmatprep.subr.mxu0 0.0
        %2968 = vmatpush1.msra.mxu0 %v2460
        %2969 = vmatprep.subr.mxu0 0.0
        %2970 = vmatpush1.msra.mxu0 %v2461
        %2971 = vmatprep.subr.mxu0 0.0
        %2972 = vmatpush1.msra.mxu0 %v2462
        %2973 = vmatprep.subr.mxu0 0.0
        %2974 = vmatpush1.msra.mxu0 %v2463
        %2975 = vmatprep.subr.mxu0 0.0
        %2976 = vmatpush1.msra.mxu0 %v2464
        %2977 = vmatprep.subr.mxu0 0.0
        %2978 = vmatpush1.msra.mxu0 %v2465
        %2979 = vmatprep.subr.mxu0 0.0
        %2980 = vmatpush1.msra.mxu0 %v2466
        %2981 = vmatprep.subr.mxu0 0.0
        %2982 = vmatpush1.msra.mxu0 %v2467
        %2983 = vmatprep.subr.mxu0 0.0
        %2984 = vmatpush1.msra.mxu0 %v2468
        %2985 = vmatprep.subr.mxu0 0.0
        %2986 = vmatpush1.msra.mxu0 %v2469
        %2987 = vmatprep.subr.mxu0 0.0
        %2988 = vmatpush1.msra.mxu0 %v2470
        %2989 = vmatprep.subr.mxu0 0.0
        %2990 = vmatpush1.msra.mxu0 %v2471
        %2991 = vmatprep.subr.mxu0 0.0
        %2992 = vmatpush1.msra.mxu0 %v2472
        %2993 = vmatprep.subr.mxu0 0.0
        %2994 = vmatpush1.msra.mxu0 %v2473
        %2995 = vmatprep.subr.mxu0 0.0
        %2996 = vmatpush1.msra.mxu0 %v2474
        %2997 = vmatprep.subr.mxu0 0.0
        %2998 = vmatpush1.msra.mxu0 %v2475
        %2999 = vmatprep.subr.mxu0 0.0
        %3000 = vmatpush1.msra.mxu0 %v2476
        %3001 = vmatprep.subr.mxu0 0.0
        %3002 = vmatpush1.msra.mxu0 %v2477
        %3003 = vmatprep.subr.mxu0 0.0
        %3004 = vmatpush1.msra.mxu0 %v2478
        %3005 = vmatprep.subr.mxu0 0.0
        %3006 = vmatpush1.msra.mxu0 %v2479
        %3007 = vmatprep.subr.mxu0 0.0
        %3008 = vmatpush1.msra.mxu0 0.0
        %3009 = vmatprep.subr.mxu0 0.0
        %3010 = vmatpush1.msra.mxu0 0.0
        %3011 = vmatprep.subr.mxu0 0.0
        %3012 = vmatpush1.msra.mxu0 0.0
        %3013 = vmatprep.subr.mxu0 0.0
        %3014 = vmatpush1.msra.mxu0 0.0
        %3015 = vmatprep.mubr.f32.mxu0 %v2913
        %3016 = vmatmul.mubr.f32.gmra.mrb[0].mxu0 %v2886
        %v3017 = vpop.f32.mrb[0].mxu0
        %v3018 = vadd.f32 0.0, %v3017
        %v3019 = vpop.f32.mrb[0].mxu0
        %3020 = vmatprep.mubr.f32.mxu0 %v2916
        %3021 = vmatmul.mubr.f32.gmra.mrb[0].mxu0 %v2888
        %v3022 = vpop.f32.mrb[0].mxu0
        %v3023 = vadd.f32 0.0, %v3022
        %v3024 = vpop.f32.mrb[0].mxu0
        %3025 = vmatprep.mubr.f32.mxu0 %v2919
        %3026 = vmatmul.mubr.f32.gmra.mrb[0].mxu0 %v2890
        %v3027 = vpop.f32.mrb[0].mxu0
        %v3028 = vadd.f32 0.0, %v3027
        %v3029 = vpop.f32.mrb[0].mxu0
        %3030 = vmatprep.mubr.f32.mxu0 %v2922
        %3031 = vmatmul.mubr.f32.gmra.mrb[0].mxu0 %v2892
        %v3032 = vpop.f32.mrb[0].mxu0
        %v3033 = vadd.f32 0.0, %v3032
        %v3034 = vpop.f32.mrb[0].mxu0
        %3035 = vmatprep.mubr.f32.mxu0 %v2925
        %3036 = vmatmul.mubr.f32.gmra.mrb[0].mxu0 %v2894
        %v3037 = vpop.f32.mrb[0].mxu0
        %v3038 = vadd.f32 0.0, %v3037
        %v3039 = vpop.f32.mrb[0].mxu0
        %3040 = vmatprep.mubr.f32.mxu0 %v2928
        %3041 = vmatmul.mubr.f32.gmra.mrb[0].mxu0 %v2896
        %v3042 = vpop.f32.mrb[0].mxu0
        %v3043 = vadd.f32 0.0, %v3042
        %v3044 = vpop.f32.mrb[0].mxu0
        %3045 = vmatprep.mubr.f32.mxu0 %v2931
        %3046 = vmatmul.mubr.f32.gmra.mrb[0].mxu0 %v2898
        %v3047 = vpop.f32.mrb[0].mxu0
        %v3048 = vadd.f32 0.0, %v3047
        %v3049 = vpop.f32.mrb[0].mxu0
        %3050 = vmatprep.mubr.f32.mxu0 %v2934
        %3051 = vmatmul.mubr.f32.gmra.mrb[0].mxu0 %v2900
        %v3052 = vpop.f32.mrb[0].mxu0
        %v3053 = vadd.f32 0.0, %v3052
        %v3054 = vpop.f32.mrb[0].mxu0
        %3055 = vmatprep.mubr.f32.mxu0 %v2937
        %3056 = vmatmul.mubr.f32.gmra.mrb[0].mxu0 %v2902
        %v3057 = vpop.f32.mrb[0].mxu0
        %v3058 = vadd.f32 0.0, %v3057
        %v3059 = vpop.f32.mrb[0].mxu0
        %3060 = vmatprep.mubr.f32.mxu0 %v2940
        %3061 = vmatmul.mubr.f32.gmra.mrb[0].mxu0 %v2904
        %v3062 = vpop.f32.mrb[0].mxu0
        %v3063 = vadd.f32 0.0, %v3062
        %v3064 = vpop.f32.mrb[0].mxu0
        %3065 = vmatprep.mubr.f32.mxu0 %v2943
        %3066 = vmatmul.mubr.f32.gmra.mrb[0].mxu0 %v2906
        %v3067 = vpop.f32.mrb[0].mxu0
        %v3068 = vadd.f32 0.0, %v3067
        %v3069 = vpop.f32.mrb[0].mxu0
        %3070 = vmatprep.mubr.f32.mxu0 %v2946
        %3071 = vmatmul.mubr.f32.gmra.mrb[0].mxu0 %v2908
        %v3072 = vpop.f32.mrb[0].mxu0
        %v3073 = vadd.f32 0.0, %v3072
        %v3074 = vpop.f32.mrb[0].mxu0
        %3075 = vmatprep.mubr.f32.mxu0 %v2949
        %3076 = vmatmul.mubr.f32.gmra.mrb[0].mxu0 %v2910
        %v3077 = vpop.f32.mrb[0].mxu0
        %v3078 = vadd.f32 0.0, %v3077
        %v3079 = vpop.f32.mrb[0].mxu0
        %3080 = vdwg.mxu0
        %v3081 = vmax.f32 %v2872, %v3018
        %v3082 = vmax.f32 %v2873, %v3023
        %v3083 = vmax.f32 %v2874, %v3028
        %v3084 = vmax.f32 %v2875, %v3033
        %v3085 = vmax.f32 %v2876, %v3038
        %v3086 = vmax.f32 %v2877, %v3043
        %v3087 = vmax.f32 %v2878, %v3048
        %v3088 = vmax.f32 %v2879, %v3053
        %v3089 = vmax.f32 %v2880, %v3058
        %v3090 = vmax.f32 %v2881, %v3063
        %v3091 = vmax.f32 %v2882, %v3068
        %v3092 = vmax.f32 %v2883, %v3073
        %v3093 = vmax.f32 %v2884, %v3078
        %s3094 = scalar_lea.vmem %s3, 624
        %v3095 = vld [vmem:[%s3094] sm:$0xff]
        %v3096 = vld [vmem:[%s3094 + $0x8] sm:$0xff]
        %v3097 = vld [vmem:[%s3094 + $0x10] sm:$0xff]
        %v3098 = vld [vmem:[%s3094 + $0x18] sm:$0xff]
        %v3099 = vld [vmem:[%s3094 + $0x20] sm:$0xff]
        %v3100 = vld [vmem:[%s3094 + $0x28] sm:$0xff]
        %v3101 = vld [vmem:[%s3094 + $0x30] sm:$0xff]
        %v3102 = vld [vmem:[%s3094 + $0x38] sm:$0xff]
        %v3103 = vld [vmem:[%s3094 + $0x40] sm:$0xff]
        %v3104 = vld [vmem:[%s3094 + $0x48] sm:$0xff]
        %v3105 = vld [vmem:[%s3094 + $0x50] sm:$0xff]
        %v3106 = vld [vmem:[%s3094 + $0x58] sm:$0xff]
        %v3107 = vld [vmem:[%s3094 + $0x60] sm:$0xff]
        %v3108 = vld [vmem:[%s3094 + $0x68] sm:$0xff]
        %v3109 = vld [vmem:[%s3094 + $0x70] sm:$0xff]
        %v3110 = vld [vmem:[%s3094 + $0x78] sm:$0xff]
        %v3111 = vld [vmem:[%s3094 + $0x80] sm:$0xff]
        %v3112 = vld [vmem:[%s3094 + $0x88] sm:$0xff]
        %v3113 = vld [vmem:[%s3094 + $0x90] sm:$0xff]
        %v3114 = vld [vmem:[%s3094 + $0x98] sm:$0xff]
        %v3115 = vld [vmem:[%s3094 + $0xa0] sm:$0xff]
        %v3116 = vld [vmem:[%s3094 + $0xa8] sm:$0xff]
        %v3117 = vld [vmem:[%s3094 + $0xb0] sm:$0xff]
        %v3118 = vld [vmem:[%s3094 + $0xb8] sm:$0xff]
        %v3119 = vld [vmem:[%s3094 + $0xc0] sm:$0x7]
        %v3120 = vld [vmem:[%s3094 + $0xc8] sm:$0x7]
        %v3122 = vsel %vm2506, %v3096, 0
        %v3125 = vsel %vm2506, %v3098, 0
        %v3128 = vsel %vm2506, %v3100, 0
        %v3131 = vsel %vm2506, %v3102, 0
        %v3134 = vsel %vm2506, %v3104, 0
        %v3137 = vsel %vm2506, %v3106, 0
        %v3140 = vsel %vm2506, %v3108, 0
        %v3143 = vsel %vm2506, %v3110, 0
        %v3146 = vsel %vm2506, %v3112, 0
        %v3149 = vsel %vm2506, %v3114, 0
        %v3152 = vsel %vm2506, %v3116, 0
        %v3155 = vsel %vm2506, %v3118, 0
        %v3158 = vsel %vm2506, %v3120, 0
        %3160 = vmatprep.subr.mxu0 0.0
        %3161 = vmatpush1.msra.mxu0 %v2452
        %3162 = vmatprep.subr.mxu0 0.0
        %3163 = vmatpush1.msra.mxu0 %v2453
        %3164 = vmatprep.subr.mxu0 0.0
        %3165 = vmatpush1.msra.mxu0 %v2454
        %3166 = vmatprep.subr.mxu0 0.0
        %3167 = vmatpush1.msra.mxu0 %v2455
        %3168 = vmatprep.subr.mxu0 0.0
        %3169 = vmatpush1.msra.mxu0 %v2456
        %3170 = vmatprep.subr.mxu0 0.0
        %3171 = vmatpush1.msra.mxu0 %v2457
        %3172 = vmatprep.subr.mxu0 0.0
        %3173 = vmatpush1.msra.mxu0 %v2458
        %3174 = vmatprep.subr.mxu0 0.0
        %3175 = vmatpush1.msra.mxu0 %v2459
        %3176 = vmatprep.subr.mxu0 0.0
        %3177 = vmatpush1.msra.mxu0 %v2460
        %3178 = vmatprep.subr.mxu0 0.0
        %3179 = vmatpush1.msra.mxu0 %v2461
        %3180 = vmatprep.subr.mxu0 0.0
        %3181 = vmatpush1.msra.mxu0 %v2462
        %3182 = vmatprep.subr.mxu0 0.0
        %3183 = vmatpush1.msra.mxu0 %v2463
        %3184 = vmatprep.subr.mxu0 0.0
        %3185 = vmatpush1.msra.mxu0 %v2464
        %3186 = vmatprep.subr.mxu0 0.0
        %3187 = vmatpush1.msra.mxu0 %v2465
        %3188 = vmatprep.subr.mxu0 0.0
        %3189 = vmatpush1.msra.mxu0 %v2466
        %3190 = vmatprep.subr.mxu0 0.0
        %3191 = vmatpush1.msra.mxu0 %v2467
        %3192 = vmatprep.subr.mxu0 0.0
        %3193 = vmatpush1.msra.mxu0 %v2468
        %3194 = vmatprep.subr.mxu0 0.0
        %3195 = vmatpush1.msra.mxu0 %v2469
        %3196 = vmatprep.subr.mxu0 0.0
        %3197 = vmatpush1.msra.mxu0 %v2470
        %3198 = vmatprep.subr.mxu0 0.0
        %3199 = vmatpush1.msra.mxu0 %v2471
        %3200 = vmatprep.subr.mxu0 0.0
        %3201 = vmatpush1.msra.mxu0 %v2472
        %3202 = vmatprep.subr.mxu0 0.0
        %3203 = vmatpush1.msra.mxu0 %v2473
        %3204 = vmatprep.subr.mxu0 0.0
        %3205 = vmatpush1.msra.mxu0 %v2474
        %3206 = vmatprep.subr.mxu0 0.0
        %3207 = vmatpush1.msra.mxu0 %v2475
        %3208 = vmatprep.subr.mxu0 0.0
        %3209 = vmatpush1.msra.mxu0 %v2476
        %3210 = vmatprep.subr.mxu0 0.0
        %3211 = vmatpush1.msra.mxu0 %v2477
        %3212 = vmatprep.subr.mxu0 0.0
        %3213 = vmatpush1.msra.mxu0 %v2478
        %3214 = vmatprep.subr.mxu0 0.0
        %3215 = vmatpush1.msra.mxu0 %v2479
        %3216 = vmatprep.subr.mxu0 0.0
        %3217 = vmatpush1.msra.mxu0 0.0
        %3218 = vmatprep.subr.mxu0 0.0
        %3219 = vmatpush1.msra.mxu0 0.0
        %3220 = vmatprep.subr.mxu0 0.0
        %3221 = vmatpush1.msra.mxu0 0.0
        %3222 = vmatprep.subr.mxu0 0.0
        %3223 = vmatpush1.msra.mxu0 0.0
        %3224 = vmatprep.mubr.f32.mxu0 %v3122
        %3225 = vmatmul.mubr.f32.gmra.mrb[0].mxu0 %v3095
        %v3226 = vpop.f32.mrb[0].mxu0
        %v3227 = vadd.f32 0.0, %v3226
        %v3228 = vpop.f32.mrb[0].mxu0
        %3229 = vmatprep.mubr.f32.mxu0 %v3125
        %3230 = vmatmul.mubr.f32.gmra.mrb[0].mxu0 %v3097
        %v3231 = vpop.f32.mrb[0].mxu0
        %v3232 = vadd.f32 0.0, %v3231
        %v3233 = vpop.f32.mrb[0].mxu0
        %3234 = vmatprep.mubr.f32.mxu0 %v3128
        %3235 = vmatmul.mubr.f32.gmra.mrb[0].mxu0 %v3099
        %v3236 = vpop.f32.mrb[0].mxu0
        %v3237 = vadd.f32 0.0, %v3236
        %v3238 = vpop.f32.mrb[0].mxu0
        %3239 = vmatprep.mubr.f32.mxu0 %v3131
        %3240 = vmatmul.mubr.f32.gmra.mrb[0].mxu0 %v3101
        %v3241 = vpop.f32.mrb[0].mxu0
        %v3242 = vadd.f32 0.0, %v3241
        %v3243 = vpop.f32.mrb[0].mxu0
        %3244 = vmatprep.mubr.f32.mxu0 %v3134
        %3245 = vmatmul.mubr.f32.gmra.mrb[0].mxu0 %v3103
        %v3246 = vpop.f32.mrb[0].mxu0
        %v3247 = vadd.f32 0.0, %v3246
        %v3248 = vpop.f32.mrb[0].mxu0
        %3249 = vmatprep.mubr.f32.mxu0 %v3137
        %3250 = vmatmul.mubr.f32.gmra.mrb[0].mxu0 %v3105
        %v3251 = vpop.f32.mrb[0].mxu0
        %v3252 = vadd.f32 0.0, %v3251
        %v3253 = vpop.f32.mrb[0].mxu0
        %3254 = vmatprep.mubr.f32.mxu0 %v3140
        %3255 = vmatmul.mubr.f32.gmra.mrb[0].mxu0 %v3107
        %v3256 = vpop.f32.mrb[0].mxu0
        %v3257 = vadd.f32 0.0, %v3256
        %v3258 = vpop.f32.mrb[0].mxu0
        %3259 = vmatprep.mubr.f32.mxu0 %v3143
        %3260 = vmatmul.mubr.f32.gmra.mrb[0].mxu0 %v3109
        %v3261 = vpop.f32.mrb[0].mxu0
        %v3262 = vadd.f32 0.0, %v3261
        %v3263 = vpop.f32.mrb[0].mxu0
        %3264 = vmatprep.mubr.f32.mxu0 %v3146
        %3265 = vmatmul.mubr.f32.gmra.mrb[0].mxu0 %v3111
        %v3266 = vpop.f32.mrb[0].mxu0
        %v3267 = vadd.f32 0.0, %v3266
        %v3268 = vpop.f32.mrb[0].mxu0
        %3269 = vmatprep.mubr.f32.mxu0 %v3149
        %3270 = vmatmul.mubr.f32.gmra.mrb[0].mxu0 %v3113
        %v3271 = vpop.f32.mrb[0].mxu0
        %v3272 = vadd.f32 0.0, %v3271
        %v3273 = vpop.f32.mrb[0].mxu0
        %3274 = vmatprep.mubr.f32.mxu0 %v3152
        %3275 = vmatmul.mubr.f32.gmra.mrb[0].mxu0 %v3115
        %v3276 = vpop.f32.mrb[0].mxu0
        %v3277 = vadd.f32 0.0, %v3276
        %v3278 = vpop.f32.mrb[0].mxu0
        %3279 = vmatprep.mubr.f32.mxu0 %v3155
        %3280 = vmatmul.mubr.f32.gmra.mrb[0].mxu0 %v3117
        %v3281 = vpop.f32.mrb[0].mxu0
        %v3282 = vadd.f32 0.0, %v3281
        %v3283 = vpop.f32.mrb[0].mxu0
        %3284 = vmatprep.mubr.f32.mxu0 %v3158
        %3285 = vmatmul.mubr.f32.gmra.mrb[0].mxu0 %v3119
        %v3286 = vpop.f32.mrb[0].mxu0
        %v3287 = vadd.f32 0.0, %v3286
        %v3288 = vpop.f32.mrb[0].mxu0
        %3289 = vdwg.mxu0
        %v3290 = vmax.f32 %v3081, %v3227
        %v3291 = vmax.f32 %v3082, %v3232
        %v3292 = vmax.f32 %v3083, %v3237
        %v3293 = vmax.f32 %v3084, %v3242
        %v3294 = vmax.f32 %v3085, %v3247
        %v3295 = vmax.f32 %v3086, %v3252
        %v3296 = vmax.f32 %v3087, %v3257
        %v3297 = vmax.f32 %v3088, %v3262
        %v3298 = vmax.f32 %v3089, %v3267
        %v3299 = vmax.f32 %v3090, %v3272
        %v3300 = vmax.f32 %v3091, %v3277
        %v3301 = vmax.f32 %v3092, %v3282
        %v3302 = vmax.f32 %v3093, %v3287
        %3303 = vst [vmem:[#allocation2] sm:$0xff] %v3290
        %3304 = vst [vmem:[#allocation2 + $0x8] sm:$0xff] %v3291
        %3305 = vst [vmem:[#allocation2 + $0x10] sm:$0xff] %v3292
        %3306 = vst [vmem:[#allocation2 + $0x18] sm:$0xff] %v3293
        %3307 = vst [vmem:[#allocation2 + $0x20] sm:$0xff] %v3294
        %3308 = vst [vmem:[#allocation2 + $0x28] sm:$0xff] %v3295
        %3309 = vst [vmem:[#allocation2 + $0x30] sm:$0xff] %v3296
        %3310 = vst [vmem:[#allocation2 + $0x38] sm:$0xff] %v3297
        %3311 = vst [vmem:[#allocation2 + $0x40] sm:$0xff] %v3298
        %3312 = vst [vmem:[#allocation2 + $0x48] sm:$0xff] %v3299
        %3313 = vst [vmem:[#allocation2 + $0x50] sm:$0xff] %v3300
        %3314 = vst [vmem:[#allocation2 + $0x58] sm:$0xff] %v3301
        %3315 = vst [vmem:[#allocation2 + $0x60] sm:$0x7] %v3302
        %v3316 = vld [vmem:[#allocation2 + $0x8] sm:$0xff]
        %v3317 = vld [vmem:[#allocation2 + $0x10] sm:$0xff]
        %v3318 = vld [vmem:[#allocation2 + $0x18] sm:$0xff]
        %v3319 = vld [vmem:[#allocation2 + $0x20] sm:$0xff]
        %v3320 = vld [vmem:[#allocation2 + $0x28] sm:$0xff]
        %v3321 = vld [vmem:[#allocation2 + $0x30] sm:$0xff]
        %v3322 = vld [vmem:[#allocation2 + $0x38] sm:$0xff]
        %v3323 = vld [vmem:[#allocation2 + $0x40] sm:$0x7f]
        %v3324 = vld [vmem:[%s4] sm:$0xf]
        %v3325 = vld [vmem:[%s4 + $0x4] sm:$0xf]
        %v3326 = vld [vmem:[%s4 + $0x8] sm:$0xf]
        %v3327 = vld [vmem:[%s4 + $0xc] sm:$0xf]
        %v3328 = vld [vmem:[%s4 + $0x10] sm:$0xf]
        %v3329 = vld [vmem:[%s4 + $0x14] sm:$0xf]
        %v3330 = vld [vmem:[%s4 + $0x18] sm:$0xf]
        %v3331 = vld [vmem:[%s4 + $0x1c] sm:$0xf]
        %v3332 = vld [vmem:[%s4 + $0x20] sm:$0xf]
        %v3333 = vld [vmem:[%s4 + $0x24] sm:$0xf]
        %v3334 = vld [vmem:[%s4 + $0x28] sm:$0xf]
        %v3335 = vld [vmem:[%s4 + $0x2c] sm:$0xf]
        %v3336 = vld [vmem:[%s4 + $0x30] sm:$0xf]
        %v3337 = vld [vmem:[%s4 + $0x34] sm:$0xf]
        %v3338 = vld [vmem:[%s4 + $0x38] sm:$0xf]
        %v3339 = vld [vmem:[%s4 + $0x3c] sm:$0xf]
        %v3340 = vpack.c.bf16 %v3317, %v3316
        %v3341 = vpack.c.bf16 %v3319, %v3318
        %v3342 = vpack.c.bf16 %v3321, %v3320
        %v3343 = vpack.c.bf16 %v3323, %v3322
        %v3344 = vld [vmem:[#allocation2 + $0x9] sm:$0xff]
        %v3345 = vld [vmem:[#allocation2 + $0x11] sm:$0xff]
        %v3346 = vld [vmem:[#allocation2 + $0x19] sm:$0xff]
        %v3347 = vld [vmem:[#allocation2 + $0x21] sm:$0xff]
        %v3348 = vld [vmem:[#allocation2 + $0x29] sm:$0xff]
        %v3349 = vld [vmem:[#allocation2 + $0x31] sm:$0xff]
        %v3350 = vld [vmem:[#allocation2 + $0x39] sm:$0xff]
        %v3351 = vld [vmem:[#allocation2 + $0x41] sm:$0x7f]
        %s3352 = scalar_lea.vmem %s4, 64
        %v3353 = vld [vmem:[%s3352] sm:$0xf]
        %v3354 = vld [vmem:[%s3352 + $0x4] sm:$0xf]
        %v3355 = vld [vmem:[%s3352 + $0x8] sm:$0xf]
        %v3356 = vld [vmem:[%s3352 + $0xc] sm:$0xf]
        %v3357 = vld [vmem:[%s3352 + $0x10] sm:$0xf]
        %v3358 = vld [vmem:[%s3352 + $0x14] sm:$0xf]
        %v3359 = vld [vmem:[%s3352 + $0x18] sm:$0xf]
        %v3360 = vld [vmem:[%s3352 + $0x1c] sm:$0xf]
        %v3361 = vld [vmem:[%s3352 + $0x20] sm:$0xf]
        %v3362 = vld [vmem:[%s3352 + $0x24] sm:$0xf]
        %v3363 = vld [vmem:[%s3352 + $0x28] sm:$0xf]
        %v3364 = vld [vmem:[%s3352 + $0x2c] sm:$0xf]
        %v3365 = vld [vmem:[%s3352 + $0x30] sm:$0xf]
        %v3366 = vld [vmem:[%s3352 + $0x34] sm:$0xf]
        %v3367 = vld [vmem:[%s3352 + $0x38] sm:$0xf]
        %v3368 = vld [vmem:[%s3352 + $0x3c] sm:$0xf]
        %v3369 = vpack.c.bf16 %v3345, %v3344
        %v3370 = vpack.c.bf16 %v3347, %v3346
        %v3371 = vpack.c.bf16 %v3349, %v3348
        %v3372 = vpack.c.bf16 %v3351, %v3350
        %v3389 = vunpack.c.l.b16 %v3353
        %v3390 = vunpack.c.l.b16 %v3354
        %v3391 = vunpack.c.l.b16 %v3355
        %v3392 = vunpack.c.l.b16 %v3356
        %v3393 = vunpack.c.l.b16 %v3357
        %v3394 = vunpack.c.l.b16 %v3358
        %v3395 = vunpack.c.l.b16 %v3359
        %v3396 = vunpack.c.l.b16 %v3360
        %v3397 = vunpack.c.l.b16 %v3361
        %v3398 = vunpack.c.l.b16 %v3362
        %v3399 = vunpack.c.l.b16 %v3363
        %v3400 = vunpack.c.l.b16 %v3364
        %v3401 = vunpack.c.l.b16 %v3365
        %v3402 = vunpack.c.l.b16 %v3366
        %v3403 = vunpack.c.l.b16 %v3367
        %v3404 = vunpack.c.l.b16 %v3368
        %v3405 = vpack.c.b16 %v3390, %v3389
        %v3406 = vpack.c.b16 %v3392, %v3391
        %v3407 = vpack.c.b16 %v3394, %v3393
        %v3408 = vpack.c.b16 %v3396, %v3395
        %v3409 = vpack.c.b16 %v3398, %v3397
        %v3410 = vpack.c.b16 %v3400, %v3399
        %v3411 = vpack.c.b16 %v3402, %v3401
        %v3412 = vpack.c.b16 %v3404, %v3403
        %3421 = vmatprep.subr.bf16.mxu0 0
        %3422 = vmatpush1.bf16.msra.mxu0 %v3405
        %3423 = vmatprep.subr.bf16.mxu0 0
        %3424 = vmatpush1.bf16.msra.mxu0 %v3406
        %3425 = vmatprep.subr.bf16.mxu0 0
        %3426 = vmatpush1.bf16.msra.mxu0 %v3407
        %3427 = vmatprep.subr.bf16.mxu0 0
        %3428 = vmatpush1.bf16.msra.mxu0 %v3408
        %3429 = vmatprep.subr.bf16.mxu0 0
        %3430 = vmatpush1.bf16.msra.mxu0 %v3409
        %3431 = vmatprep.subr.bf16.mxu0 0
        %3432 = vmatpush1.bf16.msra.mxu0 %v3410
        %3433 = vmatprep.subr.bf16.mxu0 0
        %3434 = vmatpush1.bf16.msra.mxu0 %v3411
        %3435 = vmatprep.subr.bf16.mxu0 0
        %3436 = vmatpush1.bf16.msra.mxu0 %v3412
        %3437 = vmatprep.subr.bf16.mxu0 0
        %3438 = vmatpush1.bf16.msra.mxu0 0
        %3439 = vmatprep.subr.bf16.mxu0 0
        %3440 = vmatpush1.bf16.msra.mxu0 0
        %3441 = vmatprep.subr.bf16.mxu0 0
        %3442 = vmatpush1.bf16.msra.mxu0 0
        %3443 = vmatprep.subr.bf16.mxu0 0
        %3444 = vmatpush1.bf16.msra.mxu0 0
        %3445 = vmatprep.subr.bf16.mxu0 0
        %3446 = vmatpush1.bf16.msra.mxu0 0
        %3447 = vmatprep.subr.bf16.mxu0 0
        %3448 = vmatpush1.bf16.msra.mxu0 0
        %3449 = vmatprep.subr.bf16.mxu0 0
        %3450 = vmatpush1.bf16.msra.mxu0 0
        %3451 = vmatprep.subr.bf16.mxu0 0
        %3452 = vmatpush1.bf16.msra.mxu0 0
        %3453 = vmatprep.mubr.bf16.mxu0 0
        %3454 = vmatmul.mubr.bf16.gmra.mrb[0].mxu0 %v3369
        %v3455 = vpop.f32.mrb[0].mxu0
        %v3456 = vadd.f32 0.0, %v3455
        %v3457 = vpop.f32.mrb[0].mxu0
        %v3458 = vpop.f32.mrb[0].mxu0
        %v3459 = vadd.f32 0.0, %v3458
        %v3460 = vpop.f32.mrb[0].mxu0
        %3461 = vmatprep.mubr.bf16.mxu0 0
        %3462 = vmatmul.mubr.bf16.gmra.mrb[0].mxu0 %v3370
        %v3463 = vpop.f32.mrb[0].mxu0
        %v3464 = vadd.f32 0.0, %v3463
        %v3465 = vpop.f32.mrb[0].mxu0
        %v3466 = vpop.f32.mrb[0].mxu0
        %v3467 = vadd.f32 0.0, %v3466
        %v3468 = vpop.f32.mrb[0].mxu0
        %3469 = vmatprep.mubr.bf16.mxu0 0
        %3470 = vmatmul.mubr.bf16.gmra.mrb[0].mxu0 %v3371
        %v3471 = vpop.f32.mrb[0].mxu0
        %v3472 = vadd.f32 0.0, %v3471
        %v3473 = vpop.f32.mrb[0].mxu0
        %v3474 = vpop.f32.mrb[0].mxu0
        %v3475 = vadd.f32 0.0, %v3474
        %v3476 = vpop.f32.mrb[0].mxu0
        %3477 = vmatprep.mubr.bf16.mxu0 0
        %3478 = vmatmul.mubr.bf16.gmra.mrb[0].mxu0 %v3372
        %v3479 = vpop.f32.mrb[0].mxu0
        %v3480 = vadd.f32 0.0, %v3479
        %v3481 = vpop.f32.mrb[0].mxu0
        %v3482 = vpop.f32.mrb[0].mxu0
        %v3483 = vadd.f32 0.0, %v3482
        %v3484 = vpop.f32.mrb[0].mxu0
        %3485 = vdwg.mxu0
        %v3502 = vunpack.c.l.b16 %v3324
        %v3503 = vunpack.c.l.b16 %v3325
        %v3504 = vunpack.c.l.b16 %v3326
        %v3505 = vunpack.c.l.b16 %v3327
        %v3506 = vunpack.c.l.b16 %v3328
        %v3507 = vunpack.c.l.b16 %v3329
        %v3508 = vunpack.c.l.b16 %v3330
        %v3509 = vunpack.c.l.b16 %v3331
        %v3510 = vunpack.c.l.b16 %v3332
        %v3511 = vunpack.c.l.b16 %v3333
        %v3512 = vunpack.c.l.b16 %v3334
        %v3513 = vunpack.c.l.b16 %v3335
        %v3514 = vunpack.c.l.b16 %v3336
        %v3515 = vunpack.c.l.b16 %v3337
        %v3516 = vunpack.c.l.b16 %v3338
        %v3517 = vunpack.c.l.b16 %v3339
        %v3518 = vpack.c.b16 %v3503, %v3502
        %v3519 = vpack.c.b16 %v3505, %v3504
        %v3520 = vpack.c.b16 %v3507, %v3506
        %v3521 = vpack.c.b16 %v3509, %v3508
        %v3522 = vpack.c.b16 %v3511, %v3510
        %v3523 = vpack.c.b16 %v3513, %v3512
        %v3524 = vpack.c.b16 %v3515, %v3514
        %v3525 = vpack.c.b16 %v3517, %v3516
        %3534 = vmatprep.subr.bf16.mxu0 0
        %3535 = vmatpush1.bf16.msra.mxu0 %v3518
        %3536 = vmatprep.subr.bf16.mxu0 0
        %3537 = vmatpush1.bf16.msra.mxu0 %v3519
        %3538 = vmatprep.subr.bf16.mxu0 0
        %3539 = vmatpush1.bf16.msra.mxu0 %v3520
        %3540 = vmatprep.subr.bf16.mxu0 0
        %3541 = vmatpush1.bf16.msra.mxu0 %v3521
        %3542 = vmatprep.subr.bf16.mxu0 0
        %3543 = vmatpush1.bf16.msra.mxu0 %v3522
        %3544 = vmatprep.subr.bf16.mxu0 0
        %3545 = vmatpush1.bf16.msra.mxu0 %v3523
        %3546 = vmatprep.subr.bf16.mxu0 0
        %3547 = vmatpush1.bf16.msra.mxu0 %v3524
        %3548 = vmatprep.subr.bf16.mxu0 0
        %3549 = vmatpush1.bf16.msra.mxu0 %v3525
        %3550 = vmatprep.subr.bf16.mxu0 0
        %3551 = vmatpush1.bf16.msra.mxu0 0
        %3552 = vmatprep.subr.bf16.mxu0 0
        %3553 = vmatpush1.bf16.msra.mxu0 0
        %3554 = vmatprep.subr.bf16.mxu0 0
        %3555 = vmatpush1.bf16.msra.mxu0 0
        %3556 = vmatprep.subr.bf16.mxu0 0
        %3557 = vmatpush1.bf16.msra.mxu0 0
        %3558 = vmatprep.subr.bf16.mxu0 0
        %3559 = vmatpush1.bf16.msra.mxu0 0
        %3560 = vmatprep.subr.bf16.mxu0 0
        %3561 = vmatpush1.bf16.msra.mxu0 0
        %3562 = vmatprep.subr.bf16.mxu0 0
        %3563 = vmatpush1.bf16.msra.mxu0 0
        %3564 = vmatprep.subr.bf16.mxu0 0
        %3565 = vmatpush1.bf16.msra.mxu0 0
        %3566 = vmatprep.mubr.bf16.mxu0 0
        %3567 = vmatmul.mubr.bf16.gmra.mrb[0].mxu0 %v3340
        %v3568 = vpop.f32.mrb[0].mxu0
        %v3569 = vadd.f32 %v3456, %v3568
        %v3570 = vpop.f32.mrb[0].mxu0
        %v3571 = vpop.f32.mrb[0].mxu0
        %v3572 = vadd.f32 %v3459, %v3571
        %v3573 = vpop.f32.mrb[0].mxu0
        %3574 = vmatprep.mubr.bf16.mxu0 0
        %3575 = vmatmul.mubr.bf16.gmra.mrb[0].mxu0 %v3341
        %v3576 = vpop.f32.mrb[0].mxu0
        %v3577 = vadd.f32 %v3464, %v3576
        %v3578 = vpop.f32.mrb[0].mxu0
        %v3579 = vpop.f32.mrb[0].mxu0
        %v3580 = vadd.f32 %v3467, %v3579
        %v3581 = vpop.f32.mrb[0].mxu0
        %3582 = vmatprep.mubr.bf16.mxu0 0
        %3583 = vmatmul.mubr.bf16.gmra.mrb[0].mxu0 %v3342
        %v3584 = vpop.f32.mrb[0].mxu0
        %v3585 = vadd.f32 %v3472, %v3584
        %v3586 = vpop.f32.mrb[0].mxu0
        %v3587 = vpop.f32.mrb[0].mxu0
        %v3588 = vadd.f32 %v3475, %v3587
        %v3589 = vpop.f32.mrb[0].mxu0
        %3590 = vmatprep.mubr.bf16.mxu0 0
        %3591 = vmatmul.mubr.bf16.gmra.mrb[0].mxu0 %v3343
        %v3592 = vpop.f32.mrb[0].mxu0
        %v3593 = vadd.f32 %v3480, %v3592
        %v3594 = vpop.f32.mrb[0].mxu0
        %v3595 = vpop.f32.mrb[0].mxu0
        %v3596 = vadd.f32 %v3483, %v3595
        %v3597 = vpop.f32.mrb[0].mxu0
        %3598 = vdwg.mxu0
        %v3599 = vld [vmem:[#allocation2 + $0xa] sm:$0xff]
        %v3600 = vld [vmem:[#allocation2 + $0x12] sm:$0xff]
        %v3601 = vld [vmem:[#allocation2 + $0x1a] sm:$0xff]
        %v3602 = vld [vmem:[#allocation2 + $0x22] sm:$0xff]
        %v3603 = vld [vmem:[#allocation2 + $0x2a] sm:$0xff]
        %v3604 = vld [vmem:[#allocation2 + $0x32] sm:$0xff]
        %v3605 = vld [vmem:[#allocation2 + $0x3a] sm:$0xff]
        %v3606 = vld [vmem:[#allocation2 + $0x42] sm:$0x7f]
        %s3607 = scalar_lea.vmem %s4, 128
        %v3608 = vld [vmem:[%s3607] sm:$0xf]
        %v3609 = vld [vmem:[%s3607 + $0x4] sm:$0xf]
        %v3610 = vld [vmem:[%s3607 + $0x8] sm:$0xf]
        %v3611 = vld [vmem:[%s3607 + $0xc] sm:$0xf]
        %v3612 = vld [vmem:[%s3607 + $0x10] sm:$0xf]
        %v3613 = vld [vmem:[%s3607 + $0x14] sm:$0xf]
        %v3614 = vld [vmem:[%s3607 + $0x18] sm:$0xf]
        %v3615 = vld [vmem:[%s3607 + $0x1c] sm:$0xf]
        %v3616 = vld [vmem:[%s3607 + $0x20] sm:$0xf]
        %v3617 = vld [vmem:[%s3607 + $0x24] sm:$0xf]
        %v3618 = vld [vmem:[%s3607 + $0x28] sm:$0xf]
        %v3619 = vld [vmem:[%s3607 + $0x2c] sm:$0xf]
        %v3620 = vld [vmem:[%s3607 + $0x30] sm:$0xf]
        %v3621 = vld [vmem:[%s3607 + $0x34] sm:$0xf]
        %v3622 = vld [vmem:[%s3607 + $0x38] sm:$0xf]
        %v3623 = vld [vmem:[%s3607 + $0x3c] sm:$0xf]
        %v3624 = vpack.c.bf16 %v3600, %v3599
        %v3625 = vpack.c.bf16 %v3602, %v3601
        %v3626 = vpack.c.bf16 %v3604, %v3603
        %v3627 = vpack.c.bf16 %v3606, %v3605
        %v3644 = vunpack.c.l.b16 %v3608
        %v3645 = vunpack.c.l.b16 %v3609
        %v3646 = vunpack.c.l.b16 %v3610
        %v3647 = vunpack.c.l.b16 %v3611
        %v3648 = vunpack.c.l.b16 %v3612
        %v3649 = vunpack.c.l.b16 %v3613
        %v3650 = vunpack.c.l.b16 %v3614
        %v3651 = vunpack.c.l.b16 %v3615
        %v3652 = vunpack.c.l.b16 %v3616
        %v3653 = vunpack.c.l.b16 %v3617
        %v3654 = vunpack.c.l.b16 %v3618
        %v3655 = vunpack.c.l.b16 %v3619
        %v3656 = vunpack.c.l.b16 %v3620
        %v3657 = vunpack.c.l.b16 %v3621
        %v3658 = vunpack.c.l.b16 %v3622
        %v3659 = vunpack.c.l.b16 %v3623
        %v3660 = vpack.c.b16 %v3645, %v3644
        %v3661 = vpack.c.b16 %v3647, %v3646
        %v3662 = vpack.c.b16 %v3649, %v3648
        %v3663 = vpack.c.b16 %v3651, %v3650
        %v3664 = vpack.c.b16 %v3653, %v3652
        %v3665 = vpack.c.b16 %v3655, %v3654
        %v3666 = vpack.c.b16 %v3657, %v3656
        %v3667 = vpack.c.b16 %v3659, %v3658
        %3676 = vmatprep.subr.bf16.mxu0 0
        %3677 = vmatpush1.bf16.msra.mxu0 %v3660
        %3678 = vmatprep.subr.bf16.mxu0 0
        %3679 = vmatpush1.bf16.msra.mxu0 %v3661
        %3680 = vmatprep.subr.bf16.mxu0 0
        %3681 = vmatpush1.bf16.msra.mxu0 %v3662
        %3682 = vmatprep.subr.bf16.mxu0 0
        %3683 = vmatpush1.bf16.msra.mxu0 %v3663
        %3684 = vmatprep.subr.bf16.mxu0 0
        %3685 = vmatpush1.bf16.msra.mxu0 %v3664
        %3686 = vmatprep.subr.bf16.mxu0 0
        %3687 = vmatpush1.bf16.msra.mxu0 %v3665
        %3688 = vmatprep.subr.bf16.mxu0 0
        %3689 = vmatpush1.bf16.msra.mxu0 %v3666
        %3690 = vmatprep.subr.bf16.mxu0 0
        %3691 = vmatpush1.bf16.msra.mxu0 %v3667
        %3692 = vmatprep.subr.bf16.mxu0 0
        %3693 = vmatpush1.bf16.msra.mxu0 0
        %3694 = vmatprep.subr.bf16.mxu0 0
        %3695 = vmatpush1.bf16.msra.mxu0 0
        %3696 = vmatprep.subr.bf16.mxu0 0
        %3697 = vmatpush1.bf16.msra.mxu0 0
        %3698 = vmatprep.subr.bf16.mxu0 0
        %3699 = vmatpush1.bf16.msra.mxu0 0
        %3700 = vmatprep.subr.bf16.mxu0 0
        %3701 = vmatpush1.bf16.msra.mxu0 0
        %3702 = vmatprep.subr.bf16.mxu0 0
        %3703 = vmatpush1.bf16.msra.mxu0 0
        %3704 = vmatprep.subr.bf16.mxu0 0
        %3705 = vmatpush1.bf16.msra.mxu0 0
        %3706 = vmatprep.subr.bf16.mxu0 0
        %3707 = vmatpush1.bf16.msra.mxu0 0
        %3708 = vmatprep.mubr.bf16.mxu0 0
        %3709 = vmatmul.mubr.bf16.gmra.mrb[0].mxu0 %v3624
        %v3710 = vpop.f32.mrb[0].mxu0
        %v3711 = vadd.f32 0.0, %v3710
        %v3712 = vpop.f32.mrb[0].mxu0
        %v3713 = vpop.f32.mrb[0].mxu0
        %v3714 = vadd.f32 0.0, %v3713
        %v3715 = vpop.f32.mrb[0].mxu0
        %3716 = vmatprep.mubr.bf16.mxu0 0
        %3717 = vmatmul.mubr.bf16.gmra.mrb[0].mxu0 %v3625
        %v3718 = vpop.f32.mrb[0].mxu0
        %v3719 = vadd.f32 0.0, %v3718
        %v3720 = vpop.f32.mrb[0].mxu0
        %v3721 = vpop.f32.mrb[0].mxu0
        %v3722 = vadd.f32 0.0, %v3721
        %v3723 = vpop.f32.mrb[0].mxu0
        %3724 = vmatprep.mubr.bf16.mxu0 0
        %3725 = vmatmul.mubr.bf16.gmra.mrb[0].mxu0 %v3626
        %v3726 = vpop.f32.mrb[0].mxu0
        %v3727 = vadd.f32 0.0, %v3726
        %v3728 = vpop.f32.mrb[0].mxu0
        %v3729 = vpop.f32.mrb[0].mxu0
        %v3730 = vadd.f32 0.0, %v3729
        %v3731 = vpop.f32.mrb[0].mxu0
        %3732 = vmatprep.mubr.bf16.mxu0 0
        %3733 = vmatmul.mubr.bf16.gmra.mrb[0].mxu0 %v3627
        %v3734 = vpop.f32.mrb[0].mxu0
        %v3735 = vadd.f32 0.0, %v3734
        %v3736 = vpop.f32.mrb[0].mxu0
        %v3737 = vpop.f32.mrb[0].mxu0
        %v3738 = vadd.f32 0.0, %v3737
        %v3739 = vpop.f32.mrb[0].mxu0
        %3740 = vdwg.mxu0
        %v3741 = vadd.f32 %v3569, %v3711
        %v3742 = vadd.f32 %v3572, %v3714
        %v3743 = vadd.f32 %v3577, %v3719
        %v3744 = vadd.f32 %v3580, %v3722
        %v3745 = vadd.f32 %v3585, %v3727
        %v3746 = vadd.f32 %v3588, %v3730
        %v3747 = vadd.f32 %v3593, %v3735
        %v3748 = vadd.f32 %v3596, %v3738
        %v3749 = vld [vmem:[#allocation2 + $0x11] sm:$0xff]
        %v3750 = vld [vmem:[#allocation2 + $0x19] sm:$0xff]
        %v3751 = vld [vmem:[#allocation2 + $0x21] sm:$0xff]
        %v3752 = vld [vmem:[#allocation2 + $0x29] sm:$0xff]
        %v3753 = vld [vmem:[#allocation2 + $0x31] sm:$0xff]
        %v3754 = vld [vmem:[#allocation2 + $0x39] sm:$0xff]
        %v3755 = vld [vmem:[#allocation2 + $0x41] sm:$0xff]
        %v3756 = vld [vmem:[#allocation2 + $0x49] sm:$0x7f]
        %s3757 = scalar_lea.vmem %s4, 192
        %v3758 = vld [vmem:[%s3757] sm:$0xf]
        %v3759 = vld [vmem:[%s3757 + $0x4] sm:$0xf]
        %v3760 = vld [vmem:[%s3757 + $0x8] sm:$0xf]
        %v3761 = vld [vmem:[%s3757 + $0xc] sm:$0xf]
        %v3762 = vld [vmem:[%s3757 + $0x10] sm:$0xf]
        %v3763 = vld [vmem:[%s3757 + $0x14] sm:$0xf]
        %v3764 = vld [vmem:[%s3757 + $0x18] sm:$0xf]
        %v3765 = vld [vmem:[%s3757 + $0x1c] sm:$0xf]
        %v3766 = vld [vmem:[%s3757 + $0x20] sm:$0xf]
        %v3767 = vld [vmem:[%s3757 + $0x24] sm:$0xf]
        %v3768 = vld [vmem:[%s3757 + $0x28] sm:$0xf]
        %v3769 = vld [vmem:[%s3757 + $0x2c] sm:$0xf]
        %v3770 = vld [vmem:[%s3757 + $0x30] sm:$0xf]
        %v3771 = vld [vmem:[%s3757 + $0x34] sm:$0xf]
        %v3772 = vld [vmem:[%s3757 + $0x38] sm:$0xf]
        %v3773 = vld [vmem:[%s3757 + $0x3c] sm:$0xf]
        %v3774 = vpack.c.bf16 %v3750, %v3749
        %v3775 = vpack.c.bf16 %v3752, %v3751
        %v3776 = vpack.c.bf16 %v3754, %v3753
        %v3777 = vpack.c.bf16 %v3756, %v3755
        %v3794 = vunpack.c.l.b16 %v3758
        %v3795 = vunpack.c.l.b16 %v3759
        %v3796 = vunpack.c.l.b16 %v3760
        %v3797 = vunpack.c.l.b16 %v3761
        %v3798 = vunpack.c.l.b16 %v3762
        %v3799 = vunpack.c.l.b16 %v3763
        %v3800 = vunpack.c.l.b16 %v3764
        %v3801 = vunpack.c.l.b16 %v3765
        %v3802 = vunpack.c.l.b16 %v3766
        %v3803 = vunpack.c.l.b16 %v3767
        %v3804 = vunpack.c.l.b16 %v3768
        %v3805 = vunpack.c.l.b16 %v3769
        %v3806 = vunpack.c.l.b16 %v3770
        %v3807 = vunpack.c.l.b16 %v3771
        %v3808 = vunpack.c.l.b16 %v3772
        %v3809 = vunpack.c.l.b16 %v3773
        %v3810 = vpack.c.b16 %v3795, %v3794
        %v3811 = vpack.c.b16 %v3797, %v3796
        %v3812 = vpack.c.b16 %v3799, %v3798
        %v3813 = vpack.c.b16 %v3801, %v3800
        %v3814 = vpack.c.b16 %v3803, %v3802
        %v3815 = vpack.c.b16 %v3805, %v3804
        %v3816 = vpack.c.b16 %v3807, %v3806
        %v3817 = vpack.c.b16 %v3809, %v3808
        %3826 = vmatprep.subr.bf16.mxu0 0
        %3827 = vmatpush1.bf16.msra.mxu0 %v3810
        %3828 = vmatprep.subr.bf16.mxu0 0
        %3829 = vmatpush1.bf16.msra.mxu0 %v3811
        %3830 = vmatprep.subr.bf16.mxu0 0
        %3831 = vmatpush1.bf16.msra.mxu0 %v3812
        %3832 = vmatprep.subr.bf16.mxu0 0
        %3833 = vmatpush1.bf16.msra.mxu0 %v3813
        %3834 = vmatprep.subr.bf16.mxu0 0
        %3835 = vmatpush1.bf16.msra.mxu0 %v3814
        %3836 = vmatprep.subr.bf16.mxu0 0
        %3837 = vmatpush1.bf16.msra.mxu0 %v3815
        %3838 = vmatprep.subr.bf16.mxu0 0
        %3839 = vmatpush1.bf16.msra.mxu0 %v3816
        %3840 = vmatprep.subr.bf16.mxu0 0
        %3841 = vmatpush1.bf16.msra.mxu0 %v3817
        %3842 = vmatprep.subr.bf16.mxu0 0
        %3843 = vmatpush1.bf16.msra.mxu0 0
        %3844 = vmatprep.subr.bf16.mxu0 0
        %3845 = vmatpush1.bf16.msra.mxu0 0
        %3846 = vmatprep.subr.bf16.mxu0 0
        %3847 = vmatpush1.bf16.msra.mxu0 0
        %3848 = vmatprep.subr.bf16.mxu0 0
        %3849 = vmatpush1.bf16.msra.mxu0 0
        %3850 = vmatprep.subr.bf16.mxu0 0
        %3851 = vmatpush1.bf16.msra.mxu0 0
        %3852 = vmatprep.subr.bf16.mxu0 0
        %3853 = vmatpush1.bf16.msra.mxu0 0
        %3854 = vmatprep.subr.bf16.mxu0 0
        %3855 = vmatpush1.bf16.msra.mxu0 0
        %3856 = vmatprep.subr.bf16.mxu0 0
        %3857 = vmatpush1.bf16.msra.mxu0 0
        %3858 = vmatprep.mubr.bf16.mxu0 0
        %3859 = vmatmul.mubr.bf16.gmra.mrb[0].mxu0 %v3774
        %v3860 = vpop.f32.mrb[0].mxu0
        %v3861 = vadd.f32 0.0, %v3860
        %v3862 = vpop.f32.mrb[0].mxu0
        %v3863 = vpop.f32.mrb[0].mxu0
        %v3864 = vadd.f32 0.0, %v3863
        %v3865 = vpop.f32.mrb[0].mxu0
        %3866 = vmatprep.mubr.bf16.mxu0 0
        %3867 = vmatmul.mubr.bf16.gmra.mrb[0].mxu0 %v3775
        %v3868 = vpop.f32.mrb[0].mxu0
        %v3869 = vadd.f32 0.0, %v3868
        %v3870 = vpop.f32.mrb[0].mxu0
        %v3871 = vpop.f32.mrb[0].mxu0
        %v3872 = vadd.f32 0.0, %v3871
        %v3873 = vpop.f32.mrb[0].mxu0
        %3874 = vmatprep.mubr.bf16.mxu0 0
        %3875 = vmatmul.mubr.bf16.gmra.mrb[0].mxu0 %v3776
        %v3876 = vpop.f32.mrb[0].mxu0
        %v3877 = vadd.f32 0.0, %v3876
        %v3878 = vpop.f32.mrb[0].mxu0
        %v3879 = vpop.f32.mrb[0].mxu0
        %v3880 = vadd.f32 0.0, %v3879
        %v3881 = vpop.f32.mrb[0].mxu0
        %3882 = vmatprep.mubr.bf16.mxu0 0
        %3883 = vmatmul.mubr.bf16.gmra.mrb[0].mxu0 %v3777
        %v3884 = vpop.f32.mrb[0].mxu0
        %v3885 = vadd.f32 0.0, %v3884
        %v3886 = vpop.f32.mrb[0].mxu0
        %v3887 = vpop.f32.mrb[0].mxu0
        %v3888 = vadd.f32 0.0, %v3887
        %v3889 = vpop.f32.mrb[0].mxu0
        %3890 = vdwg.mxu0
        %v3891 = vadd.f32 %v3741, %v3861
        %v3892 = vadd.f32 %v3742, %v3864
        %v3893 = vadd.f32 %v3743, %v3869
        %v3894 = vadd.f32 %v3744, %v3872
        %v3895 = vadd.f32 %v3745, %v3877
        %v3896 = vadd.f32 %v3746, %v3880
        %v3897 = vadd.f32 %v3747, %v3885
        %v3898 = vadd.f32 %v3748, %v3888
        %v3899 = vld [vmem:[#allocation2 + $0x12] sm:$0xff]
        %v3900 = vld [vmem:[#allocation2 + $0x1a] sm:$0xff]
        %v3901 = vld [vmem:[#allocation2 + $0x22] sm:$0xff]
        %v3902 = vld [vmem:[#allocation2 + $0x2a] sm:$0xff]
        %v3903 = vld [vmem:[#allocation2 + $0x32] sm:$0xff]
        %v3904 = vld [vmem:[#allocation2 + $0x3a] sm:$0xff]
        %v3905 = vld [vmem:[#allocation2 + $0x42] sm:$0xff]
        %v3906 = vld [vmem:[#allocation2 + $0x4a] sm:$0x7f]
        %s3907 = scalar_lea.vmem %s4, 256
        %v3908 = vld [vmem:[%s3907] sm:$0xf]
        %v3909 = vld [vmem:[%s3907 + $0x4] sm:$0xf]
        %v3910 = vld [vmem:[%s3907 + $0x8] sm:$0xf]
        %v3911 = vld [vmem:[%s3907 + $0xc] sm:$0xf]
        %v3912 = vld [vmem:[%s3907 + $0x10] sm:$0xf]
        %v3913 = vld [vmem:[%s3907 + $0x14] sm:$0xf]
        %v3914 = vld [vmem:[%s3907 + $0x18] sm:$0xf]
        %v3915 = vld [vmem:[%s3907 + $0x1c] sm:$0xf]
        %v3916 = vld [vmem:[%s3907 + $0x20] sm:$0xf]
        %v3917 = vld [vmem:[%s3907 + $0x24] sm:$0xf]
        %v3918 = vld [vmem:[%s3907 + $0x28] sm:$0xf]
        %v3919 = vld [vmem:[%s3907 + $0x2c] sm:$0xf]
        %v3920 = vld [vmem:[%s3907 + $0x30] sm:$0xf]
        %v3921 = vld [vmem:[%s3907 + $0x34] sm:$0xf]
        %v3922 = vld [vmem:[%s3907 + $0x38] sm:$0xf]
        %v3923 = vld [vmem:[%s3907 + $0x3c] sm:$0xf]
        %v3924 = vpack.c.bf16 %v3900, %v3899
        %v3925 = vpack.c.bf16 %v3902, %v3901
        %v3926 = vpack.c.bf16 %v3904, %v3903
        %v3927 = vpack.c.bf16 %v3906, %v3905
        %v3944 = vunpack.c.l.b16 %v3908
        %v3945 = vunpack.c.l.b16 %v3909
        %v3946 = vunpack.c.l.b16 %v3910
        %v3947 = vunpack.c.l.b16 %v3911
        %v3948 = vunpack.c.l.b16 %v3912
        %v3949 = vunpack.c.l.b16 %v3913
        %v3950 = vunpack.c.l.b16 %v3914
        %v3951 = vunpack.c.l.b16 %v3915
        %v3952 = vunpack.c.l.b16 %v3916
        %v3953 = vunpack.c.l.b16 %v3917
        %v3954 = vunpack.c.l.b16 %v3918
        %v3955 = vunpack.c.l.b16 %v3919
        %v3956 = vunpack.c.l.b16 %v3920
        %v3957 = vunpack.c.l.b16 %v3921
        %v3958 = vunpack.c.l.b16 %v3922
        %v3959 = vunpack.c.l.b16 %v3923
        %v3960 = vpack.c.b16 %v3945, %v3944
        %v3961 = vpack.c.b16 %v3947, %v3946
        %v3962 = vpack.c.b16 %v3949, %v3948
        %v3963 = vpack.c.b16 %v3951, %v3950
        %v3964 = vpack.c.b16 %v3953, %v3952
        %v3965 = vpack.c.b16 %v3955, %v3954
        %v3966 = vpack.c.b16 %v3957, %v3956
        %v3967 = vpack.c.b16 %v3959, %v3958
        %3976 = vmatprep.subr.bf16.mxu0 0
        %3977 = vmatpush1.bf16.msra.mxu0 %v3960
        %3978 = vmatprep.subr.bf16.mxu0 0
        %3979 = vmatpush1.bf16.msra.mxu0 %v3961
        %3980 = vmatprep.subr.bf16.mxu0 0
        %3981 = vmatpush1.bf16.msra.mxu0 %v3962
        %3982 = vmatprep.subr.bf16.mxu0 0
        %3983 = vmatpush1.bf16.msra.mxu0 %v3963
        %3984 = vmatprep.subr.bf16.mxu0 0
        %3985 = vmatpush1.bf16.msra.mxu0 %v3964
        %3986 = vmatprep.subr.bf16.mxu0 0
        %3987 = vmatpush1.bf16.msra.mxu0 %v3965
        %3988 = vmatprep.subr.bf16.mxu0 0
        %3989 = vmatpush1.bf16.msra.mxu0 %v3966
        %3990 = vmatprep.subr.bf16.mxu0 0
        %3991 = vmatpush1.bf16.msra.mxu0 %v3967
        %3992 = vmatprep.subr.bf16.mxu0 0
        %3993 = vmatpush1.bf16.msra.mxu0 0
        %3994 = vmatprep.subr.bf16.mxu0 0
        %3995 = vmatpush1.bf16.msra.mxu0 0
        %3996 = vmatprep.subr.bf16.mxu0 0
        %3997 = vmatpush1.bf16.msra.mxu0 0
        %3998 = vmatprep.subr.bf16.mxu0 0
        %3999 = vmatpush1.bf16.msra.mxu0 0
        %4000 = vmatprep.subr.bf16.mxu0 0
        %4001 = vmatpush1.bf16.msra.mxu0 0
        %4002 = vmatprep.subr.bf16.mxu0 0
        %4003 = vmatpush1.bf16.msra.mxu0 0
        %4004 = vmatprep.subr.bf16.mxu0 0
        %4005 = vmatpush1.bf16.msra.mxu0 0
        %4006 = vmatprep.subr.bf16.mxu0 0
        %4007 = vmatpush1.bf16.msra.mxu0 0
        %4008 = vmatprep.mubr.bf16.mxu0 0
        %4009 = vmatmul.mubr.bf16.gmra.mrb[0].mxu0 %v3924
        %v4010 = vpop.f32.mrb[0].mxu0
        %v4011 = vadd.f32 0.0, %v4010
        %v4012 = vpop.f32.mrb[0].mxu0
        %v4013 = vpop.f32.mrb[0].mxu0
        %v4014 = vadd.f32 0.0, %v4013
        %v4015 = vpop.f32.mrb[0].mxu0
        %4016 = vmatprep.mubr.bf16.mxu0 0
        %4017 = vmatmul.mubr.bf16.gmra.mrb[0].mxu0 %v3925
        %v4018 = vpop.f32.mrb[0].mxu0
        %v4019 = vadd.f32 0.0, %v4018
        %v4020 = vpop.f32.mrb[0].mxu0
        %v4021 = vpop.f32.mrb[0].mxu0
        %v4022 = vadd.f32 0.0, %v4021
        %v4023 = vpop.f32.mrb[0].mxu0
        %4024 = vmatprep.mubr.bf16.mxu0 0
        %4025 = vmatmul.mubr.bf16.gmra.mrb[0].mxu0 %v3926
        %v4026 = vpop.f32.mrb[0].mxu0
        %v4027 = vadd.f32 0.0, %v4026
        %v4028 = vpop.f32.mrb[0].mxu0
        %v4029 = vpop.f32.mrb[0].mxu0
        %v4030 = vadd.f32 0.0, %v4029
        %v4031 = vpop.f32.mrb[0].mxu0
        %4032 = vmatprep.mubr.bf16.mxu0 0
        %4033 = vmatmul.mubr.bf16.gmra.mrb[0].mxu0 %v3927
        %v4034 = vpop.f32.mrb[0].mxu0
        %v4035 = vadd.f32 0.0, %v4034
        %v4036 = vpop.f32.mrb[0].mxu0
        %v4037 = vpop.f32.mrb[0].mxu0
        %v4038 = vadd.f32 0.0, %v4037
        %v4039 = vpop.f32.mrb[0].mxu0
        %4040 = vdwg.mxu0
        %v4041 = vadd.f32 %v3891, %v4011
        %v4042 = vadd.f32 %v3892, %v4014
        %v4043 = vadd.f32 %v3893, %v4019
        %v4044 = vadd.f32 %v3894, %v4022
        %v4045 = vadd.f32 %v3895, %v4027
        %v4046 = vadd.f32 %v3896, %v4030
        %v4047 = vadd.f32 %v3897, %v4035
        %v4048 = vadd.f32 %v3898, %v4038
        %v4049 = vld [vmem:[#allocation2 + $0x13] sm:$0xff]
        %v4050 = vld [vmem:[#allocation2 + $0x1b] sm:$0xff]
        %v4051 = vld [vmem:[#allocation2 + $0x23] sm:$0xff]
        %v4052 = vld [vmem:[#allocation2 + $0x2b] sm:$0xff]
        %v4053 = vld [vmem:[#allocation2 + $0x33] sm:$0xff]
        %v4054 = vld [vmem:[#allocation2 + $0x3b] sm:$0xff]
        %v4055 = vld [vmem:[#allocation2 + $0x43] sm:$0xff]
        %v4056 = vld [vmem:[#allocation2 + $0x4b] sm:$0x7f]
        %s4057 = scalar_lea.vmem %s4, 320
        %v4058 = vld [vmem:[%s4057] sm:$0xf]
        %v4059 = vld [vmem:[%s4057 + $0x4] sm:$0xf]
        %v4060 = vld [vmem:[%s4057 + $0x8] sm:$0xf]
        %v4061 = vld [vmem:[%s4057 + $0xc] sm:$0xf]
        %v4062 = vld [vmem:[%s4057 + $0x10] sm:$0xf]
        %v4063 = vld [vmem:[%s4057 + $0x14] sm:$0xf]
        %v4064 = vld [vmem:[%s4057 + $0x18] sm:$0xf]
        %v4065 = vld [vmem:[%s4057 + $0x1c] sm:$0xf]
        %v4066 = vld [vmem:[%s4057 + $0x20] sm:$0xf]
        %v4067 = vld [vmem:[%s4057 + $0x24] sm:$0xf]
        %v4068 = vld [vmem:[%s4057 + $0x28] sm:$0xf]
        %v4069 = vld [vmem:[%s4057 + $0x2c] sm:$0xf]
        %v4070 = vld [vmem:[%s4057 + $0x30] sm:$0xf]
        %v4071 = vld [vmem:[%s4057 + $0x34] sm:$0xf]
        %v4072 = vld [vmem:[%s4057 + $0x38] sm:$0xf]
        %v4073 = vld [vmem:[%s4057 + $0x3c] sm:$0xf]
        %v4074 = vpack.c.bf16 %v4050, %v4049
        %v4075 = vpack.c.bf16 %v4052, %v4051
        %v4076 = vpack.c.bf16 %v4054, %v4053
        %v4077 = vpack.c.bf16 %v4056, %v4055
        %v4094 = vunpack.c.l.b16 %v4058
        %v4095 = vunpack.c.l.b16 %v4059
        %v4096 = vunpack.c.l.b16 %v4060
        %v4097 = vunpack.c.l.b16 %v4061
        %v4098 = vunpack.c.l.b16 %v4062
        %v4099 = vunpack.c.l.b16 %v4063
        %v4100 = vunpack.c.l.b16 %v4064
        %v4101 = vunpack.c.l.b16 %v4065
        %v4102 = vunpack.c.l.b16 %v4066
        %v4103 = vunpack.c.l.b16 %v4067
        %v4104 = vunpack.c.l.b16 %v4068
        %v4105 = vunpack.c.l.b16 %v4069
        %v4106 = vunpack.c.l.b16 %v4070
        %v4107 = vunpack.c.l.b16 %v4071
        %v4108 = vunpack.c.l.b16 %v4072
        %v4109 = vunpack.c.l.b16 %v4073
        %v4110 = vpack.c.b16 %v4095, %v4094
        %v4111 = vpack.c.b16 %v4097, %v4096
        %v4112 = vpack.c.b16 %v4099, %v4098
        %v4113 = vpack.c.b16 %v4101, %v4100
        %v4114 = vpack.c.b16 %v4103, %v4102
        %v4115 = vpack.c.b16 %v4105, %v4104
        %v4116 = vpack.c.b16 %v4107, %v4106
        %v4117 = vpack.c.b16 %v4109, %v4108
        %4126 = vmatprep.subr.bf16.mxu0 0
        %4127 = vmatpush1.bf16.msra.mxu0 %v4110
        %4128 = vmatprep.subr.bf16.mxu0 0
        %4129 = vmatpush1.bf16.msra.mxu0 %v4111
        %4130 = vmatprep.subr.bf16.mxu0 0
        %4131 = vmatpush1.bf16.msra.mxu0 %v4112
        %4132 = vmatprep.subr.bf16.mxu0 0
        %4133 = vmatpush1.bf16.msra.mxu0 %v4113
        %4134 = vmatprep.subr.bf16.mxu0 0
        %4135 = vmatpush1.bf16.msra.mxu0 %v4114
        %4136 = vmatprep.subr.bf16.mxu0 0
        %4137 = vmatpush1.bf16.msra.mxu0 %v4115
        %4138 = vmatprep.subr.bf16.mxu0 0
        %4139 = vmatpush1.bf16.msra.mxu0 %v4116
        %4140 = vmatprep.subr.bf16.mxu0 0
        %4141 = vmatpush1.bf16.msra.mxu0 %v4117
        %4142 = vmatprep.subr.bf16.mxu0 0
        %4143 = vmatpush1.bf16.msra.mxu0 0
        %4144 = vmatprep.subr.bf16.mxu0 0
        %4145 = vmatpush1.bf16.msra.mxu0 0
        %4146 = vmatprep.subr.bf16.mxu0 0
        %4147 = vmatpush1.bf16.msra.mxu0 0
        %4148 = vmatprep.subr.bf16.mxu0 0
        %4149 = vmatpush1.bf16.msra.mxu0 0
        %4150 = vmatprep.subr.bf16.mxu0 0
        %4151 = vmatpush1.bf16.msra.mxu0 0
        %4152 = vmatprep.subr.bf16.mxu0 0
        %4153 = vmatpush1.bf16.msra.mxu0 0
        %4154 = vmatprep.subr.bf16.mxu0 0
        %4155 = vmatpush1.bf16.msra.mxu0 0
        %4156 = vmatprep.subr.bf16.mxu0 0
        %4157 = vmatpush1.bf16.msra.mxu0 0
        %4158 = vmatprep.mubr.bf16.mxu0 0
        %4159 = vmatmul.mubr.bf16.gmra.mrb[0].mxu0 %v4074
        %v4160 = vpop.f32.mrb[0].mxu0
        %v4161 = vadd.f32 0.0, %v4160
        %v4162 = vpop.f32.mrb[0].mxu0
        %v4163 = vpop.f32.mrb[0].mxu0
        %v4164 = vadd.f32 0.0, %v4163
        %v4165 = vpop.f32.mrb[0].mxu0
        %4166 = vmatprep.mubr.bf16.mxu0 0
        %4167 = vmatmul.mubr.bf16.gmra.mrb[0].mxu0 %v4075
        %v4168 = vpop.f32.mrb[0].mxu0
        %v4169 = vadd.f32 0.0, %v4168
        %v4170 = vpop.f32.mrb[0].mxu0
        %v4171 = vpop.f32.mrb[0].mxu0
        %v4172 = vadd.f32 0.0, %v4171
        %v4173 = vpop.f32.mrb[0].mxu0
        %4174 = vmatprep.mubr.bf16.mxu0 0
        %4175 = vmatmul.mubr.bf16.gmra.mrb[0].mxu0 %v4076
        %v4176 = vpop.f32.mrb[0].mxu0
        %v4177 = vadd.f32 0.0, %v4176
        %v4178 = vpop.f32.mrb[0].mxu0
        %v4179 = vpop.f32.mrb[0].mxu0
        %v4180 = vadd.f32 0.0, %v4179
        %v4181 = vpop.f32.mrb[0].mxu0
        %4182 = vmatprep.mubr.bf16.mxu0 0
        %4183 = vmatmul.mubr.bf16.gmra.mrb[0].mxu0 %v4077
        %v4184 = vpop.f32.mrb[0].mxu0
        %v4185 = vadd.f32 0.0, %v4184
        %v4186 = vpop.f32.mrb[0].mxu0
        %v4187 = vpop.f32.mrb[0].mxu0
        %v4188 = vadd.f32 0.0, %v4187
        %v4189 = vpop.f32.mrb[0].mxu0
        %4190 = vdwg.mxu0
        %v4191 = vadd.f32 %v4041, %v4161
        %v4192 = vadd.f32 %v4042, %v4164
        %v4193 = vadd.f32 %v4043, %v4169
        %v4194 = vadd.f32 %v4044, %v4172
        %v4195 = vadd.f32 %v4045, %v4177
        %v4196 = vadd.f32 %v4046, %v4180
        %v4197 = vadd.f32 %v4047, %v4185
        %v4198 = vadd.f32 %v4048, %v4188
        %v4199 = vld [vmem:[#allocation2 + $0x1a] sm:$0xff]
        %v4200 = vld [vmem:[#allocation2 + $0x22] sm:$0xff]
        %v4201 = vld [vmem:[#allocation2 + $0x2a] sm:$0xff]
        %v4202 = vld [vmem:[#allocation2 + $0x32] sm:$0xff]
        %v4203 = vld [vmem:[#allocation2 + $0x3a] sm:$0xff]
        %v4204 = vld [vmem:[#allocation2 + $0x42] sm:$0xff]
        %v4205 = vld [vmem:[#allocation2 + $0x4a] sm:$0xff]
        %v4206 = vld [vmem:[#allocation2 + $0x52] sm:$0x7f]
        %s4207 = scalar_lea.vmem %s4, 384
        %v4208 = vld [vmem:[%s4207] sm:$0xf]
        %v4209 = vld [vmem:[%s4207 + $0x4] sm:$0xf]
        %v4210 = vld [vmem:[%s4207 + $0x8] sm:$0xf]
        %v4211 = vld [vmem:[%s4207 + $0xc] sm:$0xf]
        %v4212 = vld [vmem:[%s4207 + $0x10] sm:$0xf]
        %v4213 = vld [vmem:[%s4207 + $0x14] sm:$0xf]
        %v4214 = vld [vmem:[%s4207 + $0x18] sm:$0xf]
        %v4215 = vld [vmem:[%s4207 + $0x1c] sm:$0xf]
        %v4216 = vld [vmem:[%s4207 + $0x20] sm:$0xf]
        %v4217 = vld [vmem:[%s4207 + $0x24] sm:$0xf]
        %v4218 = vld [vmem:[%s4207 + $0x28] sm:$0xf]
        %v4219 = vld [vmem:[%s4207 + $0x2c] sm:$0xf]
        %v4220 = vld [vmem:[%s4207 + $0x30] sm:$0xf]
        %v4221 = vld [vmem:[%s4207 + $0x34] sm:$0xf]
        %v4222 = vld [vmem:[%s4207 + $0x38] sm:$0xf]
        %v4223 = vld [vmem:[%s4207 + $0x3c] sm:$0xf]
        %v4224 = vpack.c.bf16 %v4200, %v4199
        %v4225 = vpack.c.bf16 %v4202, %v4201
        %v4226 = vpack.c.bf16 %v4204, %v4203
        %v4227 = vpack.c.bf16 %v4206, %v4205
        %v4244 = vunpack.c.l.b16 %v4208
        %v4245 = vunpack.c.l.b16 %v4209
        %v4246 = vunpack.c.l.b16 %v4210
        %v4247 = vunpack.c.l.b16 %v4211
        %v4248 = vunpack.c.l.b16 %v4212
        %v4249 = vunpack.c.l.b16 %v4213
        %v4250 = vunpack.c.l.b16 %v4214
        %v4251 = vunpack.c.l.b16 %v4215
        %v4252 = vunpack.c.l.b16 %v4216
        %v4253 = vunpack.c.l.b16 %v4217
        %v4254 = vunpack.c.l.b16 %v4218
        %v4255 = vunpack.c.l.b16 %v4219
        %v4256 = vunpack.c.l.b16 %v4220
        %v4257 = vunpack.c.l.b16 %v4221
        %v4258 = vunpack.c.l.b16 %v4222
        %v4259 = vunpack.c.l.b16 %v4223
        %v4260 = vpack.c.b16 %v4245, %v4244
        %v4261 = vpack.c.b16 %v4247, %v4246
        %v4262 = vpack.c.b16 %v4249, %v4248
        %v4263 = vpack.c.b16 %v4251, %v4250
        %v4264 = vpack.c.b16 %v4253, %v4252
        %v4265 = vpack.c.b16 %v4255, %v4254
        %v4266 = vpack.c.b16 %v4257, %v4256
        %v4267 = vpack.c.b16 %v4259, %v4258
        %4276 = vmatprep.subr.bf16.mxu0 0
        %4277 = vmatpush1.bf16.msra.mxu0 %v4260
        %4278 = vmatprep.subr.bf16.mxu0 0
        %4279 = vmatpush1.bf16.msra.mxu0 %v4261
        %4280 = vmatprep.subr.bf16.mxu0 0
        %4281 = vmatpush1.bf16.msra.mxu0 %v4262
        %4282 = vmatprep.subr.bf16.mxu0 0
        %4283 = vmatpush1.bf16.msra.mxu0 %v4263
        %4284 = vmatprep.subr.bf16.mxu0 0
        %4285 = vmatpush1.bf16.msra.mxu0 %v4264
        %4286 = vmatprep.subr.bf16.mxu0 0
        %4287 = vmatpush1.bf16.msra.mxu0 %v4265
        %4288 = vmatprep.subr.bf16.mxu0 0
        %4289 = vmatpush1.bf16.msra.mxu0 %v4266
        %4290 = vmatprep.subr.bf16.mxu0 0
        %4291 = vmatpush1.bf16.msra.mxu0 %v4267
        %4292 = vmatprep.subr.bf16.mxu0 0
        %4293 = vmatpush1.bf16.msra.mxu0 0
        %4294 = vmatprep.subr.bf16.mxu0 0
        %4295 = vmatpush1.bf16.msra.mxu0 0
        %4296 = vmatprep.subr.bf16.mxu0 0
        %4297 = vmatpush1.bf16.msra.mxu0 0
        %4298 = vmatprep.subr.bf16.mxu0 0
        %4299 = vmatpush1.bf16.msra.mxu0 0
        %4300 = vmatprep.subr.bf16.mxu0 0
        %4301 = vmatpush1.bf16.msra.mxu0 0
        %4302 = vmatprep.subr.bf16.mxu0 0
        %4303 = vmatpush1.bf16.msra.mxu0 0
        %4304 = vmatprep.subr.bf16.mxu0 0
        %4305 = vmatpush1.bf16.msra.mxu0 0
        %4306 = vmatprep.subr.bf16.mxu0 0
        %4307 = vmatpush1.bf16.msra.mxu0 0
        %4308 = vmatprep.mubr.bf16.mxu0 0
        %4309 = vmatmul.mubr.bf16.gmra.mrb[0].mxu0 %v4224
        %v4310 = vpop.f32.mrb[0].mxu0
        %v4311 = vadd.f32 0.0, %v4310
        %v4312 = vpop.f32.mrb[0].mxu0
        %v4313 = vpop.f32.mrb[0].mxu0
        %v4314 = vadd.f32 0.0, %v4313
        %v4315 = vpop.f32.mrb[0].mxu0
        %4316 = vmatprep.mubr.bf16.mxu0 0
        %4317 = vmatmul.mubr.bf16.gmra.mrb[0].mxu0 %v4225
        %v4318 = vpop.f32.mrb[0].mxu0
        %v4319 = vadd.f32 0.0, %v4318
        %v4320 = vpop.f32.mrb[0].mxu0
        %v4321 = vpop.f32.mrb[0].mxu0
        %v4322 = vadd.f32 0.0, %v4321
        %v4323 = vpop.f32.mrb[0].mxu0
        %4324 = vmatprep.mubr.bf16.mxu0 0
        %4325 = vmatmul.mubr.bf16.gmra.mrb[0].mxu0 %v4226
        %v4326 = vpop.f32.mrb[0].mxu0
        %v4327 = vadd.f32 0.0, %v4326
        %v4328 = vpop.f32.mrb[0].mxu0
        %v4329 = vpop.f32.mrb[0].mxu0
        %v4330 = vadd.f32 0.0, %v4329
        %v4331 = vpop.f32.mrb[0].mxu0
        %4332 = vmatprep.mubr.bf16.mxu0 0
        %4333 = vmatmul.mubr.bf16.gmra.mrb[0].mxu0 %v4227
        %v4334 = vpop.f32.mrb[0].mxu0
        %v4335 = vadd.f32 0.0, %v4334
        %v4336 = vpop.f32.mrb[0].mxu0
        %v4337 = vpop.f32.mrb[0].mxu0
        %v4338 = vadd.f32 0.0, %v4337
        %v4339 = vpop.f32.mrb[0].mxu0
        %4340 = vdwg.mxu0
        %v4341 = vadd.f32 %v4191, %v4311
        %v4342 = vadd.f32 %v4192, %v4314
        %v4343 = vadd.f32 %v4193, %v4319
        %v4344 = vadd.f32 %v4194, %v4322
        %v4345 = vadd.f32 %v4195, %v4327
        %v4346 = vadd.f32 %v4196, %v4330
        %v4347 = vadd.f32 %v4197, %v4335
        %v4348 = vadd.f32 %v4198, %v4338
        %v4349 = vld [vmem:[#allocation2 + $0x1b] sm:$0xff]
        %v4350 = vld [vmem:[#allocation2 + $0x23] sm:$0xff]
        %v4351 = vld [vmem:[#allocation2 + $0x2b] sm:$0xff]
        %v4352 = vld [vmem:[#allocation2 + $0x33] sm:$0xff]
        %v4353 = vld [vmem:[#allocation2 + $0x3b] sm:$0xff]
        %v4354 = vld [vmem:[#allocation2 + $0x43] sm:$0xff]
        %v4355 = vld [vmem:[#allocation2 + $0x4b] sm:$0xff]
        %v4356 = vld [vmem:[#allocation2 + $0x53] sm:$0x7f]
        %s4357 = scalar_lea.vmem %s4, 448
        %v4358 = vld [vmem:[%s4357] sm:$0xf]
        %v4359 = vld [vmem:[%s4357 + $0x4] sm:$0xf]
        %v4360 = vld [vmem:[%s4357 + $0x8] sm:$0xf]
        %v4361 = vld [vmem:[%s4357 + $0xc] sm:$0xf]
        %v4362 = vld [vmem:[%s4357 + $0x10] sm:$0xf]
        %v4363 = vld [vmem:[%s4357 + $0x14] sm:$0xf]
        %v4364 = vld [vmem:[%s4357 + $0x18] sm:$0xf]
        %v4365 = vld [vmem:[%s4357 + $0x1c] sm:$0xf]
        %v4366 = vld [vmem:[%s4357 + $0x20] sm:$0xf]
        %v4367 = vld [vmem:[%s4357 + $0x24] sm:$0xf]
        %v4368 = vld [vmem:[%s4357 + $0x28] sm:$0xf]
        %v4369 = vld [vmem:[%s4357 + $0x2c] sm:$0xf]
        %v4370 = vld [vmem:[%s4357 + $0x30] sm:$0xf]
        %v4371 = vld [vmem:[%s4357 + $0x34] sm:$0xf]
        %v4372 = vld [vmem:[%s4357 + $0x38] sm:$0xf]
        %v4373 = vld [vmem:[%s4357 + $0x3c] sm:$0xf]
        %v4374 = vpack.c.bf16 %v4350, %v4349
        %v4375 = vpack.c.bf16 %v4352, %v4351
        %v4376 = vpack.c.bf16 %v4354, %v4353
        %v4377 = vpack.c.bf16 %v4356, %v4355
        %v4394 = vunpack.c.l.b16 %v4358
        %v4395 = vunpack.c.l.b16 %v4359
        %v4396 = vunpack.c.l.b16 %v4360
        %v4397 = vunpack.c.l.b16 %v4361
        %v4398 = vunpack.c.l.b16 %v4362
        %v4399 = vunpack.c.l.b16 %v4363
        %v4400 = vunpack.c.l.b16 %v4364
        %v4401 = vunpack.c.l.b16 %v4365
        %v4402 = vunpack.c.l.b16 %v4366
        %v4403 = vunpack.c.l.b16 %v4367
        %v4404 = vunpack.c.l.b16 %v4368
        %v4405 = vunpack.c.l.b16 %v4369
        %v4406 = vunpack.c.l.b16 %v4370
        %v4407 = vunpack.c.l.b16 %v4371
        %v4408 = vunpack.c.l.b16 %v4372
        %v4409 = vunpack.c.l.b16 %v4373
        %v4410 = vpack.c.b16 %v4395, %v4394
        %v4411 = vpack.c.b16 %v4397, %v4396
        %v4412 = vpack.c.b16 %v4399, %v4398
        %v4413 = vpack.c.b16 %v4401, %v4400
        %v4414 = vpack.c.b16 %v4403, %v4402
        %v4415 = vpack.c.b16 %v4405, %v4404
        %v4416 = vpack.c.b16 %v4407, %v4406
        %v4417 = vpack.c.b16 %v4409, %v4408
        %4426 = vmatprep.subr.bf16.mxu0 0
        %4427 = vmatpush1.bf16.msra.mxu0 %v4410
        %4428 = vmatprep.subr.bf16.mxu0 0
        %4429 = vmatpush1.bf16.msra.mxu0 %v4411
        %4430 = vmatprep.subr.bf16.mxu0 0
        %4431 = vmatpush1.bf16.msra.mxu0 %v4412
        %4432 = vmatprep.subr.bf16.mxu0 0
        %4433 = vmatpush1.bf16.msra.mxu0 %v4413
        %4434 = vmatprep.subr.bf16.mxu0 0
        %4435 = vmatpush1.bf16.msra.mxu0 %v4414
        %4436 = vmatprep.subr.bf16.mxu0 0
        %4437 = vmatpush1.bf16.msra.mxu0 %v4415
        %4438 = vmatprep.subr.bf16.mxu0 0
        %4439 = vmatpush1.bf16.msra.mxu0 %v4416
        %4440 = vmatprep.subr.bf16.mxu0 0
        %4441 = vmatpush1.bf16.msra.mxu0 %v4417
        %4442 = vmatprep.subr.bf16.mxu0 0
        %4443 = vmatpush1.bf16.msra.mxu0 0
        %4444 = vmatprep.subr.bf16.mxu0 0
        %4445 = vmatpush1.bf16.msra.mxu0 0
        %4446 = vmatprep.subr.bf16.mxu0 0
        %4447 = vmatpush1.bf16.msra.mxu0 0
        %4448 = vmatprep.subr.bf16.mxu0 0
        %4449 = vmatpush1.bf16.msra.mxu0 0
        %4450 = vmatprep.subr.bf16.mxu0 0
        %4451 = vmatpush1.bf16.msra.mxu0 0
        %4452 = vmatprep.subr.bf16.mxu0 0
        %4453 = vmatpush1.bf16.msra.mxu0 0
        %4454 = vmatprep.subr.bf16.mxu0 0
        %4455 = vmatpush1.bf16.msra.mxu0 0
        %4456 = vmatprep.subr.bf16.mxu0 0
        %4457 = vmatpush1.bf16.msra.mxu0 0
        %4458 = vmatprep.mubr.bf16.mxu0 0
        %4459 = vmatmul.mubr.bf16.gmra.mrb[0].mxu0 %v4374
        %v4460 = vpop.f32.mrb[0].mxu0
        %v4461 = vadd.f32 0.0, %v4460
        %v4462 = vpop.f32.mrb[0].mxu0
        %v4463 = vpop.f32.mrb[0].mxu0
        %v4464 = vadd.f32 0.0, %v4463
        %v4465 = vpop.f32.mrb[0].mxu0
        %4466 = vmatprep.mubr.bf16.mxu0 0
        %4467 = vmatmul.mubr.bf16.gmra.mrb[0].mxu0 %v4375
        %v4468 = vpop.f32.mrb[0].mxu0
        %v4469 = vadd.f32 0.0, %v4468
        %v4470 = vpop.f32.mrb[0].mxu0
        %v4471 = vpop.f32.mrb[0].mxu0
        %v4472 = vadd.f32 0.0, %v4471
        %v4473 = vpop.f32.mrb[0].mxu0
        %4474 = vmatprep.mubr.bf16.mxu0 0
        %4475 = vmatmul.mubr.bf16.gmra.mrb[0].mxu0 %v4376
        %v4476 = vpop.f32.mrb[0].mxu0
        %v4477 = vadd.f32 0.0, %v4476
        %v4478 = vpop.f32.mrb[0].mxu0
        %v4479 = vpop.f32.mrb[0].mxu0
        %v4480 = vadd.f32 0.0, %v4479
        %v4481 = vpop.f32.mrb[0].mxu0
        %4482 = vmatprep.mubr.bf16.mxu0 0
        %4483 = vmatmul.mubr.bf16.gmra.mrb[0].mxu0 %v4377
        %v4484 = vpop.f32.mrb[0].mxu0
        %v4485 = vadd.f32 0.0, %v4484
        %v4486 = vpop.f32.mrb[0].mxu0
        %v4487 = vpop.f32.mrb[0].mxu0
        %v4488 = vadd.f32 0.0, %v4487
        %v4489 = vpop.f32.mrb[0].mxu0
        %4490 = vdwg.mxu0
        %v4491 = vadd.f32 %v4341, %v4461
        %v4492 = vadd.f32 %v4342, %v4464
        %v4493 = vadd.f32 %v4343, %v4469
        %v4494 = vadd.f32 %v4344, %v4472
        %v4495 = vadd.f32 %v4345, %v4477
        %v4496 = vadd.f32 %v4346, %v4480
        %v4497 = vadd.f32 %v4347, %v4485
        %v4498 = vadd.f32 %v4348, %v4488
        %v4499 = vld [vmem:[#allocation2 + $0x1c] sm:$0xff]
        %v4500 = vld [vmem:[#allocation2 + $0x24] sm:$0xff]
        %v4501 = vld [vmem:[#allocation2 + $0x2c] sm:$0xff]
        %v4502 = vld [vmem:[#allocation2 + $0x34] sm:$0xff]
        %v4503 = vld [vmem:[#allocation2 + $0x3c] sm:$0xff]
        %v4504 = vld [vmem:[#allocation2 + $0x44] sm:$0xff]
        %v4505 = vld [vmem:[#allocation2 + $0x4c] sm:$0xff]
        %v4506 = vld [vmem:[#allocation2 + $0x54] sm:$0x7f]
        %s4507 = scalar_lea.vmem %s4, 512
        %v4508 = vld [vmem:[%s4507] sm:$0xf]
        %v4509 = vld [vmem:[%s4507 + $0x4] sm:$0xf]
        %v4510 = vld [vmem:[%s4507 + $0x8] sm:$0xf]
        %v4511 = vld [vmem:[%s4507 + $0xc] sm:$0xf]
        %v4512 = vld [vmem:[%s4507 + $0x10] sm:$0xf]
        %v4513 = vld [vmem:[%s4507 + $0x14] sm:$0xf]
        %v4514 = vld [vmem:[%s4507 + $0x18] sm:$0xf]
        %v4515 = vld [vmem:[%s4507 + $0x1c] sm:$0xf]
        %v4516 = vld [vmem:[%s4507 + $0x20] sm:$0xf]
        %v4517 = vld [vmem:[%s4507 + $0x24] sm:$0xf]
        %v4518 = vld [vmem:[%s4507 + $0x28] sm:$0xf]
        %v4519 = vld [vmem:[%s4507 + $0x2c] sm:$0xf]
        %v4520 = vld [vmem:[%s4507 + $0x30] sm:$0xf]
        %v4521 = vld [vmem:[%s4507 + $0x34] sm:$0xf]
        %v4522 = vld [vmem:[%s4507 + $0x38] sm:$0xf]
        %v4523 = vld [vmem:[%s4507 + $0x3c] sm:$0xf]
        %v4524 = vpack.c.bf16 %v4500, %v4499
        %v4525 = vpack.c.bf16 %v4502, %v4501
        %v4526 = vpack.c.bf16 %v4504, %v4503
        %v4527 = vpack.c.bf16 %v4506, %v4505
        %v4544 = vunpack.c.l.b16 %v4508
        %v4545 = vunpack.c.l.b16 %v4509
        %v4546 = vunpack.c.l.b16 %v4510
        %v4547 = vunpack.c.l.b16 %v4511
        %v4548 = vunpack.c.l.b16 %v4512
        %v4549 = vunpack.c.l.b16 %v4513
        %v4550 = vunpack.c.l.b16 %v4514
        %v4551 = vunpack.c.l.b16 %v4515
        %v4552 = vunpack.c.l.b16 %v4516
        %v4553 = vunpack.c.l.b16 %v4517
        %v4554 = vunpack.c.l.b16 %v4518
        %v4555 = vunpack.c.l.b16 %v4519
        %v4556 = vunpack.c.l.b16 %v4520
        %v4557 = vunpack.c.l.b16 %v4521
        %v4558 = vunpack.c.l.b16 %v4522
        %v4559 = vunpack.c.l.b16 %v4523
        %v4560 = vpack.c.b16 %v4545, %v4544
        %v4561 = vpack.c.b16 %v4547, %v4546
        %v4562 = vpack.c.b16 %v4549, %v4548
        %v4563 = vpack.c.b16 %v4551, %v4550
        %v4564 = vpack.c.b16 %v4553, %v4552
        %v4565 = vpack.c.b16 %v4555, %v4554
        %v4566 = vpack.c.b16 %v4557, %v4556
        %v4567 = vpack.c.b16 %v4559, %v4558
        %4576 = vmatprep.subr.bf16.mxu0 0
        %4577 = vmatpush1.bf16.msra.mxu0 %v4560
        %4578 = vmatprep.subr.bf16.mxu0 0
        %4579 = vmatpush1.bf16.msra.mxu0 %v4561
        %4580 = vmatprep.subr.bf16.mxu0 0
        %4581 = vmatpush1.bf16.msra.mxu0 %v4562
        %4582 = vmatprep.subr.bf16.mxu0 0
        %4583 = vmatpush1.bf16.msra.mxu0 %v4563
        %4584 = vmatprep.subr.bf16.mxu0 0
        %4585 = vmatpush1.bf16.msra.mxu0 %v4564
        %4586 = vmatprep.subr.bf16.mxu0 0
        %4587 = vmatpush1.bf16.msra.mxu0 %v4565
        %4588 = vmatprep.subr.bf16.mxu0 0
        %4589 = vmatpush1.bf16.msra.mxu0 %v4566
        %4590 = vmatprep.subr.bf16.mxu0 0
        %4591 = vmatpush1.bf16.msra.mxu0 %v4567
        %4592 = vmatprep.subr.bf16.mxu0 0
        %4593 = vmatpush1.bf16.msra.mxu0 0
        %4594 = vmatprep.subr.bf16.mxu0 0
        %4595 = vmatpush1.bf16.msra.mxu0 0
        %4596 = vmatprep.subr.bf16.mxu0 0
        %4597 = vmatpush1.bf16.msra.mxu0 0
        %4598 = vmatprep.subr.bf16.mxu0 0
        %4599 = vmatpush1.bf16.msra.mxu0 0
        %4600 = vmatprep.subr.bf16.mxu0 0
        %4601 = vmatpush1.bf16.msra.mxu0 0
        %4602 = vmatprep.subr.bf16.mxu0 0
        %4603 = vmatpush1.bf16.msra.mxu0 0
        %4604 = vmatprep.subr.bf16.mxu0 0
        %4605 = vmatpush1.bf16.msra.mxu0 0
        %4606 = vmatprep.subr.bf16.mxu0 0
        %4607 = vmatpush1.bf16.msra.mxu0 0
        %4608 = vmatprep.mubr.bf16.mxu0 0
        %4609 = vmatmul.mubr.bf16.gmra.mrb[0].mxu0 %v4524
        %v4610 = vpop.f32.mrb[0].mxu0
        %v4611 = vadd.f32 0.0, %v4610
        %v4612 = vpop.f32.mrb[0].mxu0
        %v4613 = vpop.f32.mrb[0].mxu0
        %v4614 = vadd.f32 0.0, %v4613
        %v4615 = vpop.f32.mrb[0].mxu0
        %4616 = vmatprep.mubr.bf16.mxu0 0
        %4617 = vmatmul.mubr.bf16.gmra.mrb[0].mxu0 %v4525
        %v4618 = vpop.f32.mrb[0].mxu0
        %v4619 = vadd.f32 0.0, %v4618
        %v4620 = vpop.f32.mrb[0].mxu0
        %v4621 = vpop.f32.mrb[0].mxu0
        %v4622 = vadd.f32 0.0, %v4621
        %v4623 = vpop.f32.mrb[0].mxu0
        %4624 = vmatprep.mubr.bf16.mxu0 0
        %4625 = vmatmul.mubr.bf16.gmra.mrb[0].mxu0 %v4526
        %v4626 = vpop.f32.mrb[0].mxu0
        %v4627 = vadd.f32 0.0, %v4626
        %v4628 = vpop.f32.mrb[0].mxu0
        %v4629 = vpop.f32.mrb[0].mxu0
        %v4630 = vadd.f32 0.0, %v4629
        %v4631 = vpop.f32.mrb[0].mxu0
        %4632 = vmatprep.mubr.bf16.mxu0 0
        %4633 = vmatmul.mubr.bf16.gmra.mrb[0].mxu0 %v4527
        %v4634 = vpop.f32.mrb[0].mxu0
        %v4635 = vadd.f32 0.0, %v4634
        %v4636 = vpop.f32.mrb[0].mxu0
        %v4637 = vpop.f32.mrb[0].mxu0
        %v4638 = vadd.f32 0.0, %v4637
        %v4639 = vpop.f32.mrb[0].mxu0
        %4640 = vdwg.mxu0
        %v4641 = vadd.f32 %v4491, %v4611
        %v4642 = vadd.f32 %v4492, %v4614
        %v4643 = vadd.f32 %v4493, %v4619
        %v4644 = vadd.f32 %v4494, %v4622
        %v4645 = vadd.f32 %v4495, %v4627
        %v4646 = vadd.f32 %v4496, %v4630
        %v4647 = vadd.f32 %v4497, %v4635
        %v4648 = vadd.f32 %v4498, %v4638
        %v4649 = vld [vmem:[%s5] sm:$0x1]
        %v4651 = vlaneseq
        %v4652 = vshrl.u32 %v4651, 7
        %v4653 = vsub.s32 0, %v4652
        %v4654 = vrot.slane %v4649, %v4653
        %v4656 = vadd.f32 %v4641, %v4654
        %v4657 = vadd.f32 %v4642, %v4654
        %v4658 = vadd.f32 %v4643, %v4654
        %v4659 = vadd.f32 %v4644, %v4654
        %v4660 = vadd.f32 %v4645, %v4654
        %v4661 = vadd.f32 %v4646, %v4654
        %v4662 = vadd.f32 %v4647, %v4654
        %v4663 = vadd.f32 %v4648, %v4654
        %v4664 = vmax.f32 %v4656, 0.0
        %v4665 = vmax.f32 %v4657, 0.0
        %v4666 = vmax.f32 %v4658, 0.0
        %v4667 = vmax.f32 %v4659, 0.0
        %v4668 = vmax.f32 %v4660, 0.0
        %v4669 = vmax.f32 %v4661, 0.0
        %v4670 = vmax.f32 %v4662, 0.0
        %v4671 = vmax.f32 %v4663, 0.0
        %v4672 = vld [vmem:[%s6] sm:$0xff]
        %v4673 = vld [vmem:[%s6 + $0x8] sm:$0xff]
        %v4674 = vld [vmem:[%s6 + $0x10] sm:$0xff]
        %v4675 = vld [vmem:[%s6 + $0x18] sm:$0xff]
        %v4676 = vld [vmem:[%s6 + $0x20] sm:$0x7]
        %vm4677 = vcmask 515072
        %v4679 = vsel %vm4677, %v4672, 0
        %v4682 = vsel %vm4677, %v4673, 0
        %v4685 = vsel %vm4677, %v4674, 0
        %v4688 = vsel %vm4677, %v4675, 0
        %v4691 = vsel %vm4677, %v4676, 0
        %vm4693 = vcmask 1046528
        %v4695 = vsel %vm4693, %v4671, 0
        %4697 = vmatprep.subr.mxu0 0.0
        %4698 = vmatpush1.msra.mxu0 %v4664
        %4699 = vmatprep.subr.mxu0 0.0
        %4700 = vmatpush1.msra.mxu0 %v4665
        %4701 = vmatprep.subr.mxu0 0.0
        %4702 = vmatpush1.msra.mxu0 %v4666
        %4703 = vmatprep.subr.mxu0 0.0
        %4704 = vmatpush1.msra.mxu0 %v4667
        %4705 = vmatprep.subr.mxu0 0.0
        %4706 = vmatpush1.msra.mxu0 %v4668
        %4707 = vmatprep.subr.mxu0 0.0
        %4708 = vmatpush1.msra.mxu0 %v4669
        %4709 = vmatprep.subr.mxu0 0.0
        %4710 = vmatpush1.msra.mxu0 %v4670
        %4711 = vmatprep.subr.mxu0 0.0
        %4712 = vmatpush1.msra.mxu0 %v4695
        %4713 = vmatprep.subr.mxu0 0.0
        %4714 = vmatpush1.msra.mxu0 0.0
        %4715 = vmatprep.subr.mxu0 0.0
        %4716 = vmatpush1.msra.mxu0 0.0
        %4717 = vmatprep.subr.mxu0 0.0
        %4718 = vmatpush1.msra.mxu0 0.0
        %4719 = vmatprep.subr.mxu0 0.0
        %4720 = vmatpush1.msra.mxu0 0.0
        %4721 = vmatprep.subr.mxu0 0.0
        %4722 = vmatpush1.msra.mxu0 0.0
        %4723 = vmatprep.subr.mxu0 0.0
        %4724 = vmatpush1.msra.mxu0 0.0
        %4725 = vmatprep.subr.mxu0 0.0
        %4726 = vmatpush1.msra.mxu0 0.0
        %4727 = vmatprep.subr.mxu0 0.0
        %4728 = vmatpush1.msra.mxu0 0.0
        %4729 = vmatprep.subr.mxu0 0.0
        %4730 = vmatpush1.msra.mxu0 0.0
        %4731 = vmatprep.subr.mxu0 0.0
        %4732 = vmatpush1.msra.mxu0 0.0
        %4733 = vmatprep.subr.mxu0 0.0
        %4734 = vmatpush1.msra.mxu0 0.0
        %4735 = vmatprep.subr.mxu0 0.0
        %4736 = vmatpush1.msra.mxu0 0.0
        %4737 = vmatprep.subr.mxu0 0.0
        %4738 = vmatpush1.msra.mxu0 0.0
        %4739 = vmatprep.subr.mxu0 0.0
        %4740 = vmatpush1.msra.mxu0 0.0
        %4741 = vmatprep.subr.mxu0 0.0
        %4742 = vmatpush1.msra.mxu0 0.0
        %4743 = vmatprep.subr.mxu0 0.0
        %4744 = vmatpush1.msra.mxu0 0.0
        %4745 = vmatprep.subr.mxu0 0.0
        %4746 = vmatpush1.msra.mxu0 0.0
        %4747 = vmatprep.subr.mxu0 0.0
        %4748 = vmatpush1.msra.mxu0 0.0
        %4749 = vmatprep.subr.mxu0 0.0
        %4750 = vmatpush1.msra.mxu0 0.0
        %4751 = vmatprep.subr.mxu0 0.0
        %4752 = vmatpush1.msra.mxu0 0.0
        %4753 = vmatprep.subr.mxu0 0.0
        %4754 = vmatpush1.msra.mxu0 0.0
        %4755 = vmatprep.subr.mxu0 0.0
        %4756 = vmatpush1.msra.mxu0 0.0
        %4757 = vmatprep.subr.mxu0 0.0
        %4758 = vmatpush1.msra.mxu0 0.0
        %4759 = vmatprep.subr.mxu0 0.0
        %4760 = vmatpush1.msra.mxu0 0.0
        %4761 = vmatprep.mubr.f32.mxu0 0.0
        %4762 = vmatmul.mubr.f32.gmra.mrb[0].mxu0 %v4679
        %v4763 = vpop.f32.mrb[0].mxu0
        %v4764 = vadd.f32 0.0, %v4763
        %v4765 = vpop.f32.mrb[0].mxu0
        %4766 = vmatprep.mubr.f32.mxu0 0.0
        %4767 = vmatmul.mubr.f32.gmra.mrb[0].mxu0 %v4682
        %v4768 = vpop.f32.mrb[0].mxu0
        %v4769 = vadd.f32 0.0, %v4768
        %v4770 = vpop.f32.mrb[0].mxu0
        %4771 = vmatprep.mubr.f32.mxu0 0.0
        %4772 = vmatmul.mubr.f32.gmra.mrb[0].mxu0 %v4685
        %v4773 = vpop.f32.mrb[0].mxu0
        %v4774 = vadd.f32 0.0, %v4773
        %v4775 = vpop.f32.mrb[0].mxu0
        %4776 = vmatprep.mubr.f32.mxu0 0.0
        %4777 = vmatmul.mubr.f32.gmra.mrb[0].mxu0 %v4688
        %v4778 = vpop.f32.mrb[0].mxu0
        %v4779 = vadd.f32 0.0, %v4778
        %v4780 = vpop.f32.mrb[0].mxu0
        %4781 = vmatprep.mubr.f32.mxu0 0.0
        %4782 = vmatmul.mubr.f32.gmra.mrb[0].mxu0 %v4691
        %v4783 = vpop.f32.mrb[0].mxu0
        %v4784 = vadd.f32 0.0, %v4783
        %v4785 = vpop.f32.mrb[0].mxu0
        %4786 = vdwg.mxu0
        %s4787 = scalar_lea.vmem %s6, 40
        %v4788 = vld [vmem:[%s4787] sm:$0xff]
        %v4789 = vld [vmem:[%s4787 + $0x8] sm:$0xff]
        %v4790 = vld [vmem:[%s4787 + $0x10] sm:$0xff]
        %v4791 = vld [vmem:[%s4787 + $0x18] sm:$0xff]
        %v4792 = vld [vmem:[%s4787 + $0x20] sm:$0x7]
        %v4794 = vsel %vm4677, %v4788, 0
        %v4797 = vsel %vm4677, %v4789, 0
        %v4800 = vsel %vm4677, %v4790, 0
        %v4803 = vsel %vm4677, %v4791, 0
        %v4806 = vsel %vm4677, %v4792, 0
        %4808 = vmatprep.subr.mxu0 0.0
        %4809 = vmatpush1.msra.mxu0 %v4664
        %4810 = vmatprep.subr.mxu0 0.0
        %4811 = vmatpush1.msra.mxu0 %v4665
        %4812 = vmatprep.subr.mxu0 0.0
        %4813 = vmatpush1.msra.mxu0 %v4666
        %4814 = vmatprep.subr.mxu0 0.0
        %4815 = vmatpush1.msra.mxu0 %v4667
        %4816 = vmatprep.subr.mxu0 0.0
        %4817 = vmatpush1.msra.mxu0 %v4668
        %4818 = vmatprep.subr.mxu0 0.0
        %4819 = vmatpush1.msra.mxu0 %v4669
        %4820 = vmatprep.subr.mxu0 0.0
        %4821 = vmatpush1.msra.mxu0 %v4670
        %4822 = vmatprep.subr.mxu0 0.0
        %4823 = vmatpush1.msra.mxu0 %v4695
        %4824 = vmatprep.subr.mxu0 0.0
        %4825 = vmatpush1.msra.mxu0 0.0
        %4826 = vmatprep.subr.mxu0 0.0
        %4827 = vmatpush1.msra.mxu0 0.0
        %4828 = vmatprep.subr.mxu0 0.0
        %4829 = vmatpush1.msra.mxu0 0.0
        %4830 = vmatprep.subr.mxu0 0.0
        %4831 = vmatpush1.msra.mxu0 0.0
        %4832 = vmatprep.subr.mxu0 0.0
        %4833 = vmatpush1.msra.mxu0 0.0
        %4834 = vmatprep.subr.mxu0 0.0
        %4835 = vmatpush1.msra.mxu0 0.0
        %4836 = vmatprep.subr.mxu0 0.0
        %4837 = vmatpush1.msra.mxu0 0.0
        %4838 = vmatprep.subr.mxu0 0.0
        %4839 = vmatpush1.msra.mxu0 0.0
        %4840 = vmatprep.subr.mxu0 0.0
        %4841 = vmatpush1.msra.mxu0 0.0
        %4842 = vmatprep.subr.mxu0 0.0
        %4843 = vmatpush1.msra.mxu0 0.0
        %4844 = vmatprep.subr.mxu0 0.0
        %4845 = vmatpush1.msra.mxu0 0.0
        %4846 = vmatprep.subr.mxu0 0.0
        %4847 = vmatpush1.msra.mxu0 0.0
        %4848 = vmatprep.subr.mxu0 0.0
        %4849 = vmatpush1.msra.mxu0 0.0
        %4850 = vmatprep.subr.mxu0 0.0
        %4851 = vmatpush1.msra.mxu0 0.0
        %4852 = vmatprep.subr.mxu0 0.0
        %4853 = vmatpush1.msra.mxu0 0.0
        %4854 = vmatprep.subr.mxu0 0.0
        %4855 = vmatpush1.msra.mxu0 0.0
        %4856 = vmatprep.subr.mxu0 0.0
        %4857 = vmatpush1.msra.mxu0 0.0
        %4858 = vmatprep.subr.mxu0 0.0
        %4859 = vmatpush1.msra.mxu0 0.0
        %4860 = vmatprep.subr.mxu0 0.0
        %4861 = vmatpush1.msra.mxu0 0.0
        %4862 = vmatprep.subr.mxu0 0.0
        %4863 = vmatpush1.msra.mxu0 0.0
        %4864 = vmatprep.subr.mxu0 0.0
        %4865 = vmatpush1.msra.mxu0 0.0
        %4866 = vmatprep.subr.mxu0 0.0
        %4867 = vmatpush1.msra.mxu0 0.0
        %4868 = vmatprep.subr.mxu0 0.0
        %4869 = vmatpush1.msra.mxu0 0.0
        %4870 = vmatprep.subr.mxu0 0.0
        %4871 = vmatpush1.msra.mxu0 0.0
        %4872 = vmatprep.mubr.f32.mxu0 0.0
        %4873 = vmatmul.mubr.f32.gmra.mrb[0].mxu0 %v4794
        %v4874 = vpop.f32.mrb[0].mxu0
        %v4875 = vadd.f32 0.0, %v4874
        %v4876 = vpop.f32.mrb[0].mxu0
        %4877 = vmatprep.mubr.f32.mxu0 0.0
        %4878 = vmatmul.mubr.f32.gmra.mrb[0].mxu0 %v4797
        %v4879 = vpop.f32.mrb[0].mxu0
        %v4880 = vadd.f32 0.0, %v4879
        %v4881 = vpop.f32.mrb[0].mxu0
        %4882 = vmatprep.mubr.f32.mxu0 0.0
        %4883 = vmatmul.mubr.f32.gmra.mrb[0].mxu0 %v4800
        %v4884 = vpop.f32.mrb[0].mxu0
        %v4885 = vadd.f32 0.0, %v4884
        %v4886 = vpop.f32.mrb[0].mxu0
        %4887 = vmatprep.mubr.f32.mxu0 0.0
        %4888 = vmatmul.mubr.f32.gmra.mrb[0].mxu0 %v4803
        %v4889 = vpop.f32.mrb[0].mxu0
        %v4890 = vadd.f32 0.0, %v4889
        %v4891 = vpop.f32.mrb[0].mxu0
        %4892 = vmatprep.mubr.f32.mxu0 0.0
        %4893 = vmatmul.mubr.f32.gmra.mrb[0].mxu0 %v4806
        %v4894 = vpop.f32.mrb[0].mxu0
        %v4895 = vadd.f32 0.0, %v4894
        %v4896 = vpop.f32.mrb[0].mxu0
        %4897 = vdwg.mxu0
        %v4898 = vmax.f32 %v4764, %v4875
        %v4899 = vmax.f32 %v4769, %v4880
        %v4900 = vmax.f32 %v4774, %v4885
        %v4901 = vmax.f32 %v4779, %v4890
        %v4902 = vmax.f32 %v4784, %v4895
        %s4903 = scalar_lea.vmem %s6, 80
        %v4904 = vld [vmem:[%s4903] sm:$0xff]
        %v4905 = vld [vmem:[%s4903 + $0x8] sm:$0xff]
        %v4906 = vld [vmem:[%s4903 + $0x10] sm:$0xff]
        %v4907 = vld [vmem:[%s4903 + $0x18] sm:$0xff]
        %v4908 = vld [vmem:[%s4903 + $0x20] sm:$0x7]
        %v4910 = vsel %vm4677, %v4904, 0
        %v4913 = vsel %vm4677, %v4905, 0
        %v4916 = vsel %vm4677, %v4906, 0
        %v4919 = vsel %vm4677, %v4907, 0
        %v4922 = vsel %vm4677, %v4908, 0
        %4924 = vmatprep.subr.mxu0 0.0
        %4925 = vmatpush1.msra.mxu0 %v4664
        %4926 = vmatprep.subr.mxu0 0.0
        %4927 = vmatpush1.msra.mxu0 %v4665
        %4928 = vmatprep.subr.mxu0 0.0
        %4929 = vmatpush1.msra.mxu0 %v4666
        %4930 = vmatprep.subr.mxu0 0.0
        %4931 = vmatpush1.msra.mxu0 %v4667
        %4932 = vmatprep.subr.mxu0 0.0
        %4933 = vmatpush1.msra.mxu0 %v4668
        %4934 = vmatprep.subr.mxu0 0.0
        %4935 = vmatpush1.msra.mxu0 %v4669
        %4936 = vmatprep.subr.mxu0 0.0
        %4937 = vmatpush1.msra.mxu0 %v4670
        %4938 = vmatprep.subr.mxu0 0.0
        %4939 = vmatpush1.msra.mxu0 %v4695
        %4940 = vmatprep.subr.mxu0 0.0
        %4941 = vmatpush1.msra.mxu0 0.0
        %4942 = vmatprep.subr.mxu0 0.0
        %4943 = vmatpush1.msra.mxu0 0.0
        %4944 = vmatprep.subr.mxu0 0.0
        %4945 = vmatpush1.msra.mxu0 0.0
        %4946 = vmatprep.subr.mxu0 0.0
        %4947 = vmatpush1.msra.mxu0 0.0
        %4948 = vmatprep.subr.mxu0 0.0
        %4949 = vmatpush1.msra.mxu0 0.0
        %4950 = vmatprep.subr.mxu0 0.0
        %4951 = vmatpush1.msra.mxu0 0.0
        %4952 = vmatprep.subr.mxu0 0.0
        %4953 = vmatpush1.msra.mxu0 0.0
        %4954 = vmatprep.subr.mxu0 0.0
        %4955 = vmatpush1.msra.mxu0 0.0
        %4956 = vmatprep.subr.mxu0 0.0
        %4957 = vmatpush1.msra.mxu0 0.0
        %4958 = vmatprep.subr.mxu0 0.0
        %4959 = vmatpush1.msra.mxu0 0.0
        %4960 = vmatprep.subr.mxu0 0.0
        %4961 = vmatpush1.msra.mxu0 0.0
        %4962 = vmatprep.subr.mxu0 0.0
        %4963 = vmatpush1.msra.mxu0 0.0
        %4964 = vmatprep.subr.mxu0 0.0
        %4965 = vmatpush1.msra.mxu0 0.0
        %4966 = vmatprep.subr.mxu0 0.0
        %4967 = vmatpush1.msra.mxu0 0.0
        %4968 = vmatprep.subr.mxu0 0.0
        %4969 = vmatpush1.msra.mxu0 0.0
        %4970 = vmatprep.subr.mxu0 0.0
        %4971 = vmatpush1.msra.mxu0 0.0
        %4972 = vmatprep.subr.mxu0 0.0
        %4973 = vmatpush1.msra.mxu0 0.0
        %4974 = vmatprep.subr.mxu0 0.0
        %4975 = vmatpush1.msra.mxu0 0.0
        %4976 = vmatprep.subr.mxu0 0.0
        %4977 = vmatpush1.msra.mxu0 0.0
        %4978 = vmatprep.subr.mxu0 0.0
        %4979 = vmatpush1.msra.mxu0 0.0
        %4980 = vmatprep.subr.mxu0 0.0
        %4981 = vmatpush1.msra.mxu0 0.0
        %4982 = vmatprep.subr.mxu0 0.0
        %4983 = vmatpush1.msra.mxu0 0.0
        %4984 = vmatprep.subr.mxu0 0.0
        %4985 = vmatpush1.msra.mxu0 0.0
        %4986 = vmatprep.subr.mxu0 0.0
        %4987 = vmatpush1.msra.mxu0 0.0
        %4988 = vmatprep.mubr.f32.mxu0 0.0
        %4989 = vmatmul.mubr.f32.gmra.mrb[0].mxu0 %v4910
        %v4990 = vpop.f32.mrb[0].mxu0
        %v4991 = vadd.f32 0.0, %v4990
        %v4992 = vpop.f32.mrb[0].mxu0
        %4993 = vmatprep.mubr.f32.mxu0 0.0
        %4994 = vmatmul.mubr.f32.gmra.mrb[0].mxu0 %v4913
        %v4995 = vpop.f32.mrb[0].mxu0
        %v4996 = vadd.f32 0.0, %v4995
        %v4997 = vpop.f32.mrb[0].mxu0
        %4998 = vmatprep.mubr.f32.mxu0 0.0
        %4999 = vmatmul.mubr.f32.gmra.mrb[0].mxu0 %v4916
        %v5000 = vpop.f32.mrb[0].mxu0
        %v5001 = vadd.f32 0.0, %v5000
        %v5002 = vpop.f32.mrb[0].mxu0
        %5003 = vmatprep.mubr.f32.mxu0 0.0
        %5004 = vmatmul.mubr.f32.gmra.mrb[0].mxu0 %v4919
        %v5005 = vpop.f32.mrb[0].mxu0
        %v5006 = vadd.f32 0.0, %v5005
        %v5007 = vpop.f32.mrb[0].mxu0
        %5008 = vmatprep.mubr.f32.mxu0 0.0
        %5009 = vmatmul.mubr.f32.gmra.mrb[0].mxu0 %v4922
        %v5010 = vpop.f32.mrb[0].mxu0
        %v5011 = vadd.f32 0.0, %v5010
        %v5012 = vpop.f32.mrb[0].mxu0
        %5013 = vdwg.mxu0
        %v5014 = vmax.f32 %v4898, %v4991
        %v5015 = vmax.f32 %v4899, %v4996
        %v5016 = vmax.f32 %v4900, %v5001
        %v5017 = vmax.f32 %v4901, %v5006
        %v5018 = vmax.f32 %v4902, %v5011
        %s5019 = scalar_lea.vmem %s6, 120
        %v5020 = vld [vmem:[%s5019] sm:$0xff]
        %v5021 = vld [vmem:[%s5019 + $0x8] sm:$0xff]
        %v5022 = vld [vmem:[%s5019 + $0x10] sm:$0xff]
        %v5023 = vld [vmem:[%s5019 + $0x18] sm:$0xff]
        %v5024 = vld [vmem:[%s5019 + $0x20] sm:$0x7]
        %v5026 = vsel %vm4677, %v5020, 0
        %v5029 = vsel %vm4677, %v5021, 0
        %v5032 = vsel %vm4677, %v5022, 0
        %v5035 = vsel %vm4677, %v5023, 0
        %v5038 = vsel %vm4677, %v5024, 0
        %5040 = vmatprep.subr.mxu0 0.0
        %5041 = vmatpush1.msra.mxu0 %v4664
        %5042 = vmatprep.subr.mxu0 0.0
        %5043 = vmatpush1.msra.mxu0 %v4665
        %5044 = vmatprep.subr.mxu0 0.0
        %5045 = vmatpush1.msra.mxu0 %v4666
        %5046 = vmatprep.subr.mxu0 0.0
        %5047 = vmatpush1.msra.mxu0 %v4667
        %5048 = vmatprep.subr.mxu0 0.0
        %5049 = vmatpush1.msra.mxu0 %v4668
        %5050 = vmatprep.subr.mxu0 0.0
        %5051 = vmatpush1.msra.mxu0 %v4669
        %5052 = vmatprep.subr.mxu0 0.0
        %5053 = vmatpush1.msra.mxu0 %v4670
        %5054 = vmatprep.subr.mxu0 0.0
        %5055 = vmatpush1.msra.mxu0 %v4695
        %5056 = vmatprep.subr.mxu0 0.0
        %5057 = vmatpush1.msra.mxu0 0.0
        %5058 = vmatprep.subr.mxu0 0.0
        %5059 = vmatpush1.msra.mxu0 0.0
        %5060 = vmatprep.subr.mxu0 0.0
        %5061 = vmatpush1.msra.mxu0 0.0
        %5062 = vmatprep.subr.mxu0 0.0
        %5063 = vmatpush1.msra.mxu0 0.0
        %5064 = vmatprep.subr.mxu0 0.0
        %5065 = vmatpush1.msra.mxu0 0.0
        %5066 = vmatprep.subr.mxu0 0.0
        %5067 = vmatpush1.msra.mxu0 0.0
        %5068 = vmatprep.subr.mxu0 0.0
        %5069 = vmatpush1.msra.mxu0 0.0
        %5070 = vmatprep.subr.mxu0 0.0
        %5071 = vmatpush1.msra.mxu0 0.0
        %5072 = vmatprep.subr.mxu0 0.0
        %5073 = vmatpush1.msra.mxu0 0.0
        %5074 = vmatprep.subr.mxu0 0.0
        %5075 = vmatpush1.msra.mxu0 0.0
        %5076 = vmatprep.subr.mxu0 0.0
        %5077 = vmatpush1.msra.mxu0 0.0
        %5078 = vmatprep.subr.mxu0 0.0
        %5079 = vmatpush1.msra.mxu0 0.0
        %5080 = vmatprep.subr.mxu0 0.0
        %5081 = vmatpush1.msra.mxu0 0.0
        %5082 = vmatprep.subr.mxu0 0.0
        %5083 = vmatpush1.msra.mxu0 0.0
        %5084 = vmatprep.subr.mxu0 0.0
        %5085 = vmatpush1.msra.mxu0 0.0
        %5086 = vmatprep.subr.mxu0 0.0
        %5087 = vmatpush1.msra.mxu0 0.0
        %5088 = vmatprep.subr.mxu0 0.0
        %5089 = vmatpush1.msra.mxu0 0.0
        %5090 = vmatprep.subr.mxu0 0.0
        %5091 = vmatpush1.msra.mxu0 0.0
        %5092 = vmatprep.subr.mxu0 0.0
        %5093 = vmatpush1.msra.mxu0 0.0
        %5094 = vmatprep.subr.mxu0 0.0
        %5095 = vmatpush1.msra.mxu0 0.0
        %5096 = vmatprep.subr.mxu0 0.0
        %5097 = vmatpush1.msra.mxu0 0.0
        %5098 = vmatprep.subr.mxu0 0.0
        %5099 = vmatpush1.msra.mxu0 0.0
        %5100 = vmatprep.subr.mxu0 0.0
        %5101 = vmatpush1.msra.mxu0 0.0
        %5102 = vmatprep.subr.mxu0 0.0
        %5103 = vmatpush1.msra.mxu0 0.0
        %5104 = vmatprep.mubr.f32.mxu0 0.0
        %5105 = vmatmul.mubr.f32.gmra.mrb[0].mxu0 %v5026
        %v5106 = vpop.f32.mrb[0].mxu0
        %v5107 = vadd.f32 0.0, %v5106
        %v5108 = vpop.f32.mrb[0].mxu0
        %5109 = vmatprep.mubr.f32.mxu0 0.0
        %5110 = vmatmul.mubr.f32.gmra.mrb[0].mxu0 %v5029
        %v5111 = vpop.f32.mrb[0].mxu0
        %v5112 = vadd.f32 0.0, %v5111
        %v5113 = vpop.f32.mrb[0].mxu0
        %5114 = vmatprep.mubr.f32.mxu0 0.0
        %5115 = vmatmul.mubr.f32.gmra.mrb[0].mxu0 %v5032
        %v5116 = vpop.f32.mrb[0].mxu0
        %v5117 = vadd.f32 0.0, %v5116
        %v5118 = vpop.f32.mrb[0].mxu0
        %5119 = vmatprep.mubr.f32.mxu0 0.0
        %5120 = vmatmul.mubr.f32.gmra.mrb[0].mxu0 %v5035
        %v5121 = vpop.f32.mrb[0].mxu0
        %v5122 = vadd.f32 0.0, %v5121
        %v5123 = vpop.f32.mrb[0].mxu0
        %5124 = vmatprep.mubr.f32.mxu0 0.0
        %5125 = vmatmul.mubr.f32.gmra.mrb[0].mxu0 %v5038
        %v5126 = vpop.f32.mrb[0].mxu0
        %v5127 = vadd.f32 0.0, %v5126
        %v5128 = vpop.f32.mrb[0].mxu0
        %5129 = vdwg.mxu0
        %v5130 = vmax.f32 %v5014, %v5107
        %v5131 = vmax.f32 %v5015, %v5112
        %v5132 = vmax.f32 %v5016, %v5117
        %v5133 = vmax.f32 %v5017, %v5122
        %v5134 = vmax.f32 %v5018, %v5127
        %5135 = vst [vmem:[#allocation3] sm:$0xff] %v5130
        %5136 = vst [vmem:[#allocation3 + $0x8] sm:$0xff] %v5131
        %5137 = vst [vmem:[#allocation3 + $0x10] sm:$0xff] %v5132
        %5138 = vst [vmem:[#allocation3 + $0x18] sm:$0xff] %v5133
        %5139 = vst [vmem:[#allocation3 + $0x20] sm:$0x7] %v5134
        %v5140 = vld [vmem:[#allocation3 + $0x4] sm:$0xff]
        %v5141 = vld [vmem:[#allocation3 + $0xc] sm:$0x7f]
        %v5142 = vld [vmem:[%s7] sm:$0xf]
        %v5143 = vld [vmem:[%s7 + $0x4] sm:$0xf]
        %v5144 = vld [vmem:[%s7 + $0x8] sm:$0xf]
        %v5145 = vld [vmem:[%s7 + $0xc] sm:$0xf]
        %v5146 = vld [vmem:[%s7 + $0x10] sm:$0xf]
        %v5147 = vld [vmem:[%s7 + $0x14] sm:$0xf]
        %v5148 = vld [vmem:[%s7 + $0x18] sm:$0xf]
        %v5149 = vld [vmem:[%s7 + $0x1c] sm:$0xf]
        %v5150 = vld [vmem:[%s7 + $0x20] sm:$0xf]
        %v5151 = vld [vmem:[%s7 + $0x24] sm:$0xf]
        %v5152 = vld [vmem:[%s7 + $0x28] sm:$0xf]
        %v5153 = vld [vmem:[%s7 + $0x2c] sm:$0xf]
        %v5154 = vld [vmem:[%s7 + $0x30] sm:$0xf]
        %v5155 = vld [vmem:[%s7 + $0x34] sm:$0xf]
        %v5156 = vld [vmem:[%s7 + $0x38] sm:$0xf]
        %v5157 = vld [vmem:[%s7 + $0x3c] sm:$0xf]
        %v5158 = vpack.c.bf16 %v5141, %v5140
        %v5159 = vld [vmem:[#allocation3 + $0x5] sm:$0xff]
        %v5160 = vld [vmem:[#allocation3 + $0xd] sm:$0x7f]
        %s5161 = scalar_lea.vmem %s7, 64
        %v5162 = vld [vmem:[%s5161] sm:$0xf]
        %v5163 = vld [vmem:[%s5161 + $0x4] sm:$0xf]
        %v5164 = vld [vmem:[%s5161 + $0x8] sm:$0xf]
        %v5165 = vld [vmem:[%s5161 + $0xc] sm:$0xf]
        %v5166 = vld [vmem:[%s5161 + $0x10] sm:$0xf]
        %v5167 = vld [vmem:[%s5161 + $0x14] sm:$0xf]
        %v5168 = vld [vmem:[%s5161 + $0x18] sm:$0xf]
        %v5169 = vld [vmem:[%s5161 + $0x1c] sm:$0xf]
        %v5170 = vld [vmem:[%s5161 + $0x20] sm:$0xf]
        %v5171 = vld [vmem:[%s5161 + $0x24] sm:$0xf]
        %v5172 = vld [vmem:[%s5161 + $0x28] sm:$0xf]
        %v5173 = vld [vmem:[%s5161 + $0x2c] sm:$0xf]
        %v5174 = vld [vmem:[%s5161 + $0x30] sm:$0xf]
        %v5175 = vld [vmem:[%s5161 + $0x34] sm:$0xf]
        %v5176 = vld [vmem:[%s5161 + $0x38] sm:$0xf]
        %v5177 = vld [vmem:[%s5161 + $0x3c] sm:$0xf]
        %v5178 = vpack.c.bf16 %v5160, %v5159
        %v5195 = vunpack.c.l.b16 %v5162
        %v5196 = vunpack.c.l.b16 %v5163
        %v5197 = vunpack.c.l.b16 %v5164
        %v5198 = vunpack.c.l.b16 %v5165
        %v5199 = vunpack.c.l.b16 %v5166
        %v5200 = vunpack.c.l.b16 %v5167
        %v5201 = vunpack.c.l.b16 %v5168
        %v5202 = vunpack.c.l.b16 %v5169
        %v5203 = vunpack.c.l.b16 %v5170
        %v5204 = vunpack.c.l.b16 %v5171
        %v5205 = vunpack.c.l.b16 %v5172
        %v5206 = vunpack.c.l.b16 %v5173
        %v5207 = vunpack.c.l.b16 %v5174
        %v5208 = vunpack.c.l.b16 %v5175
        %v5209 = vunpack.c.l.b16 %v5176
        %v5210 = vunpack.c.l.b16 %v5177
        %v5211 = vpack.c.b16 %v5196, %v5195
        %v5212 = vpack.c.b16 %v5198, %v5197
        %v5213 = vpack.c.b16 %v5200, %v5199
        %v5214 = vpack.c.b16 %v5202, %v5201
        %v5215 = vpack.c.b16 %v5204, %v5203
        %v5216 = vpack.c.b16 %v5206, %v5205
        %v5217 = vpack.c.b16 %v5208, %v5207
        %v5218 = vpack.c.b16 %v5210, %v5209
        %5227 = vmatprep.subr.bf16.mxu0 0
        %5228 = vmatpush1.bf16.msra.mxu0 %v5211
        %5229 = vmatprep.subr.bf16.mxu0 0
        %5230 = vmatpush1.bf16.msra.mxu0 %v5212
        %5231 = vmatprep.subr.bf16.mxu0 0
        %5232 = vmatpush1.bf16.msra.mxu0 %v5213
        %5233 = vmatprep.subr.bf16.mxu0 0
        %5234 = vmatpush1.bf16.msra.mxu0 %v5214
        %5235 = vmatprep.subr.bf16.mxu0 0
        %5236 = vmatpush1.bf16.msra.mxu0 %v5215
        %5237 = vmatprep.subr.bf16.mxu0 0
        %5238 = vmatpush1.bf16.msra.mxu0 %v5216
        %5239 = vmatprep.subr.bf16.mxu0 0
        %5240 = vmatpush1.bf16.msra.mxu0 %v5217
        %5241 = vmatprep.subr.bf16.mxu0 0
        %5242 = vmatpush1.bf16.msra.mxu0 %v5218
        %5243 = vmatprep.subr.bf16.mxu0 0
        %5244 = vmatpush1.bf16.msra.mxu0 0
        %5245 = vmatprep.subr.bf16.mxu0 0
        %5246 = vmatpush1.bf16.msra.mxu0 0
        %5247 = vmatprep.subr.bf16.mxu0 0
        %5248 = vmatpush1.bf16.msra.mxu0 0
        %5249 = vmatprep.subr.bf16.mxu0 0
        %5250 = vmatpush1.bf16.msra.mxu0 0
        %5251 = vmatprep.subr.bf16.mxu0 0
        %5252 = vmatpush1.bf16.msra.mxu0 0
        %5253 = vmatprep.subr.bf16.mxu0 0
        %5254 = vmatpush1.bf16.msra.mxu0 0
        %5255 = vmatprep.subr.bf16.mxu0 0
        %5256 = vmatpush1.bf16.msra.mxu0 0
        %5257 = vmatprep.subr.bf16.mxu0 0
        %5258 = vmatpush1.bf16.msra.mxu0 0
        %5259 = vmatprep.mubr.bf16.mxu0 0
        %5260 = vmatmul.mubr.bf16.gmra.mrb[0].mxu0 %v5178
        %v5261 = vpop.f32.mrb[0].mxu0
        %v5262 = vadd.f32 0.0, %v5261
        %v5263 = vpop.f32.mrb[0].mxu0
        %v5264 = vpop.f32.mrb[0].mxu0
        %v5265 = vadd.f32 0.0, %v5264
        %v5266 = vpop.f32.mrb[0].mxu0
        %5267 = vdwg.mxu0
        %v5284 = vunpack.c.l.b16 %v5142
        %v5285 = vunpack.c.l.b16 %v5143
        %v5286 = vunpack.c.l.b16 %v5144
        %v5287 = vunpack.c.l.b16 %v5145
        %v5288 = vunpack.c.l.b16 %v5146
        %v5289 = vunpack.c.l.b16 %v5147
        %v5290 = vunpack.c.l.b16 %v5148
        %v5291 = vunpack.c.l.b16 %v5149
        %v5292 = vunpack.c.l.b16 %v5150
        %v5293 = vunpack.c.l.b16 %v5151
        %v5294 = vunpack.c.l.b16 %v5152
        %v5295 = vunpack.c.l.b16 %v5153
        %v5296 = vunpack.c.l.b16 %v5154
        %v5297 = vunpack.c.l.b16 %v5155
        %v5298 = vunpack.c.l.b16 %v5156
        %v5299 = vunpack.c.l.b16 %v5157
        %v5300 = vpack.c.b16 %v5285, %v5284
        %v5301 = vpack.c.b16 %v5287, %v5286
        %v5302 = vpack.c.b16 %v5289, %v5288
        %v5303 = vpack.c.b16 %v5291, %v5290
        %v5304 = vpack.c.b16 %v5293, %v5292
        %v5305 = vpack.c.b16 %v5295, %v5294
        %v5306 = vpack.c.b16 %v5297, %v5296
        %v5307 = vpack.c.b16 %v5299, %v5298
        %5316 = vmatprep.subr.bf16.mxu0 0
        %5317 = vmatpush1.bf16.msra.mxu0 %v5300
        %5318 = vmatprep.subr.bf16.mxu0 0
        %5319 = vmatpush1.bf16.msra.mxu0 %v5301
        %5320 = vmatprep.subr.bf16.mxu0 0
        %5321 = vmatpush1.bf16.msra.mxu0 %v5302
        %5322 = vmatprep.subr.bf16.mxu0 0
        %5323 = vmatpush1.bf16.msra.mxu0 %v5303
        %5324 = vmatprep.subr.bf16.mxu0 0
        %5325 = vmatpush1.bf16.msra.mxu0 %v5304
        %5326 = vmatprep.subr.bf16.mxu0 0
        %5327 = vmatpush1.bf16.msra.mxu0 %v5305
        %5328 = vmatprep.subr.bf16.mxu0 0
        %5329 = vmatpush1.bf16.msra.mxu0 %v5306
        %5330 = vmatprep.subr.bf16.mxu0 0
        %5331 = vmatpush1.bf16.msra.mxu0 %v5307
        %5332 = vmatprep.subr.bf16.mxu0 0
        %5333 = vmatpush1.bf16.msra.mxu0 0
        %5334 = vmatprep.subr.bf16.mxu0 0
        %5335 = vmatpush1.bf16.msra.mxu0 0
        %5336 = vmatprep.subr.bf16.mxu0 0
        %5337 = vmatpush1.bf16.msra.mxu0 0
        %5338 = vmatprep.subr.bf16.mxu0 0
        %5339 = vmatpush1.bf16.msra.mxu0 0
        %5340 = vmatprep.subr.bf16.mxu0 0
        %5341 = vmatpush1.bf16.msra.mxu0 0
        %5342 = vmatprep.subr.bf16.mxu0 0
        %5343 = vmatpush1.bf16.msra.mxu0 0
        %5344 = vmatprep.subr.bf16.mxu0 0
        %5345 = vmatpush1.bf16.msra.mxu0 0
        %5346 = vmatprep.subr.bf16.mxu0 0
        %5347 = vmatpush1.bf16.msra.mxu0 0
        %5348 = vmatprep.mubr.bf16.mxu0 0
        %5349 = vmatmul.mubr.bf16.gmra.mrb[0].mxu0 %v5158
        %v5350 = vpop.f32.mrb[0].mxu0
        %v5351 = vadd.f32 %v5262, %v5350
        %v5352 = vpop.f32.mrb[0].mxu0
        %v5353 = vpop.f32.mrb[0].mxu0
        %v5354 = vadd.f32 %v5265, %v5353
        %v5355 = vpop.f32.mrb[0].mxu0
        %5356 = vdwg.mxu0
        %v5357 = vld [vmem:[#allocation3 + $0x6] sm:$0xff]
        %v5358 = vld [vmem:[#allocation3 + $0xe] sm:$0x7f]
        %s5359 = scalar_lea.vmem %s7, 128
        %v5360 = vld [vmem:[%s5359] sm:$0xf]
        %v5361 = vld [vmem:[%s5359 + $0x4] sm:$0xf]
        %v5362 = vld [vmem:[%s5359 + $0x8] sm:$0xf]
        %v5363 = vld [vmem:[%s5359 + $0xc] sm:$0xf]
        %v5364 = vld [vmem:[%s5359 + $0x10] sm:$0xf]
        %v5365 = vld [vmem:[%s5359 + $0x14] sm:$0xf]
        %v5366 = vld [vmem:[%s5359 + $0x18] sm:$0xf]
        %v5367 = vld [vmem:[%s5359 + $0x1c] sm:$0xf]
        %v5368 = vld [vmem:[%s5359 + $0x20] sm:$0xf]
        %v5369 = vld [vmem:[%s5359 + $0x24] sm:$0xf]
        %v5370 = vld [vmem:[%s5359 + $0x28] sm:$0xf]
        %v5371 = vld [vmem:[%s5359 + $0x2c] sm:$0xf]
        %v5372 = vld [vmem:[%s5359 + $0x30] sm:$0xf]
        %v5373 = vld [vmem:[%s5359 + $0x34] sm:$0xf]
        %v5374 = vld [vmem:[%s5359 + $0x38] sm:$0xf]
        %v5375 = vld [vmem:[%s5359 + $0x3c] sm:$0xf]
        %v5376 = vpack.c.bf16 %v5358, %v5357
        %v5393 = vunpack.c.l.b16 %v5360
        %v5394 = vunpack.c.l.b16 %v5361
        %v5395 = vunpack.c.l.b16 %v5362
        %v5396 = vunpack.c.l.b16 %v5363
        %v5397 = vunpack.c.l.b16 %v5364
        %v5398 = vunpack.c.l.b16 %v5365
        %v5399 = vunpack.c.l.b16 %v5366
        %v5400 = vunpack.c.l.b16 %v5367
        %v5401 = vunpack.c.l.b16 %v5368
        %v5402 = vunpack.c.l.b16 %v5369
        %v5403 = vunpack.c.l.b16 %v5370
        %v5404 = vunpack.c.l.b16 %v5371
        %v5405 = vunpack.c.l.b16 %v5372
        %v5406 = vunpack.c.l.b16 %v5373
        %v5407 = vunpack.c.l.b16 %v5374
        %v5408 = vunpack.c.l.b16 %v5375
        %v5409 = vpack.c.b16 %v5394, %v5393
        %v5410 = vpack.c.b16 %v5396, %v5395
        %v5411 = vpack.c.b16 %v5398, %v5397
        %v5412 = vpack.c.b16 %v5400, %v5399
        %v5413 = vpack.c.b16 %v5402, %v5401
        %v5414 = vpack.c.b16 %v5404, %v5403
        %v5415 = vpack.c.b16 %v5406, %v5405
        %v5416 = vpack.c.b16 %v5408, %v5407
        %5425 = vmatprep.subr.bf16.mxu0 0
        %5426 = vmatpush1.bf16.msra.mxu0 %v5409
        %5427 = vmatprep.subr.bf16.mxu0 0
        %5428 = vmatpush1.bf16.msra.mxu0 %v5410
        %5429 = vmatprep.subr.bf16.mxu0 0
        %5430 = vmatpush1.bf16.msra.mxu0 %v5411
        %5431 = vmatprep.subr.bf16.mxu0 0
        %5432 = vmatpush1.bf16.msra.mxu0 %v5412
        %5433 = vmatprep.subr.bf16.mxu0 0
        %5434 = vmatpush1.bf16.msra.mxu0 %v5413
        %5435 = vmatprep.subr.bf16.mxu0 0
        %5436 = vmatpush1.bf16.msra.mxu0 %v5414
        %5437 = vmatprep.subr.bf16.mxu0 0
        %5438 = vmatpush1.bf16.msra.mxu0 %v5415
        %5439 = vmatprep.subr.bf16.mxu0 0
        %5440 = vmatpush1.bf16.msra.mxu0 %v5416
        %5441 = vmatprep.subr.bf16.mxu0 0
        %5442 = vmatpush1.bf16.msra.mxu0 0
        %5443 = vmatprep.subr.bf16.mxu0 0
        %5444 = vmatpush1.bf16.msra.mxu0 0
        %5445 = vmatprep.subr.bf16.mxu0 0
        %5446 = vmatpush1.bf16.msra.mxu0 0
        %5447 = vmatprep.subr.bf16.mxu0 0
        %5448 = vmatpush1.bf16.msra.mxu0 0
        %5449 = vmatprep.subr.bf16.mxu0 0
        %5450 = vmatpush1.bf16.msra.mxu0 0
        %5451 = vmatprep.subr.bf16.mxu0 0
        %5452 = vmatpush1.bf16.msra.mxu0 0
        %5453 = vmatprep.subr.bf16.mxu0 0
        %5454 = vmatpush1.bf16.msra.mxu0 0
        %5455 = vmatprep.subr.bf16.mxu0 0
        %5456 = vmatpush1.bf16.msra.mxu0 0
        %5457 = vmatprep.mubr.bf16.mxu0 0
        %5458 = vmatmul.mubr.bf16.gmra.mrb[0].mxu0 %v5376
        %v5459 = vpop.f32.mrb[0].mxu0
        %v5460 = vadd.f32 0.0, %v5459
        %v5461 = vpop.f32.mrb[0].mxu0
        %v5462 = vpop.f32.mrb[0].mxu0
        %v5463 = vadd.f32 0.0, %v5462
        %v5464 = vpop.f32.mrb[0].mxu0
        %5465 = vdwg.mxu0
        %v5466 = vadd.f32 %v5351, %v5460
        %v5467 = vadd.f32 %v5354, %v5463
        %v5468 = vld [vmem:[#allocation3 + $0x9] sm:$0xff]
        %v5469 = vld [vmem:[#allocation3 + $0x11] sm:$0x7f]
        %s5470 = scalar_lea.vmem %s7, 192
        %v5471 = vld [vmem:[%s5470] sm:$0xf]
        %v5472 = vld [vmem:[%s5470 + $0x4] sm:$0xf]
        %v5473 = vld [vmem:[%s5470 + $0x8] sm:$0xf]
        %v5474 = vld [vmem:[%s5470 + $0xc] sm:$0xf]
        %v5475 = vld [vmem:[%s5470 + $0x10] sm:$0xf]
        %v5476 = vld [vmem:[%s5470 + $0x14] sm:$0xf]
        %v5477 = vld [vmem:[%s5470 + $0x18] sm:$0xf]
        %v5478 = vld [vmem:[%s5470 + $0x1c] sm:$0xf]
        %v5479 = vld [vmem:[%s5470 + $0x20] sm:$0xf]
        %v5480 = vld [vmem:[%s5470 + $0x24] sm:$0xf]
        %v5481 = vld [vmem:[%s5470 + $0x28] sm:$0xf]
        %v5482 = vld [vmem:[%s5470 + $0x2c] sm:$0xf]
        %v5483 = vld [vmem:[%s5470 + $0x30] sm:$0xf]
        %v5484 = vld [vmem:[%s5470 + $0x34] sm:$0xf]
        %v5485 = vld [vmem:[%s5470 + $0x38] sm:$0xf]
        %v5486 = vld [vmem:[%s5470 + $0x3c] sm:$0xf]
        %v5487 = vpack.c.bf16 %v5469, %v5468
        %v5504 = vunpack.c.l.b16 %v5471
        %v5505 = vunpack.c.l.b16 %v5472
        %v5506 = vunpack.c.l.b16 %v5473
        %v5507 = vunpack.c.l.b16 %v5474
        %v5508 = vunpack.c.l.b16 %v5475
        %v5509 = vunpack.c.l.b16 %v5476
        %v5510 = vunpack.c.l.b16 %v5477
        %v5511 = vunpack.c.l.b16 %v5478
        %v5512 = vunpack.c.l.b16 %v5479
        %v5513 = vunpack.c.l.b16 %v5480
        %v5514 = vunpack.c.l.b16 %v5481
        %v5515 = vunpack.c.l.b16 %v5482
        %v5516 = vunpack.c.l.b16 %v5483
        %v5517 = vunpack.c.l.b16 %v5484
        %v5518 = vunpack.c.l.b16 %v5485
        %v5519 = vunpack.c.l.b16 %v5486
        %v5520 = vpack.c.b16 %v5505, %v5504
        %v5521 = vpack.c.b16 %v5507, %v5506
        %v5522 = vpack.c.b16 %v5509, %v5508
        %v5523 = vpack.c.b16 %v5511, %v5510
        %v5524 = vpack.c.b16 %v5513, %v5512
        %v5525 = vpack.c.b16 %v5515, %v5514
        %v5526 = vpack.c.b16 %v5517, %v5516
        %v5527 = vpack.c.b16 %v5519, %v5518
        %5536 = vmatprep.subr.bf16.mxu0 0
        %5537 = vmatpush1.bf16.msra.mxu0 %v5520
        %5538 = vmatprep.subr.bf16.mxu0 0
        %5539 = vmatpush1.bf16.msra.mxu0 %v5521
        %5540 = vmatprep.subr.bf16.mxu0 0
        %5541 = vmatpush1.bf16.msra.mxu0 %v5522
        %5542 = vmatprep.subr.bf16.mxu0 0
        %5543 = vmatpush1.bf16.msra.mxu0 %v5523
        %5544 = vmatprep.subr.bf16.mxu0 0
        %5545 = vmatpush1.bf16.msra.mxu0 %v5524
        %5546 = vmatprep.subr.bf16.mxu0 0
        %5547 = vmatpush1.bf16.msra.mxu0 %v5525
        %5548 = vmatprep.subr.bf16.mxu0 0
        %5549 = vmatpush1.bf16.msra.mxu0 %v5526
        %5550 = vmatprep.subr.bf16.mxu0 0
        %5551 = vmatpush1.bf16.msra.mxu0 %v5527
        %5552 = vmatprep.subr.bf16.mxu0 0
        %5553 = vmatpush1.bf16.msra.mxu0 0
        %5554 = vmatprep.subr.bf16.mxu0 0
        %5555 = vmatpush1.bf16.msra.mxu0 0
        %5556 = vmatprep.subr.bf16.mxu0 0
        %5557 = vmatpush1.bf16.msra.mxu0 0
        %5558 = vmatprep.subr.bf16.mxu0 0
        %5559 = vmatpush1.bf16.msra.mxu0 0
        %5560 = vmatprep.subr.bf16.mxu0 0
        %5561 = vmatpush1.bf16.msra.mxu0 0
        %5562 = vmatprep.subr.bf16.mxu0 0
        %5563 = vmatpush1.bf16.msra.mxu0 0
        %5564 = vmatprep.subr.bf16.mxu0 0
        %5565 = vmatpush1.bf16.msra.mxu0 0
        %5566 = vmatprep.subr.bf16.mxu0 0
        %5567 = vmatpush1.bf16.msra.mxu0 0
        %5568 = vmatprep.mubr.bf16.mxu0 0
        %5569 = vmatmul.mubr.bf16.gmra.mrb[0].mxu0 %v5487
        %v5570 = vpop.f32.mrb[0].mxu0
        %v5571 = vadd.f32 0.0, %v5570
        %v5572 = vpop.f32.mrb[0].mxu0
        %v5573 = vpop.f32.mrb[0].mxu0
        %v5574 = vadd.f32 0.0, %v5573
        %v5575 = vpop.f32.mrb[0].mxu0
        %5576 = vdwg.mxu0
        %v5577 = vadd.f32 %v5466, %v5571
        %v5578 = vadd.f32 %v5467, %v5574
        %v5579 = vld [vmem:[#allocation3 + $0xa] sm:$0xff]
        %v5580 = vld [vmem:[#allocation3 + $0x12] sm:$0x7f]
        %s5581 = scalar_lea.vmem %s7, 256
        %v5582 = vld [vmem:[%s5581] sm:$0xf]
        %v5583 = vld [vmem:[%s5581 + $0x4] sm:$0xf]
        %v5584 = vld [vmem:[%s5581 + $0x8] sm:$0xf]
        %v5585 = vld [vmem:[%s5581 + $0xc] sm:$0xf]
        %v5586 = vld [vmem:[%s5581 + $0x10] sm:$0xf]
        %v5587 = vld [vmem:[%s5581 + $0x14] sm:$0xf]
        %v5588 = vld [vmem:[%s5581 + $0x18] sm:$0xf]
        %v5589 = vld [vmem:[%s5581 + $0x1c] sm:$0xf]
        %v5590 = vld [vmem:[%s5581 + $0x20] sm:$0xf]
        %v5591 = vld [vmem:[%s5581 + $0x24] sm:$0xf]
        %v5592 = vld [vmem:[%s5581 + $0x28] sm:$0xf]
        %v5593 = vld [vmem:[%s5581 + $0x2c] sm:$0xf]
        %v5594 = vld [vmem:[%s5581 + $0x30] sm:$0xf]
        %v5595 = vld [vmem:[%s5581 + $0x34] sm:$0xf]
        %v5596 = vld [vmem:[%s5581 + $0x38] sm:$0xf]
        %v5597 = vld [vmem:[%s5581 + $0x3c] sm:$0xf]
        %v5598 = vpack.c.bf16 %v5580, %v5579
        %v5615 = vunpack.c.l.b16 %v5582
        %v5616 = vunpack.c.l.b16 %v5583
        %v5617 = vunpack.c.l.b16 %v5584
        %v5618 = vunpack.c.l.b16 %v5585
        %v5619 = vunpack.c.l.b16 %v5586
        %v5620 = vunpack.c.l.b16 %v5587
        %v5621 = vunpack.c.l.b16 %v5588
        %v5622 = vunpack.c.l.b16 %v5589
        %v5623 = vunpack.c.l.b16 %v5590
        %v5624 = vunpack.c.l.b16 %v5591
        %v5625 = vunpack.c.l.b16 %v5592
        %v5626 = vunpack.c.l.b16 %v5593
        %v5627 = vunpack.c.l.b16 %v5594
        %v5628 = vunpack.c.l.b16 %v5595
        %v5629 = vunpack.c.l.b16 %v5596
        %v5630 = vunpack.c.l.b16 %v5597
        %v5631 = vpack.c.b16 %v5616, %v5615
        %v5632 = vpack.c.b16 %v5618, %v5617
        %v5633 = vpack.c.b16 %v5620, %v5619
        %v5634 = vpack.c.b16 %v5622, %v5621
        %v5635 = vpack.c.b16 %v5624, %v5623
        %v5636 = vpack.c.b16 %v5626, %v5625
        %v5637 = vpack.c.b16 %v5628, %v5627
        %v5638 = vpack.c.b16 %v5630, %v5629
        %5647 = vmatprep.subr.bf16.mxu0 0
        %5648 = vmatpush1.bf16.msra.mxu0 %v5631
        %5649 = vmatprep.subr.bf16.mxu0 0
        %5650 = vmatpush1.bf16.msra.mxu0 %v5632
        %5651 = vmatprep.subr.bf16.mxu0 0
        %5652 = vmatpush1.bf16.msra.mxu0 %v5633
        %5653 = vmatprep.subr.bf16.mxu0 0
        %5654 = vmatpush1.bf16.msra.mxu0 %v5634
        %5655 = vmatprep.subr.bf16.mxu0 0
        %5656 = vmatpush1.bf16.msra.mxu0 %v5635
        %5657 = vmatprep.subr.bf16.mxu0 0
        %5658 = vmatpush1.bf16.msra.mxu0 %v5636
        %5659 = vmatprep.subr.bf16.mxu0 0
        %5660 = vmatpush1.bf16.msra.mxu0 %v5637
        %5661 = vmatprep.subr.bf16.mxu0 0
        %5662 = vmatpush1.bf16.msra.mxu0 %v5638
        %5663 = vmatprep.subr.bf16.mxu0 0
        %5664 = vmatpush1.bf16.msra.mxu0 0
        %5665 = vmatprep.subr.bf16.mxu0 0
        %5666 = vmatpush1.bf16.msra.mxu0 0
        %5667 = vmatprep.subr.bf16.mxu0 0
        %5668 = vmatpush1.bf16.msra.mxu0 0
        %5669 = vmatprep.subr.bf16.mxu0 0
        %5670 = vmatpush1.bf16.msra.mxu0 0
        %5671 = vmatprep.subr.bf16.mxu0 0
        %5672 = vmatpush1.bf16.msra.mxu0 0
        %5673 = vmatprep.subr.bf16.mxu0 0
        %5674 = vmatpush1.bf16.msra.mxu0 0
        %5675 = vmatprep.subr.bf16.mxu0 0
        %5676 = vmatpush1.bf16.msra.mxu0 0
        %5677 = vmatprep.subr.bf16.mxu0 0
        %5678 = vmatpush1.bf16.msra.mxu0 0
        %5679 = vmatprep.mubr.bf16.mxu0 0
        %5680 = vmatmul.mubr.bf16.gmra.mrb[0].mxu0 %v5598
        %v5681 = vpop.f32.mrb[0].mxu0
        %v5682 = vadd.f32 0.0, %v5681
        %v5683 = vpop.f32.mrb[0].mxu0
        %v5684 = vpop.f32.mrb[0].mxu0
        %v5685 = vadd.f32 0.0, %v5684
        %v5686 = vpop.f32.mrb[0].mxu0
        %5687 = vdwg.mxu0
        %v5688 = vadd.f32 %v5577, %v5682
        %v5689 = vadd.f32 %v5578, %v5685
        %v5690 = vld [vmem:[#allocation3 + $0xb] sm:$0xff]
        %v5691 = vld [vmem:[#allocation3 + $0x13] sm:$0x7f]
        %s5692 = scalar_lea.vmem %s7, 320
        %v5693 = vld [vmem:[%s5692] sm:$0xf]
        %v5694 = vld [vmem:[%s5692 + $0x4] sm:$0xf]
        %v5695 = vld [vmem:[%s5692 + $0x8] sm:$0xf]
        %v5696 = vld [vmem:[%s5692 + $0xc] sm:$0xf]
        %v5697 = vld [vmem:[%s5692 + $0x10] sm:$0xf]
        %v5698 = vld [vmem:[%s5692 + $0x14] sm:$0xf]
        %v5699 = vld [vmem:[%s5692 + $0x18] sm:$0xf]
        %v5700 = vld [vmem:[%s5692 + $0x1c] sm:$0xf]
        %v5701 = vld [vmem:[%s5692 + $0x20] sm:$0xf]
        %v5702 = vld [vmem:[%s5692 + $0x24] sm:$0xf]
        %v5703 = vld [vmem:[%s5692 + $0x28] sm:$0xf]
        %v5704 = vld [vmem:[%s5692 + $0x2c] sm:$0xf]
        %v5705 = vld [vmem:[%s5692 + $0x30] sm:$0xf]
        %v5706 = vld [vmem:[%s5692 + $0x34] sm:$0xf]
        %v5707 = vld [vmem:[%s5692 + $0x38] sm:$0xf]
        %v5708 = vld [vmem:[%s5692 + $0x3c] sm:$0xf]
        %v5709 = vpack.c.bf16 %v5691, %v5690
        %v5726 = vunpack.c.l.b16 %v5693
        %v5727 = vunpack.c.l.b16 %v5694
        %v5728 = vunpack.c.l.b16 %v5695
        %v5729 = vunpack.c.l.b16 %v5696
        %v5730 = vunpack.c.l.b16 %v5697
        %v5731 = vunpack.c.l.b16 %v5698
        %v5732 = vunpack.c.l.b16 %v5699
        %v5733 = vunpack.c.l.b16 %v5700
        %v5734 = vunpack.c.l.b16 %v5701
        %v5735 = vunpack.c.l.b16 %v5702
        %v5736 = vunpack.c.l.b16 %v5703
        %v5737 = vunpack.c.l.b16 %v5704
        %v5738 = vunpack.c.l.b16 %v5705
        %v5739 = vunpack.c.l.b16 %v5706
        %v5740 = vunpack.c.l.b16 %v5707
        %v5741 = vunpack.c.l.b16 %v5708
        %v5742 = vpack.c.b16 %v5727, %v5726
        %v5743 = vpack.c.b16 %v5729, %v5728
        %v5744 = vpack.c.b16 %v5731, %v5730
        %v5745 = vpack.c.b16 %v5733, %v5732
        %v5746 = vpack.c.b16 %v5735, %v5734
        %v5747 = vpack.c.b16 %v5737, %v5736
        %v5748 = vpack.c.b16 %v5739, %v5738
        %v5749 = vpack.c.b16 %v5741, %v5740
        %5758 = vmatprep.subr.bf16.mxu0 0
        %5759 = vmatpush1.bf16.msra.mxu0 %v5742
        %5760 = vmatprep.subr.bf16.mxu0 0
        %5761 = vmatpush1.bf16.msra.mxu0 %v5743
        %5762 = vmatprep.subr.bf16.mxu0 0
        %5763 = vmatpush1.bf16.msra.mxu0 %v5744
        %5764 = vmatprep.subr.bf16.mxu0 0
        %5765 = vmatpush1.bf16.msra.mxu0 %v5745
        %5766 = vmatprep.subr.bf16.mxu0 0
        %5767 = vmatpush1.bf16.msra.mxu0 %v5746
        %5768 = vmatprep.subr.bf16.mxu0 0
        %5769 = vmatpush1.bf16.msra.mxu0 %v5747
        %5770 = vmatprep.subr.bf16.mxu0 0
        %5771 = vmatpush1.bf16.msra.mxu0 %v5748
        %5772 = vmatprep.subr.bf16.mxu0 0
        %5773 = vmatpush1.bf16.msra.mxu0 %v5749
        %5774 = vmatprep.subr.bf16.mxu0 0
        %5775 = vmatpush1.bf16.msra.mxu0 0
        %5776 = vmatprep.subr.bf16.mxu0 0
        %5777 = vmatpush1.bf16.msra.mxu0 0
        %5778 = vmatprep.subr.bf16.mxu0 0
        %5779 = vmatpush1.bf16.msra.mxu0 0
        %5780 = vmatprep.subr.bf16.mxu0 0
        %5781 = vmatpush1.bf16.msra.mxu0 0
        %5782 = vmatprep.subr.bf16.mxu0 0
        %5783 = vmatpush1.bf16.msra.mxu0 0
        %5784 = vmatprep.subr.bf16.mxu0 0
        %5785 = vmatpush1.bf16.msra.mxu0 0
        %5786 = vmatprep.subr.bf16.mxu0 0
        %5787 = vmatpush1.bf16.msra.mxu0 0
        %5788 = vmatprep.subr.bf16.mxu0 0
        %5789 = vmatpush1.bf16.msra.mxu0 0
        %5790 = vmatprep.mubr.bf16.mxu0 0
        %5791 = vmatmul.mubr.bf16.gmra.mrb[0].mxu0 %v5709
        %v5792 = vpop.f32.mrb[0].mxu0
        %v5793 = vadd.f32 0.0, %v5792
        %v5794 = vpop.f32.mrb[0].mxu0
        %v5795 = vpop.f32.mrb[0].mxu0
        %v5796 = vadd.f32 0.0, %v5795
        %v5797 = vpop.f32.mrb[0].mxu0
        %5798 = vdwg.mxu0
        %v5799 = vadd.f32 %v5688, %v5793
        %v5800 = vadd.f32 %v5689, %v5796
        %v5801 = vld [vmem:[#allocation3 + $0xe] sm:$0xff]
        %v5802 = vld [vmem:[#allocation3 + $0x16] sm:$0x7f]
        %s5803 = scalar_lea.vmem %s7, 384
        %v5804 = vld [vmem:[%s5803] sm:$0xf]
        %v5805 = vld [vmem:[%s5803 + $0x4] sm:$0xf]
        %v5806 = vld [vmem:[%s5803 + $0x8] sm:$0xf]
        %v5807 = vld [vmem:[%s5803 + $0xc] sm:$0xf]
        %v5808 = vld [vmem:[%s5803 + $0x10] sm:$0xf]
        %v5809 = vld [vmem:[%s5803 + $0x14] sm:$0xf]
        %v5810 = vld [vmem:[%s5803 + $0x18] sm:$0xf]
        %v5811 = vld [vmem:[%s5803 + $0x1c] sm:$0xf]
        %v5812 = vld [vmem:[%s5803 + $0x20] sm:$0xf]
        %v5813 = vld [vmem:[%s5803 + $0x24] sm:$0xf]
        %v5814 = vld [vmem:[%s5803 + $0x28] sm:$0xf]
        %v5815 = vld [vmem:[%s5803 + $0x2c] sm:$0xf]
        %v5816 = vld [vmem:[%s5803 + $0x30] sm:$0xf]
        %v5817 = vld [vmem:[%s5803 + $0x34] sm:$0xf]
        %v5818 = vld [vmem:[%s5803 + $0x38] sm:$0xf]
        %v5819 = vld [vmem:[%s5803 + $0x3c] sm:$0xf]
        %v5820 = vpack.c.bf16 %v5802, %v5801
        %v5837 = vunpack.c.l.b16 %v5804
        %v5838 = vunpack.c.l.b16 %v5805
        %v5839 = vunpack.c.l.b16 %v5806
        %v5840 = vunpack.c.l.b16 %v5807
        %v5841 = vunpack.c.l.b16 %v5808
        %v5842 = vunpack.c.l.b16 %v5809
        %v5843 = vunpack.c.l.b16 %v5810
        %v5844 = vunpack.c.l.b16 %v5811
        %v5845 = vunpack.c.l.b16 %v5812
        %v5846 = vunpack.c.l.b16 %v5813
        %v5847 = vunpack.c.l.b16 %v5814
        %v5848 = vunpack.c.l.b16 %v5815
        %v5849 = vunpack.c.l.b16 %v5816
        %v5850 = vunpack.c.l.b16 %v5817
        %v5851 = vunpack.c.l.b16 %v5818
        %v5852 = vunpack.c.l.b16 %v5819
        %v5853 = vpack.c.b16 %v5838, %v5837
        %v5854 = vpack.c.b16 %v5840, %v5839
        %v5855 = vpack.c.b16 %v5842, %v5841
        %v5856 = vpack.c.b16 %v5844, %v5843
        %v5857 = vpack.c.b16 %v5846, %v5845
        %v5858 = vpack.c.b16 %v5848, %v5847
        %v5859 = vpack.c.b16 %v5850, %v5849
        %v5860 = vpack.c.b16 %v5852, %v5851
        %5869 = vmatprep.subr.bf16.mxu0 0
        %5870 = vmatpush1.bf16.msra.mxu0 %v5853
        %5871 = vmatprep.subr.bf16.mxu0 0
        %5872 = vmatpush1.bf16.msra.mxu0 %v5854
        %5873 = vmatprep.subr.bf16.mxu0 0
        %5874 = vmatpush1.bf16.msra.mxu0 %v5855
        %5875 = vmatprep.subr.bf16.mxu0 0
        %5876 = vmatpush1.bf16.msra.mxu0 %v5856
        %5877 = vmatprep.subr.bf16.mxu0 0
        %5878 = vmatpush1.bf16.msra.mxu0 %v5857
        %5879 = vmatprep.subr.bf16.mxu0 0
        %5880 = vmatpush1.bf16.msra.mxu0 %v5858
        %5881 = vmatprep.subr.bf16.mxu0 0
        %5882 = vmatpush1.bf16.msra.mxu0 %v5859
        %5883 = vmatprep.subr.bf16.mxu0 0
        %5884 = vmatpush1.bf16.msra.mxu0 %v5860
        %5885 = vmatprep.subr.bf16.mxu0 0
        %5886 = vmatpush1.bf16.msra.mxu0 0
        %5887 = vmatprep.subr.bf16.mxu0 0
        %5888 = vmatpush1.bf16.msra.mxu0 0
        %5889 = vmatprep.subr.bf16.mxu0 0
        %5890 = vmatpush1.bf16.msra.mxu0 0
        %5891 = vmatprep.subr.bf16.mxu0 0
        %5892 = vmatpush1.bf16.msra.mxu0 0
        %5893 = vmatprep.subr.bf16.mxu0 0
        %5894 = vmatpush1.bf16.msra.mxu0 0
        %5895 = vmatprep.subr.bf16.mxu0 0
        %5896 = vmatpush1.bf16.msra.mxu0 0
        %5897 = vmatprep.subr.bf16.mxu0 0
        %5898 = vmatpush1.bf16.msra.mxu0 0
        %5899 = vmatprep.subr.bf16.mxu0 0
        %5900 = vmatpush1.bf16.msra.mxu0 0
        %5901 = vmatprep.mubr.bf16.mxu0 0
        %5902 = vmatmul.mubr.bf16.gmra.mrb[0].mxu0 %v5820
        %v5903 = vpop.f32.mrb[0].mxu0
        %v5904 = vadd.f32 0.0, %v5903
        %v5905 = vpop.f32.mrb[0].mxu0
        %v5906 = vpop.f32.mrb[0].mxu0
        %v5907 = vadd.f32 0.0, %v5906
        %v5908 = vpop.f32.mrb[0].mxu0
        %5909 = vdwg.mxu0
        %v5910 = vadd.f32 %v5799, %v5904
        %v5911 = vadd.f32 %v5800, %v5907
        %v5912 = vld [vmem:[#allocation3 + $0xf] sm:$0xff]
        %v5913 = vld [vmem:[#allocation3 + $0x17] sm:$0x7f]
        %s5914 = scalar_lea.vmem %s7, 448
        %v5915 = vld [vmem:[%s5914] sm:$0xf]
        %v5916 = vld [vmem:[%s5914 + $0x4] sm:$0xf]
        %v5917 = vld [vmem:[%s5914 + $0x8] sm:$0xf]
        %v5918 = vld [vmem:[%s5914 + $0xc] sm:$0xf]
        %v5919 = vld [vmem:[%s5914 + $0x10] sm:$0xf]
        %v5920 = vld [vmem:[%s5914 + $0x14] sm:$0xf]
        %v5921 = vld [vmem:[%s5914 + $0x18] sm:$0xf]
        %v5922 = vld [vmem:[%s5914 + $0x1c] sm:$0xf]
        %v5923 = vld [vmem:[%s5914 + $0x20] sm:$0xf]
        %v5924 = vld [vmem:[%s5914 + $0x24] sm:$0xf]
        %v5925 = vld [vmem:[%s5914 + $0x28] sm:$0xf]
        %v5926 = vld [vmem:[%s5914 + $0x2c] sm:$0xf]
        %v5927 = vld [vmem:[%s5914 + $0x30] sm:$0xf]
        %v5928 = vld [vmem:[%s5914 + $0x34] sm:$0xf]
        %v5929 = vld [vmem:[%s5914 + $0x38] sm:$0xf]
        %v5930 = vld [vmem:[%s5914 + $0x3c] sm:$0xf]
        %v5931 = vpack.c.bf16 %v5913, %v5912
        %v5948 = vunpack.c.l.b16 %v5915
        %v5949 = vunpack.c.l.b16 %v5916
        %v5950 = vunpack.c.l.b16 %v5917
        %v5951 = vunpack.c.l.b16 %v5918
        %v5952 = vunpack.c.l.b16 %v5919
        %v5953 = vunpack.c.l.b16 %v5920
        %v5954 = vunpack.c.l.b16 %v5921
        %v5955 = vunpack.c.l.b16 %v5922
        %v5956 = vunpack.c.l.b16 %v5923
        %v5957 = vunpack.c.l.b16 %v5924
        %v5958 = vunpack.c.l.b16 %v5925
        %v5959 = vunpack.c.l.b16 %v5926
        %v5960 = vunpack.c.l.b16 %v5927
        %v5961 = vunpack.c.l.b16 %v5928
        %v5962 = vunpack.c.l.b16 %v5929
        %v5963 = vunpack.c.l.b16 %v5930
        %v5964 = vpack.c.b16 %v5949, %v5948
        %v5965 = vpack.c.b16 %v5951, %v5950
        %v5966 = vpack.c.b16 %v5953, %v5952
        %v5967 = vpack.c.b16 %v5955, %v5954
        %v5968 = vpack.c.b16 %v5957, %v5956
        %v5969 = vpack.c.b16 %v5959, %v5958
        %v5970 = vpack.c.b16 %v5961, %v5960
        %v5971 = vpack.c.b16 %v5963, %v5962
        %5980 = vmatprep.subr.bf16.mxu0 0
        %5981 = vmatpush1.bf16.msra.mxu0 %v5964
        %5982 = vmatprep.subr.bf16.mxu0 0
        %5983 = vmatpush1.bf16.msra.mxu0 %v5965
        %5984 = vmatprep.subr.bf16.mxu0 0
        %5985 = vmatpush1.bf16.msra.mxu0 %v5966
        %5986 = vmatprep.subr.bf16.mxu0 0
        %5987 = vmatpush1.bf16.msra.mxu0 %v5967
        %5988 = vmatprep.subr.bf16.mxu0 0
        %5989 = vmatpush1.bf16.msra.mxu0 %v5968
        %5990 = vmatprep.subr.bf16.mxu0 0
        %5991 = vmatpush1.bf16.msra.mxu0 %v5969
        %5992 = vmatprep.subr.bf16.mxu0 0
        %5993 = vmatpush1.bf16.msra.mxu0 %v5970
        %5994 = vmatprep.subr.bf16.mxu0 0
        %5995 = vmatpush1.bf16.msra.mxu0 %v5971
        %5996 = vmatprep.subr.bf16.mxu0 0
        %5997 = vmatpush1.bf16.msra.mxu0 0
        %5998 = vmatprep.subr.bf16.mxu0 0
        %5999 = vmatpush1.bf16.msra.mxu0 0
        %6000 = vmatprep.subr.bf16.mxu0 0
        %6001 = vmatpush1.bf16.msra.mxu0 0
        %6002 = vmatprep.subr.bf16.mxu0 0
        %6003 = vmatpush1.bf16.msra.mxu0 0
        %6004 = vmatprep.subr.bf16.mxu0 0
        %6005 = vmatpush1.bf16.msra.mxu0 0
        %6006 = vmatprep.subr.bf16.mxu0 0
        %6007 = vmatpush1.bf16.msra.mxu0 0
        %6008 = vmatprep.subr.bf16.mxu0 0
        %6009 = vmatpush1.bf16.msra.mxu0 0
        %6010 = vmatprep.subr.bf16.mxu0 0
        %6011 = vmatpush1.bf16.msra.mxu0 0
        %6012 = vmatprep.mubr.bf16.mxu0 0
        %6013 = vmatmul.mubr.bf16.gmra.mrb[0].mxu0 %v5931
        %v6014 = vpop.f32.mrb[0].mxu0
        %v6015 = vadd.f32 0.0, %v6014
        %v6016 = vpop.f32.mrb[0].mxu0
        %v6017 = vpop.f32.mrb[0].mxu0
        %v6018 = vadd.f32 0.0, %v6017
        %v6019 = vpop.f32.mrb[0].mxu0
        %6020 = vdwg.mxu0
        %v6021 = vadd.f32 %v5910, %v6015
        %v6022 = vadd.f32 %v5911, %v6018
        %v6023 = vld [vmem:[#allocation3 + $0x10] sm:$0xff]
        %v6024 = vld [vmem:[#allocation3 + $0x18] sm:$0x7f]
        %s6025 = scalar_lea.vmem %s7, 512
        %v6026 = vld [vmem:[%s6025] sm:$0xf]
        %v6027 = vld [vmem:[%s6025 + $0x4] sm:$0xf]
        %v6028 = vld [vmem:[%s6025 + $0x8] sm:$0xf]
        %v6029 = vld [vmem:[%s6025 + $0xc] sm:$0xf]
        %v6030 = vld [vmem:[%s6025 + $0x10] sm:$0xf]
        %v6031 = vld [vmem:[%s6025 + $0x14] sm:$0xf]
        %v6032 = vld [vmem:[%s6025 + $0x18] sm:$0xf]
        %v6033 = vld [vmem:[%s6025 + $0x1c] sm:$0xf]
        %v6034 = vld [vmem:[%s6025 + $0x20] sm:$0xf]
        %v6035 = vld [vmem:[%s6025 + $0x24] sm:$0xf]
        %v6036 = vld [vmem:[%s6025 + $0x28] sm:$0xf]
        %v6037 = vld [vmem:[%s6025 + $0x2c] sm:$0xf]
        %v6038 = vld [vmem:[%s6025 + $0x30] sm:$0xf]
        %v6039 = vld [vmem:[%s6025 + $0x34] sm:$0xf]
        %v6040 = vld [vmem:[%s6025 + $0x38] sm:$0xf]
        %v6041 = vld [vmem:[%s6025 + $0x3c] sm:$0xf]
        %v6042 = vpack.c.bf16 %v6024, %v6023
        %v6059 = vunpack.c.l.b16 %v6026
        %v6060 = vunpack.c.l.b16 %v6027
        %v6061 = vunpack.c.l.b16 %v6028
        %v6062 = vunpack.c.l.b16 %v6029
        %v6063 = vunpack.c.l.b16 %v6030
        %v6064 = vunpack.c.l.b16 %v6031
        %v6065 = vunpack.c.l.b16 %v6032
        %v6066 = vunpack.c.l.b16 %v6033
        %v6067 = vunpack.c.l.b16 %v6034
        %v6068 = vunpack.c.l.b16 %v6035
        %v6069 = vunpack.c.l.b16 %v6036
        %v6070 = vunpack.c.l.b16 %v6037
        %v6071 = vunpack.c.l.b16 %v6038
        %v6072 = vunpack.c.l.b16 %v6039
        %v6073 = vunpack.c.l.b16 %v6040
        %v6074 = vunpack.c.l.b16 %v6041
        %v6075 = vpack.c.b16 %v6060, %v6059
        %v6076 = vpack.c.b16 %v6062, %v6061
        %v6077 = vpack.c.b16 %v6064, %v6063
        %v6078 = vpack.c.b16 %v6066, %v6065
        %v6079 = vpack.c.b16 %v6068, %v6067
        %v6080 = vpack.c.b16 %v6070, %v6069
        %v6081 = vpack.c.b16 %v6072, %v6071
        %v6082 = vpack.c.b16 %v6074, %v6073
        %6091 = vmatprep.subr.bf16.mxu0 0
        %6092 = vmatpush1.bf16.msra.mxu0 %v6075
        %6093 = vmatprep.subr.bf16.mxu0 0
        %6094 = vmatpush1.bf16.msra.mxu0 %v6076
        %6095 = vmatprep.subr.bf16.mxu0 0
        %6096 = vmatpush1.bf16.msra.mxu0 %v6077
        %6097 = vmatprep.subr.bf16.mxu0 0
        %6098 = vmatpush1.bf16.msra.mxu0 %v6078
        %6099 = vmatprep.subr.bf16.mxu0 0
        %6100 = vmatpush1.bf16.msra.mxu0 %v6079
        %6101 = vmatprep.subr.bf16.mxu0 0
        %6102 = vmatpush1.bf16.msra.mxu0 %v6080
        %6103 = vmatprep.subr.bf16.mxu0 0
        %6104 = vmatpush1.bf16.msra.mxu0 %v6081
        %6105 = vmatprep.subr.bf16.mxu0 0
        %6106 = vmatpush1.bf16.msra.mxu0 %v6082
        %6107 = vmatprep.subr.bf16.mxu0 0
        %6108 = vmatpush1.bf16.msra.mxu0 0
        %6109 = vmatprep.subr.bf16.mxu0 0
        %6110 = vmatpush1.bf16.msra.mxu0 0
        %6111 = vmatprep.subr.bf16.mxu0 0
        %6112 = vmatpush1.bf16.msra.mxu0 0
        %6113 = vmatprep.subr.bf16.mxu0 0
        %6114 = vmatpush1.bf16.msra.mxu0 0
        %6115 = vmatprep.subr.bf16.mxu0 0
        %6116 = vmatpush1.bf16.msra.mxu0 0
        %6117 = vmatprep.subr.bf16.mxu0 0
        %6118 = vmatpush1.bf16.msra.mxu0 0
        %6119 = vmatprep.subr.bf16.mxu0 0
        %6120 = vmatpush1.bf16.msra.mxu0 0
        %6121 = vmatprep.subr.bf16.mxu0 0
        %6122 = vmatpush1.bf16.msra.mxu0 0
        %6123 = vmatprep.mubr.bf16.mxu0 0
        %6124 = vmatmul.mubr.bf16.gmra.mrb[0].mxu0 %v6042
        %v6125 = vpop.f32.mrb[0].mxu0
        %v6126 = vadd.f32 0.0, %v6125
        %v6127 = vpop.f32.mrb[0].mxu0
        %v6128 = vpop.f32.mrb[0].mxu0
        %v6129 = vadd.f32 0.0, %v6128
        %v6130 = vpop.f32.mrb[0].mxu0
        %6131 = vdwg.mxu0
        %v6132 = vadd.f32 %v6021, %v6126
        %v6133 = vadd.f32 %v6022, %v6129
        %v6134 = vld [vmem:[%s8] sm:$0x1]
        %v6136 = vlaneseq
        %v6137 = vshrl.u32 %v6136, 7
        %v6138 = vsub.s32 0, %v6137
        %v6139 = vrot.slane %v6134, %v6138
        %v6141 = vadd.f32 %v6132, %v6139
        %v6142 = vadd.f32 %v6133, %v6139
        %v6143 = vmax.f32 %v6141, 0.0
        %v6144 = vmax.f32 %v6142, 0.0
        %v6145 = vld [vmem:[%s9] sm:$0x1]
        %vm6146 = vcmask 121856
        %v6148 = vsel %vm6146, %v6145, 0
        %v6151 = vsel %vm4693, %v6144, 0
        %6153 = vmatprep.subr.mxu0 0.0
        %6154 = vmatpush1.msra.mxu0 %v6143
        %6155 = vmatprep.subr.mxu0 0.0
        %6156 = vmatpush1.msra.mxu0 %v6151
        %6157 = vmatprep.subr.mxu0 0.0
        %6158 = vmatpush1.msra.mxu0 0.0
        %6159 = vmatprep.subr.mxu0 0.0
        %6160 = vmatpush1.msra.mxu0 0.0
        %6161 = vmatprep.subr.mxu0 0.0
        %6162 = vmatpush1.msra.mxu0 0.0
        %6163 = vmatprep.subr.mxu0 0.0
        %6164 = vmatpush1.msra.mxu0 0.0
        %6165 = vmatprep.subr.mxu0 0.0
        %6166 = vmatpush1.msra.mxu0 0.0
        %6167 = vmatprep.subr.mxu0 0.0
        %6168 = vmatpush1.msra.mxu0 0.0
        %6169 = vmatprep.subr.mxu0 0.0
        %6170 = vmatpush1.msra.mxu0 0.0
        %6171 = vmatprep.subr.mxu0 0.0
        %6172 = vmatpush1.msra.mxu0 0.0
        %6173 = vmatprep.subr.mxu0 0.0
        %6174 = vmatpush1.msra.mxu0 0.0
        %6175 = vmatprep.subr.mxu0 0.0
        %6176 = vmatpush1.msra.mxu0 0.0
        %6177 = vmatprep.subr.mxu0 0.0
        %6178 = vmatpush1.msra.mxu0 0.0
        %6179 = vmatprep.subr.mxu0 0.0
        %6180 = vmatpush1.msra.mxu0 0.0
        %6181 = vmatprep.subr.mxu0 0.0
        %6182 = vmatpush1.msra.mxu0 0.0
        %6183 = vmatprep.subr.mxu0 0.0
        %6184 = vmatpush1.msra.mxu0 0.0
        %6185 = vmatprep.subr.mxu0 0.0
        %6186 = vmatpush1.msra.mxu0 0.0
        %6187 = vmatprep.subr.mxu0 0.0
        %6188 = vmatpush1.msra.mxu0 0.0
        %6189 = vmatprep.subr.mxu0 0.0
        %6190 = vmatpush1.msra.mxu0 0.0
        %6191 = vmatprep.subr.mxu0 0.0
        %6192 = vmatpush1.msra.mxu0 0.0
        %6193 = vmatprep.subr.mxu0 0.0
        %6194 = vmatpush1.msra.mxu0 0.0
        %6195 = vmatprep.subr.mxu0 0.0
        %6196 = vmatpush1.msra.mxu0 0.0
        %6197 = vmatprep.subr.mxu0 0.0
        %6198 = vmatpush1.msra.mxu0 0.0
        %6199 = vmatprep.subr.mxu0 0.0
        %6200 = vmatpush1.msra.mxu0 0.0
        %6201 = vmatprep.subr.mxu0 0.0
        %6202 = vmatpush1.msra.mxu0 0.0
        %6203 = vmatprep.subr.mxu0 0.0
        %6204 = vmatpush1.msra.mxu0 0.0
        %6205 = vmatprep.subr.mxu0 0.0
        %6206 = vmatpush1.msra.mxu0 0.0
        %6207 = vmatprep.subr.mxu0 0.0
        %6208 = vmatpush1.msra.mxu0 0.0
        %6209 = vmatprep.subr.mxu0 0.0
        %6210 = vmatpush1.msra.mxu0 0.0
        %6211 = vmatprep.subr.mxu0 0.0
        %6212 = vmatpush1.msra.mxu0 0.0
        %6213 = vmatprep.subr.mxu0 0.0
        %6214 = vmatpush1.msra.mxu0 0.0
        %6215 = vmatprep.subr.mxu0 0.0
        %6216 = vmatpush1.msra.mxu0 0.0
        %6217 = vmatprep.mubr.f32.mxu0 0.0
        %6218 = vmatmul.mubr.f32.gmra.mrb[0].mxu0 %v6148
        %v6219 = vpop.f32.mrb[0].mxu0
        %v6220 = vadd.f32 0.0, %v6219
        %v6221 = vpop.f32.mrb[0].mxu0
        %6222 = vdwg.mxu0
        %s6223 = scalar_lea.vmem %s9, 1
        %v6224 = vld [vmem:[%s6223] sm:$0x1]
        %v6226 = vsel %vm6146, %v6224, 0
        %6228 = vmatprep.subr.mxu0 0.0
        %6229 = vmatpush1.msra.mxu0 %v6143
        %6230 = vmatprep.subr.mxu0 0.0
        %6231 = vmatpush1.msra.mxu0 %v6151
        %6232 = vmatprep.subr.mxu0 0.0
        %6233 = vmatpush1.msra.mxu0 0.0
        %6234 = vmatprep.subr.mxu0 0.0
        %6235 = vmatpush1.msra.mxu0 0.0
        %6236 = vmatprep.subr.mxu0 0.0
        %6237 = vmatpush1.msra.mxu0 0.0
        %6238 = vmatprep.subr.mxu0 0.0
        %6239 = vmatpush1.msra.mxu0 0.0
        %6240 = vmatprep.subr.mxu0 0.0
        %6241 = vmatpush1.msra.mxu0 0.0
        %6242 = vmatprep.subr.mxu0 0.0
        %6243 = vmatpush1.msra.mxu0 0.0
        %6244 = vmatprep.subr.mxu0 0.0
        %6245 = vmatpush1.msra.mxu0 0.0
        %6246 = vmatprep.subr.mxu0 0.0
        %6247 = vmatpush1.msra.mxu0 0.0
        %6248 = vmatprep.subr.mxu0 0.0
        %6249 = vmatpush1.msra.mxu0 0.0
        %6250 = vmatprep.subr.mxu0 0.0
        %6251 = vmatpush1.msra.mxu0 0.0
        %6252 = vmatprep.subr.mxu0 0.0
        %6253 = vmatpush1.msra.mxu0 0.0
        %6254 = vmatprep.subr.mxu0 0.0
        %6255 = vmatpush1.msra.mxu0 0.0
        %6256 = vmatprep.subr.mxu0 0.0
        %6257 = vmatpush1.msra.mxu0 0.0
        %6258 = vmatprep.subr.mxu0 0.0
        %6259 = vmatpush1.msra.mxu0 0.0
        %6260 = vmatprep.subr.mxu0 0.0
        %6261 = vmatpush1.msra.mxu0 0.0
        %6262 = vmatprep.subr.mxu0 0.0
        %6263 = vmatpush1.msra.mxu0 0.0
        %6264 = vmatprep.subr.mxu0 0.0
        %6265 = vmatpush1.msra.mxu0 0.0
        %6266 = vmatprep.subr.mxu0 0.0
        %6267 = vmatpush1.msra.mxu0 0.0
        %6268 = vmatprep.subr.mxu0 0.0
        %6269 = vmatpush1.msra.mxu0 0.0
        %6270 = vmatprep.subr.mxu0 0.0
        %6271 = vmatpush1.msra.mxu0 0.0
        %6272 = vmatprep.subr.mxu0 0.0
        %6273 = vmatpush1.msra.mxu0 0.0
        %6274 = vmatprep.subr.mxu0 0.0
        %6275 = vmatpush1.msra.mxu0 0.0
        %6276 = vmatprep.subr.mxu0 0.0
        %6277 = vmatpush1.msra.mxu0 0.0
        %6278 = vmatprep.subr.mxu0 0.0
        %6279 = vmatpush1.msra.mxu0 0.0
        %6280 = vmatprep.subr.mxu0 0.0
        %6281 = vmatpush1.msra.mxu0 0.0
        %6282 = vmatprep.subr.mxu0 0.0
        %6283 = vmatpush1.msra.mxu0 0.0
        %6284 = vmatprep.subr.mxu0 0.0
        %6285 = vmatpush1.msra.mxu0 0.0
        %6286 = vmatprep.subr.mxu0 0.0
        %6287 = vmatpush1.msra.mxu0 0.0
        %6288 = vmatprep.subr.mxu0 0.0
        %6289 = vmatpush1.msra.mxu0 0.0
        %6290 = vmatprep.subr.mxu0 0.0
        %6291 = vmatpush1.msra.mxu0 0.0
        %6292 = vmatprep.mubr.f32.mxu0 0.0
        %6293 = vmatmul.mubr.f32.gmra.mrb[0].mxu0 %v6226
        %v6294 = vpop.f32.mrb[0].mxu0
        %v6295 = vadd.f32 0.0, %v6294
        %v6296 = vpop.f32.mrb[0].mxu0
        %6297 = vdwg.mxu0
        %v6298 = vmax.f32 %v6220, %v6295
        %s6299 = scalar_lea.vmem %s9, 2
        %v6300 = vld [vmem:[%s6299] sm:$0x1]
        %v6302 = vsel %vm6146, %v6300, 0
        %6304 = vmatprep.subr.mxu0 0.0
        %6305 = vmatpush1.msra.mxu0 %v6143
        %6306 = vmatprep.subr.mxu0 0.0
        %6307 = vmatpush1.msra.mxu0 %v6151
        %6308 = vmatprep.subr.mxu0 0.0
        %6309 = vmatpush1.msra.mxu0 0.0
        %6310 = vmatprep.subr.mxu0 0.0
        %6311 = vmatpush1.msra.mxu0 0.0
        %6312 = vmatprep.subr.mxu0 0.0
        %6313 = vmatpush1.msra.mxu0 0.0
        %6314 = vmatprep.subr.mxu0 0.0
        %6315 = vmatpush1.msra.mxu0 0.0
        %6316 = vmatprep.subr.mxu0 0.0
        %6317 = vmatpush1.msra.mxu0 0.0
        %6318 = vmatprep.subr.mxu0 0.0
        %6319 = vmatpush1.msra.mxu0 0.0
        %6320 = vmatprep.subr.mxu0 0.0
        %6321 = vmatpush1.msra.mxu0 0.0
        %6322 = vmatprep.subr.mxu0 0.0
        %6323 = vmatpush1.msra.mxu0 0.0
        %6324 = vmatprep.subr.mxu0 0.0
        %6325 = vmatpush1.msra.mxu0 0.0
        %6326 = vmatprep.subr.mxu0 0.0
        %6327 = vmatpush1.msra.mxu0 0.0
        %6328 = vmatprep.subr.mxu0 0.0
        %6329 = vmatpush1.msra.mxu0 0.0
        %6330 = vmatprep.subr.mxu0 0.0
        %6331 = vmatpush1.msra.mxu0 0.0
        %6332 = vmatprep.subr.mxu0 0.0
        %6333 = vmatpush1.msra.mxu0 0.0
        %6334 = vmatprep.subr.mxu0 0.0
        %6335 = vmatpush1.msra.mxu0 0.0
        %6336 = vmatprep.subr.mxu0 0.0
        %6337 = vmatpush1.msra.mxu0 0.0
        %6338 = vmatprep.subr.mxu0 0.0
        %6339 = vmatpush1.msra.mxu0 0.0
        %6340 = vmatprep.subr.mxu0 0.0
        %6341 = vmatpush1.msra.mxu0 0.0
        %6342 = vmatprep.subr.mxu0 0.0
        %6343 = vmatpush1.msra.mxu0 0.0
        %6344 = vmatprep.subr.mxu0 0.0
        %6345 = vmatpush1.msra.mxu0 0.0
        %6346 = vmatprep.subr.mxu0 0.0
        %6347 = vmatpush1.msra.mxu0 0.0
        %6348 = vmatprep.subr.mxu0 0.0
        %6349 = vmatpush1.msra.mxu0 0.0
        %6350 = vmatprep.subr.mxu0 0.0
        %6351 = vmatpush1.msra.mxu0 0.0
        %6352 = vmatprep.subr.mxu0 0.0
        %6353 = vmatpush1.msra.mxu0 0.0
        %6354 = vmatprep.subr.mxu0 0.0
        %6355 = vmatpush1.msra.mxu0 0.0
        %6356 = vmatprep.subr.mxu0 0.0
        %6357 = vmatpush1.msra.mxu0 0.0
        %6358 = vmatprep.subr.mxu0 0.0
        %6359 = vmatpush1.msra.mxu0 0.0
        %6360 = vmatprep.subr.mxu0 0.0
        %6361 = vmatpush1.msra.mxu0 0.0
        %6362 = vmatprep.subr.mxu0 0.0
        %6363 = vmatpush1.msra.mxu0 0.0
        %6364 = vmatprep.subr.mxu0 0.0
        %6365 = vmatpush1.msra.mxu0 0.0
        %6366 = vmatprep.subr.mxu0 0.0
        %6367 = vmatpush1.msra.mxu0 0.0
        %6368 = vmatprep.mubr.f32.mxu0 0.0
        %6369 = vmatmul.mubr.f32.gmra.mrb[0].mxu0 %v6302
        %v6370 = vpop.f32.mrb[0].mxu0
        %v6371 = vadd.f32 0.0, %v6370
        %v6372 = vpop.f32.mrb[0].mxu0
        %6373 = vdwg.mxu0
        %v6374 = vmax.f32 %v6298, %v6371
        %s6375 = scalar_lea.vmem %s9, 3
        %v6376 = vld [vmem:[%s6375] sm:$0x1]
        %v6378 = vsel %vm6146, %v6376, 0
        %6380 = vmatprep.subr.mxu0 0.0
        %6381 = vmatpush1.msra.mxu0 %v6143
        %6382 = vmatprep.subr.mxu0 0.0
        %6383 = vmatpush1.msra.mxu0 %v6151
        %6384 = vmatprep.subr.mxu0 0.0
        %6385 = vmatpush1.msra.mxu0 0.0
        %6386 = vmatprep.subr.mxu0 0.0
        %6387 = vmatpush1.msra.mxu0 0.0
        %6388 = vmatprep.subr.mxu0 0.0
        %6389 = vmatpush1.msra.mxu0 0.0
        %6390 = vmatprep.subr.mxu0 0.0
        %6391 = vmatpush1.msra.mxu0 0.0
        %6392 = vmatprep.subr.mxu0 0.0
        %6393 = vmatpush1.msra.mxu0 0.0
        %6394 = vmatprep.subr.mxu0 0.0
        %6395 = vmatpush1.msra.mxu0 0.0
        %6396 = vmatprep.subr.mxu0 0.0
        %6397 = vmatpush1.msra.mxu0 0.0
        %6398 = vmatprep.subr.mxu0 0.0
        %6399 = vmatpush1.msra.mxu0 0.0
        %6400 = vmatprep.subr.mxu0 0.0
        %6401 = vmatpush1.msra.mxu0 0.0
        %6402 = vmatprep.subr.mxu0 0.0
        %6403 = vmatpush1.msra.mxu0 0.0
        %6404 = vmatprep.subr.mxu0 0.0
        %6405 = vmatpush1.msra.mxu0 0.0
        %6406 = vmatprep.subr.mxu0 0.0
        %6407 = vmatpush1.msra.mxu0 0.0
        %6408 = vmatprep.subr.mxu0 0.0
        %6409 = vmatpush1.msra.mxu0 0.0
        %6410 = vmatprep.subr.mxu0 0.0
        %6411 = vmatpush1.msra.mxu0 0.0
        %6412 = vmatprep.subr.mxu0 0.0
        %6413 = vmatpush1.msra.mxu0 0.0
        %6414 = vmatprep.subr.mxu0 0.0
        %6415 = vmatpush1.msra.mxu0 0.0
        %6416 = vmatprep.subr.mxu0 0.0
        %6417 = vmatpush1.msra.mxu0 0.0
        %6418 = vmatprep.subr.mxu0 0.0
        %6419 = vmatpush1.msra.mxu0 0.0
        %6420 = vmatprep.subr.mxu0 0.0
        %6421 = vmatpush1.msra.mxu0 0.0
        %6422 = vmatprep.subr.mxu0 0.0
        %6423 = vmatpush1.msra.mxu0 0.0
        %6424 = vmatprep.subr.mxu0 0.0
        %6425 = vmatpush1.msra.mxu0 0.0
        %6426 = vmatprep.subr.mxu0 0.0
        %6427 = vmatpush1.msra.mxu0 0.0
        %6428 = vmatprep.subr.mxu0 0.0
        %6429 = vmatpush1.msra.mxu0 0.0
        %6430 = vmatprep.subr.mxu0 0.0
        %6431 = vmatpush1.msra.mxu0 0.0
        %6432 = vmatprep.subr.mxu0 0.0
        %6433 = vmatpush1.msra.mxu0 0.0
        %6434 = vmatprep.subr.mxu0 0.0
        %6435 = vmatpush1.msra.mxu0 0.0
        %6436 = vmatprep.subr.mxu0 0.0
        %6437 = vmatpush1.msra.mxu0 0.0
        %6438 = vmatprep.subr.mxu0 0.0
        %6439 = vmatpush1.msra.mxu0 0.0
        %6440 = vmatprep.subr.mxu0 0.0
        %6441 = vmatpush1.msra.mxu0 0.0
        %6442 = vmatprep.subr.mxu0 0.0
        %6443 = vmatpush1.msra.mxu0 0.0
        %6444 = vmatprep.mubr.f32.mxu0 0.0
        %6445 = vmatmul.mubr.f32.gmra.mrb[0].mxu0 %v6378
        %v6446 = vpop.f32.mrb[0].mxu0
        %v6447 = vadd.f32 0.0, %v6446
        %v6448 = vpop.f32.mrb[0].mxu0
        %6449 = vdwg.mxu0
        %v6450 = vmax.f32 %v6374, %v6447
        %6451 = vst [vmem:[%s351] sm:$0x1] %v6450
        %s6452 = sand.u32 %s247, 1
        %s6453 = scalar_lea.sflag [#allocation5], %s6452
        %s6454 = sand.u32 %s247, 1
        %s6455 = scalar_lea.vmem [#allocation4], %s6454
        // Predicated region
        $region61: #{tpu_custom_call.1} parent=59 // pred_check
          %p6456 = pneg %p257
        $region62: #{tpu_custom_call.1} parent=59 // pred_check_branch
          %6458 = sbr.rel (%p6456) target = $region64
        $region63: #{tpu_custom_call.1} parent=59 // pred_region
          %s6460 = ssub.s32 16, 16
          %6461 = vsyncadd %s6453, %s6460
          %s6462 = smul.addr %s24, 16
          %s6463 = scalar_lea.hbm %s10, %s6462
          %s6465 = sshll.u32 %s6455, 4
          %s6466 = int_to_ptr.vmem [resolvable:$true] %s6465
          %6468 = dma.vmem_to_hbm [thread:$0]  %s6466, 16, %s6463, %s6453
        $region64: #{tpu_custom_call.1} parent=59 // pred_fallthru
          _
      $region60: #{tpu_custom_call.1} parent=5 // pred_fallthru
        _
      %p6469 = scmp.le.s32.totalorder 2, %s19
      // Predicated region
      $region65: #{tpu_custom_call.1} parent=5 // pred_check
        %p6470 = pneg %p6469
      $region66: #{tpu_custom_call.1} parent=5 // pred_check_branch
        %6472 = sbr.rel (%p6470) target = $region68
      $region67: #{tpu_custom_call.1} parent=5 // pred_region
        %s6473 = ssub.s32 %s19, 2
        // Predicated region
        $region69: #{tpu_custom_call.1} parent=67 // pred_check
          %p6474 = pneg %p263
        $region70: #{tpu_custom_call.1} parent=67 // pred_check_branch
          %6476 = sbr.rel (%p6474) target = $region72
        $region71: #{tpu_custom_call.1} parent=67 // pred_region
          %s6477 = sand.u32 %s248, 1
          %s6478 = scalar_lea.sflag [#allocation5], %s6477
          %s6479 = sand.u32 %s248, 1
          %s6480 = scalar_lea.vmem [#allocation4], %s6479
          %6481 = dma.done %s6478, 16
        $region72: #{tpu_custom_call.1} parent=67 // pred_fallthru
          _
      $region68: #{tpu_custom_call.1} parent=5 // pred_fallthru
        _
    $region6: #{tpu_custom_call.1} parent=1 // loop_footer
      %s23 = sadd.s32 1, %s19
    $region7: #{tpu_custom_call.1} parent=1 // loop_footer_branch
      %18 = sbr.rel target = $region3
    $region8: #{tpu_custom_call.1} parent=1 // loop_exit
      _
    %6482 = vsyncpa [#allocation5], 1
    %s6483 = scalar_lea.sflag [#allocation5], 1
    %6484 = vsyncpa %s6483, 1

</llo_original>
